<compile_context>
chip_gen: v7x
topology: tpu7x:2x2x1
jax: 0.10.0
libtpu: 0.0.40
codegen_flags: <defaults>
</compile_context>

<pallas_src>
import functools

import jax
import jax.numpy as jnp
from jax.experimental import pallas as pl
from jax.experimental.pallas import tpu as pltpu


def _silu(z):
    return z * jax.nn.sigmoid(z)


def _to_proxy2_kernel(
    x_ref,        # (1, HW, C)            f32  input tokens
    kq1_ref,      # (C, head*Nkv)         cdt  q2_w folded with scale*K1^T blockdiag
    sb1_ref,      # (1, head*Nkv)         f32  q2_b folded score bias
    wnv1_ref,     # (head*Nkv, 2C)        cdt  [V1 blockdiag | 0/1 denom broadcast]
    pe1v_ref,     # (1, C)                f32  pe1 @ V1 (constant row)
    w1a_ref,      # (C, C)                cdt  ffn1 fc1
    w1b_ref,      # (C, C)                cdt  ffn1 fc2
    wsv2_ref,     # (C, head*Nq + C)      cdt  [wk_x @ q2_blockdiag | wv_x]
    bsv2_ref,     # (1, head*Nq + C)      f32  [score bias | bv_x]
    wvf_ref,      # (C, C)                f32  wv_x (exact colsum matvec)
    pe2c_ref,     # (head*Nq, 1)          f32  pe2 column
    hmask_ref,    # (head, C)             f32  per-head channel mask
    w2a_ref,      # (C, C)                f32  ffn2 fc1 (Nq rows only -> f32)
    w2b_ref,      # (C, C)                f32  ffn2 fc2
    biasc_ref,    # (5, C)                f32  [f1a_b, f1b_b, bv_x, f2a_b, f2b_b]
    o_ref,        # (1, HW, C)            f32
    *, head, nq, h1, w1, ry, rx, approx_recip,
):
    f32 = jnp.float32
    hw, c = x_ref.shape[1], x_ref.shape[2]
    cdt = kq1_ref.dtype
    hn2 = head * nq

    x = x_ref[0]                        # (HW, C) f32
    xc = x.astype(cdt)
    bias = biasc_ref[...]

    def dotf(a, b):
        return jnp.dot(a, b, preferred_element_type=f32)

    # ---------------- attention 1: image tokens -> learnable kv ----------------
    # q-projection folded into the score weights (one matmul, one rounding).
    s1 = dotf(xc, kq1_ref[...]) + sb1_ref[...]             # (HW, head*Nkv)
    m1 = jnp.max(s1, axis=-1, keepdims=True)               # global row shift (exact)
    e1 = jnp.exp(s1 - m1)
    # One bf16 matmul gives [num | per-channel denominator] (no f32 seg matmuls).
    nv = dotf(e1.astype(cdt), wnv1_ref[...])               # (HW, 2C)
    num = nv[:, :c]
    den = nv[:, c:]
    o1 = num * pl.reciprocal(den, approx=approx_recip) + pe1v_ref[...]   # (HW, C)

    # ------------------------------ MLP 1 + skip -------------------------------
    t1 = _silu(dotf(o1.astype(cdt), w1a_ref[...]) + bias[0:1, :])
    f1 = dotf(t1.astype(cdt), w1b_ref[...]) + bias[1:2, :]
    mid = f1 + x                                           # mskip (f32)
    midc = mid.astype(cdt)

    # ------------- attention 2: learnable queries -> image tokens --------------
    # scores transposed (rows = image tokens) and V from a single wide matmul.
    sv = dotf(midc, wsv2_ref[...]) + bsv2_ref[...]         # (HW, head*Nq + C)
    s2t = sv[:, :hn2]
    v2 = sv[:, hn2:]
    m2 = jnp.max(s2t, axis=0, keepdims=True)
    e2 = jnp.exp(s2t - m2)
    d2 = jnp.sum(e2, axis=0, keepdims=True)
    p2 = e2 * pl.reciprocal(d2, approx=approx_recip)       # softmax over tokens

    # softmax part:  g = P^T V   (contract over the HW token axis)
    g = jax.lax.dot_general(p2.astype(cdt), v2.astype(cdt),
                            (((0,), (0,)), ((), ())),
                            preferred_element_type=f32)    # (head*Nq, C)

    # pe part: (pe + softmax) @ V = softmax@V + pe * colsum(V).  colsum(V) is
    # computed exactly from f32 `mid` through the f32 wv copy (precision-critical:
    # the column sum amplifies per-element bf16 rounding by sqrt(HW)).
    colsum_mid = jnp.sum(mid, axis=0, keepdims=True)                     # (1, C)
    colsum_v = dotf(colsum_mid, wvf_ref[...]) + float(hw) * bias[2:3, :]  # (1, C)
    g = g + pe2c_ref[...] * colsum_v                       # outer product add

    # per-head channel-masked merge (full-lane masked FMAs, no concatenate)
    hmask = hmask_ref[...]
    o2 = jnp.zeros((nq, c), f32)
    for h in range(head):
        o2 = o2 + g[h * nq:(h + 1) * nq, :] * hmask[h:h + 1, :]

    # -------- MLP 2 (only Nq rows -> keep f32 operands; negligible MXU) --------
    t2 = _silu(dotf(o2, w2a_ref[...]) + bias[3:4, :])
    fin = dotf(t2, w2b_ref[...]) + bias[4:5, :]            # (Nq, C)

    # ---------- nearest-neighbour upsample (pure repeat) + residuals -----------
    fin3 = fin.reshape(h1, w1, c)
    upy = jnp.broadcast_to(fin3[:, None, :, :], (h1, ry, w1, c)).reshape(h1 * ry, w1, c)
    upx = jnp.broadcast_to(upy[:, :, None, :], (h1 * ry, w1, rx, c)).reshape(h1 * ry, w1 * rx, c)
    o_ref[0] = upx.reshape(hw, c) + mid + x


def fold_to_proxy2_params(params, *, head, compute_dtype=jnp.bfloat16):
    """Host-side, parameter-only folding. Compute ONCE at model init (review item:
    keep parameter algebra out of the per-forward path)."""
    f32 = jnp.float32
    cdt = compute_dtype
    c = params["q2_w"].shape[0]
    d = c // head
    scale = float(d) ** -0.5
    nq = params["learnable_q"].shape[0]
    nkv = params["learnable_kv"].shape[0]

    chan_head = jnp.arange(c) // d                             # head id per channel
    colh_kv = jnp.repeat(jnp.arange(head), nkv)                # head id per kv column
    colh_q = jnp.repeat(jnp.arange(head), nq)                  # head id per q column

    # ---- attention 1 (head-block-diagonal, q-projection folded in) ----
    kv1 = params["learnable_kv"] @ params["kvy_w"] + params["kvy_b"]   # (Nkv, 2C)
    k1, v1 = kv1[:, :c], kv1[:, c:]
    kbd1 = jnp.where(chan_head[:, None] == colh_kv[None, :],
                     jnp.tile(scale * k1.T, (1, head)), 0.0)           # (C, head*Nkv)
    kq1 = params["q2_w"] @ kbd1                                        # fold q proj
    sb1 = (params["q2_b"] @ kbd1).reshape(1, head * nkv)
    vbd1 = jnp.where(colh_kv[:, None] == chan_head[None, :],
                     jnp.tile(v1, (head, 1)), 0.0)                     # (head*Nkv, C)
    den1 = (colh_kv[:, None] == chan_head[None, :]).astype(f32)        # denom bcast
    wnv1 = jnp.concatenate([vbd1, den1], axis=1)                       # (head*Nkv, 2C)
    pe1v = (params["pe1"].reshape(head * nkv) @ vbd1).reshape(1, c)    # pe1 @ V1

    # ---- attention 2 (scores transposed; score+V weights concatenated) ----
    q2full = params["learnable_q"] @ params["q_w"] + params["q_b"]     # (Nq, C)
    q2bd = jnp.where(chan_head[:, None] == colh_q[None, :],
                     jnp.tile(scale * q2full.T, (1, head)), 0.0)       # (C, head*Nq)
    wk_x, wv_x = params["kvx_w"][:, :c], params["kvx_w"][:, c:]
    bk_x, bv_x = params["kvx_b"][:c], params["kvx_b"][c:]
    ws2 = wk_x @ q2bd                                                  # (C, head*Nq)
    bs2 = bk_x @ q2bd                                                  # (head*Nq,)
    wsv2 = jnp.concatenate([ws2, wv_x], axis=1)                        # (C, head*Nq+C)
    bsv2 = jnp.concatenate([bs2, bv_x]).reshape(1, head * nq + c)

    pe2c = params["pe2"].reshape(head * nq, 1).astype(f32)
    hmask = (jnp.arange(head)[:, None] == chan_head[None, :]).astype(f32)
    biasc = jnp.stack([params["f1a_b"], params["f1b_b"], bv_x,
                       params["f2a_b"], params["f2b_b"]], axis=0).astype(f32)

    return dict(
        head=head, nq=nq, nkv=nkv, c=c, compute_dtype=cdt,
        kq1=kq1.astype(cdt), sb1=sb1.astype(f32),
        wnv1=wnv1.astype(cdt), pe1v=pe1v.astype(f32),
        w1a=params["f1a_w"].astype(cdt), w1b=params["f1b_w"].astype(cdt),
        wsv2=wsv2.astype(cdt), bsv2=bsv2.astype(f32),
        wvf=wv_x.astype(f32),
        pe2c=pe2c, hmask=hmask,
        w2a=params["f2a_w"].astype(f32), w2b=params["f2b_w"].astype(f32),
        biasc=biasc,
    )


def to_proxy2_forward(x_nhwc, folded):
    f32 = jnp.float32
    head, nq, c = folded["head"], folded["nq"], folded["c"]
    cdt = folded["compute_dtype"]
    b, hgt, wdt, cx = x_nhwc.shape
    assert cx == c
    hw = hgt * wdt
    h1 = w1 = int(round(nq ** 0.5))
    assert h1 * w1 == nq
    assert hgt % h1 == 0 and wdt % w1 == 0     # integer nearest-neighbour ratio
    ry, rx = hgt // h1, wdt // w1

    x = x_nhwc.reshape(b, hw, c).astype(f32)

    args = (x, folded["kq1"], folded["sb1"], folded["wnv1"], folded["pe1v"],
            folded["w1a"], folded["w1b"], folded["wsv2"], folded["bsv2"],
            folded["wvf"], folded["pe2c"], folded["hmask"],
            folded["w2a"], folded["w2b"], folded["biasc"])

    def full(a):
        nd = a.ndim
        return pl.BlockSpec(a.shape, lambda i, nd=nd: (0,) * nd)

    in_specs = [pl.BlockSpec((1, hw, c), lambda i: (i, 0, 0))] + [full(a) for a in args[1:]]
    out_specs = pl.BlockSpec((1, hw, c), lambda i: (i, 0, 0))

    # VMEM budget: double-buffered param/IO blocks + activation live set,
    # capped by the actual chip VMEM capacity minus headroom.
    param_bytes = sum(int(a.size) * a.dtype.itemsize for a in args[1:])
    io_bytes = 2 * hw * c * 4
    wide = max(2 * c, head * nq + c, head * folded["nkv"])
    act_bytes = 10 * hw * wide * 4
    need = 2 * (param_bytes + io_bytes) + act_bytes
    try:
        cap = int(pltpu.get_tpu_info().vmem_capacity_bytes)
    except Exception:
        cap = 64 * 2 ** 20
    vmem_limit = int(min(max(need, 32 * 2 ** 20), cap - 8 * 2 ** 20))

    kern = functools.partial(
        _to_proxy2_kernel, head=head, nq=nq, h1=h1, w1=w1, ry=ry, rx=rx,
        approx_recip=(cdt != jnp.float32))

    out_flat = pl.pallas_call(
        kern,
        out_shape=jax.ShapeDtypeStruct((b, hw, c), f32),
        grid_spec=pltpu.PrefetchScalarGridSpec(
            num_scalar_prefetch=0,
            grid=(b,),
            in_specs=in_specs,
            out_specs=out_specs,
        ),
        compiler_params=pltpu.CompilerParams(
            dimension_semantics=("parallel",),
            vmem_limit_bytes=vmem_limit),
    )(*args)
    return out_flat.reshape(b, hgt, wdt, c)


def to_proxy2_reference(x_nhwc, params, *, head):
    """Pure-JAX mirror of the PyTorch forward (Attention = pe + softmax, Mlp)."""
    b, h, w, c = x_nhwc.shape
    hw = h * w
    d = c // head
    scale = float(d) ** -0.5
    x = x_nhwc.reshape(b, hw, c)

    def lin(t, wk, bk):
        return t @ params[wk] + params[bk]

    def split_heads(t):
        return t.reshape(b, -1, head, d).transpose(0, 2, 1, 3)

    def merge_heads(t):
        return t.transpose(0, 2, 1, 3).reshape(b, -1, c)

    def attn(q, k, v, pe):
        s = jnp.einsum("bhnd,bhmd->bhnm", q, k) * scale
        p = jax.nn.softmax(s, axis=-1)
        return merge_heads(jnp.einsum("bhnm,bhmd->bhnd", pe + p, v))

    def mlp(t, w1, b1, w2, b2):
        return lin(jax.nn.silu(lin(t, w1, b1)), w2, b2)

    # attention 1
    q = split_heads(lin(x, "q2_w", "q2_b"))
    lkv = jnp.broadcast_to(params["learnable_kv"],
                           (b,) + params["learnable_kv"].shape)
    kv = lkv @ params["kvy_w"] + params["kvy_b"]
    k, v = kv[..., :c], kv[..., c:]
    pe1 = params["pe1"].reshape(1, head, 1, -1)
    out = attn(q, split_heads(k), split_heads(v), pe1)
    out = mlp(out, "f1a_w", "f1a_b", "f1b_w", "f1b_b") + x
    mskip = out

    # attention 2
    lq = jnp.broadcast_to(params["learnable_q"],
                          (b,) + params["learnable_q"].shape)
    q = split_heads(lq @ params["q_w"] + params["q_b"])
    kv = out @ params["kvx_w"] + params["kvx_b"]
    k, v = kv[..., :c], kv[..., c:]
    pe2 = params["pe2"].reshape(1, head, -1, 1)
    fin = attn(q, split_heads(k), split_heads(v), pe2)
    fin = mlp(fin, "f2a_w", "f2a_b", "f2b_w", "f2b_b")

    nq = params["learnable_q"].shape[0]
    h1 = w1 = int(round(nq ** 0.5))
    fin_img = fin.reshape(b, h1, w1, c)
    ri = (jnp.arange(h) * h1) // h
    ci = (jnp.arange(w) * w1) // w
    up = fin_img[:, ri][:, :, ci]
    return (up.reshape(b, hw, c) + mskip + x).reshape(b, h, w, c)


if __name__ == "__main__":
    B, H, W, C = 2, 16, 16, 128
    HEAD = 4
    NQ = NKV = 64            # 8x8 agent grid -> 2x nearest upsample to 16x16

    key = jax.random.PRNGKey(0)
    keys = iter(jax.random.split(key, 32))

    def rnd(shape, s=0.1):
        return (s * jax.random.normal(next(keys), shape)).astype(jnp.float32)

    params = {
        "learnable_q": rnd((NQ, C)),
        "learnable_kv": rnd((NKV, C)),
        "q_w": rnd((C, C)), "q_b": rnd((C,)),
        "kvx_w": rnd((C, 2 * C)), "kvx_b": rnd((2 * C,)),
        "kvy_w": rnd((C, 2 * C)), "kvy_b": rnd((2 * C,)),
        "q2_w": rnd((C, C)), "q2_b": rnd((C,)),
        "pe1": rnd((HEAD, 1, NKV)),
        "pe2": rnd((HEAD, NQ, 1)),
        "f1a_w": rnd((C, C)), "f1a_b": rnd((C,)),
        "f1b_w": rnd((C, C)), "f1b_b": rnd((C,)),
        "f2a_w": rnd((C, C)), "f2a_b": rnd((C,)),
        "f2b_w": rnd((C, C)), "f2b_b": rnd((C,)),
    }
    x = jax.random.normal(next(keys), (B, H, W, C), jnp.float32)

    ref = to_proxy2_reference(x, params, head=HEAD)
    ref_mag = float(jnp.max(jnp.abs(ref)))

    # 1) f32-operand path: proves the restructured math (q-fold, [num|den] softmax,
    #    [score|V] concat, pe2 colsum split, repeat-upsample) is the reference.
    folded_f32 = fold_to_proxy2_params(params, head=HEAD, compute_dtype=jnp.float32)
    out_f32 = jax.block_until_ready(to_proxy2_forward(x, folded_f32))
    assert out_f32.shape == (B, H, W, C), out_f32.shape
    err_f32 = float(jnp.max(jnp.abs(out_f32 - ref)))
    assert err_f32 < 1e-3, f"f32 mismatch vs reference: {err_f32}"

    # 2) fast path: bf16 matmul operands for the big (HW, .) matmuls, f32 softmax /
    #    residuals / colsum(V) path / MLP-2.  Accepted within bf16 rounding of the
    #    f32 reference (scaled by output magnitude).
    folded_bf16 = fold_to_proxy2_params(params, head=HEAD, compute_dtype=jnp.bfloat16)
    out_bf16 = jax.block_until_ready(to_proxy2_forward(x, folded_bf16))
    err_bf16 = float(jnp.max(jnp.abs(out_bf16 - ref)))
    tol_bf16 = 2.5e-2 * ref_mag + 2.5e-2
    assert err_bf16 < tol_bf16, (
        f"bf16 mismatch vs reference: {err_bf16} (tol {tol_bf16}, ref_mag {ref_mag})")

    print("KERNEL_OK")
</pallas_src>

<mosaic_0001>
module attributes {stable_mosaic.version = 11 : i64} {
  func.func @_to_proxy2_kernel(%arg0: i32, %arg1: memref<1x256x128xf32, #tpu.memory_space<vmem>>, %arg2: memref<128x256xf32, #tpu.memory_space<vmem>>, %arg3: memref<1x256xf32, #tpu.memory_space<vmem>>, %arg4: memref<256x256xf32, #tpu.memory_space<vmem>>, %arg5: memref<1x128xf32, #tpu.memory_space<vmem>>, %arg6: memref<128x128xf32, #tpu.memory_space<vmem>>, %arg7: memref<128x128xf32, #tpu.memory_space<vmem>>, %arg8: memref<128x384xf32, #tpu.memory_space<vmem>>, %arg9: memref<1x384xf32, #tpu.memory_space<vmem>>, %arg10: memref<128x128xf32, #tpu.memory_space<vmem>>, %arg11: memref<256x1xf32, #tpu.memory_space<vmem>>, %arg12: memref<4x128xf32, #tpu.memory_space<vmem>>, %arg13: memref<128x128xf32, #tpu.memory_space<vmem>>, %arg14: memref<128x128xf32, #tpu.memory_space<vmem>>, %arg15: memref<5x128xf32, #tpu.memory_space<vmem>>, %arg16: memref<1x256x128xf32, #tpu.memory_space<vmem>>) attributes {dimension_semantics = [#tpu.dimension_semantics<parallel>], iteration_bounds = array<i64: 2>, scalar_prefetch = 0 : i64, scratch_operands = 0 : i64, tpu.core_type = #tpu.core_type<tc>, window_params = [{transform_indices = @transform_0, window_bounds = array<i64: 1, 256, 128>}, {pipeline_mode = #tpu.pipeline_mode<synchronous>, transform_indices = @transform_1, window_bounds = array<i64: 128, 256>}, {pipeline_mode = #tpu.pipeline_mode<synchronous>, transform_indices = @transform_2, window_bounds = array<i64: 1, 256>}, {pipeline_mode = #tpu.pipeline_mode<synchronous>, transform_indices = @transform_3, window_bounds = array<i64: 256, 256>}, {pipeline_mode = #tpu.pipeline_mode<synchronous>, transform_indices = @transform_4, window_bounds = array<i64: 1, 128>}, {pipeline_mode = #tpu.pipeline_mode<synchronous>, transform_indices = @transform_5, window_bounds = array<i64: 128, 128>}, {pipeline_mode = #tpu.pipeline_mode<synchronous>, transform_indices = @transform_6, window_bounds = array<i64: 128, 128>}, {pipeline_mode = #tpu.pipeline_mode<synchronous>, transform_indices = @transform_7, window_bounds = array<i64: 128, 384>}, {pipeline_mode = #tpu.pipeline_mode<synchronous>, transform_indices = @transform_8, window_bounds = array<i64: 1, 384>}, {pipeline_mode = #tpu.pipeline_mode<synchronous>, transform_indices = @transform_9, window_bounds = array<i64: 128, 128>}, {pipeline_mode = #tpu.pipeline_mode<synchronous>, transform_indices = @transform_10, window_bounds = array<i64: 256, 1>}, {pipeline_mode = #tpu.pipeline_mode<synchronous>, transform_indices = @transform_11, window_bounds = array<i64: 4, 128>}, {pipeline_mode = #tpu.pipeline_mode<synchronous>, transform_indices = @transform_12, window_bounds = array<i64: 128, 128>}, {pipeline_mode = #tpu.pipeline_mode<synchronous>, transform_indices = @transform_13, window_bounds = array<i64: 128, 128>}, {pipeline_mode = #tpu.pipeline_mode<synchronous>, transform_indices = @transform_14, window_bounds = array<i64: 5, 128>}, {transform_indices = @transform_15, window_bounds = array<i64: 1, 256, 128>}]} {
    %c0 = arith.constant 0 : index
    %c0_0 = arith.constant 0 : index
    %c0_1 = arith.constant 0 : index
    %0 = vector.load %arg1[%c0, %c0_0, %c0_1] : memref<1x256x128xf32, #tpu.memory_space<vmem>>, vector<1x256x128xf32>
    %1 = vector.shape_cast %0 : vector<1x256x128xf32> to vector<256x128xf32>
    %c0_2 = arith.constant 0 : index
    %c0_3 = arith.constant 0 : index
    %2 = vector.load %arg15[%c0_2, %c0_3] : memref<5x128xf32, #tpu.memory_space<vmem>>, vector<5x128xf32>
    %c0_4 = arith.constant 0 : index
    %c0_5 = arith.constant 0 : index
    %3 = vector.load %arg2[%c0_4, %c0_5] : memref<128x256xf32, #tpu.memory_space<vmem>>, vector<128x256xf32>
    %cst = arith.constant dense<0.000000e+00> : vector<256x256xf32>
    %4 = tpu.matmul %1, %3, %cst {dimension_numbers = #tpu.dot_dimension_numbers<[1], [0], [0], [1], [0, 0, 1, 1], [], []>} : vector<256x128xf32>, vector<128x256xf32>, vector<256x256xf32> -> vector<256x256xf32>
    %c0_6 = arith.constant 0 : index
    %c0_7 = arith.constant 0 : index
    %5 = vector.load %arg3[%c0_6, %c0_7] : memref<1x256xf32, #tpu.memory_space<vmem>>, vector<1x256xf32>
    %6 = vector.broadcast %5 : vector<1x256xf32> to vector<256x256xf32>
    %7 = arith.addf %4, %6 : vector<256x256xf32>
    %cst_8 = arith.constant dense<0xFF800000> : vector<256xf32>
    %8 = vector.multi_reduction <maximumf>, %7, %cst_8 [1] : vector<256x256xf32> to vector<256xf32>
    %9 = vector.shape_cast %8 : vector<256xf32> to vector<256x1xf32>
    %10 = vector.broadcast %9 : vector<256x1xf32> to vector<256x256xf32>
    %11 = arith.subf %7, %10 : vector<256x256xf32>
    %12 = math.exp %11 : vector<256x256xf32>
    %c0_9 = arith.constant 0 : index
    %c0_10 = arith.constant 0 : index
    %13 = vector.load %arg4[%c0_9, %c0_10] : memref<256x256xf32, #tpu.memory_space<vmem>>, vector<256x256xf32>
    %cst_11 = arith.constant dense<0.000000e+00> : vector<256x256xf32>
    %14 = tpu.matmul %12, %13, %cst_11 {dimension_numbers = #tpu.dot_dimension_numbers<[1], [0], [0], [1], [0, 0, 1, 1], [], []>} : vector<256x256xf32>, vector<256x256xf32>, vector<256x256xf32> -> vector<256x256xf32>
    %15 = vector.extract_strided_slice %14 {offsets = [0, 0], sizes = [256, 128], strides = [1, 1]} : vector<256x256xf32> to vector<256x128xf32>
    %16 = vector.extract_strided_slice %14 {offsets = [0, 128], sizes = [256, 128], strides = [1, 1]} : vector<256x256xf32> to vector<256x128xf32>
    %17 = tpu.reciprocal %16 : vector<256x128xf32> -> vector<256x128xf32>
    %18 = arith.mulf %15, %17 : vector<256x128xf32>
    %c0_12 = arith.constant 0 : index
    %c0_13 = arith.constant 0 : index
    %19 = vector.load %arg5[%c0_12, %c0_13] : memref<1x128xf32, #tpu.memory_space<vmem>>, vector<1x128xf32>
    %20 = vector.broadcast %19 : vector<1x128xf32> to vector<256x128xf32>
    %21 = arith.addf %18, %20 : vector<256x128xf32>
    %c0_14 = arith.constant 0 : index
    %c0_15 = arith.constant 0 : index
    %22 = vector.load %arg6[%c0_14, %c0_15] : memref<128x128xf32, #tpu.memory_space<vmem>>, vector<128x128xf32>
    %cst_16 = arith.constant dense<0.000000e+00> : vector<256x128xf32>
    %23 = tpu.matmul %21, %22, %cst_16 {dimension_numbers = #tpu.dot_dimension_numbers<[1], [0], [0], [1], [0, 0, 1, 1], [], []>} : vector<256x128xf32>, vector<128x128xf32>, vector<256x128xf32> -> vector<256x128xf32>
    %24 = vector.extract_strided_slice %2 {offsets = [0, 0], sizes = [1, 128], strides = [1, 1]} : vector<5x128xf32> to vector<1x128xf32>
    %25 = vector.broadcast %24 : vector<1x128xf32> to vector<256x128xf32>
    %26 = arith.addf %23, %25 : vector<256x128xf32>
    %27 = arith.negf %26 : vector<256x128xf32>
    %28 = math.exp %27 : vector<256x128xf32>
    %cst_17 = arith.constant 1.000000e+00 : f32
    %29 = vector.broadcast %cst_17 : f32 to vector<256x128xf32>
    %30 = arith.addf %29, %28 : vector<256x128xf32>
    %31 = arith.divf %29, %30 : vector<256x128xf32>
    %32 = arith.mulf %26, %31 : vector<256x128xf32>
    %c0_18 = arith.constant 0 : index
    %c0_19 = arith.constant 0 : index
    %33 = vector.load %arg7[%c0_18, %c0_19] : memref<128x128xf32, #tpu.memory_space<vmem>>, vector<128x128xf32>
    %cst_20 = arith.constant dense<0.000000e+00> : vector<256x128xf32>
    %34 = tpu.matmul %32, %33, %cst_20 {dimension_numbers = #tpu.dot_dimension_numbers<[1], [0], [0], [1], [0, 0, 1, 1], [], []>} : vector<256x128xf32>, vector<128x128xf32>, vector<256x128xf32> -> vector<256x128xf32>
    %35 = vector.extract_strided_slice %2 {offsets = [1, 0], sizes = [1, 128], strides = [1, 1]} : vector<5x128xf32> to vector<1x128xf32>
    %36 = vector.broadcast %35 : vector<1x128xf32> to vector<256x128xf32>
    %37 = arith.addf %34, %36 : vector<256x128xf32>
    %38 = arith.addf %37, %1 : vector<256x128xf32>
    %c0_21 = arith.constant 0 : index
    %c0_22 = arith.constant 0 : index
    %39 = vector.load %arg8[%c0_21, %c0_22] : memref<128x384xf32, #tpu.memory_space<vmem>>, vector<128x384xf32>
    %cst_23 = arith.constant dense<0.000000e+00> : vector<256x384xf32>
    %40 = tpu.matmul %38, %39, %cst_23 {dimension_numbers = #tpu.dot_dimension_numbers<[1], [0], [0], [1], [0, 0, 1, 1], [], []>} : vector<256x128xf32>, vector<128x384xf32>, vector<256x384xf32> -> vector<256x384xf32>
    %c0_24 = arith.constant 0 : index
    %c0_25 = arith.constant 0 : index
    %41 = vector.load %arg9[%c0_24, %c0_25] : memref<1x384xf32, #tpu.memory_space<vmem>>, vector<1x384xf32>
    %42 = vector.broadcast %41 : vector<1x384xf32> to vector<256x384xf32>
    %43 = arith.addf %40, %42 : vector<256x384xf32>
    %44 = vector.extract_strided_slice %43 {offsets = [0, 0], sizes = [256, 256], strides = [1, 1]} : vector<256x384xf32> to vector<256x256xf32>
    %45 = vector.extract_strided_slice %43 {offsets = [0, 256], sizes = [256, 128], strides = [1, 1]} : vector<256x384xf32> to vector<256x128xf32>
    %cst_26 = arith.constant dense<0xFF800000> : vector<256xf32>
    %46 = vector.multi_reduction <maximumf>, %44, %cst_26 [0] : vector<256x256xf32> to vector<256xf32>
    %47 = vector.shape_cast %46 : vector<256xf32> to vector<1x256xf32>
    %48 = vector.broadcast %47 : vector<1x256xf32> to vector<256x256xf32>
    %49 = arith.subf %44, %48 : vector<256x256xf32>
    %50 = math.exp %49 : vector<256x256xf32>
    %cst_27 = arith.constant dense<0.000000e+00> : vector<256xf32>
    %51 = vector.multi_reduction <add>, %50, %cst_27 [0] : vector<256x256xf32> to vector<256xf32>
    %52 = vector.shape_cast %51 : vector<256xf32> to vector<1x256xf32>
    %53 = tpu.reciprocal %52 : vector<1x256xf32> -> vector<1x256xf32>
    %54 = vector.broadcast %53 : vector<1x256xf32> to vector<256x256xf32>
    %55 = arith.mulf %50, %54 : vector<256x256xf32>
    %cst_28 = arith.constant dense<0.000000e+00> : vector<256x128xf32>
    %56 = tpu.matmul %55, %45, %cst_28 {dimension_numbers = #tpu.dot_dimension_numbers<[0], [0], [1], [1], [0, 1, 1, 1], [], []>} : vector<256x256xf32>, vector<256x128xf32>, vector<256x128xf32> -> vector<256x128xf32>
    %cst_29 = arith.constant dense<0.000000e+00> : vector<128xf32>
    %57 = vector.multi_reduction <add>, %38, %cst_29 [0] : vector<256x128xf32> to vector<128xf32>
    %58 = vector.shape_cast %57 : vector<128xf32> to vector<1x128xf32>
    %c0_30 = arith.constant 0 : index
    %c0_31 = arith.constant 0 : index
    %59 = vector.load %arg10[%c0_30, %c0_31] : memref<128x128xf32, #tpu.memory_space<vmem>>, vector<128x128xf32>
    %cst_32 = arith.constant dense<0.000000e+00> : vector<1x128xf32>
    %60 = tpu.matmul %58, %59, %cst_32 {dimension_numbers = #tpu.dot_dimension_numbers<[1], [0], [0], [1], [0, 0, 1, 1], [], []>} : vector<1x128xf32>, vector<128x128xf32>, vector<1x128xf32> -> vector<1x128xf32>
    %61 = vector.extract_strided_slice %2 {offsets = [2, 0], sizes = [1, 128], strides = [1, 1]} : vector<5x128xf32> to vector<1x128xf32>
    %cst_33 = arith.constant 2.560000e+02 : f32
    %62 = vector.broadcast %cst_33 : f32 to vector<1x128xf32>
    %63 = arith.mulf %62, %61 : vector<1x128xf32>
    %64 = arith.addf %60, %63 : vector<1x128xf32>
    %c0_34 = arith.constant 0 : index
    %c0_35 = arith.constant 0 : index
    %65 = vector.load %arg11[%c0_34, %c0_35] : memref<256x1xf32, #tpu.memory_space<vmem>>, vector<256x1xf32>
    %66 = vector.broadcast %65 : vector<256x1xf32> to vector<256x128xf32>
    %67 = vector.broadcast %64 : vector<1x128xf32> to vector<256x128xf32>
    %68 = arith.mulf %66, %67 : vector<256x128xf32>
    %69 = arith.addf %56, %68 : vector<256x128xf32>
    %c0_36 = arith.constant 0 : index
    %c0_37 = arith.constant 0 : index
    %70 = vector.load %arg12[%c0_36, %c0_37] : memref<4x128xf32, #tpu.memory_space<vmem>>, vector<4x128xf32>
    %cst_38 = arith.constant 0.000000e+00 : f32
    %71 = vector.broadcast %cst_38 : f32 to vector<64x128xf32>
    %72 = vector.extract_strided_slice %69 {offsets = [0, 0], sizes = [64, 128], strides = [1, 1]} : vector<256x128xf32> to vector<64x128xf32>
    %73 = vector.extract_strided_slice %70 {offsets = [0, 0], sizes = [1, 128], strides = [1, 1]} : vector<4x128xf32> to vector<1x128xf32>
    %74 = vector.broadcast %73 : vector<1x128xf32> to vector<64x128xf32>
    %75 = arith.mulf %72, %74 : vector<64x128xf32>
    %76 = arith.addf %71, %75 : vector<64x128xf32>
    %77 = vector.extract_strided_slice %69 {offsets = [64, 0], sizes = [64, 128], strides = [1, 1]} : vector<256x128xf32> to vector<64x128xf32>
    %78 = vector.extract_strided_slice %70 {offsets = [1, 0], sizes = [1, 128], strides = [1, 1]} : vector<4x128xf32> to vector<1x128xf32>
    %79 = vector.broadcast %78 : vector<1x128xf32> to vector<64x128xf32>
    %80 = arith.mulf %77, %79 : vector<64x128xf32>
    %81 = arith.addf %76, %80 : vector<64x128xf32>
    %82 = vector.extract_strided_slice %69 {offsets = [128, 0], sizes = [64, 128], strides = [1, 1]} : vector<256x128xf32> to vector<64x128xf32>
    %83 = vector.extract_strided_slice %70 {offsets = [2, 0], sizes = [1, 128], strides = [1, 1]} : vector<4x128xf32> to vector<1x128xf32>
    %84 = vector.broadcast %83 : vector<1x128xf32> to vector<64x128xf32>
    %85 = arith.mulf %82, %84 : vector<64x128xf32>
    %86 = arith.addf %81, %85 : vector<64x128xf32>
    %87 = vector.extract_strided_slice %69 {offsets = [192, 0], sizes = [64, 128], strides = [1, 1]} : vector<256x128xf32> to vector<64x128xf32>
    %88 = vector.extract_strided_slice %70 {offsets = [3, 0], sizes = [1, 128], strides = [1, 1]} : vector<4x128xf32> to vector<1x128xf32>
    %89 = vector.broadcast %88 : vector<1x128xf32> to vector<64x128xf32>
    %90 = arith.mulf %87, %89 : vector<64x128xf32>
    %91 = arith.addf %86, %90 : vector<64x128xf32>
    %c0_39 = arith.constant 0 : index
    %c0_40 = arith.constant 0 : index
    %92 = vector.load %arg13[%c0_39, %c0_40] : memref<128x128xf32, #tpu.memory_space<vmem>>, vector<128x128xf32>
    %cst_41 = arith.constant dense<0.000000e+00> : vector<64x128xf32>
    %93 = tpu.matmul %91, %92, %cst_41 {dimension_numbers = #tpu.dot_dimension_numbers<[1], [0], [0], [1], [0, 0, 1, 1], [], []>} : vector<64x128xf32>, vector<128x128xf32>, vector<64x128xf32> -> vector<64x128xf32>
    %94 = vector.extract_strided_slice %2 {offsets = [3, 0], sizes = [1, 128], strides = [1, 1]} : vector<5x128xf32> to vector<1x128xf32>
    %95 = vector.broadcast %94 : vector<1x128xf32> to vector<64x128xf32>
    %96 = arith.addf %93, %95 : vector<64x128xf32>
    %97 = arith.negf %96 : vector<64x128xf32>
    %98 = math.exp %97 : vector<64x128xf32>
    %cst_42 = arith.constant 1.000000e+00 : f32
    %99 = vector.broadcast %cst_42 : f32 to vector<64x128xf32>
    %100 = arith.addf %99, %98 : vector<64x128xf32>
    %101 = arith.divf %99, %100 : vector<64x128xf32>
    %102 = arith.mulf %96, %101 : vector<64x128xf32>
    %c0_43 = arith.constant 0 : index
    %c0_44 = arith.constant 0 : index
    %103 = vector.load %arg14[%c0_43, %c0_44] : memref<128x128xf32, #tpu.memory_space<vmem>>, vector<128x128xf32>
    %cst_45 = arith.constant dense<0.000000e+00> : vector<64x128xf32>
    %104 = tpu.matmul %102, %103, %cst_45 {dimension_numbers = #tpu.dot_dimension_numbers<[1], [0], [0], [1], [0, 0, 1, 1], [], []>} : vector<64x128xf32>, vector<128x128xf32>, vector<64x128xf32> -> vector<64x128xf32>
    %105 = vector.extract_strided_slice %2 {offsets = [4, 0], sizes = [1, 128], strides = [1, 1]} : vector<5x128xf32> to vector<1x128xf32>
    %106 = vector.broadcast %105 : vector<1x128xf32> to vector<64x128xf32>
    %107 = arith.addf %104, %106 : vector<64x128xf32>
    %108 = vector.shape_cast %107 : vector<64x128xf32> to vector<8x8x128xf32>
    %109 = vector.shape_cast %108 : vector<8x8x128xf32> to vector<8x1x8x128xf32>
    %110 = vector.shape_cast %109 : vector<8x1x8x128xf32> to vector<8x1x8x128xf32>
    %111 = vector.broadcast %110 : vector<8x1x8x128xf32> to vector<8x2x8x128xf32>
    %112 = vector.shape_cast %111 : vector<8x2x8x128xf32> to vector<16x8x128xf32>
    %113 = vector.shape_cast %112 : vector<16x8x128xf32> to vector<16x8x1x128xf32>
    %114 = vector.shape_cast %113 : vector<16x8x1x128xf32> to vector<16x8x1x128xf32>
    %115 = vector.broadcast %114 : vector<16x8x1x128xf32> to vector<16x8x2x128xf32>
    %116 = vector.shape_cast %115 : vector<16x8x2x128xf32> to vector<16x16x128xf32>
    %117 = vector.shape_cast %116 : vector<16x16x128xf32> to vector<256x128xf32>
    %118 = arith.addf %117, %38 : vector<256x128xf32>
    %119 = arith.addf %118, %1 : vector<256x128xf32>
    %c0_46 = arith.constant 0 : index
    %c0_47 = arith.constant 0 : index
    %c0_48 = arith.constant 0 : index
    %120 = vector.load %arg16[%c0_46, %c0_47, %c0_48] : memref<1x256x128xf32, #tpu.memory_space<vmem>>, vector<1x256x128xf32>
    %121 = vector.shape_cast %120 : vector<1x256x128xf32> to vector<256x128xf32>
    %122 = vector.shape_cast %119 : vector<256x128xf32> to vector<1x256x128xf32>
    tpu.vector_store %arg16[%c0_46, %c0_47, %c0_48], %122 {strides = array<i32>} : memref<1x256x128xf32, #tpu.memory_space<vmem>>, vector<1x256x128xf32>,
    return
  }
  func.func @transform_0(%arg0: i32) -> (i32, i32, i32) {
    %c0_i32 = arith.constant 0 : i32
    %c0_i32_0 = arith.constant 0 : i32
    %c0_i32_1 = arith.constant 0 : i32
    return %arg0, %c0_i32, %c0_i32_0 : i32, i32, i32
  }
  func.func @transform_1(%arg0: i32) -> (i32, i32) {
    %c0_i32 = arith.constant 0 : i32
    %c0_i32_0 = arith.constant 0 : i32
    %c0_i32_1 = arith.constant 0 : i32
    return %c0_i32, %c0_i32_0 : i32, i32
  }
  func.func @transform_2(%arg0: i32) -> (i32, i32) {
    %c0_i32 = arith.constant 0 : i32
    %c0_i32_0 = arith.constant 0 : i32
    %c0_i32_1 = arith.constant 0 : i32
    return %c0_i32, %c0_i32_0 : i32, i32
  }
  func.func @transform_3(%arg0: i32) -> (i32, i32) {
    %c0_i32 = arith.constant 0 : i32
    %c0_i32_0 = arith.constant 0 : i32
    %c0_i32_1 = arith.constant 0 : i32
    return %c0_i32, %c0_i32_0 : i32, i32
  }
  func.func @transform_4(%arg0: i32) -> (i32, i32) {
    %c0_i32 = arith.constant 0 : i32
    %c0_i32_0 = arith.constant 0 : i32
    %c0_i32_1 = arith.constant 0 : i32
    return %c0_i32, %c0_i32_0 : i32, i32
  }
  func.func @transform_5(%arg0: i32) -> (i32, i32) {
    %c0_i32 = arith.constant 0 : i32
    %c0_i32_0 = arith.constant 0 : i32
    %c0_i32_1 = arith.constant 0 : i32
    return %c0_i32, %c0_i32_0 : i32, i32
  }
  func.func @transform_6(%arg0: i32) -> (i32, i32) {
    %c0_i32 = arith.constant 0 : i32
    %c0_i32_0 = arith.constant 0 : i32
    %c0_i32_1 = arith.constant 0 : i32
    return %c0_i32, %c0_i32_0 : i32, i32
  }
  func.func @transform_7(%arg0: i32) -> (i32, i32) {
    %c0_i32 = arith.constant 0 : i32
    %c0_i32_0 = arith.constant 0 : i32
    %c0_i32_1 = arith.constant 0 : i32
    return %c0_i32, %c0_i32_0 : i32, i32
  }
  func.func @transform_8(%arg0: i32) -> (i32, i32) {
    %c0_i32 = arith.constant 0 : i32
    %c0_i32_0 = arith.constant 0 : i32
    %c0_i32_1 = arith.constant 0 : i32
    return %c0_i32, %c0_i32_0 : i32, i32
  }
  func.func @transform_9(%arg0: i32) -> (i32, i32) {
    %c0_i32 = arith.constant 0 : i32
    %c0_i32_0 = arith.constant 0 : i32
    %c0_i32_1 = arith.constant 0 : i32
    return %c0_i32, %c0_i32_0 : i32, i32
  }
  func.func @transform_10(%arg0: i32) -> (i32, i32) {
    %c0_i32 = arith.constant 0 : i32
    %c0_i32_0 = arith.constant 0 : i32
    %c0_i32_1 = arith.constant 0 : i32
    return %c0_i32, %c0_i32_0 : i32, i32
  }
  func.func @transform_11(%arg0: i32) -> (i32, i32) {
    %c0_i32 = arith.constant 0 : i32
    %c0_i32_0 = arith.constant 0 : i32
    %c0_i32_1 = arith.constant 0 : i32
    return %c0_i32, %c0_i32_0 : i32, i32
  }
  func.func @transform_12(%arg0: i32) -> (i32, i32) {
    %c0_i32 = arith.constant 0 : i32
    %c0_i32_0 = arith.constant 0 : i32
    %c0_i32_1 = arith.constant 0 : i32
    return %c0_i32, %c0_i32_0 : i32, i32
  }
  func.func @transform_13(%arg0: i32) -> (i32, i32) {
    %c0_i32 = arith.constant 0 : i32
    %c0_i32_0 = arith.constant 0 : i32
    %c0_i32_1 = arith.constant 0 : i32
    return %c0_i32, %c0_i32_0 : i32, i32
  }
  func.func @transform_14(%arg0: i32) -> (i32, i32) {
    %c0_i32 = arith.constant 0 : i32
    %c0_i32_0 = arith.constant 0 : i32
    %c0_i32_1 = arith.constant 0 : i32
    return %c0_i32, %c0_i32_0 : i32, i32
  }
  func.func @transform_15(%arg0: i32) -> (i32, i32, i32) {
    %c0_i32 = arith.constant 0 : i32
    %c0_i32_0 = arith.constant 0 : i32
    %c0_i32_1 = arith.constant 0 : i32
    return %arg0, %c0_i32, %c0_i32_0 : i32, i32, i32
  }
}

</mosaic_0001>

<llo_original>
// kernel: tpu_custom_call.1
$region0: #{tpu_custom_call.1}
  #allocation0 [shape = 'u32[]', space=smem, size = 0x4, offset = 0x4, fixed_abs, tag = 'smem constant byte address 0x4 - core index']
  #allocation1 [shape = 'u32[144,128]{1,0:T(1,128)}', space=vmem, size = 0x12000, scoped, tag = 'internal scratch']
  %s0 = inlined_call_operand.hbm [shape: f32[2,256,128], index: 0, kind: input, shape index: {}]
  %s1 = inlined_call_operand.vmem [shape: f32[128,256], index: 1, kind: input, shape index: {}]
  %s2 = inlined_call_operand.hbm [shape: f32[1,256], index: 2, kind: input, shape index: {}]
  %s3 = inlined_call_operand.hbm [shape: f32[256,256], index: 3, kind: input, shape index: {}]
  %s4 = inlined_call_operand.hbm [shape: f32[1,128], index: 4, kind: input, shape index: {}]
  %s5 = inlined_call_operand.hbm [shape: f32[128,128], index: 5, kind: input, shape index: {}]
  %s6 = inlined_call_operand.hbm [shape: f32[128,128], index: 6, kind: input, shape index: {}]
  %s7 = inlined_call_operand.hbm [shape: f32[128,384], index: 7, kind: input, shape index: {}]
  %s8 = inlined_call_operand.vmem [shape: f32[1,384], index: 8, kind: input, shape index: {}]
  %s9 = inlined_call_operand.hbm [shape: f32[128,128], index: 9, kind: input, shape index: {}]
  %s10 = inlined_call_operand.vmem [shape: f32[256,1], index: 10, kind: input, shape index: {}]
  %s11 = inlined_call_operand.vmem [shape: f32[4,128], index: 11, kind: input, shape index: {}]
  %s12 = inlined_call_operand.hbm [shape: f32[128,128], index: 12, kind: input, shape index: {}]
  %s13 = inlined_call_operand.hbm [shape: f32[128,128], index: 13, kind: input, shape index: {}]
  %s14 = inlined_call_operand.vmem [shape: f32[5,128], index: 14, kind: input, shape index: {}]
  %s15 = inlined_call_operand.hbm [shape: f32[2,256,128], index: 15, kind: output, shape index: {}]
  %s16 = sld [smem:[#allocation0]]
  $region133: #{tpu_custom_call.1} parent=0
    _
  %s18 = ssub.s32 1, %s16
  %s19 = scalar_select 0, %s18, %s16
  $region1: #{tpu_custom_call.1} parent=0
    #allocation2 [shape = 'u8[262144]{0}', space=vmem, size = 0x40000, scoped, tag = 'input window, operand 0']
    #allocation3 [shape = 's32[2]{0}', space=sflag, size = 0x8, scoped, tag = 'scoped memory for tpu_custom_call.1']
    #allocation4 [shape = 's32[2]{0}', space=sflag, size = 0x8, scoped, tag = 'scoped memory for tpu_custom_call.1']
    #allocation5 [shape = 'u8[1024]{0}', space=vmem, size = 0x400, scoped, tag = 'input window, operand 2, single buffered']
    #allocation6 [shape = 's32[1]{0}', space=sflag, size = 0x4, scoped, tag = 'scoped memory for tpu_custom_call.1']
    #allocation7 [shape = 'u8[262144]{0}', space=vmem, size = 0x40000, scoped, tag = 'input window, operand 3, single buffered']
    #allocation8 [shape = 'u8[512]{0}', space=vmem, size = 0x400, scoped, tag = 'input window, operand 4, single buffered']
    #allocation9 [shape = 's32[1]{0}', space=sflag, size = 0x4, scoped, tag = 'scoped memory for tpu_custom_call.1']
    #allocation10 [shape = 'u8[65536]{0}', space=vmem, size = 0x10000, scoped, tag = 'input window, operand 5, single buffered']
    #allocation11 [shape = 'u8[65536]{0}', space=vmem, size = 0x10000, scoped, tag = 'input window, operand 6, single buffered']
    #allocation12 [shape = 's32[1]{0}', space=sflag, size = 0x4, scoped, tag = 'scoped memory for tpu_custom_call.1']
    #allocation13 [shape = 'u8[196608]{0}', space=vmem, size = 0x30000, scoped, tag = 'input window, operand 7, single buffered']
    #allocation14 [shape = 'u8[65536]{0}', space=vmem, size = 0x10000, scoped, tag = 'input window, operand 9, single buffered']
    #allocation15 [shape = 's32[1]{0}', space=sflag, size = 0x4, scoped, tag = 'scoped memory for tpu_custom_call.1']
    #allocation16 [shape = 'u8[65536]{0}', space=vmem, size = 0x10000, scoped, tag = 'input window, operand 12, single buffered']
    #allocation17 [shape = 'u8[65536]{0}', space=vmem, size = 0x10000, scoped, tag = 'input window, operand 13, single buffered']
    #allocation18 [shape = 's32[1]{0}', space=sflag, size = 0x4, scoped, tag = 'scoped memory for tpu_custom_call.1']
    #allocation19 [shape = 'u8[262144]{0}', space=vmem, size = 0x40000, scoped, tag = 'output window, operand 0']
    %20 = vsyncpa [#allocation3], 0
    %s21 = scalar_lea.sflag [#allocation3], 1
    %22 = vsyncpa %s21, 0
    %23 = vsyncpa [#allocation6], 0
    %24 = vsyncpa [#allocation9], 0
    %25 = vsyncpa [#allocation12], 0
    %26 = vsyncpa [#allocation15], 0
    %27 = vsyncpa [#allocation18], 0
    %28 = vsyncpa [#allocation4], 0
    %s29 = scalar_lea.sflag [#allocation4], 1
    %30 = vsyncpa %s29, 0
    loop: start=0, step=1, limit=4
    $region2: #{tpu_custom_call.1} parent=1 // loop_pre_header
      _
    $region3: #{tpu_custom_call.1} parent=1 // loop_header
      %s32 = sphi 0, %s36
      %p33 = scmp.ge.s32.totalorder %s32, 4
      %s42 = sphi 0, %s44
      %s45 = sphi 0, %s42
      %s46 = sphi 0, %s45
      %s62 = sphi 0, %s46
      %s66 = sphi 0, %s66
      %s68 = sphi 0, %s66
      %s69 = sphi 0, %s68
      %s83 = sphi 0, %s69
      %s87 = sphi 0, %s87
      %s89 = sphi 0, %s87
      %s90 = sphi 0, %s89
      %s104 = sphi 0, %s90
      %s108 = sphi 0, %s108
      %s110 = sphi 0, %s108
      %s111 = sphi 0, %s110
      %s125 = sphi 0, %s111
      %s129 = sphi 0, %s129
      %s131 = sphi 0, %s129
      %s132 = sphi 0, %s131
      %s146 = sphi 0, %s132
      %s150 = sphi 0, %s150
      %s152 = sphi 0, %s150
      %s153 = sphi 0, %s152
      %s167 = sphi 0, %s153
      %s171 = sphi 0, %s171
      %s173 = sphi 0, %s171
      %s174 = sphi 0, %s173
      %s188 = sphi 0, %s174
      %s192 = sphi 0, %s192
      %s194 = sphi 0, %s192
      %s195 = sphi 0, %s194
      %s209 = sphi 0, %s195
      %s213 = sphi 0, %s213
      %s215 = sphi 0, %s213
      %s216 = sphi 0, %s215
      %s230 = sphi 0, %s216
      %s234 = sphi 0, %s234
      %s236 = sphi 0, %s234
      %s237 = sphi 0, %s236
      %s251 = sphi 0, %s237
      %s255 = sphi 0, %s255
      %s257 = sphi 0, %s255
      %s258 = sphi 0, %s257
      %s272 = sphi 0, %s258
      %s276 = sphi 0, %s276
      %s278 = sphi 0, %s276
      %s279 = sphi 0, %s278
      %s293 = sphi 0, %s279
      %s297 = sphi 0, %s297
      %s299 = sphi 0, %s297
      %s300 = sphi 0, %s299
      %s314 = sphi 0, %s300
      %s318 = sphi 0, %s318
      %s320 = sphi 0, %s318
      %s321 = sphi 0, %s320
      %s335 = sphi 0, %s321
      %s339 = sphi 0, %s339
      %s341 = sphi 0, %s339
      %s342 = sphi 0, %s341
      %s356 = sphi 0, %s342
      %s362 = sphi 0, %s364
      %s365 = sphi 0, %s362
      %s366 = sphi 0, %s365
      %s382 = sphi 0, %s366
    $region4: #{tpu_custom_call.1} parent=1 // loop_header_branch
      %35 = sbr.rel (%p33) target = $region8
    $region5: #{tpu_custom_call.1} parent=1 // loop_body
      %s37 = ssub.s32 %s32, 1
      %s38 = ssub.s32 %s32, 2
      %s39 = sadd.s32 %s32, 1
      %s40 = ssub.s32 %s32, %s39
      %p41 = scmp.eq.s32.totalorder %s40, 0
      %s43 = sadd.s32 %s42, 1
      %s44 = scalar_select %p41, %s42, %s43
      %p47 = pneg %p41
      %p48 = scmp.eq.s32.totalorder %s32, 1
      %p49 = por %p47, %p48
      %p50 = scmp.ne.s32.totalorder %s42, %s45
      %p51 = scmp.eq.s32.totalorder %s32, 0
      %p52 = por %p50, %p51
      %p53 = scmp.ne.s32.totalorder %s42, %s45
      %p54 = scmp.eq.s32.totalorder %s37, 1
      %p55 = por %p53, %p54
      %p56 = scmp.ne.s32.totalorder %s45, %s46
      %p57 = scmp.eq.s32.totalorder %s37, 0
      %p58 = por %p56, %p57
      %p59 = scmp.ne.s32.totalorder %s45, %s46
      %p60 = scmp.eq.s32.totalorder %s38, 1
      %p61 = por %p59, %p60
      %p63 = scmp.ne.s32.totalorder %s46, %s62
      %p64 = scmp.eq.s32.totalorder %s38, 0
      %p65 = por %p63, %p64
      %s67 = sadd.s32 %s66, 1
      %p70 = scmp.eq.s32.totalorder %s32, 1
      %p71 = scmp.ne.s32.totalorder %s66, %s68
      %p72 = scmp.eq.s32.totalorder %s32, 0
      %p73 = por %p71, %p72
      %p74 = scmp.ne.s32.totalorder %s66, %s68
      %p75 = scmp.eq.s32.totalorder %s37, 1
      %p76 = por %p74, %p75
      %p77 = scmp.ne.s32.totalorder %s68, %s69
      %p78 = scmp.eq.s32.totalorder %s37, 0
      %p79 = por %p77, %p78
      %p80 = scmp.ne.s32.totalorder %s68, %s69
      %p81 = scmp.eq.s32.totalorder %s38, 1
      %p82 = por %p80, %p81
      %p84 = scmp.ne.s32.totalorder %s69, %s83
      %p85 = scmp.eq.s32.totalorder %s38, 0
      %p86 = por %p84, %p85
      %s88 = sadd.s32 %s87, 1
      %p91 = scmp.eq.s32.totalorder %s32, 1
      %p92 = scmp.ne.s32.totalorder %s87, %s89
      %p93 = scmp.eq.s32.totalorder %s32, 0
      %p94 = por %p92, %p93
      %p95 = scmp.ne.s32.totalorder %s87, %s89
      %p96 = scmp.eq.s32.totalorder %s37, 1
      %p97 = por %p95, %p96
      %p98 = scmp.ne.s32.totalorder %s89, %s90
      %p99 = scmp.eq.s32.totalorder %s37, 0
      %p100 = por %p98, %p99
      %p101 = scmp.ne.s32.totalorder %s89, %s90
      %p102 = scmp.eq.s32.totalorder %s38, 1
      %p103 = por %p101, %p102
      %p105 = scmp.ne.s32.totalorder %s90, %s104
      %p106 = scmp.eq.s32.totalorder %s38, 0
      %p107 = por %p105, %p106
      %s109 = sadd.s32 %s108, 1
      %p112 = scmp.eq.s32.totalorder %s32, 1
      %p113 = scmp.ne.s32.totalorder %s108, %s110
      %p114 = scmp.eq.s32.totalorder %s32, 0
      %p115 = por %p113, %p114
      %p116 = scmp.ne.s32.totalorder %s108, %s110
      %p117 = scmp.eq.s32.totalorder %s37, 1
      %p118 = por %p116, %p117
      %p119 = scmp.ne.s32.totalorder %s110, %s111
      %p120 = scmp.eq.s32.totalorder %s37, 0
      %p121 = por %p119, %p120
      %p122 = scmp.ne.s32.totalorder %s110, %s111
      %p123 = scmp.eq.s32.totalorder %s38, 1
      %p124 = por %p122, %p123
      %p126 = scmp.ne.s32.totalorder %s111, %s125
      %p127 = scmp.eq.s32.totalorder %s38, 0
      %p128 = por %p126, %p127
      %s130 = sadd.s32 %s129, 1
      %p133 = scmp.eq.s32.totalorder %s32, 1
      %p134 = scmp.ne.s32.totalorder %s129, %s131
      %p135 = scmp.eq.s32.totalorder %s32, 0
      %p136 = por %p134, %p135
      %p137 = scmp.ne.s32.totalorder %s129, %s131
      %p138 = scmp.eq.s32.totalorder %s37, 1
      %p139 = por %p137, %p138
      %p140 = scmp.ne.s32.totalorder %s131, %s132
      %p141 = scmp.eq.s32.totalorder %s37, 0
      %p142 = por %p140, %p141
      %p143 = scmp.ne.s32.totalorder %s131, %s132
      %p144 = scmp.eq.s32.totalorder %s38, 1
      %p145 = por %p143, %p144
      %p147 = scmp.ne.s32.totalorder %s132, %s146
      %p148 = scmp.eq.s32.totalorder %s38, 0
      %p149 = por %p147, %p148
      %s151 = sadd.s32 %s150, 1
      %p154 = scmp.eq.s32.totalorder %s32, 1
      %p155 = scmp.ne.s32.totalorder %s150, %s152
      %p156 = scmp.eq.s32.totalorder %s32, 0
      %p157 = por %p155, %p156
      %p158 = scmp.ne.s32.totalorder %s150, %s152
      %p159 = scmp.eq.s32.totalorder %s37, 1
      %p160 = por %p158, %p159
      %p161 = scmp.ne.s32.totalorder %s152, %s153
      %p162 = scmp.eq.s32.totalorder %s37, 0
      %p163 = por %p161, %p162
      %p164 = scmp.ne.s32.totalorder %s152, %s153
      %p165 = scmp.eq.s32.totalorder %s38, 1
      %p166 = por %p164, %p165
      %p168 = scmp.ne.s32.totalorder %s153, %s167
      %p169 = scmp.eq.s32.totalorder %s38, 0
      %p170 = por %p168, %p169
      %s172 = sadd.s32 %s171, 1
      %p175 = scmp.eq.s32.totalorder %s32, 1
      %p176 = scmp.ne.s32.totalorder %s171, %s173
      %p177 = scmp.eq.s32.totalorder %s32, 0
      %p178 = por %p176, %p177
      %p179 = scmp.ne.s32.totalorder %s171, %s173
      %p180 = scmp.eq.s32.totalorder %s37, 1
      %p181 = por %p179, %p180
      %p182 = scmp.ne.s32.totalorder %s173, %s174
      %p183 = scmp.eq.s32.totalorder %s37, 0
      %p184 = por %p182, %p183
      %p185 = scmp.ne.s32.totalorder %s173, %s174
      %p186 = scmp.eq.s32.totalorder %s38, 1
      %p187 = por %p185, %p186
      %p189 = scmp.ne.s32.totalorder %s174, %s188
      %p190 = scmp.eq.s32.totalorder %s38, 0
      %p191 = por %p189, %p190
      %s193 = sadd.s32 %s192, 1
      %p196 = scmp.eq.s32.totalorder %s32, 1
      %p197 = scmp.ne.s32.totalorder %s192, %s194
      %p198 = scmp.eq.s32.totalorder %s32, 0
      %p199 = por %p197, %p198
      %p200 = scmp.ne.s32.totalorder %s192, %s194
      %p201 = scmp.eq.s32.totalorder %s37, 1
      %p202 = por %p200, %p201
      %p203 = scmp.ne.s32.totalorder %s194, %s195
      %p204 = scmp.eq.s32.totalorder %s37, 0
      %p205 = por %p203, %p204
      %p206 = scmp.ne.s32.totalorder %s194, %s195
      %p207 = scmp.eq.s32.totalorder %s38, 1
      %p208 = por %p206, %p207
      %p210 = scmp.ne.s32.totalorder %s195, %s209
      %p211 = scmp.eq.s32.totalorder %s38, 0
      %p212 = por %p210, %p211
      %s214 = sadd.s32 %s213, 1
      %p217 = scmp.eq.s32.totalorder %s32, 1
      %p218 = scmp.ne.s32.totalorder %s213, %s215
      %p219 = scmp.eq.s32.totalorder %s32, 0
      %p220 = por %p218, %p219
      %p221 = scmp.ne.s32.totalorder %s213, %s215
      %p222 = scmp.eq.s32.totalorder %s37, 1
      %p223 = por %p221, %p222
      %p224 = scmp.ne.s32.totalorder %s215, %s216
      %p225 = scmp.eq.s32.totalorder %s37, 0
      %p226 = por %p224, %p225
      %p227 = scmp.ne.s32.totalorder %s215, %s216
      %p228 = scmp.eq.s32.totalorder %s38, 1
      %p229 = por %p227, %p228
      %p231 = scmp.ne.s32.totalorder %s216, %s230
      %p232 = scmp.eq.s32.totalorder %s38, 0
      %p233 = por %p231, %p232
      %s235 = sadd.s32 %s234, 1
      %p238 = scmp.eq.s32.totalorder %s32, 1
      %p239 = scmp.ne.s32.totalorder %s234, %s236
      %p240 = scmp.eq.s32.totalorder %s32, 0
      %p241 = por %p239, %p240
      %p242 = scmp.ne.s32.totalorder %s234, %s236
      %p243 = scmp.eq.s32.totalorder %s37, 1
      %p244 = por %p242, %p243
      %p245 = scmp.ne.s32.totalorder %s236, %s237
      %p246 = scmp.eq.s32.totalorder %s37, 0
      %p247 = por %p245, %p246
      %p248 = scmp.ne.s32.totalorder %s236, %s237
      %p249 = scmp.eq.s32.totalorder %s38, 1
      %p250 = por %p248, %p249
      %p252 = scmp.ne.s32.totalorder %s237, %s251
      %p253 = scmp.eq.s32.totalorder %s38, 0
      %p254 = por %p252, %p253
      %s256 = sadd.s32 %s255, 1
      %p259 = scmp.eq.s32.totalorder %s32, 1
      %p260 = scmp.ne.s32.totalorder %s255, %s257
      %p261 = scmp.eq.s32.totalorder %s32, 0
      %p262 = por %p260, %p261
      %p263 = scmp.ne.s32.totalorder %s255, %s257
      %p264 = scmp.eq.s32.totalorder %s37, 1
      %p265 = por %p263, %p264
      %p266 = scmp.ne.s32.totalorder %s257, %s258
      %p267 = scmp.eq.s32.totalorder %s37, 0
      %p268 = por %p266, %p267
      %p269 = scmp.ne.s32.totalorder %s257, %s258
      %p270 = scmp.eq.s32.totalorder %s38, 1
      %p271 = por %p269, %p270
      %p273 = scmp.ne.s32.totalorder %s258, %s272
      %p274 = scmp.eq.s32.totalorder %s38, 0
      %p275 = por %p273, %p274
      %s277 = sadd.s32 %s276, 1
      %p280 = scmp.eq.s32.totalorder %s32, 1
      %p281 = scmp.ne.s32.totalorder %s276, %s278
      %p282 = scmp.eq.s32.totalorder %s32, 0
      %p283 = por %p281, %p282
      %p284 = scmp.ne.s32.totalorder %s276, %s278
      %p285 = scmp.eq.s32.totalorder %s37, 1
      %p286 = por %p284, %p285
      %p287 = scmp.ne.s32.totalorder %s278, %s279
      %p288 = scmp.eq.s32.totalorder %s37, 0
      %p289 = por %p287, %p288
      %p290 = scmp.ne.s32.totalorder %s278, %s279
      %p291 = scmp.eq.s32.totalorder %s38, 1
      %p292 = por %p290, %p291
      %p294 = scmp.ne.s32.totalorder %s279, %s293
      %p295 = scmp.eq.s32.totalorder %s38, 0
      %p296 = por %p294, %p295
      %s298 = sadd.s32 %s297, 1
      %p301 = scmp.eq.s32.totalorder %s32, 1
      %p302 = scmp.ne.s32.totalorder %s297, %s299
      %p303 = scmp.eq.s32.totalorder %s32, 0
      %p304 = por %p302, %p303
      %p305 = scmp.ne.s32.totalorder %s297, %s299
      %p306 = scmp.eq.s32.totalorder %s37, 1
      %p307 = por %p305, %p306
      %p308 = scmp.ne.s32.totalorder %s299, %s300
      %p309 = scmp.eq.s32.totalorder %s37, 0
      %p310 = por %p308, %p309
      %p311 = scmp.ne.s32.totalorder %s299, %s300
      %p312 = scmp.eq.s32.totalorder %s38, 1
      %p313 = por %p311, %p312
      %p315 = scmp.ne.s32.totalorder %s300, %s314
      %p316 = scmp.eq.s32.totalorder %s38, 0
      %p317 = por %p315, %p316
      %s319 = sadd.s32 %s318, 1
      %p322 = scmp.eq.s32.totalorder %s32, 1
      %p323 = scmp.ne.s32.totalorder %s318, %s320
      %p324 = scmp.eq.s32.totalorder %s32, 0
      %p325 = por %p323, %p324
      %p326 = scmp.ne.s32.totalorder %s318, %s320
      %p327 = scmp.eq.s32.totalorder %s37, 1
      %p328 = por %p326, %p327
      %p329 = scmp.ne.s32.totalorder %s320, %s321
      %p330 = scmp.eq.s32.totalorder %s37, 0
      %p331 = por %p329, %p330
      %p332 = scmp.ne.s32.totalorder %s320, %s321
      %p333 = scmp.eq.s32.totalorder %s38, 1
      %p334 = por %p332, %p333
      %p336 = scmp.ne.s32.totalorder %s321, %s335
      %p337 = scmp.eq.s32.totalorder %s38, 0
      %p338 = por %p336, %p337
      %s340 = sadd.s32 %s339, 1
      %p343 = scmp.eq.s32.totalorder %s32, 1
      %p344 = scmp.ne.s32.totalorder %s339, %s341
      %p345 = scmp.eq.s32.totalorder %s32, 0
      %p346 = por %p344, %p345
      %p347 = scmp.ne.s32.totalorder %s339, %s341
      %p348 = scmp.eq.s32.totalorder %s37, 1
      %p349 = por %p347, %p348
      %p350 = scmp.ne.s32.totalorder %s341, %s342
      %p351 = scmp.eq.s32.totalorder %s37, 0
      %p352 = por %p350, %p351
      %p353 = scmp.ne.s32.totalorder %s341, %s342
      %p354 = scmp.eq.s32.totalorder %s38, 1
      %p355 = por %p353, %p354
      %p357 = scmp.ne.s32.totalorder %s342, %s356
      %p358 = scmp.eq.s32.totalorder %s38, 0
      %p359 = por %p357, %p358
      %s360 = ssub.s32 %s32, %s39
      %p361 = scmp.eq.s32.totalorder %s360, 0
      %s363 = sadd.s32 %s362, 1
      %s364 = scalar_select %p361, %s362, %s363
      %p367 = pneg %p361
      %p368 = scmp.eq.s32.totalorder %s32, 1
      %p369 = por %p367, %p368
      %p370 = scmp.ne.s32.totalorder %s362, %s365
      %p371 = scmp.eq.s32.totalorder %s32, 0
      %p372 = por %p370, %p371
      %p373 = scmp.ne.s32.totalorder %s362, %s365
      %p374 = scmp.eq.s32.totalorder %s37, 1
      %p375 = por %p373, %p374
      %p376 = scmp.ne.s32.totalorder %s365, %s366
      %p377 = scmp.eq.s32.totalorder %s37, 0
      %p378 = por %p376, %p377
      %p379 = scmp.ne.s32.totalorder %s365, %s366
      %p380 = scmp.eq.s32.totalorder %s38, 1
      %p381 = por %p379, %p380
      %p383 = scmp.ne.s32.totalorder %s366, %s382
      %p384 = scmp.eq.s32.totalorder %s38, 0
      %p385 = por %p383, %p384
      %p386 = scmp.le.s32.totalorder 1, %s32
      %p387 = scmp.lt.s32.totalorder %s32, 3
      %p388 = pnand %p386, %p387
      %p389 = pneg %p388
      // Predicated region
      $region9: #{tpu_custom_call.1} parent=5 // pred_check
        _
      $region10: #{tpu_custom_call.1} parent=5 // pred_check_branch
        %391 = sbr.rel (%p388) target = $region12
      $region11: #{tpu_custom_call.1} parent=5 // pred_region
        %s392 = ssub.s32 %s32, 1
        // Predicated region
        $region13: #{tpu_custom_call.1} parent=11 // pred_check
          %p393 = pneg %p79
        $region14: #{tpu_custom_call.1} parent=11 // pred_check_branch
          %395 = sbr.rel (%p393) target = $region16
        $region15: #{tpu_custom_call.1} parent=11 // pred_region
          _
        $region16: #{tpu_custom_call.1} parent=11 // pred_fallthru
          _
        // Predicated region
        $region17: #{tpu_custom_call.1} parent=11 // pred_check
          %p396 = pneg %p100
        $region18: #{tpu_custom_call.1} parent=11 // pred_check_branch
          %398 = sbr.rel (%p396) target = $region20
        $region19: #{tpu_custom_call.1} parent=11 // pred_region
          %s400 = ssub.s32 32, 32
          %401 = vsyncadd [#allocation6], %s400
          %s403 = sshll.u32 [#allocation5], 4
          %s404 = int_to_ptr.vmem [resolvable:$true] %s403
          %406 = dma.hbm_to_vmem [thread:$0]  %s2, 32, %s404, [#allocation6]
        $region20: #{tpu_custom_call.1} parent=11 // pred_fallthru
          _
        // Predicated region
        $region21: #{tpu_custom_call.1} parent=11 // pred_check
          %p407 = pneg %p121
        $region22: #{tpu_custom_call.1} parent=11 // pred_check_branch
          %409 = sbr.rel (%p407) target = $region24
        $region23: #{tpu_custom_call.1} parent=11 // pred_region
          %s411 = ssub.s32 8192, 8192
          %412 = vsyncadd [#allocation6], %s411
          %s413 = sshll.u32 [#allocation7], 4
          %s414 = int_to_ptr.vmem [resolvable:$true] %s413
          %419 = dma.hbm_to_vmem [thread:$0]  %s3, 8192, %s414, [#allocation6], 256, 256, 16
        $region24: #{tpu_custom_call.1} parent=11 // pred_fallthru
          _
        // Predicated region
        $region25: #{tpu_custom_call.1} parent=11 // pred_check
          %p420 = pneg %p142
        $region26: #{tpu_custom_call.1} parent=11 // pred_check_branch
          %422 = sbr.rel (%p420) target = $region28
        $region27: #{tpu_custom_call.1} parent=11 // pred_region
          %s424 = ssub.s32 16, 16
          %425 = vsyncadd [#allocation9], %s424
          %s427 = sshll.u32 [#allocation8], 4
          %s428 = int_to_ptr.vmem [resolvable:$true] %s427
          %430 = dma.hbm_to_vmem [thread:$0]  %s4, 16, %s428, [#allocation9]
        $region28: #{tpu_custom_call.1} parent=11 // pred_fallthru
          _
        // Predicated region
        $region29: #{tpu_custom_call.1} parent=11 // pred_check
          %p431 = pneg %p163
        $region30: #{tpu_custom_call.1} parent=11 // pred_check_branch
          %433 = sbr.rel (%p431) target = $region32
        $region31: #{tpu_custom_call.1} parent=11 // pred_region
          %s435 = ssub.s32 2048, 2048
          %436 = vsyncadd [#allocation9], %s435
          %s437 = sshll.u32 [#allocation10], 4
          %s438 = int_to_ptr.vmem [resolvable:$true] %s437
          %443 = dma.hbm_to_vmem [thread:$0]  %s5, 2048, %s438, [#allocation9], 128, 128, 8
        $region32: #{tpu_custom_call.1} parent=11 // pred_fallthru
          _
        // Predicated region
        $region33: #{tpu_custom_call.1} parent=11 // pred_check
          %p444 = pneg %p184
        $region34: #{tpu_custom_call.1} parent=11 // pred_check_branch
          %446 = sbr.rel (%p444) target = $region36
        $region35: #{tpu_custom_call.1} parent=11 // pred_region
          %s448 = ssub.s32 2048, 2048
          %449 = vsyncadd [#allocation12], %s448
          %s450 = sshll.u32 [#allocation11], 4
          %s451 = int_to_ptr.vmem [resolvable:$true] %s450
          %456 = dma.hbm_to_vmem [thread:$0]  %s6, 2048, %s451, [#allocation12], 128, 128, 8
        $region36: #{tpu_custom_call.1} parent=11 // pred_fallthru
          _
        // Predicated region
        $region37: #{tpu_custom_call.1} parent=11 // pred_check
          %p457 = pneg %p205
        $region38: #{tpu_custom_call.1} parent=11 // pred_check_branch
          %459 = sbr.rel (%p457) target = $region40
        $region39: #{tpu_custom_call.1} parent=11 // pred_region
          %s461 = ssub.s32 6144, 6144
          %462 = vsyncadd [#allocation12], %s461
          %s463 = sshll.u32 [#allocation13], 4
          %s464 = int_to_ptr.vmem [resolvable:$true] %s463
          %469 = dma.hbm_to_vmem [thread:$0]  %s7, 6144, %s464, [#allocation12], 384, 384, 24
        $region40: #{tpu_custom_call.1} parent=11 // pred_fallthru
          _
        // Predicated region
        $region41: #{tpu_custom_call.1} parent=11 // pred_check
          %p470 = pneg %p226
        $region42: #{tpu_custom_call.1} parent=11 // pred_check_branch
          %472 = sbr.rel (%p470) target = $region44
        $region43: #{tpu_custom_call.1} parent=11 // pred_region
          _
        $region44: #{tpu_custom_call.1} parent=11 // pred_fallthru
          _
        // Predicated region
        $region45: #{tpu_custom_call.1} parent=11 // pred_check
          %p473 = pneg %p247
        $region46: #{tpu_custom_call.1} parent=11 // pred_check_branch
          %475 = sbr.rel (%p473) target = $region48
        $region47: #{tpu_custom_call.1} parent=11 // pred_region
          %s477 = ssub.s32 2048, 2048
          %478 = vsyncadd [#allocation15], %s477
          %s479 = sshll.u32 [#allocation14], 4
          %s480 = int_to_ptr.vmem [resolvable:$true] %s479
          %485 = dma.hbm_to_vmem [thread:$0]  %s9, 2048, %s480, [#allocation15], 128, 128, 8
        $region48: #{tpu_custom_call.1} parent=11 // pred_fallthru
          _
        // Predicated region
        $region49: #{tpu_custom_call.1} parent=11 // pred_check
          %p486 = pneg %p268
        $region50: #{tpu_custom_call.1} parent=11 // pred_check_branch
          %488 = sbr.rel (%p486) target = $region52
        $region51: #{tpu_custom_call.1} parent=11 // pred_region
          _
        $region52: #{tpu_custom_call.1} parent=11 // pred_fallthru
          _
        // Predicated region
        $region53: #{tpu_custom_call.1} parent=11 // pred_check
          %p489 = pneg %p289
        $region54: #{tpu_custom_call.1} parent=11 // pred_check_branch
          %491 = sbr.rel (%p489) target = $region56
        $region55: #{tpu_custom_call.1} parent=11 // pred_region
          _
        $region56: #{tpu_custom_call.1} parent=11 // pred_fallthru
          _
        // Predicated region
        $region57: #{tpu_custom_call.1} parent=11 // pred_check
          %p492 = pneg %p310
        $region58: #{tpu_custom_call.1} parent=11 // pred_check_branch
          %494 = sbr.rel (%p492) target = $region60
        $region59: #{tpu_custom_call.1} parent=11 // pred_region
          %s496 = ssub.s32 2048, 2048
          %497 = vsyncadd [#allocation15], %s496
          %s498 = sshll.u32 [#allocation16], 4
          %s499 = int_to_ptr.vmem [resolvable:$true] %s498
          %504 = dma.hbm_to_vmem [thread:$0]  %s12, 2048, %s499, [#allocation15], 128, 128, 8
        $region60: #{tpu_custom_call.1} parent=11 // pred_fallthru
          _
        // Predicated region
        $region61: #{tpu_custom_call.1} parent=11 // pred_check
          %p505 = pneg %p331
        $region62: #{tpu_custom_call.1} parent=11 // pred_check_branch
          %507 = sbr.rel (%p505) target = $region64
        $region63: #{tpu_custom_call.1} parent=11 // pred_region
          %s509 = ssub.s32 2048, 2048
          %510 = vsyncadd [#allocation18], %s509
          %s511 = sshll.u32 [#allocation17], 4
          %s512 = int_to_ptr.vmem [resolvable:$true] %s511
          %517 = dma.hbm_to_vmem [thread:$0]  %s13, 2048, %s512, [#allocation18], 128, 128, 8
        $region64: #{tpu_custom_call.1} parent=11 // pred_fallthru
          _
        // Predicated region
        $region65: #{tpu_custom_call.1} parent=11 // pred_check
          %p518 = pneg %p352
        $region66: #{tpu_custom_call.1} parent=11 // pred_check_branch
          %520 = sbr.rel (%p518) target = $region68
        $region67: #{tpu_custom_call.1} parent=11 // pred_region
          _
        $region68: #{tpu_custom_call.1} parent=11 // pred_fallthru
          _
      $region12: #{tpu_custom_call.1} parent=5 // pred_fallthru
        _
      %p521 = scmp.lt.s32.totalorder %s32, 2
      // Predicated region
      $region69: #{tpu_custom_call.1} parent=5 // pred_check
        %p522 = pneg %p521
      $region70: #{tpu_custom_call.1} parent=5 // pred_check_branch
        %524 = sbr.rel (%p522) target = $region72
      $region71: #{tpu_custom_call.1} parent=5 // pred_region
        // Predicated region
        $region73: #{tpu_custom_call.1} parent=71 // pred_check
          %p525 = pneg %p52
        $region74: #{tpu_custom_call.1} parent=71 // pred_check_branch
          %527 = sbr.rel (%p525) target = $region76
        $region75: #{tpu_custom_call.1} parent=71 // pred_region
          %s528 = sand.u32 %s42, 1
          %s529 = scalar_lea.sflag [#allocation3], %s528
          %s530 = sand.u32 %s42, 1
          %s531 = smul.addr %s530, 256
          %s532 = scalar_lea.vmem [#allocation2], %s531
          %s534 = ssub.s32 4096, 4096
          %535 = vsyncadd %s529, %s534
          %s536 = smul.addr %s32, 32
          %s537 = smul.addr %s536, 128
          %s538 = scalar_lea.hbm %s0, %s537
          %s539 = sshll.u32 %s532, 4
          %s540 = int_to_ptr.vmem [resolvable:$true] %s539
          %545 = dma.hbm_to_vmem [thread:$0]  %s538, 4096, %s540, %s529, 128, 128, 8
        $region76: #{tpu_custom_call.1} parent=71 // pred_fallthru
          _
      $region72: #{tpu_custom_call.1} parent=5 // pred_fallthru
        _
      %p546 = scmp.le.s32.totalorder 1, %s32
      %p547 = scmp.lt.s32.totalorder %s32, 3
      %p548 = pnand %p546, %p547
      %p549 = pneg %p548
      // Predicated region
      $region77: #{tpu_custom_call.1} parent=5 // pred_check
        _
      $region78: #{tpu_custom_call.1} parent=5 // pred_check_branch
        %551 = sbr.rel (%p548) target = $region80
      $region79: #{tpu_custom_call.1} parent=5 // pred_region
        %s552 = ssub.s32 %s32, 1
        %s553 = sand.u32 %s45, 1
        %s554 = scalar_lea.sflag [#allocation3], %s553
        %s555 = sand.u32 %s45, 1
        %s556 = smul.addr %s555, 256
        %s557 = scalar_lea.vmem [#allocation2], %s556
        // Predicated region
        $region81: #{tpu_custom_call.1} parent=79 // pred_check
          %p558 = pneg %p58
        $region82: #{tpu_custom_call.1} parent=79 // pred_check_branch
          %560 = sbr.rel (%p558) target = $region84
        $region83: #{tpu_custom_call.1} parent=79 // pred_region
          %561 = dma.done %s554, 4096
        $region84: #{tpu_custom_call.1} parent=79 // pred_fallthru
          _
        // Predicated region
        $region85: #{tpu_custom_call.1} parent=79 // pred_check
          %p562 = pneg %p100
        $region86: #{tpu_custom_call.1} parent=79 // pred_check_branch
          %564 = sbr.rel (%p562) target = $region88
        $region87: #{tpu_custom_call.1} parent=79 // pred_region
          %565 = dma.done [#allocation6], 32
        $region88: #{tpu_custom_call.1} parent=79 // pred_fallthru
          _
        // Predicated region
        $region89: #{tpu_custom_call.1} parent=79 // pred_check
          %p566 = pneg %p121
        $region90: #{tpu_custom_call.1} parent=79 // pred_check_branch
          %568 = sbr.rel (%p566) target = $region92
        $region91: #{tpu_custom_call.1} parent=79 // pred_region
          %569 = dma.done [#allocation6], 8192
        $region92: #{tpu_custom_call.1} parent=79 // pred_fallthru
          _
        // Predicated region
        $region93: #{tpu_custom_call.1} parent=79 // pred_check
          %p570 = pneg %p142
        $region94: #{tpu_custom_call.1} parent=79 // pred_check_branch
          %572 = sbr.rel (%p570) target = $region96
        $region95: #{tpu_custom_call.1} parent=79 // pred_region
          %573 = dma.done [#allocation9], 16
        $region96: #{tpu_custom_call.1} parent=79 // pred_fallthru
          _
        // Predicated region
        $region97: #{tpu_custom_call.1} parent=79 // pred_check
          %p574 = pneg %p163
        $region98: #{tpu_custom_call.1} parent=79 // pred_check_branch
          %576 = sbr.rel (%p574) target = $region100
        $region99: #{tpu_custom_call.1} parent=79 // pred_region
          %577 = dma.done [#allocation9], 2048
        $region100: #{tpu_custom_call.1} parent=79 // pred_fallthru
          _
        // Predicated region
        $region101: #{tpu_custom_call.1} parent=79 // pred_check
          %p578 = pneg %p184
        $region102: #{tpu_custom_call.1} parent=79 // pred_check_branch
          %580 = sbr.rel (%p578) target = $region104
        $region103: #{tpu_custom_call.1} parent=79 // pred_region
          %581 = dma.done [#allocation12], 2048
        $region104: #{tpu_custom_call.1} parent=79 // pred_fallthru
          _
        // Predicated region
        $region105: #{tpu_custom_call.1} parent=79 // pred_check
          %p582 = pneg %p205
        $region106: #{tpu_custom_call.1} parent=79 // pred_check_branch
          %584 = sbr.rel (%p582) target = $region108
        $region107: #{tpu_custom_call.1} parent=79 // pred_region
          %585 = dma.done [#allocation12], 6144
        $region108: #{tpu_custom_call.1} parent=79 // pred_fallthru
          _
        // Predicated region
        $region109: #{tpu_custom_call.1} parent=79 // pred_check
          %p586 = pneg %p247
        $region110: #{tpu_custom_call.1} parent=79 // pred_check_branch
          %588 = sbr.rel (%p586) target = $region112
        $region111: #{tpu_custom_call.1} parent=79 // pred_region
          %589 = dma.done [#allocation15], 2048
        $region112: #{tpu_custom_call.1} parent=79 // pred_fallthru
          _
        // Predicated region
        $region113: #{tpu_custom_call.1} parent=79 // pred_check
          %p590 = pneg %p310
        $region114: #{tpu_custom_call.1} parent=79 // pred_check_branch
          %592 = sbr.rel (%p590) target = $region116
        $region115: #{tpu_custom_call.1} parent=79 // pred_region
          %593 = dma.done [#allocation15], 2048
        $region116: #{tpu_custom_call.1} parent=79 // pred_fallthru
          _
        // Predicated region
        $region117: #{tpu_custom_call.1} parent=79 // pred_check
          %p594 = pneg %p331
        $region118: #{tpu_custom_call.1} parent=79 // pred_check_branch
          %596 = sbr.rel (%p594) target = $region120
        $region119: #{tpu_custom_call.1} parent=79 // pred_region
          %597 = dma.done [#allocation18], 2048
        $region120: #{tpu_custom_call.1} parent=79 // pred_fallthru
          _
        %s598 = sand.u32 %s45, 1
        %s599 = scalar_lea.sflag [#allocation3], %s598
        %s600 = sand.u32 %s45, 1
        %s601 = smul.addr %s600, 256
        %s602 = scalar_lea.vmem [#allocation2], %s601
        %p603 = pneg %p58
        %p604 = pneg %p55
        %p605 = pneg %p79
        %p606 = pneg %p76
        %p607 = pneg %p100
        %p608 = pneg %p97
        %p609 = pneg %p121
        %p610 = pneg %p118
        %p611 = pneg %p142
        %p612 = pneg %p139
        %p613 = pneg %p163
        %p614 = pneg %p160
        %p615 = pneg %p184
        %p616 = pneg %p181
        %p617 = pneg %p205
        %p618 = pneg %p202
        %p619 = pneg %p226
        %p620 = pneg %p223
        %p621 = pneg %p247
        %p622 = pneg %p244
        %p623 = pneg %p268
        %p624 = pneg %p265
        %p625 = pneg %p289
        %p626 = pneg %p286
        %p627 = pneg %p310
        %p628 = pneg %p307
        %p629 = pneg %p331
        %p630 = pneg %p328
        %p631 = pneg %p352
        %p632 = pneg %p349
        %p633 = pneg %p378
        %p634 = pneg %p375
        %s635 = sand.u32 %s365, 1
        %s636 = scalar_lea.sflag [#allocation4], %s635
        %s637 = sand.u32 %s365, 1
        %s638 = smul.addr %s637, 256
        %s639 = scalar_lea.vmem [#allocation19], %s638
        %v640 = vld [vmem:[%s557] sm:$0xff]
        %v641 = vld [vmem:[%s557 + $0x8] sm:$0xff]
        %v642 = vld [vmem:[%s557 + $0x10] sm:$0xff]
        %v643 = vld [vmem:[%s557 + $0x18] sm:$0xff]
        %v644 = vld [vmem:[%s557 + $0x20] sm:$0xff]
        %v645 = vld [vmem:[%s557 + $0x28] sm:$0xff]
        %v646 = vld [vmem:[%s557 + $0x30] sm:$0xff]
        %v647 = vld [vmem:[%s557 + $0x38] sm:$0xff]
        %v648 = vld [vmem:[%s557 + $0x40] sm:$0xff]
        %v649 = vld [vmem:[%s557 + $0x48] sm:$0xff]
        %v650 = vld [vmem:[%s557 + $0x50] sm:$0xff]
        %v651 = vld [vmem:[%s557 + $0x58] sm:$0xff]
        %v652 = vld [vmem:[%s557 + $0x60] sm:$0xff]
        %v653 = vld [vmem:[%s557 + $0x68] sm:$0xff]
        %v654 = vld [vmem:[%s557 + $0x70] sm:$0xff]
        %v655 = vld [vmem:[%s557 + $0x78] sm:$0xff]
        %v656 = vld [vmem:[%s557 + $0x80] sm:$0xff]
        %v657 = vld [vmem:[%s557 + $0x88] sm:$0xff]
        %v658 = vld [vmem:[%s557 + $0x90] sm:$0xff]
        %v659 = vld [vmem:[%s557 + $0x98] sm:$0xff]
        %v660 = vld [vmem:[%s557 + $0xa0] sm:$0xff]
        %v661 = vld [vmem:[%s557 + $0xa8] sm:$0xff]
        %v662 = vld [vmem:[%s557 + $0xb0] sm:$0xff]
        %v663 = vld [vmem:[%s557 + $0xb8] sm:$0xff]
        %v664 = vld [vmem:[%s557 + $0xc0] sm:$0xff]
        %v665 = vld [vmem:[%s557 + $0xc8] sm:$0xff]
        %v666 = vld [vmem:[%s557 + $0xd0] sm:$0xff]
        %v667 = vld [vmem:[%s557 + $0xd8] sm:$0xff]
        %v668 = vld [vmem:[%s557 + $0xe0] sm:$0xff]
        %v669 = vld [vmem:[%s557 + $0xe8] sm:$0xff]
        %v670 = vld [vmem:[%s557 + $0xf0] sm:$0xff]
        %v671 = vld [vmem:[%s557 + $0xf8] sm:$0xff]
        %v672 = vld [vmem:[%s14] sm:$0x1f]
        %v673 = vld [vmem:[%s1] sm:$0xff]
        %v674 = vld [vmem:[%s1 + $0x8] sm:$0xff]
        %v675 = vld [vmem:[%s1 + $0x10] sm:$0xff]
        %v676 = vld [vmem:[%s1 + $0x18] sm:$0xff]
        %v677 = vld [vmem:[%s1 + $0x20] sm:$0xff]
        %v678 = vld [vmem:[%s1 + $0x28] sm:$0xff]
        %v679 = vld [vmem:[%s1 + $0x30] sm:$0xff]
        %v680 = vld [vmem:[%s1 + $0x38] sm:$0xff]
        %v681 = vld [vmem:[%s1 + $0x40] sm:$0xff]
        %v682 = vld [vmem:[%s1 + $0x48] sm:$0xff]
        %v683 = vld [vmem:[%s1 + $0x50] sm:$0xff]
        %v684 = vld [vmem:[%s1 + $0x58] sm:$0xff]
        %v685 = vld [vmem:[%s1 + $0x60] sm:$0xff]
        %v686 = vld [vmem:[%s1 + $0x68] sm:$0xff]
        %v687 = vld [vmem:[%s1 + $0x70] sm:$0xff]
        %v688 = vld [vmem:[%s1 + $0x78] sm:$0xff]
        %v689 = vld [vmem:[%s1 + $0x80] sm:$0xff]
        %v690 = vld [vmem:[%s1 + $0x88] sm:$0xff]
        %v691 = vld [vmem:[%s1 + $0x90] sm:$0xff]
        %v692 = vld [vmem:[%s1 + $0x98] sm:$0xff]
        %v693 = vld [vmem:[%s1 + $0xa0] sm:$0xff]
        %v694 = vld [vmem:[%s1 + $0xa8] sm:$0xff]
        %v695 = vld [vmem:[%s1 + $0xb0] sm:$0xff]
        %v696 = vld [vmem:[%s1 + $0xb8] sm:$0xff]
        %v697 = vld [vmem:[%s1 + $0xc0] sm:$0xff]
        %v698 = vld [vmem:[%s1 + $0xc8] sm:$0xff]
        %v699 = vld [vmem:[%s1 + $0xd0] sm:$0xff]
        %v700 = vld [vmem:[%s1 + $0xd8] sm:$0xff]
        %v701 = vld [vmem:[%s1 + $0xe0] sm:$0xff]
        %v702 = vld [vmem:[%s1 + $0xe8] sm:$0xff]
        %v703 = vld [vmem:[%s1 + $0xf0] sm:$0xff]
        %v704 = vld [vmem:[%s1 + $0xf8] sm:$0xff]
        %v705 = vld [vmem:[#allocation5] sm:$0x3]
        %v707 = vlaneseq
        %v708 = vshrl.u32 %v707, 7
        %v709 = vsub.s32 0, %v708
        %v710 = vrot.slane %v705, %v709
        %v711 = vlaneseq
        %v712 = vshrl.u32 %v711, 7
        %v713 = vsub.s32 1, %v712
        %v714 = vrot.slane %v705, %v713
        %717 = vmatprep.subr.mxu0 %v674
        %718 = vmatpush1.msra.mxu0 %v673
        %719 = vmatprep.subr.mxu0 %v676
        %720 = vmatpush1.msra.mxu0 %v675
        %721 = vmatprep.subr.mxu0 %v678
        %722 = vmatpush1.msra.mxu0 %v677
        %723 = vmatprep.subr.mxu0 %v680
        %724 = vmatpush1.msra.mxu0 %v679
        %725 = vmatprep.subr.mxu0 %v682
        %726 = vmatpush1.msra.mxu0 %v681
        %727 = vmatprep.subr.mxu0 %v684
        %728 = vmatpush1.msra.mxu0 %v683
        %729 = vmatprep.subr.mxu0 %v686
        %730 = vmatpush1.msra.mxu0 %v685
        %731 = vmatprep.subr.mxu0 %v688
        %732 = vmatpush1.msra.mxu0 %v687
        %733 = vmatprep.subr.mxu0 %v690
        %734 = vmatpush1.msra.mxu0 %v689
        %735 = vmatprep.subr.mxu0 %v692
        %736 = vmatpush1.msra.mxu0 %v691
        %737 = vmatprep.subr.mxu0 %v694
        %738 = vmatpush1.msra.mxu0 %v693
        %739 = vmatprep.subr.mxu0 %v696
        %740 = vmatpush1.msra.mxu0 %v695
        %741 = vmatprep.subr.mxu0 %v698
        %742 = vmatpush1.msra.mxu0 %v697
        %743 = vmatprep.subr.mxu0 %v700
        %744 = vmatpush1.msra.mxu0 %v699
        %745 = vmatprep.subr.mxu0 %v702
        %746 = vmatpush1.msra.mxu0 %v701
        %747 = vmatprep.subr.mxu0 %v704
        %748 = vmatpush1.msra.mxu0 %v703
        %749 = vmatprep.subr.mxu0 0.0
        %750 = vmatpush1.msra.mxu0 0.0
        %751 = vmatprep.subr.mxu0 0.0
        %752 = vmatpush1.msra.mxu0 0.0
        %753 = vmatprep.subr.mxu0 0.0
        %754 = vmatpush1.msra.mxu0 0.0
        %755 = vmatprep.subr.mxu0 0.0
        %756 = vmatpush1.msra.mxu0 0.0
        %757 = vmatprep.subr.mxu0 0.0
        %758 = vmatpush1.msra.mxu0 0.0
        %759 = vmatprep.subr.mxu0 0.0
        %760 = vmatpush1.msra.mxu0 0.0
        %761 = vmatprep.subr.mxu0 0.0
        %762 = vmatpush1.msra.mxu0 0.0
        %763 = vmatprep.subr.mxu0 0.0
        %764 = vmatpush1.msra.mxu0 0.0
        %765 = vmatprep.subr.mxu0 0.0
        %766 = vmatpush1.msra.mxu0 0.0
        %767 = vmatprep.subr.mxu0 0.0
        %768 = vmatpush1.msra.mxu0 0.0
        %769 = vmatprep.subr.mxu0 0.0
        %770 = vmatpush1.msra.mxu0 0.0
        %771 = vmatprep.subr.mxu0 0.0
        %772 = vmatpush1.msra.mxu0 0.0
        %773 = vmatprep.subr.mxu0 0.0
        %774 = vmatpush1.msra.mxu0 0.0
        %775 = vmatprep.subr.mxu0 0.0
        %776 = vmatpush1.msra.mxu0 0.0
        %777 = vmatprep.subr.mxu0 0.0
        %778 = vmatpush1.msra.mxu0 0.0
        %779 = vmatprep.subr.mxu0 0.0
        %780 = vmatpush1.msra.mxu0 0.0
        %781 = vmatprep.mubr.f32.mxu0 0.0
        %782 = vmatmul.mubr.f32.gmra.mrb[0].mxu0 %v640
        %v783 = vpop.f32.mrb[0].mxu0
        %v784 = vadd.f32 %v710, %v783
        %v785 = vpop.f32.mrb[0].mxu0
        %v786 = vadd.f32 %v714, %v785
        %787 = vmatprep.mubr.f32.mxu0 0.0
        %788 = vmatmul.mubr.f32.gmra.mrb[0].mxu0 %v641
        %v789 = vpop.f32.mrb[0].mxu0
        %v790 = vadd.f32 %v710, %v789
        %v791 = vpop.f32.mrb[0].mxu0
        %v792 = vadd.f32 %v714, %v791
        %793 = vmatprep.mubr.f32.mxu0 0.0
        %794 = vmatmul.mubr.f32.gmra.mrb[0].mxu0 %v642
        %v795 = vpop.f32.mrb[0].mxu0
        %v796 = vadd.f32 %v710, %v795
        %v797 = vpop.f32.mrb[0].mxu0
        %v798 = vadd.f32 %v714, %v797
        %799 = vmatprep.mubr.f32.mxu0 0.0
        %800 = vmatmul.mubr.f32.gmra.mrb[0].mxu0 %v643
        %v801 = vpop.f32.mrb[0].mxu0
        %v802 = vadd.f32 %v710, %v801
        %v803 = vpop.f32.mrb[0].mxu0
        %v804 = vadd.f32 %v714, %v803
        %805 = vmatprep.mubr.f32.mxu0 0.0
        %806 = vmatmul.mubr.f32.gmra.mrb[0].mxu0 %v644
        %v807 = vpop.f32.mrb[0].mxu0
        %v808 = vadd.f32 %v710, %v807
        %v809 = vpop.f32.mrb[0].mxu0
        %v810 = vadd.f32 %v714, %v809
        %811 = vmatprep.mubr.f32.mxu0 0.0
        %812 = vmatmul.mubr.f32.gmra.mrb[0].mxu0 %v645
        %v813 = vpop.f32.mrb[0].mxu0
        %v814 = vadd.f32 %v710, %v813
        %v815 = vpop.f32.mrb[0].mxu0
        %v816 = vadd.f32 %v714, %v815
        %817 = vmatprep.mubr.f32.mxu0 0.0
        %818 = vmatmul.mubr.f32.gmra.mrb[0].mxu0 %v646
        %v819 = vpop.f32.mrb[0].mxu0
        %v820 = vadd.f32 %v710, %v819
        %v821 = vpop.f32.mrb[0].mxu0
        %v822 = vadd.f32 %v714, %v821
        %823 = vmatprep.mubr.f32.mxu0 0.0
        %824 = vmatmul.mubr.f32.gmra.mrb[0].mxu0 %v647
        %v825 = vpop.f32.mrb[0].mxu0
        %v826 = vadd.f32 %v710, %v825
        %v827 = vpop.f32.mrb[0].mxu0
        %v828 = vadd.f32 %v714, %v827
        %829 = vmatprep.mubr.f32.mxu0 0.0
        %830 = vmatmul.mubr.f32.gmra.mrb[0].mxu0 %v648
        %v831 = vpop.f32.mrb[0].mxu0
        %v832 = vadd.f32 %v710, %v831
        %v833 = vpop.f32.mrb[0].mxu0
        %v834 = vadd.f32 %v714, %v833
        %835 = vmatprep.mubr.f32.mxu0 0.0
        %836 = vmatmul.mubr.f32.gmra.mrb[0].mxu0 %v649
        %v837 = vpop.f32.mrb[0].mxu0
        %v838 = vadd.f32 %v710, %v837
        %v839 = vpop.f32.mrb[0].mxu0
        %v840 = vadd.f32 %v714, %v839
        %841 = vmatprep.mubr.f32.mxu0 0.0
        %842 = vmatmul.mubr.f32.gmra.mrb[0].mxu0 %v650
        %v843 = vpop.f32.mrb[0].mxu0
        %v844 = vadd.f32 %v710, %v843
        %v845 = vpop.f32.mrb[0].mxu0
        %v846 = vadd.f32 %v714, %v845
        %847 = vmatprep.mubr.f32.mxu0 0.0
        %848 = vmatmul.mubr.f32.gmra.mrb[0].mxu0 %v651
        %v849 = vpop.f32.mrb[0].mxu0
        %v850 = vadd.f32 %v710, %v849
        %v851 = vpop.f32.mrb[0].mxu0
        %v852 = vadd.f32 %v714, %v851
        %853 = vmatprep.mubr.f32.mxu0 0.0
        %854 = vmatmul.mubr.f32.gmra.mrb[0].mxu0 %v652
        %v855 = vpop.f32.mrb[0].mxu0
        %v856 = vadd.f32 %v710, %v855
        %v857 = vpop.f32.mrb[0].mxu0
        %v858 = vadd.f32 %v714, %v857
        %859 = vmatprep.mubr.f32.mxu0 0.0
        %860 = vmatmul.mubr.f32.gmra.mrb[0].mxu0 %v653
        %v861 = vpop.f32.mrb[0].mxu0
        %v862 = vadd.f32 %v710, %v861
        %v863 = vpop.f32.mrb[0].mxu0
        %v864 = vadd.f32 %v714, %v863
        %865 = vmatprep.mubr.f32.mxu0 0.0
        %866 = vmatmul.mubr.f32.gmra.mrb[0].mxu0 %v654
        %v867 = vpop.f32.mrb[0].mxu0
        %v868 = vadd.f32 %v710, %v867
        %v869 = vpop.f32.mrb[0].mxu0
        %v870 = vadd.f32 %v714, %v869
        %871 = vmatprep.mubr.f32.mxu0 0.0
        %872 = vmatmul.mubr.f32.gmra.mrb[0].mxu0 %v655
        %v873 = vpop.f32.mrb[0].mxu0
        %v874 = vadd.f32 %v710, %v873
        %v875 = vpop.f32.mrb[0].mxu0
        %v876 = vadd.f32 %v714, %v875
        %877 = vmatprep.mubr.f32.mxu0 0.0
        %878 = vmatmul.mubr.f32.gmra.mrb[0].mxu0 %v656
        %v879 = vpop.f32.mrb[0].mxu0
        %v880 = vadd.f32 %v710, %v879
        %v881 = vpop.f32.mrb[0].mxu0
        %v882 = vadd.f32 %v714, %v881
        %883 = vmatprep.mubr.f32.mxu0 0.0
        %884 = vmatmul.mubr.f32.gmra.mrb[0].mxu0 %v657
        %v885 = vpop.f32.mrb[0].mxu0
        %v886 = vadd.f32 %v710, %v885
        %v887 = vpop.f32.mrb[0].mxu0
        %v888 = vadd.f32 %v714, %v887
        %889 = vmatprep.mubr.f32.mxu0 0.0
        %890 = vmatmul.mubr.f32.gmra.mrb[0].mxu0 %v658
        %v891 = vpop.f32.mrb[0].mxu0
        %v892 = vadd.f32 %v710, %v891
        %v893 = vpop.f32.mrb[0].mxu0
        %v894 = vadd.f32 %v714, %v893
        %895 = vmatprep.mubr.f32.mxu0 0.0
        %896 = vmatmul.mubr.f32.gmra.mrb[0].mxu0 %v659
        %v897 = vpop.f32.mrb[0].mxu0
        %v898 = vadd.f32 %v710, %v897
        %v899 = vpop.f32.mrb[0].mxu0
        %v900 = vadd.f32 %v714, %v899
        %901 = vmatprep.mubr.f32.mxu0 0.0
        %902 = vmatmul.mubr.f32.gmra.mrb[0].mxu0 %v660
        %v903 = vpop.f32.mrb[0].mxu0
        %v904 = vadd.f32 %v710, %v903
        %v905 = vpop.f32.mrb[0].mxu0
        %v906 = vadd.f32 %v714, %v905
        %907 = vmatprep.mubr.f32.mxu0 0.0
        %908 = vmatmul.mubr.f32.gmra.mrb[0].mxu0 %v661
        %v909 = vpop.f32.mrb[0].mxu0
        %v910 = vadd.f32 %v710, %v909
        %v911 = vpop.f32.mrb[0].mxu0
        %v912 = vadd.f32 %v714, %v911
        %913 = vmatprep.mubr.f32.mxu0 0.0
        %914 = vmatmul.mubr.f32.gmra.mrb[0].mxu0 %v662
        %v915 = vpop.f32.mrb[0].mxu0
        %v916 = vadd.f32 %v710, %v915
        %v917 = vpop.f32.mrb[0].mxu0
        %v918 = vadd.f32 %v714, %v917
        %919 = vmatprep.mubr.f32.mxu0 0.0
        %920 = vmatmul.mubr.f32.gmra.mrb[0].mxu0 %v663
        %v921 = vpop.f32.mrb[0].mxu0
        %v922 = vadd.f32 %v710, %v921
        %v923 = vpop.f32.mrb[0].mxu0
        %v924 = vadd.f32 %v714, %v923
        %925 = vmatprep.mubr.f32.mxu0 0.0
        %926 = vmatmul.mubr.f32.gmra.mrb[0].mxu0 %v664
        %v927 = vpop.f32.mrb[0].mxu0
        %v928 = vadd.f32 %v710, %v927
        %v929 = vpop.f32.mrb[0].mxu0
        %v930 = vadd.f32 %v714, %v929
        %931 = vmatprep.mubr.f32.mxu0 0.0
        %932 = vmatmul.mubr.f32.gmra.mrb[0].mxu0 %v665
        %v933 = vpop.f32.mrb[0].mxu0
        %v934 = vadd.f32 %v710, %v933
        %v935 = vpop.f32.mrb[0].mxu0
        %v936 = vadd.f32 %v714, %v935
        %937 = vmatprep.mubr.f32.mxu0 0.0
        %938 = vmatmul.mubr.f32.gmra.mrb[0].mxu0 %v666
        %v939 = vpop.f32.mrb[0].mxu0
        %v940 = vadd.f32 %v710, %v939
        %v941 = vpop.f32.mrb[0].mxu0
        %v942 = vadd.f32 %v714, %v941
        %943 = vmatprep.mubr.f32.mxu0 0.0
        %944 = vmatmul.mubr.f32.gmra.mrb[0].mxu0 %v667
        %v945 = vpop.f32.mrb[0].mxu0
        %v946 = vadd.f32 %v710, %v945
        %v947 = vpop.f32.mrb[0].mxu0
        %v948 = vadd.f32 %v714, %v947
        %949 = vmatprep.mubr.f32.mxu0 0.0
        %950 = vmatmul.mubr.f32.gmra.mrb[0].mxu0 %v668
        %v951 = vpop.f32.mrb[0].mxu0
        %v952 = vadd.f32 %v710, %v951
        %v953 = vpop.f32.mrb[0].mxu0
        %v954 = vadd.f32 %v714, %v953
        %955 = vmatprep.mubr.f32.mxu0 0.0
        %956 = vmatmul.mubr.f32.gmra.mrb[0].mxu0 %v669
        %v957 = vpop.f32.mrb[0].mxu0
        %v958 = vadd.f32 %v710, %v957
        %v959 = vpop.f32.mrb[0].mxu0
        %v960 = vadd.f32 %v714, %v959
        %961 = vmatprep.mubr.f32.mxu0 0.0
        %962 = vmatmul.mubr.f32.gmra.mrb[0].mxu0 %v670
        %v963 = vpop.f32.mrb[0].mxu0
        %v964 = vadd.f32 %v710, %v963
        %v965 = vpop.f32.mrb[0].mxu0
        %v966 = vadd.f32 %v714, %v965
        %967 = vmatprep.mubr.f32.mxu0 0.0
        %968 = vmatmul.mubr.f32.gmra.mrb[0].mxu0 %v671
        %v969 = vpop.f32.mrb[0].mxu0
        %v970 = vadd.f32 %v710, %v969
        %v971 = vpop.f32.mrb[0].mxu0
        %v972 = vadd.f32 %v714, %v971
        %973 = vdwg.mxu0
        %v974 = vmax.f32 %v784, %v786
        %975 = vmax.xlane.f32.xlu0 %v974
        %v976 = vpop.xlane.xlu0 %975
        %v977 = vmax.f32 %v790, %v792
        %978 = vmax.xlane.f32.xlu0 %v977
        %v979 = vpop.xlane.xlu0 %978
        %v980 = vmax.f32 %v796, %v798
        %981 = vmax.xlane.f32.xlu0 %v980
        %v982 = vpop.xlane.xlu0 %981
        %v983 = vmax.f32 %v802, %v804
        %984 = vmax.xlane.f32.xlu0 %v983
        %v985 = vpop.xlane.xlu0 %984
        %v986 = vmax.f32 %v808, %v810
        %987 = vmax.xlane.f32.xlu0 %v986
        %v988 = vpop.xlane.xlu0 %987
        %v989 = vmax.f32 %v814, %v816
        %990 = vmax.xlane.f32.xlu0 %v989
        %v991 = vpop.xlane.xlu0 %990
        %v992 = vmax.f32 %v820, %v822
        %993 = vmax.xlane.f32.xlu0 %v992
        %v994 = vpop.xlane.xlu0 %993
        %v995 = vmax.f32 %v826, %v828
        %996 = vmax.xlane.f32.xlu0 %v995
        %v997 = vpop.xlane.xlu0 %996
        %v998 = vmax.f32 %v832, %v834
        %999 = vmax.xlane.f32.xlu0 %v998
        %v1000 = vpop.xlane.xlu0 %999
        %v1001 = vmax.f32 %v838, %v840
        %1002 = vmax.xlane.f32.xlu0 %v1001
        %v1003 = vpop.xlane.xlu0 %1002
        %v1004 = vmax.f32 %v844, %v846
        %1005 = vmax.xlane.f32.xlu0 %v1004
        %v1006 = vpop.xlane.xlu0 %1005
        %v1007 = vmax.f32 %v850, %v852
        %1008 = vmax.xlane.f32.xlu0 %v1007
        %v1009 = vpop.xlane.xlu0 %1008
        %v1010 = vmax.f32 %v856, %v858
        %1011 = vmax.xlane.f32.xlu0 %v1010
        %v1012 = vpop.xlane.xlu0 %1011
        %v1013 = vmax.f32 %v862, %v864
        %1014 = vmax.xlane.f32.xlu0 %v1013
        %v1015 = vpop.xlane.xlu0 %1014
        %v1016 = vmax.f32 %v868, %v870
        %1017 = vmax.xlane.f32.xlu0 %v1016
        %v1018 = vpop.xlane.xlu0 %1017
        %v1019 = vmax.f32 %v874, %v876
        %1020 = vmax.xlane.f32.xlu0 %v1019
        %v1021 = vpop.xlane.xlu0 %1020
        %v1022 = vmax.f32 %v880, %v882
        %1023 = vmax.xlane.f32.xlu0 %v1022
        %v1024 = vpop.xlane.xlu0 %1023
        %v1025 = vmax.f32 %v886, %v888
        %1026 = vmax.xlane.f32.xlu0 %v1025
        %v1027 = vpop.xlane.xlu0 %1026
        %v1028 = vmax.f32 %v892, %v894
        %1029 = vmax.xlane.f32.xlu0 %v1028
        %v1030 = vpop.xlane.xlu0 %1029
        %v1031 = vmax.f32 %v898, %v900
        %1032 = vmax.xlane.f32.xlu0 %v1031
        %v1033 = vpop.xlane.xlu0 %1032
        %v1034 = vmax.f32 %v904, %v906
        %1035 = vmax.xlane.f32.xlu0 %v1034
        %v1036 = vpop.xlane.xlu0 %1035
        %v1037 = vmax.f32 %v910, %v912
        %1038 = vmax.xlane.f32.xlu0 %v1037
        %v1039 = vpop.xlane.xlu0 %1038
        %v1040 = vmax.f32 %v916, %v918
        %1041 = vmax.xlane.f32.xlu0 %v1040
        %v1042 = vpop.xlane.xlu0 %1041
        %v1043 = vmax.f32 %v922, %v924
        %1044 = vmax.xlane.f32.xlu0 %v1043
        %v1045 = vpop.xlane.xlu0 %1044
        %v1046 = vmax.f32 %v928, %v930
        %1047 = vmax.xlane.f32.xlu0 %v1046
        %v1048 = vpop.xlane.xlu0 %1047
        %v1049 = vmax.f32 %v934, %v936
        %1050 = vmax.xlane.f32.xlu0 %v1049
        %v1051 = vpop.xlane.xlu0 %1050
        %v1052 = vmax.f32 %v940, %v942
        %1053 = vmax.xlane.f32.xlu0 %v1052
        %v1054 = vpop.xlane.xlu0 %1053
        %v1055 = vmax.f32 %v946, %v948
        %1056 = vmax.xlane.f32.xlu0 %v1055
        %v1057 = vpop.xlane.xlu0 %1056
        %v1058 = vmax.f32 %v952, %v954
        %1059 = vmax.xlane.f32.xlu0 %v1058
        %v1060 = vpop.xlane.xlu0 %1059
        %v1061 = vmax.f32 %v958, %v960
        %1062 = vmax.xlane.f32.xlu0 %v1061
        %v1063 = vpop.xlane.xlu0 %1062
        %v1064 = vmax.f32 %v964, %v966
        %1065 = vmax.xlane.f32.xlu0 %v1064
        %v1066 = vpop.xlane.xlu0 %1065
        %v1067 = vmax.f32 %v970, %v972
        %1068 = vmax.xlane.f32.xlu0 %v1067
        %v1069 = vpop.xlane.xlu0 %1068
        %v1070 = vsub.f32 %v784, %v976
        %v1071 = vsub.f32 %v786, %v976
        %v1072 = vsub.f32 %v790, %v979
        %v1073 = vsub.f32 %v792, %v979
        %v1074 = vsub.f32 %v796, %v982
        %v1075 = vsub.f32 %v798, %v982
        %v1076 = vsub.f32 %v802, %v985
        %v1077 = vsub.f32 %v804, %v985
        %v1078 = vsub.f32 %v808, %v988
        %v1079 = vsub.f32 %v810, %v988
        %v1080 = vsub.f32 %v814, %v991
        %v1081 = vsub.f32 %v816, %v991
        %v1082 = vsub.f32 %v820, %v994
        %v1083 = vsub.f32 %v822, %v994
        %v1084 = vsub.f32 %v826, %v997
        %v1085 = vsub.f32 %v828, %v997
        %v1086 = vsub.f32 %v832, %v1000
        %v1087 = vsub.f32 %v834, %v1000
        %v1088 = vsub.f32 %v838, %v1003
        %v1089 = vsub.f32 %v840, %v1003
        %v1090 = vsub.f32 %v844, %v1006
        %v1091 = vsub.f32 %v846, %v1006
        %v1092 = vsub.f32 %v850, %v1009
        %v1093 = vsub.f32 %v852, %v1009
        %v1094 = vsub.f32 %v856, %v1012
        %v1095 = vsub.f32 %v858, %v1012
        %v1096 = vsub.f32 %v862, %v1015
        %v1097 = vsub.f32 %v864, %v1015
        %v1098 = vsub.f32 %v868, %v1018
        %v1099 = vsub.f32 %v870, %v1018
        %v1100 = vsub.f32 %v874, %v1021
        %v1101 = vsub.f32 %v876, %v1021
        %v1102 = vsub.f32 %v880, %v1024
        %v1103 = vsub.f32 %v882, %v1024
        %v1104 = vsub.f32 %v886, %v1027
        %v1105 = vsub.f32 %v888, %v1027
        %v1106 = vsub.f32 %v892, %v1030
        %v1107 = vsub.f32 %v894, %v1030
        %v1108 = vsub.f32 %v898, %v1033
        %v1109 = vsub.f32 %v900, %v1033
        %v1110 = vsub.f32 %v904, %v1036
        %v1111 = vsub.f32 %v906, %v1036
        %v1112 = vsub.f32 %v910, %v1039
        %v1113 = vsub.f32 %v912, %v1039
        %v1114 = vsub.f32 %v916, %v1042
        %v1115 = vsub.f32 %v918, %v1042
        %v1116 = vsub.f32 %v922, %v1045
        %v1117 = vsub.f32 %v924, %v1045
        %v1118 = vsub.f32 %v928, %v1048
        %v1119 = vsub.f32 %v930, %v1048
        %v1120 = vsub.f32 %v934, %v1051
        %v1121 = vsub.f32 %v936, %v1051
        %v1122 = vsub.f32 %v940, %v1054
        %v1123 = vsub.f32 %v942, %v1054
        %v1124 = vsub.f32 %v946, %v1057
        %v1125 = vsub.f32 %v948, %v1057
        %v1126 = vsub.f32 %v952, %v1060
        %v1127 = vsub.f32 %v954, %v1060
        %v1128 = vsub.f32 %v958, %v1063
        %v1129 = vsub.f32 %v960, %v1063
        %v1130 = vsub.f32 %v964, %v1066
        %v1131 = vsub.f32 %v966, %v1066
        %v1132 = vsub.f32 %v970, %v1069
        %v1133 = vsub.f32 %v972, %v1069
        %v1134 = vmul.f32 %v1070, 1.442695
        %v1135 = vpow.pop %v1134
        %v1136 = vmul.f32 %v1071, 1.442695
        %v1137 = vpow.pop %v1136
        %v1138 = vmul.f32 %v1072, 1.442695
        %v1139 = vpow.pop %v1138
        %v1140 = vmul.f32 %v1073, 1.442695
        %v1141 = vpow.pop %v1140
        %v1142 = vmul.f32 %v1074, 1.442695
        %v1143 = vpow.pop %v1142
        %v1144 = vmul.f32 %v1075, 1.442695
        %v1145 = vpow.pop %v1144
        %v1146 = vmul.f32 %v1076, 1.442695
        %v1147 = vpow.pop %v1146
        %v1148 = vmul.f32 %v1077, 1.442695
        %v1149 = vpow.pop %v1148
        %v1150 = vmul.f32 %v1078, 1.442695
        %v1151 = vpow.pop %v1150
        %v1152 = vmul.f32 %v1079, 1.442695
        %v1153 = vpow.pop %v1152
        %v1154 = vmul.f32 %v1080, 1.442695
        %v1155 = vpow.pop %v1154
        %v1156 = vmul.f32 %v1081, 1.442695
        %v1157 = vpow.pop %v1156
        %v1158 = vmul.f32 %v1082, 1.442695
        %v1159 = vpow.pop %v1158
        %v1160 = vmul.f32 %v1083, 1.442695
        %v1161 = vpow.pop %v1160
        %v1162 = vmul.f32 %v1084, 1.442695
        %v1163 = vpow.pop %v1162
        %v1164 = vmul.f32 %v1085, 1.442695
        %v1165 = vpow.pop %v1164
        %v1166 = vmul.f32 %v1086, 1.442695
        %v1167 = vpow.pop %v1166
        %v1168 = vmul.f32 %v1087, 1.442695
        %v1169 = vpow.pop %v1168
        %v1170 = vmul.f32 %v1088, 1.442695
        %v1171 = vpow.pop %v1170
        %v1172 = vmul.f32 %v1089, 1.442695
        %v1173 = vpow.pop %v1172
        %v1174 = vmul.f32 %v1090, 1.442695
        %v1175 = vpow.pop %v1174
        %v1176 = vmul.f32 %v1091, 1.442695
        %v1177 = vpow.pop %v1176
        %v1178 = vmul.f32 %v1092, 1.442695
        %v1179 = vpow.pop %v1178
        %v1180 = vmul.f32 %v1093, 1.442695
        %v1181 = vpow.pop %v1180
        %v1182 = vmul.f32 %v1094, 1.442695
        %v1183 = vpow.pop %v1182
        %v1184 = vmul.f32 %v1095, 1.442695
        %v1185 = vpow.pop %v1184
        %v1186 = vmul.f32 %v1096, 1.442695
        %v1187 = vpow.pop %v1186
        %v1188 = vmul.f32 %v1097, 1.442695
        %v1189 = vpow.pop %v1188
        %v1190 = vmul.f32 %v1098, 1.442695
        %v1191 = vpow.pop %v1190
        %v1192 = vmul.f32 %v1099, 1.442695
        %v1193 = vpow.pop %v1192
        %v1194 = vmul.f32 %v1100, 1.442695
        %v1195 = vpow.pop %v1194
        %v1196 = vmul.f32 %v1101, 1.442695
        %v1197 = vpow.pop %v1196
        %v1198 = vmul.f32 %v1102, 1.442695
        %v1199 = vpow.pop %v1198
        %v1200 = vmul.f32 %v1103, 1.442695
        %v1201 = vpow.pop %v1200
        %v1202 = vmul.f32 %v1104, 1.442695
        %v1203 = vpow.pop %v1202
        %v1204 = vmul.f32 %v1105, 1.442695
        %v1205 = vpow.pop %v1204
        %v1206 = vmul.f32 %v1106, 1.442695
        %v1207 = vpow.pop %v1206
        %v1208 = vmul.f32 %v1107, 1.442695
        %v1209 = vpow.pop %v1208
        %v1210 = vmul.f32 %v1108, 1.442695
        %v1211 = vpow.pop %v1210
        %v1212 = vmul.f32 %v1109, 1.442695
        %v1213 = vpow.pop %v1212
        %v1214 = vmul.f32 %v1110, 1.442695
        %v1215 = vpow.pop %v1214
        %v1216 = vmul.f32 %v1111, 1.442695
        %v1217 = vpow.pop %v1216
        %v1218 = vmul.f32 %v1112, 1.442695
        %v1219 = vpow.pop %v1218
        %v1220 = vmul.f32 %v1113, 1.442695
        %v1221 = vpow.pop %v1220
        %v1222 = vmul.f32 %v1114, 1.442695
        %v1223 = vpow.pop %v1222
        %v1224 = vmul.f32 %v1115, 1.442695
        %v1225 = vpow.pop %v1224
        %v1226 = vmul.f32 %v1116, 1.442695
        %v1227 = vpow.pop %v1226
        %v1228 = vmul.f32 %v1117, 1.442695
        %v1229 = vpow.pop %v1228
        %v1230 = vmul.f32 %v1118, 1.442695
        %v1231 = vpow.pop %v1230
        %v1232 = vmul.f32 %v1119, 1.442695
        %v1233 = vpow.pop %v1232
        %v1234 = vmul.f32 %v1120, 1.442695
        %v1235 = vpow.pop %v1234
        %v1236 = vmul.f32 %v1121, 1.442695
        %v1237 = vpow.pop %v1236
        %v1238 = vmul.f32 %v1122, 1.442695
        %v1239 = vpow.pop %v1238
        %v1240 = vmul.f32 %v1123, 1.442695
        %v1241 = vpow.pop %v1240
        %v1242 = vmul.f32 %v1124, 1.442695
        %v1243 = vpow.pop %v1242
        %v1244 = vmul.f32 %v1125, 1.442695
        %v1245 = vpow.pop %v1244
        %v1246 = vmul.f32 %v1126, 1.442695
        %v1247 = vpow.pop %v1246
        %v1248 = vmul.f32 %v1127, 1.442695
        %v1249 = vpow.pop %v1248
        %v1250 = vmul.f32 %v1128, 1.442695
        %v1251 = vpow.pop %v1250
        %v1252 = vmul.f32 %v1129, 1.442695
        %v1253 = vpow.pop %v1252
        %v1254 = vmul.f32 %v1130, 1.442695
        %v1255 = vpow.pop %v1254
        %v1256 = vmul.f32 %v1131, 1.442695
        %v1257 = vpow.pop %v1256
        %v1258 = vmul.f32 %v1132, 1.442695
        %v1259 = vpow.pop %v1258
        %v1260 = vmul.f32 %v1133, 1.442695
        %v1261 = vpow.pop %v1260
        %v1262 = vld [vmem:[#allocation7] sm:$0xff]
        %v1263 = vld [vmem:[#allocation7 + $0x8] sm:$0xff]
        %v1264 = vld [vmem:[#allocation7 + $0x10] sm:$0xff]
        %v1265 = vld [vmem:[#allocation7 + $0x18] sm:$0xff]
        %v1266 = vld [vmem:[#allocation7 + $0x20] sm:$0xff]
        %v1267 = vld [vmem:[#allocation7 + $0x28] sm:$0xff]
        %v1268 = vld [vmem:[#allocation7 + $0x30] sm:$0xff]
        %v1269 = vld [vmem:[#allocation7 + $0x38] sm:$0xff]
        %v1270 = vld [vmem:[#allocation7 + $0x40] sm:$0xff]
        %v1271 = vld [vmem:[#allocation7 + $0x48] sm:$0xff]
        %v1272 = vld [vmem:[#allocation7 + $0x50] sm:$0xff]
        %v1273 = vld [vmem:[#allocation7 + $0x58] sm:$0xff]
        %v1274 = vld [vmem:[#allocation7 + $0x60] sm:$0xff]
        %v1275 = vld [vmem:[#allocation7 + $0x68] sm:$0xff]
        %v1276 = vld [vmem:[#allocation7 + $0x70] sm:$0xff]
        %v1277 = vld [vmem:[#allocation7 + $0x78] sm:$0xff]
        %v1278 = vld [vmem:[#allocation7 + $0x80] sm:$0xff]
        %v1279 = vld [vmem:[#allocation7 + $0x88] sm:$0xff]
        %v1280 = vld [vmem:[#allocation7 + $0x90] sm:$0xff]
        %v1281 = vld [vmem:[#allocation7 + $0x98] sm:$0xff]
        %v1282 = vld [vmem:[#allocation7 + $0xa0] sm:$0xff]
        %v1283 = vld [vmem:[#allocation7 + $0xa8] sm:$0xff]
        %v1284 = vld [vmem:[#allocation7 + $0xb0] sm:$0xff]
        %v1285 = vld [vmem:[#allocation7 + $0xb8] sm:$0xff]
        %v1286 = vld [vmem:[#allocation7 + $0xc0] sm:$0xff]
        %v1287 = vld [vmem:[#allocation7 + $0xc8] sm:$0xff]
        %v1288 = vld [vmem:[#allocation7 + $0xd0] sm:$0xff]
        %v1289 = vld [vmem:[#allocation7 + $0xd8] sm:$0xff]
        %v1290 = vld [vmem:[#allocation7 + $0xe0] sm:$0xff]
        %v1291 = vld [vmem:[#allocation7 + $0xe8] sm:$0xff]
        %v1292 = vld [vmem:[#allocation7 + $0xf0] sm:$0xff]
        %v1293 = vld [vmem:[#allocation7 + $0xf8] sm:$0xff]
        %v1294 = vld [vmem:[#allocation7 + $0x100] sm:$0xff]
        %v1295 = vld [vmem:[#allocation7 + $0x108] sm:$0xff]
        %v1296 = vld [vmem:[#allocation7 + $0x110] sm:$0xff]
        %v1297 = vld [vmem:[#allocation7 + $0x118] sm:$0xff]
        %v1298 = vld [vmem:[#allocation7 + $0x120] sm:$0xff]
        %v1299 = vld [vmem:[#allocation7 + $0x128] sm:$0xff]
        %v1300 = vld [vmem:[#allocation7 + $0x130] sm:$0xff]
        %v1301 = vld [vmem:[#allocation7 + $0x138] sm:$0xff]
        %v1302 = vld [vmem:[#allocation7 + $0x140] sm:$0xff]
        %v1303 = vld [vmem:[#allocation7 + $0x148] sm:$0xff]
        %v1304 = vld [vmem:[#allocation7 + $0x150] sm:$0xff]
        %v1305 = vld [vmem:[#allocation7 + $0x158] sm:$0xff]
        %v1306 = vld [vmem:[#allocation7 + $0x160] sm:$0xff]
        %v1307 = vld [vmem:[#allocation7 + $0x168] sm:$0xff]
        %v1308 = vld [vmem:[#allocation7 + $0x170] sm:$0xff]
        %v1309 = vld [vmem:[#allocation7 + $0x178] sm:$0xff]
        %v1310 = vld [vmem:[#allocation7 + $0x180] sm:$0xff]
        %v1311 = vld [vmem:[#allocation7 + $0x188] sm:$0xff]
        %v1312 = vld [vmem:[#allocation7 + $0x190] sm:$0xff]
        %v1313 = vld [vmem:[#allocation7 + $0x198] sm:$0xff]
        %v1314 = vld [vmem:[#allocation7 + $0x1a0] sm:$0xff]
        %v1315 = vld [vmem:[#allocation7 + $0x1a8] sm:$0xff]
        %v1316 = vld [vmem:[#allocation7 + $0x1b0] sm:$0xff]
        %v1317 = vld [vmem:[#allocation7 + $0x1b8] sm:$0xff]
        %v1318 = vld [vmem:[#allocation7 + $0x1c0] sm:$0xff]
        %v1319 = vld [vmem:[#allocation7 + $0x1c8] sm:$0xff]
        %v1320 = vld [vmem:[#allocation7 + $0x1d0] sm:$0xff]
        %v1321 = vld [vmem:[#allocation7 + $0x1d8] sm:$0xff]
        %v1322 = vld [vmem:[#allocation7 + $0x1e0] sm:$0xff]
        %v1323 = vld [vmem:[#allocation7 + $0x1e8] sm:$0xff]
        %v1324 = vld [vmem:[#allocation7 + $0x1f0] sm:$0xff]
        %v1325 = vld [vmem:[#allocation7 + $0x1f8] sm:$0xff]
        %1326 = vmatprep.subr.mxu0 %v1263
        %1327 = vmatpush1.msra.mxu0 %v1262
        %1328 = vmatprep.subr.mxu0 %v1265
        %1329 = vmatpush1.msra.mxu0 %v1264
        %1330 = vmatprep.subr.mxu0 %v1267
        %1331 = vmatpush1.msra.mxu0 %v1266
        %1332 = vmatprep.subr.mxu0 %v1269
        %1333 = vmatpush1.msra.mxu0 %v1268
        %1334 = vmatprep.subr.mxu0 %v1271
        %1335 = vmatpush1.msra.mxu0 %v1270
        %1336 = vmatprep.subr.mxu0 %v1273
        %1337 = vmatpush1.msra.mxu0 %v1272
        %1338 = vmatprep.subr.mxu0 %v1275
        %1339 = vmatpush1.msra.mxu0 %v1274
        %1340 = vmatprep.subr.mxu0 %v1277
        %1341 = vmatpush1.msra.mxu0 %v1276
        %1342 = vmatprep.subr.mxu0 %v1279
        %1343 = vmatpush1.msra.mxu0 %v1278
        %1344 = vmatprep.subr.mxu0 %v1281
        %1345 = vmatpush1.msra.mxu0 %v1280
        %1346 = vmatprep.subr.mxu0 %v1283
        %1347 = vmatpush1.msra.mxu0 %v1282
        %1348 = vmatprep.subr.mxu0 %v1285
        %1349 = vmatpush1.msra.mxu0 %v1284
        %1350 = vmatprep.subr.mxu0 %v1287
        %1351 = vmatpush1.msra.mxu0 %v1286
        %1352 = vmatprep.subr.mxu0 %v1289
        %1353 = vmatpush1.msra.mxu0 %v1288
        %1354 = vmatprep.subr.mxu0 %v1291
        %1355 = vmatpush1.msra.mxu0 %v1290
        %1356 = vmatprep.subr.mxu0 %v1293
        %1357 = vmatpush1.msra.mxu0 %v1292
        %1358 = vmatprep.subr.mxu0 %v1295
        %1359 = vmatpush1.msra.mxu0 %v1294
        %1360 = vmatprep.subr.mxu0 %v1297
        %1361 = vmatpush1.msra.mxu0 %v1296
        %1362 = vmatprep.subr.mxu0 %v1299
        %1363 = vmatpush1.msra.mxu0 %v1298
        %1364 = vmatprep.subr.mxu0 %v1301
        %1365 = vmatpush1.msra.mxu0 %v1300
        %1366 = vmatprep.subr.mxu0 %v1303
        %1367 = vmatpush1.msra.mxu0 %v1302
        %1368 = vmatprep.subr.mxu0 %v1305
        %1369 = vmatpush1.msra.mxu0 %v1304
        %1370 = vmatprep.subr.mxu0 %v1307
        %1371 = vmatpush1.msra.mxu0 %v1306
        %1372 = vmatprep.subr.mxu0 %v1309
        %1373 = vmatpush1.msra.mxu0 %v1308
        %1374 = vmatprep.subr.mxu0 %v1311
        %1375 = vmatpush1.msra.mxu0 %v1310
        %1376 = vmatprep.subr.mxu0 %v1313
        %1377 = vmatpush1.msra.mxu0 %v1312
        %1378 = vmatprep.subr.mxu0 %v1315
        %1379 = vmatpush1.msra.mxu0 %v1314
        %1380 = vmatprep.subr.mxu0 %v1317
        %1381 = vmatpush1.msra.mxu0 %v1316
        %1382 = vmatprep.subr.mxu0 %v1319
        %1383 = vmatpush1.msra.mxu0 %v1318
        %1384 = vmatprep.subr.mxu0 %v1321
        %1385 = vmatpush1.msra.mxu0 %v1320
        %1386 = vmatprep.subr.mxu0 %v1323
        %1387 = vmatpush1.msra.mxu0 %v1322
        %1388 = vmatprep.subr.mxu0 %v1325
        %1389 = vmatpush1.msra.mxu0 %v1324
        %1390 = vmatprep.mubr.f32.mxu0 %v1137
        %1391 = vmatmul.mubr.f32.gmra.mrb[0].mxu0 %v1135
        %v1392 = vpop.f32.mrb[0].mxu0
        %v1393 = vadd.f32 0.0, %v1392
        %v1394 = vpop.f32.mrb[0].mxu0
        %v1395 = vadd.f32 0.0, %v1394
        %1396 = vmatprep.mubr.f32.mxu0 %v1141
        %1397 = vmatmul.mubr.f32.gmra.mrb[0].mxu0 %v1139
        %v1398 = vpop.f32.mrb[0].mxu0
        %v1399 = vadd.f32 0.0, %v1398
        %v1400 = vpop.f32.mrb[0].mxu0
        %v1401 = vadd.f32 0.0, %v1400
        %1402 = vmatprep.mubr.f32.mxu0 %v1145
        %1403 = vmatmul.mubr.f32.gmra.mrb[0].mxu0 %v1143
        %v1404 = vpop.f32.mrb[0].mxu0
        %v1405 = vadd.f32 0.0, %v1404
        %v1406 = vpop.f32.mrb[0].mxu0
        %v1407 = vadd.f32 0.0, %v1406
        %1408 = vmatprep.mubr.f32.mxu0 %v1149
        %1409 = vmatmul.mubr.f32.gmra.mrb[0].mxu0 %v1147
        %v1410 = vpop.f32.mrb[0].mxu0
        %v1411 = vadd.f32 0.0, %v1410
        %v1412 = vpop.f32.mrb[0].mxu0
        %v1413 = vadd.f32 0.0, %v1412
        %1414 = vmatprep.mubr.f32.mxu0 %v1153
        %1415 = vmatmul.mubr.f32.gmra.mrb[0].mxu0 %v1151
        %v1416 = vpop.f32.mrb[0].mxu0
        %v1417 = vadd.f32 0.0, %v1416
        %v1418 = vpop.f32.mrb[0].mxu0
        %v1419 = vadd.f32 0.0, %v1418
        %1420 = vmatprep.mubr.f32.mxu0 %v1157
        %1421 = vmatmul.mubr.f32.gmra.mrb[0].mxu0 %v1155
        %v1422 = vpop.f32.mrb[0].mxu0
        %v1423 = vadd.f32 0.0, %v1422
        %v1424 = vpop.f32.mrb[0].mxu0
        %v1425 = vadd.f32 0.0, %v1424
        %1426 = vmatprep.mubr.f32.mxu0 %v1161
        %1427 = vmatmul.mubr.f32.gmra.mrb[0].mxu0 %v1159
        %v1428 = vpop.f32.mrb[0].mxu0
        %v1429 = vadd.f32 0.0, %v1428
        %v1430 = vpop.f32.mrb[0].mxu0
        %v1431 = vadd.f32 0.0, %v1430
        %1432 = vmatprep.mubr.f32.mxu0 %v1165
        %1433 = vmatmul.mubr.f32.gmra.mrb[0].mxu0 %v1163
        %v1434 = vpop.f32.mrb[0].mxu0
        %v1435 = vadd.f32 0.0, %v1434
        %v1436 = vpop.f32.mrb[0].mxu0
        %v1437 = vadd.f32 0.0, %v1436
        %1438 = vmatprep.mubr.f32.mxu0 %v1169
        %1439 = vmatmul.mubr.f32.gmra.mrb[0].mxu0 %v1167
        %v1440 = vpop.f32.mrb[0].mxu0
        %v1441 = vadd.f32 0.0, %v1440
        %v1442 = vpop.f32.mrb[0].mxu0
        %v1443 = vadd.f32 0.0, %v1442
        %1444 = vmatprep.mubr.f32.mxu0 %v1173
        %1445 = vmatmul.mubr.f32.gmra.mrb[0].mxu0 %v1171
        %v1446 = vpop.f32.mrb[0].mxu0
        %v1447 = vadd.f32 0.0, %v1446
        %v1448 = vpop.f32.mrb[0].mxu0
        %v1449 = vadd.f32 0.0, %v1448
        %1450 = vmatprep.mubr.f32.mxu0 %v1177
        %1451 = vmatmul.mubr.f32.gmra.mrb[0].mxu0 %v1175
        %v1452 = vpop.f32.mrb[0].mxu0
        %v1453 = vadd.f32 0.0, %v1452
        %v1454 = vpop.f32.mrb[0].mxu0
        %v1455 = vadd.f32 0.0, %v1454
        %1456 = vmatprep.mubr.f32.mxu0 %v1181
        %1457 = vmatmul.mubr.f32.gmra.mrb[0].mxu0 %v1179
        %v1458 = vpop.f32.mrb[0].mxu0
        %v1459 = vadd.f32 0.0, %v1458
        %v1460 = vpop.f32.mrb[0].mxu0
        %v1461 = vadd.f32 0.0, %v1460
        %1462 = vmatprep.mubr.f32.mxu0 %v1185
        %1463 = vmatmul.mubr.f32.gmra.mrb[0].mxu0 %v1183
        %v1464 = vpop.f32.mrb[0].mxu0
        %v1465 = vadd.f32 0.0, %v1464
        %v1466 = vpop.f32.mrb[0].mxu0
        %v1467 = vadd.f32 0.0, %v1466
        %1468 = vmatprep.mubr.f32.mxu0 %v1189
        %1469 = vmatmul.mubr.f32.gmra.mrb[0].mxu0 %v1187
        %v1470 = vpop.f32.mrb[0].mxu0
        %v1471 = vadd.f32 0.0, %v1470
        %v1472 = vpop.f32.mrb[0].mxu0
        %v1473 = vadd.f32 0.0, %v1472
        %1474 = vmatprep.mubr.f32.mxu0 %v1193
        %1475 = vmatmul.mubr.f32.gmra.mrb[0].mxu0 %v1191
        %v1476 = vpop.f32.mrb[0].mxu0
        %v1477 = vadd.f32 0.0, %v1476
        %v1478 = vpop.f32.mrb[0].mxu0
        %v1479 = vadd.f32 0.0, %v1478
        %1480 = vmatprep.mubr.f32.mxu0 %v1197
        %1481 = vmatmul.mubr.f32.gmra.mrb[0].mxu0 %v1195
        %v1482 = vpop.f32.mrb[0].mxu0
        %v1483 = vadd.f32 0.0, %v1482
        %v1484 = vpop.f32.mrb[0].mxu0
        %v1485 = vadd.f32 0.0, %v1484
        %1486 = vmatprep.mubr.f32.mxu0 %v1201
        %1487 = vmatmul.mubr.f32.gmra.mrb[0].mxu0 %v1199
        %v1488 = vpop.f32.mrb[0].mxu0
        %v1489 = vadd.f32 0.0, %v1488
        %v1490 = vpop.f32.mrb[0].mxu0
        %v1491 = vadd.f32 0.0, %v1490
        %1492 = vmatprep.mubr.f32.mxu0 %v1205
        %1493 = vmatmul.mubr.f32.gmra.mrb[0].mxu0 %v1203
        %v1494 = vpop.f32.mrb[0].mxu0
        %v1495 = vadd.f32 0.0, %v1494
        %v1496 = vpop.f32.mrb[0].mxu0
        %v1497 = vadd.f32 0.0, %v1496
        %1498 = vmatprep.mubr.f32.mxu0 %v1209
        %1499 = vmatmul.mubr.f32.gmra.mrb[0].mxu0 %v1207
        %v1500 = vpop.f32.mrb[0].mxu0
        %v1501 = vadd.f32 0.0, %v1500
        %v1502 = vpop.f32.mrb[0].mxu0
        %v1503 = vadd.f32 0.0, %v1502
        %1504 = vmatprep.mubr.f32.mxu0 %v1213
        %1505 = vmatmul.mubr.f32.gmra.mrb[0].mxu0 %v1211
        %v1506 = vpop.f32.mrb[0].mxu0
        %v1507 = vadd.f32 0.0, %v1506
        %v1508 = vpop.f32.mrb[0].mxu0
        %v1509 = vadd.f32 0.0, %v1508
        %1510 = vmatprep.mubr.f32.mxu0 %v1217
        %1511 = vmatmul.mubr.f32.gmra.mrb[0].mxu0 %v1215
        %v1512 = vpop.f32.mrb[0].mxu0
        %v1513 = vadd.f32 0.0, %v1512
        %v1514 = vpop.f32.mrb[0].mxu0
        %v1515 = vadd.f32 0.0, %v1514
        %1516 = vmatprep.mubr.f32.mxu0 %v1221
        %1517 = vmatmul.mubr.f32.gmra.mrb[0].mxu0 %v1219
        %v1518 = vpop.f32.mrb[0].mxu0
        %v1519 = vadd.f32 0.0, %v1518
        %v1520 = vpop.f32.mrb[0].mxu0
        %v1521 = vadd.f32 0.0, %v1520
        %1522 = vmatprep.mubr.f32.mxu0 %v1225
        %1523 = vmatmul.mubr.f32.gmra.mrb[0].mxu0 %v1223
        %v1524 = vpop.f32.mrb[0].mxu0
        %v1525 = vadd.f32 0.0, %v1524
        %v1526 = vpop.f32.mrb[0].mxu0
        %v1527 = vadd.f32 0.0, %v1526
        %1528 = vmatprep.mubr.f32.mxu0 %v1229
        %1529 = vmatmul.mubr.f32.gmra.mrb[0].mxu0 %v1227
        %v1530 = vpop.f32.mrb[0].mxu0
        %v1531 = vadd.f32 0.0, %v1530
        %v1532 = vpop.f32.mrb[0].mxu0
        %v1533 = vadd.f32 0.0, %v1532
        %1534 = vmatprep.mubr.f32.mxu0 %v1233
        %1535 = vmatmul.mubr.f32.gmra.mrb[0].mxu0 %v1231
        %v1536 = vpop.f32.mrb[0].mxu0
        %v1537 = vadd.f32 0.0, %v1536
        %v1538 = vpop.f32.mrb[0].mxu0
        %v1539 = vadd.f32 0.0, %v1538
        %1540 = vmatprep.mubr.f32.mxu0 %v1237
        %1541 = vmatmul.mubr.f32.gmra.mrb[0].mxu0 %v1235
        %v1542 = vpop.f32.mrb[0].mxu0
        %v1543 = vadd.f32 0.0, %v1542
        %v1544 = vpop.f32.mrb[0].mxu0
        %v1545 = vadd.f32 0.0, %v1544
        %1546 = vmatprep.mubr.f32.mxu0 %v1241
        %1547 = vmatmul.mubr.f32.gmra.mrb[0].mxu0 %v1239
        %v1548 = vpop.f32.mrb[0].mxu0
        %v1549 = vadd.f32 0.0, %v1548
        %v1550 = vpop.f32.mrb[0].mxu0
        %v1551 = vadd.f32 0.0, %v1550
        %1552 = vmatprep.mubr.f32.mxu0 %v1245
        %1553 = vmatmul.mubr.f32.gmra.mrb[0].mxu0 %v1243
        %v1554 = vpop.f32.mrb[0].mxu0
        %v1555 = vadd.f32 0.0, %v1554
        %v1556 = vpop.f32.mrb[0].mxu0
        %v1557 = vadd.f32 0.0, %v1556
        %1558 = vmatprep.mubr.f32.mxu0 %v1249
        %1559 = vmatmul.mubr.f32.gmra.mrb[0].mxu0 %v1247
        %v1560 = vpop.f32.mrb[0].mxu0
        %v1561 = vadd.f32 0.0, %v1560
        %v1562 = vpop.f32.mrb[0].mxu0
        %v1563 = vadd.f32 0.0, %v1562
        %1564 = vmatprep.mubr.f32.mxu0 %v1253
        %1565 = vmatmul.mubr.f32.gmra.mrb[0].mxu0 %v1251
        %v1566 = vpop.f32.mrb[0].mxu0
        %v1567 = vadd.f32 0.0, %v1566
        %v1568 = vpop.f32.mrb[0].mxu0
        %v1569 = vadd.f32 0.0, %v1568
        %1570 = vmatprep.mubr.f32.mxu0 %v1257
        %1571 = vmatmul.mubr.f32.gmra.mrb[0].mxu0 %v1255
        %v1572 = vpop.f32.mrb[0].mxu0
        %v1573 = vadd.f32 0.0, %v1572
        %v1574 = vpop.f32.mrb[0].mxu0
        %v1575 = vadd.f32 0.0, %v1574
        %1576 = vmatprep.mubr.f32.mxu0 %v1261
        %1577 = vmatmul.mubr.f32.gmra.mrb[0].mxu0 %v1259
        %v1578 = vpop.f32.mrb[0].mxu0
        %v1579 = vadd.f32 0.0, %v1578
        %v1580 = vpop.f32.mrb[0].mxu0
        %v1581 = vadd.f32 0.0, %v1580
        %1582 = vdwg.mxu0
        %v1583 = vrcp.pop %v1395
        %v1584 = vrcp.pop %v1401
        %v1585 = vrcp.pop %v1407
        %v1586 = vrcp.pop %v1413
        %v1587 = vrcp.pop %v1419
        %v1588 = vrcp.pop %v1425
        %v1589 = vrcp.pop %v1431
        %v1590 = vrcp.pop %v1437
        %v1591 = vrcp.pop %v1443
        %v1592 = vrcp.pop %v1449
        %v1593 = vrcp.pop %v1455
        %v1594 = vrcp.pop %v1461
        %v1595 = vrcp.pop %v1467
        %v1596 = vrcp.pop %v1473
        %v1597 = vrcp.pop %v1479
        %v1598 = vrcp.pop %v1485
        %v1599 = vrcp.pop %v1491
        %v1600 = vrcp.pop %v1497
        %v1601 = vrcp.pop %v1503
        %v1602 = vrcp.pop %v1509
        %v1603 = vrcp.pop %v1515
        %v1604 = vrcp.pop %v1521
        %v1605 = vrcp.pop %v1527
        %v1606 = vrcp.pop %v1533
        %v1607 = vrcp.pop %v1539
        %v1608 = vrcp.pop %v1545
        %v1609 = vrcp.pop %v1551
        %v1610 = vrcp.pop %v1557
        %v1611 = vrcp.pop %v1563
        %v1612 = vrcp.pop %v1569
        %v1613 = vrcp.pop %v1575
        %v1614 = vrcp.pop %v1581
        %v1615 = vmul.f32 %v1393, %v1583
        %v1616 = vmul.f32 %v1399, %v1584
        %v1617 = vmul.f32 %v1405, %v1585
        %v1618 = vmul.f32 %v1411, %v1586
        %v1619 = vmul.f32 %v1417, %v1587
        %v1620 = vmul.f32 %v1423, %v1588
        %v1621 = vmul.f32 %v1429, %v1589
        %v1622 = vmul.f32 %v1435, %v1590
        %v1623 = vmul.f32 %v1441, %v1591
        %v1624 = vmul.f32 %v1447, %v1592
        %v1625 = vmul.f32 %v1453, %v1593
        %v1626 = vmul.f32 %v1459, %v1594
        %v1627 = vmul.f32 %v1465, %v1595
        %v1628 = vmul.f32 %v1471, %v1596
        %v1629 = vmul.f32 %v1477, %v1597
        %v1630 = vmul.f32 %v1483, %v1598
        %v1631 = vmul.f32 %v1489, %v1599
        %v1632 = vmul.f32 %v1495, %v1600
        %v1633 = vmul.f32 %v1501, %v1601
        %v1634 = vmul.f32 %v1507, %v1602
        %v1635 = vmul.f32 %v1513, %v1603
        %v1636 = vmul.f32 %v1519, %v1604
        %v1637 = vmul.f32 %v1525, %v1605
        %v1638 = vmul.f32 %v1531, %v1606
        %v1639 = vmul.f32 %v1537, %v1607
        %v1640 = vmul.f32 %v1543, %v1608
        %v1641 = vmul.f32 %v1549, %v1609
        %v1642 = vmul.f32 %v1555, %v1610
        %v1643 = vmul.f32 %v1561, %v1611
        %v1644 = vmul.f32 %v1567, %v1612
        %v1645 = vmul.f32 %v1573, %v1613
        %v1646 = vmul.f32 %v1579, %v1614
        %v1647 = vld [vmem:[#allocation8] sm:$0x1]
        %v1649 = vlaneseq
        %v1650 = vshrl.u32 %v1649, 7
        %v1651 = vsub.s32 0, %v1650
        %v1652 = vrot.slane %v1647, %v1651
        %v1654 = vadd.f32 %v1615, %v1652
        %v1655 = vadd.f32 %v1616, %v1652
        %v1656 = vadd.f32 %v1617, %v1652
        %v1657 = vadd.f32 %v1618, %v1652
        %v1658 = vadd.f32 %v1619, %v1652
        %v1659 = vadd.f32 %v1620, %v1652
        %v1660 = vadd.f32 %v1621, %v1652
        %v1661 = vadd.f32 %v1622, %v1652
        %v1662 = vadd.f32 %v1623, %v1652
        %v1663 = vadd.f32 %v1624, %v1652
        %v1664 = vadd.f32 %v1625, %v1652
        %v1665 = vadd.f32 %v1626, %v1652
        %v1666 = vadd.f32 %v1627, %v1652
        %v1667 = vadd.f32 %v1628, %v1652
        %v1668 = vadd.f32 %v1629, %v1652
        %v1669 = vadd.f32 %v1630, %v1652
        %v1670 = vadd.f32 %v1631, %v1652
        %v1671 = vadd.f32 %v1632, %v1652
        %v1672 = vadd.f32 %v1633, %v1652
        %v1673 = vadd.f32 %v1634, %v1652
        %v1674 = vadd.f32 %v1635, %v1652
        %v1675 = vadd.f32 %v1636, %v1652
        %v1676 = vadd.f32 %v1637, %v1652
        %v1677 = vadd.f32 %v1638, %v1652
        %v1678 = vadd.f32 %v1639, %v1652
        %v1679 = vadd.f32 %v1640, %v1652
        %v1680 = vadd.f32 %v1641, %v1652
        %v1681 = vadd.f32 %v1642, %v1652
        %v1682 = vadd.f32 %v1643, %v1652
        %v1683 = vadd.f32 %v1644, %v1652
        %v1684 = vadd.f32 %v1645, %v1652
        %v1685 = vadd.f32 %v1646, %v1652
        %v1686 = vld [vmem:[#allocation10] sm:$0xff]
        %v1687 = vld [vmem:[#allocation10 + $0x8] sm:$0xff]
        %v1688 = vld [vmem:[#allocation10 + $0x10] sm:$0xff]
        %v1689 = vld [vmem:[#allocation10 + $0x18] sm:$0xff]
        %v1690 = vld [vmem:[#allocation10 + $0x20] sm:$0xff]
        %v1691 = vld [vmem:[#allocation10 + $0x28] sm:$0xff]
        %v1692 = vld [vmem:[#allocation10 + $0x30] sm:$0xff]
        %v1693 = vld [vmem:[#allocation10 + $0x38] sm:$0xff]
        %v1694 = vld [vmem:[#allocation10 + $0x40] sm:$0xff]
        %v1695 = vld [vmem:[#allocation10 + $0x48] sm:$0xff]
        %v1696 = vld [vmem:[#allocation10 + $0x50] sm:$0xff]
        %v1697 = vld [vmem:[#allocation10 + $0x58] sm:$0xff]
        %v1698 = vld [vmem:[#allocation10 + $0x60] sm:$0xff]
        %v1699 = vld [vmem:[#allocation10 + $0x68] sm:$0xff]
        %v1700 = vld [vmem:[#allocation10 + $0x70] sm:$0xff]
        %v1701 = vld [vmem:[#allocation10 + $0x78] sm:$0xff]
        %v1702 = vlaneseq
        %v1703 = vshrl.u32 %v1702, 7
        %v1704 = vsub.s32 0, %v1703
        %v1705 = vrot.slane %v672, %v1704
        %1706 = vmatprep.subr.mxu0 0.0
        %1707 = vmatpush1.msra.mxu0 %v1686
        %1708 = vmatprep.subr.mxu0 0.0
        %1709 = vmatpush1.msra.mxu0 %v1687
        %1710 = vmatprep.subr.mxu0 0.0
        %1711 = vmatpush1.msra.mxu0 %v1688
        %1712 = vmatprep.subr.mxu0 0.0
        %1713 = vmatpush1.msra.mxu0 %v1689
        %1714 = vmatprep.subr.mxu0 0.0
        %1715 = vmatpush1.msra.mxu0 %v1690
        %1716 = vmatprep.subr.mxu0 0.0
        %1717 = vmatpush1.msra.mxu0 %v1691
        %1718 = vmatprep.subr.mxu0 0.0
        %1719 = vmatpush1.msra.mxu0 %v1692
        %1720 = vmatprep.subr.mxu0 0.0
        %1721 = vmatpush1.msra.mxu0 %v1693
        %1722 = vmatprep.subr.mxu0 0.0
        %1723 = vmatpush1.msra.mxu0 %v1694
        %1724 = vmatprep.subr.mxu0 0.0
        %1725 = vmatpush1.msra.mxu0 %v1695
        %1726 = vmatprep.subr.mxu0 0.0
        %1727 = vmatpush1.msra.mxu0 %v1696
        %1728 = vmatprep.subr.mxu0 0.0
        %1729 = vmatpush1.msra.mxu0 %v1697
        %1730 = vmatprep.subr.mxu0 0.0
        %1731 = vmatpush1.msra.mxu0 %v1698
        %1732 = vmatprep.subr.mxu0 0.0
        %1733 = vmatpush1.msra.mxu0 %v1699
        %1734 = vmatprep.subr.mxu0 0.0
        %1735 = vmatpush1.msra.mxu0 %v1700
        %1736 = vmatprep.subr.mxu0 0.0
        %1737 = vmatpush1.msra.mxu0 %v1701
        %1738 = vmatprep.subr.mxu0 0.0
        %1739 = vmatpush1.msra.mxu0 0.0
        %1740 = vmatprep.subr.mxu0 0.0
        %1741 = vmatpush1.msra.mxu0 0.0
        %1742 = vmatprep.subr.mxu0 0.0
        %1743 = vmatpush1.msra.mxu0 0.0
        %1744 = vmatprep.subr.mxu0 0.0
        %1745 = vmatpush1.msra.mxu0 0.0
        %1746 = vmatprep.subr.mxu0 0.0
        %1747 = vmatpush1.msra.mxu0 0.0
        %1748 = vmatprep.subr.mxu0 0.0
        %1749 = vmatpush1.msra.mxu0 0.0
        %1750 = vmatprep.subr.mxu0 0.0
        %1751 = vmatpush1.msra.mxu0 0.0
        %1752 = vmatprep.subr.mxu0 0.0
        %1753 = vmatpush1.msra.mxu0 0.0
        %1754 = vmatprep.subr.mxu0 0.0
        %1755 = vmatpush1.msra.mxu0 0.0
        %1756 = vmatprep.subr.mxu0 0.0
        %1757 = vmatpush1.msra.mxu0 0.0
        %1758 = vmatprep.subr.mxu0 0.0
        %1759 = vmatpush1.msra.mxu0 0.0
        %1760 = vmatprep.subr.mxu0 0.0
        %1761 = vmatpush1.msra.mxu0 0.0
        %1762 = vmatprep.subr.mxu0 0.0
        %1763 = vmatpush1.msra.mxu0 0.0
        %1764 = vmatprep.subr.mxu0 0.0
        %1765 = vmatpush1.msra.mxu0 0.0
        %1766 = vmatprep.subr.mxu0 0.0
        %1767 = vmatpush1.msra.mxu0 0.0
        %1768 = vmatprep.subr.mxu0 0.0
        %1769 = vmatpush1.msra.mxu0 0.0
        %1770 = vmatprep.mubr.f32.mxu0 0.0
        %1771 = vmatmul.mubr.f32.gmra.mrb[0].mxu0 %v1654
        %v1772 = vpop.f32.mrb[0].mxu0
        %v1773 = vadd.f32 %v1705, %v1772
        %v1774 = vpop.f32.mrb[0].mxu0
        %1775 = vmatprep.mubr.f32.mxu0 0.0
        %1776 = vmatmul.mubr.f32.gmra.mrb[0].mxu0 %v1655
        %v1777 = vpop.f32.mrb[0].mxu0
        %v1778 = vadd.f32 %v1705, %v1777
        %v1779 = vpop.f32.mrb[0].mxu0
        %1780 = vmatprep.mubr.f32.mxu0 0.0
        %1781 = vmatmul.mubr.f32.gmra.mrb[0].mxu0 %v1656
        %v1782 = vpop.f32.mrb[0].mxu0
        %v1783 = vadd.f32 %v1705, %v1782
        %v1784 = vpop.f32.mrb[0].mxu0
        %1785 = vmatprep.mubr.f32.mxu0 0.0
        %1786 = vmatmul.mubr.f32.gmra.mrb[0].mxu0 %v1657
        %v1787 = vpop.f32.mrb[0].mxu0
        %v1788 = vadd.f32 %v1705, %v1787
        %v1789 = vpop.f32.mrb[0].mxu0
        %1790 = vmatprep.mubr.f32.mxu0 0.0
        %1791 = vmatmul.mubr.f32.gmra.mrb[0].mxu0 %v1658
        %v1792 = vpop.f32.mrb[0].mxu0
        %v1793 = vadd.f32 %v1705, %v1792
        %v1794 = vpop.f32.mrb[0].mxu0
        %1795 = vmatprep.mubr.f32.mxu0 0.0
        %1796 = vmatmul.mubr.f32.gmra.mrb[0].mxu0 %v1659
        %v1797 = vpop.f32.mrb[0].mxu0
        %v1798 = vadd.f32 %v1705, %v1797
        %v1799 = vpop.f32.mrb[0].mxu0
        %1800 = vmatprep.mubr.f32.mxu0 0.0
        %1801 = vmatmul.mubr.f32.gmra.mrb[0].mxu0 %v1660
        %v1802 = vpop.f32.mrb[0].mxu0
        %v1803 = vadd.f32 %v1705, %v1802
        %v1804 = vpop.f32.mrb[0].mxu0
        %1805 = vmatprep.mubr.f32.mxu0 0.0
        %1806 = vmatmul.mubr.f32.gmra.mrb[0].mxu0 %v1661
        %v1807 = vpop.f32.mrb[0].mxu0
        %v1808 = vadd.f32 %v1705, %v1807
        %v1809 = vpop.f32.mrb[0].mxu0
        %1810 = vmatprep.mubr.f32.mxu0 0.0
        %1811 = vmatmul.mubr.f32.gmra.mrb[0].mxu0 %v1662
        %v1812 = vpop.f32.mrb[0].mxu0
        %v1813 = vadd.f32 %v1705, %v1812
        %v1814 = vpop.f32.mrb[0].mxu0
        %1815 = vmatprep.mubr.f32.mxu0 0.0
        %1816 = vmatmul.mubr.f32.gmra.mrb[0].mxu0 %v1663
        %v1817 = vpop.f32.mrb[0].mxu0
        %v1818 = vadd.f32 %v1705, %v1817
        %v1819 = vpop.f32.mrb[0].mxu0
        %1820 = vmatprep.mubr.f32.mxu0 0.0
        %1821 = vmatmul.mubr.f32.gmra.mrb[0].mxu0 %v1664
        %v1822 = vpop.f32.mrb[0].mxu0
        %v1823 = vadd.f32 %v1705, %v1822
        %v1824 = vpop.f32.mrb[0].mxu0
        %1825 = vmatprep.mubr.f32.mxu0 0.0
        %1826 = vmatmul.mubr.f32.gmra.mrb[0].mxu0 %v1665
        %v1827 = vpop.f32.mrb[0].mxu0
        %v1828 = vadd.f32 %v1705, %v1827
        %v1829 = vpop.f32.mrb[0].mxu0
        %1830 = vmatprep.mubr.f32.mxu0 0.0
        %1831 = vmatmul.mubr.f32.gmra.mrb[0].mxu0 %v1666
        %v1832 = vpop.f32.mrb[0].mxu0
        %v1833 = vadd.f32 %v1705, %v1832
        %v1834 = vpop.f32.mrb[0].mxu0
        %1835 = vmatprep.mubr.f32.mxu0 0.0
        %1836 = vmatmul.mubr.f32.gmra.mrb[0].mxu0 %v1667
        %v1837 = vpop.f32.mrb[0].mxu0
        %v1838 = vadd.f32 %v1705, %v1837
        %v1839 = vpop.f32.mrb[0].mxu0
        %1840 = vmatprep.mubr.f32.mxu0 0.0
        %1841 = vmatmul.mubr.f32.gmra.mrb[0].mxu0 %v1668
        %v1842 = vpop.f32.mrb[0].mxu0
        %v1843 = vadd.f32 %v1705, %v1842
        %v1844 = vpop.f32.mrb[0].mxu0
        %1845 = vmatprep.mubr.f32.mxu0 0.0
        %1846 = vmatmul.mubr.f32.gmra.mrb[0].mxu0 %v1669
        %v1847 = vpop.f32.mrb[0].mxu0
        %v1848 = vadd.f32 %v1705, %v1847
        %v1849 = vpop.f32.mrb[0].mxu0
        %1850 = vmatprep.mubr.f32.mxu0 0.0
        %1851 = vmatmul.mubr.f32.gmra.mrb[0].mxu0 %v1670
        %v1852 = vpop.f32.mrb[0].mxu0
        %v1853 = vadd.f32 %v1705, %v1852
        %v1854 = vpop.f32.mrb[0].mxu0
        %1855 = vmatprep.mubr.f32.mxu0 0.0
        %1856 = vmatmul.mubr.f32.gmra.mrb[0].mxu0 %v1671
        %v1857 = vpop.f32.mrb[0].mxu0
        %v1858 = vadd.f32 %v1705, %v1857
        %v1859 = vpop.f32.mrb[0].mxu0
        %1860 = vmatprep.mubr.f32.mxu0 0.0
        %1861 = vmatmul.mubr.f32.gmra.mrb[0].mxu0 %v1672
        %v1862 = vpop.f32.mrb[0].mxu0
        %v1863 = vadd.f32 %v1705, %v1862
        %v1864 = vpop.f32.mrb[0].mxu0
        %1865 = vmatprep.mubr.f32.mxu0 0.0
        %1866 = vmatmul.mubr.f32.gmra.mrb[0].mxu0 %v1673
        %v1867 = vpop.f32.mrb[0].mxu0
        %v1868 = vadd.f32 %v1705, %v1867
        %v1869 = vpop.f32.mrb[0].mxu0
        %1870 = vmatprep.mubr.f32.mxu0 0.0
        %1871 = vmatmul.mubr.f32.gmra.mrb[0].mxu0 %v1674
        %v1872 = vpop.f32.mrb[0].mxu0
        %v1873 = vadd.f32 %v1705, %v1872
        %v1874 = vpop.f32.mrb[0].mxu0
        %1875 = vmatprep.mubr.f32.mxu0 0.0
        %1876 = vmatmul.mubr.f32.gmra.mrb[0].mxu0 %v1675
        %v1877 = vpop.f32.mrb[0].mxu0
        %v1878 = vadd.f32 %v1705, %v1877
        %v1879 = vpop.f32.mrb[0].mxu0
        %1880 = vmatprep.mubr.f32.mxu0 0.0
        %1881 = vmatmul.mubr.f32.gmra.mrb[0].mxu0 %v1676
        %v1882 = vpop.f32.mrb[0].mxu0
        %v1883 = vadd.f32 %v1705, %v1882
        %v1884 = vpop.f32.mrb[0].mxu0
        %1885 = vmatprep.mubr.f32.mxu0 0.0
        %1886 = vmatmul.mubr.f32.gmra.mrb[0].mxu0 %v1677
        %v1887 = vpop.f32.mrb[0].mxu0
        %v1888 = vadd.f32 %v1705, %v1887
        %v1889 = vpop.f32.mrb[0].mxu0
        %1890 = vmatprep.mubr.f32.mxu0 0.0
        %1891 = vmatmul.mubr.f32.gmra.mrb[0].mxu0 %v1678
        %v1892 = vpop.f32.mrb[0].mxu0
        %v1893 = vadd.f32 %v1705, %v1892
        %v1894 = vpop.f32.mrb[0].mxu0
        %1895 = vmatprep.mubr.f32.mxu0 0.0
        %1896 = vmatmul.mubr.f32.gmra.mrb[0].mxu0 %v1679
        %v1897 = vpop.f32.mrb[0].mxu0
        %v1898 = vadd.f32 %v1705, %v1897
        %v1899 = vpop.f32.mrb[0].mxu0
        %1900 = vmatprep.mubr.f32.mxu0 0.0
        %1901 = vmatmul.mubr.f32.gmra.mrb[0].mxu0 %v1680
        %v1902 = vpop.f32.mrb[0].mxu0
        %v1903 = vadd.f32 %v1705, %v1902
        %v1904 = vpop.f32.mrb[0].mxu0
        %1905 = vmatprep.mubr.f32.mxu0 0.0
        %1906 = vmatmul.mubr.f32.gmra.mrb[0].mxu0 %v1681
        %v1907 = vpop.f32.mrb[0].mxu0
        %v1908 = vadd.f32 %v1705, %v1907
        %v1909 = vpop.f32.mrb[0].mxu0
        %1910 = vmatprep.mubr.f32.mxu0 0.0
        %1911 = vmatmul.mubr.f32.gmra.mrb[0].mxu0 %v1682
        %v1912 = vpop.f32.mrb[0].mxu0
        %v1913 = vadd.f32 %v1705, %v1912
        %v1914 = vpop.f32.mrb[0].mxu0
        %1915 = vmatprep.mubr.f32.mxu0 0.0
        %1916 = vmatmul.mubr.f32.gmra.mrb[0].mxu0 %v1683
        %v1917 = vpop.f32.mrb[0].mxu0
        %v1918 = vadd.f32 %v1705, %v1917
        %v1919 = vpop.f32.mrb[0].mxu0
        %1920 = vmatprep.mubr.f32.mxu0 0.0
        %1921 = vmatmul.mubr.f32.gmra.mrb[0].mxu0 %v1684
        %v1922 = vpop.f32.mrb[0].mxu0
        %v1923 = vadd.f32 %v1705, %v1922
        %v1924 = vpop.f32.mrb[0].mxu0
        %1925 = vmatprep.mubr.f32.mxu0 0.0
        %1926 = vmatmul.mubr.f32.gmra.mrb[0].mxu0 %v1685
        %v1927 = vpop.f32.mrb[0].mxu0
        %v1928 = vadd.f32 %v1705, %v1927
        %v1929 = vpop.f32.mrb[0].mxu0
        %1930 = vdwg.mxu0
        %v1931 = vxor.u32 %v1773, 2147483648
        %v1932 = vxor.u32 %v1778, 2147483648
        %v1933 = vxor.u32 %v1783, 2147483648
        %v1934 = vxor.u32 %v1788, 2147483648
        %v1935 = vxor.u32 %v1793, 2147483648
        %v1936 = vxor.u32 %v1798, 2147483648
        %v1937 = vxor.u32 %v1803, 2147483648
        %v1938 = vxor.u32 %v1808, 2147483648
        %v1939 = vxor.u32 %v1813, 2147483648
        %v1940 = vxor.u32 %v1818, 2147483648
        %v1941 = vxor.u32 %v1823, 2147483648
        %v1942 = vxor.u32 %v1828, 2147483648
        %v1943 = vxor.u32 %v1833, 2147483648
        %v1944 = vxor.u32 %v1838, 2147483648
        %v1945 = vxor.u32 %v1843, 2147483648
        %v1946 = vxor.u32 %v1848, 2147483648
        %v1947 = vxor.u32 %v1853, 2147483648
        %v1948 = vxor.u32 %v1858, 2147483648
        %v1949 = vxor.u32 %v1863, 2147483648
        %v1950 = vxor.u32 %v1868, 2147483648
        %v1951 = vxor.u32 %v1873, 2147483648
        %v1952 = vxor.u32 %v1878, 2147483648
        %v1953 = vxor.u32 %v1883, 2147483648
        %v1954 = vxor.u32 %v1888, 2147483648
        %v1955 = vxor.u32 %v1893, 2147483648
        %v1956 = vxor.u32 %v1898, 2147483648
        %v1957 = vxor.u32 %v1903, 2147483648
        %v1958 = vxor.u32 %v1908, 2147483648
        %v1959 = vxor.u32 %v1913, 2147483648
        %v1960 = vxor.u32 %v1918, 2147483648
        %v1961 = vxor.u32 %v1923, 2147483648
        %v1962 = vxor.u32 %v1928, 2147483648
        %v1963 = vmul.f32 %v1931, 1.442695
        %v1964 = vpow.pop %v1963
        %v1965 = vmul.f32 %v1932, 1.442695
        %v1966 = vpow.pop %v1965
        %v1967 = vmul.f32 %v1933, 1.442695
        %v1968 = vpow.pop %v1967
        %v1969 = vmul.f32 %v1934, 1.442695
        %v1970 = vpow.pop %v1969
        %v1971 = vmul.f32 %v1935, 1.442695
        %v1972 = vpow.pop %v1971
        %v1973 = vmul.f32 %v1936, 1.442695
        %v1974 = vpow.pop %v1973
        %v1975 = vmul.f32 %v1937, 1.442695
        %v1976 = vpow.pop %v1975
        %v1977 = vmul.f32 %v1938, 1.442695
        %v1978 = vpow.pop %v1977
        %v1979 = vmul.f32 %v1939, 1.442695
        %v1980 = vpow.pop %v1979
        %v1981 = vmul.f32 %v1940, 1.442695
        %v1982 = vpow.pop %v1981
        %v1983 = vmul.f32 %v1941, 1.442695
        %v1984 = vpow.pop %v1983
        %v1985 = vmul.f32 %v1942, 1.442695
        %v1986 = vpow.pop %v1985
        %v1987 = vmul.f32 %v1943, 1.442695
        %v1988 = vpow.pop %v1987
        %v1989 = vmul.f32 %v1944, 1.442695
        %v1990 = vpow.pop %v1989
        %v1991 = vmul.f32 %v1945, 1.442695
        %v1992 = vpow.pop %v1991
        %v1993 = vmul.f32 %v1946, 1.442695
        %v1994 = vpow.pop %v1993
        %v1995 = vmul.f32 %v1947, 1.442695
        %v1996 = vpow.pop %v1995
        %v1997 = vmul.f32 %v1948, 1.442695
        %v1998 = vpow.pop %v1997
        %v1999 = vmul.f32 %v1949, 1.442695
        %v2000 = vpow.pop %v1999
        %v2001 = vmul.f32 %v1950, 1.442695
        %v2002 = vpow.pop %v2001
        %v2003 = vmul.f32 %v1951, 1.442695
        %v2004 = vpow.pop %v2003
        %v2005 = vmul.f32 %v1952, 1.442695
        %v2006 = vpow.pop %v2005
        %v2007 = vmul.f32 %v1953, 1.442695
        %v2008 = vpow.pop %v2007
        %v2009 = vmul.f32 %v1954, 1.442695
        %v2010 = vpow.pop %v2009
        %v2011 = vmul.f32 %v1955, 1.442695
        %v2012 = vpow.pop %v2011
        %v2013 = vmul.f32 %v1956, 1.442695
        %v2014 = vpow.pop %v2013
        %v2015 = vmul.f32 %v1957, 1.442695
        %v2016 = vpow.pop %v2015
        %v2017 = vmul.f32 %v1958, 1.442695
        %v2018 = vpow.pop %v2017
        %v2019 = vmul.f32 %v1959, 1.442695
        %v2020 = vpow.pop %v2019
        %v2021 = vmul.f32 %v1960, 1.442695
        %v2022 = vpow.pop %v2021
        %v2023 = vmul.f32 %v1961, 1.442695
        %v2024 = vpow.pop %v2023
        %v2025 = vmul.f32 %v1962, 1.442695
        %v2026 = vpow.pop %v2025
        %v2027 = vadd.f32 %v1964, 1.0
        %v2028 = vadd.f32 %v1966, 1.0
        %v2029 = vadd.f32 %v1968, 1.0
        %v2030 = vadd.f32 %v1970, 1.0
        %v2031 = vadd.f32 %v1972, 1.0
        %v2032 = vadd.f32 %v1974, 1.0
        %v2033 = vadd.f32 %v1976, 1.0
        %v2034 = vadd.f32 %v1978, 1.0
        %v2035 = vadd.f32 %v1980, 1.0
        %v2036 = vadd.f32 %v1982, 1.0
        %v2037 = vadd.f32 %v1984, 1.0
        %v2038 = vadd.f32 %v1986, 1.0
        %v2039 = vadd.f32 %v1988, 1.0
        %v2040 = vadd.f32 %v1990, 1.0
        %v2041 = vadd.f32 %v1992, 1.0
        %v2042 = vadd.f32 %v1994, 1.0
        %v2043 = vadd.f32 %v1996, 1.0
        %v2044 = vadd.f32 %v1998, 1.0
        %v2045 = vadd.f32 %v2000, 1.0
        %v2046 = vadd.f32 %v2002, 1.0
        %v2047 = vadd.f32 %v2004, 1.0
        %v2048 = vadd.f32 %v2006, 1.0
        %v2049 = vadd.f32 %v2008, 1.0
        %v2050 = vadd.f32 %v2010, 1.0
        %v2051 = vadd.f32 %v2012, 1.0
        %v2052 = vadd.f32 %v2014, 1.0
        %v2053 = vadd.f32 %v2016, 1.0
        %v2054 = vadd.f32 %v2018, 1.0
        %v2055 = vadd.f32 %v2020, 1.0
        %v2056 = vadd.f32 %v2022, 1.0
        %v2057 = vadd.f32 %v2024, 1.0
        %v2058 = vadd.f32 %v2026, 1.0
        %v2059 = vrcp.pop %v2027
        %v2060 = vmul.f32 1.0, %v2059
        %v2061 = vrcp.pop %v2028
        %v2062 = vmul.f32 1.0, %v2061
        %v2063 = vrcp.pop %v2029
        %v2064 = vmul.f32 1.0, %v2063
        %v2065 = vrcp.pop %v2030
        %v2066 = vmul.f32 1.0, %v2065
        %v2067 = vrcp.pop %v2031
        %v2068 = vmul.f32 1.0, %v2067
        %v2069 = vrcp.pop %v2032
        %v2070 = vmul.f32 1.0, %v2069
        %v2071 = vrcp.pop %v2033
        %v2072 = vmul.f32 1.0, %v2071
        %v2073 = vrcp.pop %v2034
        %v2074 = vmul.f32 1.0, %v2073
        %v2075 = vrcp.pop %v2035
        %v2076 = vmul.f32 1.0, %v2075
        %v2077 = vrcp.pop %v2036
        %v2078 = vmul.f32 1.0, %v2077
        %v2079 = vrcp.pop %v2037
        %v2080 = vmul.f32 1.0, %v2079
        %v2081 = vrcp.pop %v2038
        %v2082 = vmul.f32 1.0, %v2081
        %v2083 = vrcp.pop %v2039
        %v2084 = vmul.f32 1.0, %v2083
        %v2085 = vrcp.pop %v2040
        %v2086 = vmul.f32 1.0, %v2085
        %v2087 = vrcp.pop %v2041
        %v2088 = vmul.f32 1.0, %v2087
        %v2089 = vrcp.pop %v2042
        %v2090 = vmul.f32 1.0, %v2089
        %v2091 = vrcp.pop %v2043
        %v2092 = vmul.f32 1.0, %v2091
        %v2093 = vrcp.pop %v2044
        %v2094 = vmul.f32 1.0, %v2093
        %v2095 = vrcp.pop %v2045
        %v2096 = vmul.f32 1.0, %v2095
        %v2097 = vrcp.pop %v2046
        %v2098 = vmul.f32 1.0, %v2097
        %v2099 = vrcp.pop %v2047
        %v2100 = vmul.f32 1.0, %v2099
        %v2101 = vrcp.pop %v2048
        %v2102 = vmul.f32 1.0, %v2101
        %v2103 = vrcp.pop %v2049
        %v2104 = vmul.f32 1.0, %v2103
        %v2105 = vrcp.pop %v2050
        %v2106 = vmul.f32 1.0, %v2105
        %v2107 = vrcp.pop %v2051
        %v2108 = vmul.f32 1.0, %v2107
        %v2109 = vrcp.pop %v2052
        %v2110 = vmul.f32 1.0, %v2109
        %v2111 = vrcp.pop %v2053
        %v2112 = vmul.f32 1.0, %v2111
        %v2113 = vrcp.pop %v2054
        %v2114 = vmul.f32 1.0, %v2113
        %v2115 = vrcp.pop %v2055
        %v2116 = vmul.f32 1.0, %v2115
        %v2117 = vrcp.pop %v2056
        %v2118 = vmul.f32 1.0, %v2117
        %v2119 = vrcp.pop %v2057
        %v2120 = vmul.f32 1.0, %v2119
        %v2121 = vrcp.pop %v2058
        %v2122 = vmul.f32 1.0, %v2121
        %v2123 = vmul.f32 %v1773, %v2060
        %v2124 = vmul.f32 %v1778, %v2062
        %v2125 = vmul.f32 %v1783, %v2064
        %v2126 = vmul.f32 %v1788, %v2066
        %v2127 = vmul.f32 %v1793, %v2068
        %v2128 = vmul.f32 %v1798, %v2070
        %v2129 = vmul.f32 %v1803, %v2072
        %v2130 = vmul.f32 %v1808, %v2074
        %v2131 = vmul.f32 %v1813, %v2076
        %v2132 = vmul.f32 %v1818, %v2078
        %v2133 = vmul.f32 %v1823, %v2080
        %v2134 = vmul.f32 %v1828, %v2082
        %v2135 = vmul.f32 %v1833, %v2084
        %v2136 = vmul.f32 %v1838, %v2086
        %v2137 = vmul.f32 %v1843, %v2088
        %v2138 = vmul.f32 %v1848, %v2090
        %v2139 = vmul.f32 %v1853, %v2092
        %v2140 = vmul.f32 %v1858, %v2094
        %v2141 = vmul.f32 %v1863, %v2096
        %v2142 = vmul.f32 %v1868, %v2098
        %v2143 = vmul.f32 %v1873, %v2100
        %v2144 = vmul.f32 %v1878, %v2102
        %v2145 = vmul.f32 %v1883, %v2104
        %v2146 = vmul.f32 %v1888, %v2106
        %v2147 = vmul.f32 %v1893, %v2108
        %v2148 = vmul.f32 %v1898, %v2110
        %v2149 = vmul.f32 %v1903, %v2112
        %v2150 = vmul.f32 %v1908, %v2114
        %v2151 = vmul.f32 %v1913, %v2116
        %v2152 = vmul.f32 %v1918, %v2118
        %v2153 = vmul.f32 %v1923, %v2120
        %v2154 = vmul.f32 %v1928, %v2122
        %v2155 = vld [vmem:[#allocation11] sm:$0xff]
        %v2156 = vld [vmem:[#allocation11 + $0x8] sm:$0xff]
        %v2157 = vld [vmem:[#allocation11 + $0x10] sm:$0xff]
        %v2158 = vld [vmem:[#allocation11 + $0x18] sm:$0xff]
        %v2159 = vld [vmem:[#allocation11 + $0x20] sm:$0xff]
        %v2160 = vld [vmem:[#allocation11 + $0x28] sm:$0xff]
        %v2161 = vld [vmem:[#allocation11 + $0x30] sm:$0xff]
        %v2162 = vld [vmem:[#allocation11 + $0x38] sm:$0xff]
        %v2163 = vld [vmem:[#allocation11 + $0x40] sm:$0xff]
        %v2164 = vld [vmem:[#allocation11 + $0x48] sm:$0xff]
        %v2165 = vld [vmem:[#allocation11 + $0x50] sm:$0xff]
        %v2166 = vld [vmem:[#allocation11 + $0x58] sm:$0xff]
        %v2167 = vld [vmem:[#allocation11 + $0x60] sm:$0xff]
        %v2168 = vld [vmem:[#allocation11 + $0x68] sm:$0xff]
        %v2169 = vld [vmem:[#allocation11 + $0x70] sm:$0xff]
        %v2170 = vld [vmem:[#allocation11 + $0x78] sm:$0xff]
        %v2171 = vlaneseq
        %v2172 = vshrl.u32 %v2171, 7
        %v2173 = vsub.s32 1, %v2172
        %v2174 = vrot.slane %v672, %v2173
        %2175 = vmatprep.subr.mxu0 0.0
        %2176 = vmatpush1.msra.mxu0 %v2155
        %2177 = vmatprep.subr.mxu0 0.0
        %2178 = vmatpush1.msra.mxu0 %v2156
        %2179 = vmatprep.subr.mxu0 0.0
        %2180 = vmatpush1.msra.mxu0 %v2157
        %2181 = vmatprep.subr.mxu0 0.0
        %2182 = vmatpush1.msra.mxu0 %v2158
        %2183 = vmatprep.subr.mxu0 0.0
        %2184 = vmatpush1.msra.mxu0 %v2159
        %2185 = vmatprep.subr.mxu0 0.0
        %2186 = vmatpush1.msra.mxu0 %v2160
        %2187 = vmatprep.subr.mxu0 0.0
        %2188 = vmatpush1.msra.mxu0 %v2161
        %2189 = vmatprep.subr.mxu0 0.0
        %2190 = vmatpush1.msra.mxu0 %v2162
        %2191 = vmatprep.subr.mxu0 0.0
        %2192 = vmatpush1.msra.mxu0 %v2163
        %2193 = vmatprep.subr.mxu0 0.0
        %2194 = vmatpush1.msra.mxu0 %v2164
        %2195 = vmatprep.subr.mxu0 0.0
        %2196 = vmatpush1.msra.mxu0 %v2165
        %2197 = vmatprep.subr.mxu0 0.0
        %2198 = vmatpush1.msra.mxu0 %v2166
        %2199 = vmatprep.subr.mxu0 0.0
        %2200 = vmatpush1.msra.mxu0 %v2167
        %2201 = vmatprep.subr.mxu0 0.0
        %2202 = vmatpush1.msra.mxu0 %v2168
        %2203 = vmatprep.subr.mxu0 0.0
        %2204 = vmatpush1.msra.mxu0 %v2169
        %2205 = vmatprep.subr.mxu0 0.0
        %2206 = vmatpush1.msra.mxu0 %v2170
        %2207 = vmatprep.subr.mxu0 0.0
        %2208 = vmatpush1.msra.mxu0 0.0
        %2209 = vmatprep.subr.mxu0 0.0
        %2210 = vmatpush1.msra.mxu0 0.0
        %2211 = vmatprep.subr.mxu0 0.0
        %2212 = vmatpush1.msra.mxu0 0.0
        %2213 = vmatprep.subr.mxu0 0.0
        %2214 = vmatpush1.msra.mxu0 0.0
        %2215 = vmatprep.subr.mxu0 0.0
        %2216 = vmatpush1.msra.mxu0 0.0
        %2217 = vmatprep.subr.mxu0 0.0
        %2218 = vmatpush1.msra.mxu0 0.0
        %2219 = vmatprep.subr.mxu0 0.0
        %2220 = vmatpush1.msra.mxu0 0.0
        %2221 = vmatprep.subr.mxu0 0.0
        %2222 = vmatpush1.msra.mxu0 0.0
        %2223 = vmatprep.subr.mxu0 0.0
        %2224 = vmatpush1.msra.mxu0 0.0
        %2225 = vmatprep.subr.mxu0 0.0
        %2226 = vmatpush1.msra.mxu0 0.0
        %2227 = vmatprep.subr.mxu0 0.0
        %2228 = vmatpush1.msra.mxu0 0.0
        %2229 = vmatprep.subr.mxu0 0.0
        %2230 = vmatpush1.msra.mxu0 0.0
        %2231 = vmatprep.subr.mxu0 0.0
        %2232 = vmatpush1.msra.mxu0 0.0
        %2233 = vmatprep.subr.mxu0 0.0
        %2234 = vmatpush1.msra.mxu0 0.0
        %2235 = vmatprep.subr.mxu0 0.0
        %2236 = vmatpush1.msra.mxu0 0.0
        %2237 = vmatprep.subr.mxu0 0.0
        %2238 = vmatpush1.msra.mxu0 0.0
        %2239 = vmatprep.mubr.f32.mxu0 0.0
        %2240 = vmatmul.mubr.f32.gmra.mrb[0].mxu0 %v2123
        %v2241 = vpop.f32.mrb[0].mxu0
        %v2242 = vadd.f32 %v2174, %v2241
        %v2243 = vpop.f32.mrb[0].mxu0
        %2244 = vmatprep.mubr.f32.mxu0 0.0
        %2245 = vmatmul.mubr.f32.gmra.mrb[0].mxu0 %v2124
        %v2246 = vpop.f32.mrb[0].mxu0
        %v2247 = vadd.f32 %v2174, %v2246
        %v2248 = vpop.f32.mrb[0].mxu0
        %2249 = vmatprep.mubr.f32.mxu0 0.0
        %2250 = vmatmul.mubr.f32.gmra.mrb[0].mxu0 %v2125
        %v2251 = vpop.f32.mrb[0].mxu0
        %v2252 = vadd.f32 %v2174, %v2251
        %v2253 = vpop.f32.mrb[0].mxu0
        %2254 = vmatprep.mubr.f32.mxu0 0.0
        %2255 = vmatmul.mubr.f32.gmra.mrb[0].mxu0 %v2126
        %v2256 = vpop.f32.mrb[0].mxu0
        %v2257 = vadd.f32 %v2174, %v2256
        %v2258 = vpop.f32.mrb[0].mxu0
        %2259 = vmatprep.mubr.f32.mxu0 0.0
        %2260 = vmatmul.mubr.f32.gmra.mrb[0].mxu0 %v2127
        %v2261 = vpop.f32.mrb[0].mxu0
        %v2262 = vadd.f32 %v2174, %v2261
        %v2263 = vpop.f32.mrb[0].mxu0
        %2264 = vmatprep.mubr.f32.mxu0 0.0
        %2265 = vmatmul.mubr.f32.gmra.mrb[0].mxu0 %v2128
        %v2266 = vpop.f32.mrb[0].mxu0
        %v2267 = vadd.f32 %v2174, %v2266
        %v2268 = vpop.f32.mrb[0].mxu0
        %2269 = vmatprep.mubr.f32.mxu0 0.0
        %2270 = vmatmul.mubr.f32.gmra.mrb[0].mxu0 %v2129
        %v2271 = vpop.f32.mrb[0].mxu0
        %v2272 = vadd.f32 %v2174, %v2271
        %v2273 = vpop.f32.mrb[0].mxu0
        %2274 = vmatprep.mubr.f32.mxu0 0.0
        %2275 = vmatmul.mubr.f32.gmra.mrb[0].mxu0 %v2130
        %v2276 = vpop.f32.mrb[0].mxu0
        %v2277 = vadd.f32 %v2174, %v2276
        %v2278 = vpop.f32.mrb[0].mxu0
        %2279 = vmatprep.mubr.f32.mxu0 0.0
        %2280 = vmatmul.mubr.f32.gmra.mrb[0].mxu0 %v2131
        %v2281 = vpop.f32.mrb[0].mxu0
        %v2282 = vadd.f32 %v2174, %v2281
        %v2283 = vpop.f32.mrb[0].mxu0
        %2284 = vmatprep.mubr.f32.mxu0 0.0
        %2285 = vmatmul.mubr.f32.gmra.mrb[0].mxu0 %v2132
        %v2286 = vpop.f32.mrb[0].mxu0
        %v2287 = vadd.f32 %v2174, %v2286
        %v2288 = vpop.f32.mrb[0].mxu0
        %2289 = vmatprep.mubr.f32.mxu0 0.0
        %2290 = vmatmul.mubr.f32.gmra.mrb[0].mxu0 %v2133
        %v2291 = vpop.f32.mrb[0].mxu0
        %v2292 = vadd.f32 %v2174, %v2291
        %v2293 = vpop.f32.mrb[0].mxu0
        %2294 = vmatprep.mubr.f32.mxu0 0.0
        %2295 = vmatmul.mubr.f32.gmra.mrb[0].mxu0 %v2134
        %v2296 = vpop.f32.mrb[0].mxu0
        %v2297 = vadd.f32 %v2174, %v2296
        %v2298 = vpop.f32.mrb[0].mxu0
        %2299 = vmatprep.mubr.f32.mxu0 0.0
        %2300 = vmatmul.mubr.f32.gmra.mrb[0].mxu0 %v2135
        %v2301 = vpop.f32.mrb[0].mxu0
        %v2302 = vadd.f32 %v2174, %v2301
        %v2303 = vpop.f32.mrb[0].mxu0
        %2304 = vmatprep.mubr.f32.mxu0 0.0
        %2305 = vmatmul.mubr.f32.gmra.mrb[0].mxu0 %v2136
        %v2306 = vpop.f32.mrb[0].mxu0
        %v2307 = vadd.f32 %v2174, %v2306
        %v2308 = vpop.f32.mrb[0].mxu0
        %2309 = vmatprep.mubr.f32.mxu0 0.0
        %2310 = vmatmul.mubr.f32.gmra.mrb[0].mxu0 %v2137
        %v2311 = vpop.f32.mrb[0].mxu0
        %v2312 = vadd.f32 %v2174, %v2311
        %v2313 = vpop.f32.mrb[0].mxu0
        %2314 = vmatprep.mubr.f32.mxu0 0.0
        %2315 = vmatmul.mubr.f32.gmra.mrb[0].mxu0 %v2138
        %v2316 = vpop.f32.mrb[0].mxu0
        %v2317 = vadd.f32 %v2174, %v2316
        %v2318 = vpop.f32.mrb[0].mxu0
        %2319 = vmatprep.mubr.f32.mxu0 0.0
        %2320 = vmatmul.mubr.f32.gmra.mrb[0].mxu0 %v2139
        %v2321 = vpop.f32.mrb[0].mxu0
        %v2322 = vadd.f32 %v2174, %v2321
        %v2323 = vpop.f32.mrb[0].mxu0
        %2324 = vmatprep.mubr.f32.mxu0 0.0
        %2325 = vmatmul.mubr.f32.gmra.mrb[0].mxu0 %v2140
        %v2326 = vpop.f32.mrb[0].mxu0
        %v2327 = vadd.f32 %v2174, %v2326
        %v2328 = vpop.f32.mrb[0].mxu0
        %2329 = vmatprep.mubr.f32.mxu0 0.0
        %2330 = vmatmul.mubr.f32.gmra.mrb[0].mxu0 %v2141
        %v2331 = vpop.f32.mrb[0].mxu0
        %v2332 = vadd.f32 %v2174, %v2331
        %v2333 = vpop.f32.mrb[0].mxu0
        %2334 = vmatprep.mubr.f32.mxu0 0.0
        %2335 = vmatmul.mubr.f32.gmra.mrb[0].mxu0 %v2142
        %v2336 = vpop.f32.mrb[0].mxu0
        %v2337 = vadd.f32 %v2174, %v2336
        %v2338 = vpop.f32.mrb[0].mxu0
        %2339 = vmatprep.mubr.f32.mxu0 0.0
        %2340 = vmatmul.mubr.f32.gmra.mrb[0].mxu0 %v2143
        %v2341 = vpop.f32.mrb[0].mxu0
        %v2342 = vadd.f32 %v2174, %v2341
        %v2343 = vpop.f32.mrb[0].mxu0
        %2344 = vmatprep.mubr.f32.mxu0 0.0
        %2345 = vmatmul.mubr.f32.gmra.mrb[0].mxu0 %v2144
        %v2346 = vpop.f32.mrb[0].mxu0
        %v2347 = vadd.f32 %v2174, %v2346
        %v2348 = vpop.f32.mrb[0].mxu0
        %2349 = vmatprep.mubr.f32.mxu0 0.0
        %2350 = vmatmul.mubr.f32.gmra.mrb[0].mxu0 %v2145
        %v2351 = vpop.f32.mrb[0].mxu0
        %v2352 = vadd.f32 %v2174, %v2351
        %v2353 = vpop.f32.mrb[0].mxu0
        %2354 = vmatprep.mubr.f32.mxu0 0.0
        %2355 = vmatmul.mubr.f32.gmra.mrb[0].mxu0 %v2146
        %v2356 = vpop.f32.mrb[0].mxu0
        %v2357 = vadd.f32 %v2174, %v2356
        %v2358 = vpop.f32.mrb[0].mxu0
        %2359 = vmatprep.mubr.f32.mxu0 0.0
        %2360 = vmatmul.mubr.f32.gmra.mrb[0].mxu0 %v2147
        %v2361 = vpop.f32.mrb[0].mxu0
        %v2362 = vadd.f32 %v2174, %v2361
        %v2363 = vpop.f32.mrb[0].mxu0
        %2364 = vmatprep.mubr.f32.mxu0 0.0
        %2365 = vmatmul.mubr.f32.gmra.mrb[0].mxu0 %v2148
        %v2366 = vpop.f32.mrb[0].mxu0
        %v2367 = vadd.f32 %v2174, %v2366
        %v2368 = vpop.f32.mrb[0].mxu0
        %2369 = vmatprep.mubr.f32.mxu0 0.0
        %2370 = vmatmul.mubr.f32.gmra.mrb[0].mxu0 %v2149
        %v2371 = vpop.f32.mrb[0].mxu0
        %v2372 = vadd.f32 %v2174, %v2371
        %v2373 = vpop.f32.mrb[0].mxu0
        %2374 = vmatprep.mubr.f32.mxu0 0.0
        %2375 = vmatmul.mubr.f32.gmra.mrb[0].mxu0 %v2150
        %v2376 = vpop.f32.mrb[0].mxu0
        %v2377 = vadd.f32 %v2174, %v2376
        %v2378 = vpop.f32.mrb[0].mxu0
        %2379 = vmatprep.mubr.f32.mxu0 0.0
        %2380 = vmatmul.mubr.f32.gmra.mrb[0].mxu0 %v2151
        %v2381 = vpop.f32.mrb[0].mxu0
        %v2382 = vadd.f32 %v2174, %v2381
        %v2383 = vpop.f32.mrb[0].mxu0
        %2384 = vmatprep.mubr.f32.mxu0 0.0
        %2385 = vmatmul.mubr.f32.gmra.mrb[0].mxu0 %v2152
        %v2386 = vpop.f32.mrb[0].mxu0
        %v2387 = vadd.f32 %v2174, %v2386
        %v2388 = vpop.f32.mrb[0].mxu0
        %2389 = vmatprep.mubr.f32.mxu0 0.0
        %2390 = vmatmul.mubr.f32.gmra.mrb[0].mxu0 %v2153
        %v2391 = vpop.f32.mrb[0].mxu0
        %v2392 = vadd.f32 %v2174, %v2391
        %v2393 = vpop.f32.mrb[0].mxu0
        %2394 = vmatprep.mubr.f32.mxu0 0.0
        %2395 = vmatmul.mubr.f32.gmra.mrb[0].mxu0 %v2154
        %v2396 = vpop.f32.mrb[0].mxu0
        %v2397 = vadd.f32 %v2174, %v2396
        %v2398 = vpop.f32.mrb[0].mxu0
        %2399 = vdwg.mxu0
        %v2400 = vadd.f32 %v2242, %v640
        %v2401 = vadd.f32 %v2247, %v641
        %v2402 = vadd.f32 %v2252, %v642
        %v2403 = vadd.f32 %v2257, %v643
        %v2404 = vadd.f32 %v2262, %v644
        %v2405 = vadd.f32 %v2267, %v645
        %v2406 = vadd.f32 %v2272, %v646
        %v2407 = vadd.f32 %v2277, %v647
        %v2408 = vadd.f32 %v2282, %v648
        %v2409 = vadd.f32 %v2287, %v649
        %v2410 = vadd.f32 %v2292, %v650
        %v2411 = vadd.f32 %v2297, %v651
        %v2412 = vadd.f32 %v2302, %v652
        %v2413 = vadd.f32 %v2307, %v653
        %v2414 = vadd.f32 %v2312, %v654
        %v2415 = vadd.f32 %v2317, %v655
        %v2416 = vadd.f32 %v2322, %v656
        %v2417 = vadd.f32 %v2327, %v657
        %v2418 = vadd.f32 %v2332, %v658
        %v2419 = vadd.f32 %v2337, %v659
        %v2420 = vadd.f32 %v2342, %v660
        %v2421 = vadd.f32 %v2347, %v661
        %v2422 = vadd.f32 %v2352, %v662
        %v2423 = vadd.f32 %v2357, %v663
        %v2424 = vadd.f32 %v2362, %v664
        %v2425 = vadd.f32 %v2367, %v665
        %v2426 = vadd.f32 %v2372, %v666
        %v2427 = vadd.f32 %v2377, %v667
        %v2428 = vadd.f32 %v2382, %v668
        %v2429 = vadd.f32 %v2387, %v669
        %v2430 = vadd.f32 %v2392, %v670
        %v2431 = vadd.f32 %v2397, %v671
        %v2432 = vld [vmem:[#allocation13] sm:$0xff]
        %v2433 = vld [vmem:[#allocation13 + $0x8] sm:$0xff]
        %v2434 = vld [vmem:[#allocation13 + $0x10] sm:$0xff]
        %v2435 = vld [vmem:[#allocation13 + $0x18] sm:$0xff]
        %v2436 = vld [vmem:[#allocation13 + $0x20] sm:$0xff]
        %v2437 = vld [vmem:[#allocation13 + $0x28] sm:$0xff]
        %v2438 = vld [vmem:[#allocation13 + $0x30] sm:$0xff]
        %v2439 = vld [vmem:[#allocation13 + $0x38] sm:$0xff]
        %v2440 = vld [vmem:[#allocation13 + $0x40] sm:$0xff]
        %v2441 = vld [vmem:[#allocation13 + $0x48] sm:$0xff]
        %v2442 = vld [vmem:[#allocation13 + $0x50] sm:$0xff]
        %v2443 = vld [vmem:[#allocation13 + $0x58] sm:$0xff]
        %v2444 = vld [vmem:[#allocation13 + $0x60] sm:$0xff]
        %v2445 = vld [vmem:[#allocation13 + $0x68] sm:$0xff]
        %v2446 = vld [vmem:[#allocation13 + $0x70] sm:$0xff]
        %v2447 = vld [vmem:[#allocation13 + $0x78] sm:$0xff]
        %v2448 = vld [vmem:[#allocation13 + $0x80] sm:$0xff]
        %v2449 = vld [vmem:[#allocation13 + $0x88] sm:$0xff]
        %v2450 = vld [vmem:[#allocation13 + $0x90] sm:$0xff]
        %v2451 = vld [vmem:[#allocation13 + $0x98] sm:$0xff]
        %v2452 = vld [vmem:[#allocation13 + $0xa0] sm:$0xff]
        %v2453 = vld [vmem:[#allocation13 + $0xa8] sm:$0xff]
        %v2454 = vld [vmem:[#allocation13 + $0xb0] sm:$0xff]
        %v2455 = vld [vmem:[#allocation13 + $0xb8] sm:$0xff]
        %v2456 = vld [vmem:[#allocation13 + $0xc0] sm:$0xff]
        %v2457 = vld [vmem:[#allocation13 + $0xc8] sm:$0xff]
        %v2458 = vld [vmem:[#allocation13 + $0xd0] sm:$0xff]
        %v2459 = vld [vmem:[#allocation13 + $0xd8] sm:$0xff]
        %v2460 = vld [vmem:[#allocation13 + $0xe0] sm:$0xff]
        %v2461 = vld [vmem:[#allocation13 + $0xe8] sm:$0xff]
        %v2462 = vld [vmem:[#allocation13 + $0xf0] sm:$0xff]
        %v2463 = vld [vmem:[#allocation13 + $0xf8] sm:$0xff]
        %v2464 = vld [vmem:[#allocation13 + $0x100] sm:$0xff]
        %v2465 = vld [vmem:[#allocation13 + $0x108] sm:$0xff]
        %v2466 = vld [vmem:[#allocation13 + $0x110] sm:$0xff]
        %v2467 = vld [vmem:[#allocation13 + $0x118] sm:$0xff]
        %v2468 = vld [vmem:[#allocation13 + $0x120] sm:$0xff]
        %v2469 = vld [vmem:[#allocation13 + $0x128] sm:$0xff]
        %v2470 = vld [vmem:[#allocation13 + $0x130] sm:$0xff]
        %v2471 = vld [vmem:[#allocation13 + $0x138] sm:$0xff]
        %v2472 = vld [vmem:[#allocation13 + $0x140] sm:$0xff]
        %v2473 = vld [vmem:[#allocation13 + $0x148] sm:$0xff]
        %v2474 = vld [vmem:[#allocation13 + $0x150] sm:$0xff]
        %v2475 = vld [vmem:[#allocation13 + $0x158] sm:$0xff]
        %v2476 = vld [vmem:[#allocation13 + $0x160] sm:$0xff]
        %v2477 = vld [vmem:[#allocation13 + $0x168] sm:$0xff]
        %v2478 = vld [vmem:[#allocation13 + $0x170] sm:$0xff]
        %v2479 = vld [vmem:[#allocation13 + $0x178] sm:$0xff]
        %v2480 = vld [vmem:[%s8] sm:$0x7]
        %v2482 = vlaneseq
        %v2483 = vshrl.u32 %v2482, 7
        %v2484 = vsub.s32 0, %v2483
        %v2485 = vrot.slane %v2480, %v2484
        %v2486 = vlaneseq
        %v2487 = vshrl.u32 %v2486, 7
        %v2488 = vsub.s32 1, %v2487
        %v2489 = vrot.slane %v2480, %v2488
        %v2490 = vlaneseq
        %v2491 = vshrl.u32 %v2490, 7
        %v2492 = vsub.s32 2, %v2491
        %v2493 = vrot.slane %v2480, %v2492
        %2497 = vmatprep.subr.mxu0 %v2433
        %2498 = vmatpush1.msra.mxu0 %v2432
        %2499 = vmatprep.subr.mxu0 %v2436
        %2500 = vmatpush1.msra.mxu0 %v2435
        %2501 = vmatprep.subr.mxu0 %v2439
        %2502 = vmatpush1.msra.mxu0 %v2438
        %2503 = vmatprep.subr.mxu0 %v2442
        %2504 = vmatpush1.msra.mxu0 %v2441
        %2505 = vmatprep.subr.mxu0 %v2445
        %2506 = vmatpush1.msra.mxu0 %v2444
        %2507 = vmatprep.subr.mxu0 %v2448
        %2508 = vmatpush1.msra.mxu0 %v2447
        %2509 = vmatprep.subr.mxu0 %v2451
        %2510 = vmatpush1.msra.mxu0 %v2450
        %2511 = vmatprep.subr.mxu0 %v2454
        %2512 = vmatpush1.msra.mxu0 %v2453
        %2513 = vmatprep.subr.mxu0 %v2457
        %2514 = vmatpush1.msra.mxu0 %v2456
        %2515 = vmatprep.subr.mxu0 %v2460
        %2516 = vmatpush1.msra.mxu0 %v2459
        %2517 = vmatprep.subr.mxu0 %v2463
        %2518 = vmatpush1.msra.mxu0 %v2462
        %2519 = vmatprep.subr.mxu0 %v2466
        %2520 = vmatpush1.msra.mxu0 %v2465
        %2521 = vmatprep.subr.mxu0 %v2469
        %2522 = vmatpush1.msra.mxu0 %v2468
        %2523 = vmatprep.subr.mxu0 %v2472
        %2524 = vmatpush1.msra.mxu0 %v2471
        %2525 = vmatprep.subr.mxu0 %v2475
        %2526 = vmatpush1.msra.mxu0 %v2474
        %2527 = vmatprep.subr.mxu0 %v2478
        %2528 = vmatpush1.msra.mxu0 %v2477
        %2529 = vmatprep.subr.mxu0 0.0
        %2530 = vmatpush1.msra.mxu0 0.0
        %2531 = vmatprep.subr.mxu0 0.0
        %2532 = vmatpush1.msra.mxu0 0.0
        %2533 = vmatprep.subr.mxu0 0.0
        %2534 = vmatpush1.msra.mxu0 0.0
        %2535 = vmatprep.subr.mxu0 0.0
        %2536 = vmatpush1.msra.mxu0 0.0
        %2537 = vmatprep.subr.mxu0 0.0
        %2538 = vmatpush1.msra.mxu0 0.0
        %2539 = vmatprep.subr.mxu0 0.0
        %2540 = vmatpush1.msra.mxu0 0.0
        %2541 = vmatprep.subr.mxu0 0.0
        %2542 = vmatpush1.msra.mxu0 0.0
        %2543 = vmatprep.subr.mxu0 0.0
        %2544 = vmatpush1.msra.mxu0 0.0
        %2545 = vmatprep.subr.mxu0 0.0
        %2546 = vmatpush1.msra.mxu0 0.0
        %2547 = vmatprep.subr.mxu0 0.0
        %2548 = vmatpush1.msra.mxu0 0.0
        %2549 = vmatprep.subr.mxu0 0.0
        %2550 = vmatpush1.msra.mxu0 0.0
        %2551 = vmatprep.subr.mxu0 0.0
        %2552 = vmatpush1.msra.mxu0 0.0
        %2553 = vmatprep.subr.mxu0 0.0
        %2554 = vmatpush1.msra.mxu0 0.0
        %2555 = vmatprep.subr.mxu0 0.0
        %2556 = vmatpush1.msra.mxu0 0.0
        %2557 = vmatprep.subr.mxu0 0.0
        %2558 = vmatpush1.msra.mxu0 0.0
        %2559 = vmatprep.subr.mxu0 0.0
        %2560 = vmatpush1.msra.mxu0 0.0
        %2561 = vmatprep.mubr.f32.mxu0 0.0
        %2562 = vmatmul.mubr.f32.gmra.mrb[0].mxu0 %v2400
        %v2563 = vpop.f32.mrb[0].mxu0
        %v2564 = vadd.f32 %v2485, %v2563
        %v2565 = vpop.f32.mrb[0].mxu0
        %v2566 = vadd.f32 %v2489, %v2565
        %2567 = vmatprep.mubr.f32.mxu0 0.0
        %2568 = vmatmul.mubr.f32.gmra.mrb[0].mxu0 %v2401
        %v2569 = vpop.f32.mrb[0].mxu0
        %v2570 = vadd.f32 %v2485, %v2569
        %v2571 = vpop.f32.mrb[0].mxu0
        %v2572 = vadd.f32 %v2489, %v2571
        %2573 = vmatprep.mubr.f32.mxu0 0.0
        %2574 = vmatmul.mubr.f32.gmra.mrb[0].mxu0 %v2402
        %v2575 = vpop.f32.mrb[0].mxu0
        %v2576 = vadd.f32 %v2485, %v2575
        %v2577 = vpop.f32.mrb[0].mxu0
        %v2578 = vadd.f32 %v2489, %v2577
        %2579 = vmatprep.mubr.f32.mxu0 0.0
        %2580 = vmatmul.mubr.f32.gmra.mrb[0].mxu0 %v2403
        %v2581 = vpop.f32.mrb[0].mxu0
        %v2582 = vadd.f32 %v2485, %v2581
        %v2583 = vpop.f32.mrb[0].mxu0
        %v2584 = vadd.f32 %v2489, %v2583
        %2585 = vmatprep.mubr.f32.mxu0 0.0
        %2586 = vmatmul.mubr.f32.gmra.mrb[0].mxu0 %v2404
        %v2587 = vpop.f32.mrb[0].mxu0
        %v2588 = vadd.f32 %v2485, %v2587
        %v2589 = vpop.f32.mrb[0].mxu0
        %v2590 = vadd.f32 %v2489, %v2589
        %2591 = vmatprep.mubr.f32.mxu0 0.0
        %2592 = vmatmul.mubr.f32.gmra.mrb[0].mxu0 %v2405
        %v2593 = vpop.f32.mrb[0].mxu0
        %v2594 = vadd.f32 %v2485, %v2593
        %v2595 = vpop.f32.mrb[0].mxu0
        %v2596 = vadd.f32 %v2489, %v2595
        %2597 = vmatprep.mubr.f32.mxu0 0.0
        %2598 = vmatmul.mubr.f32.gmra.mrb[0].mxu0 %v2406
        %v2599 = vpop.f32.mrb[0].mxu0
        %v2600 = vadd.f32 %v2485, %v2599
        %v2601 = vpop.f32.mrb[0].mxu0
        %v2602 = vadd.f32 %v2489, %v2601
        %2603 = vmatprep.mubr.f32.mxu0 0.0
        %2604 = vmatmul.mubr.f32.gmra.mrb[0].mxu0 %v2407
        %v2605 = vpop.f32.mrb[0].mxu0
        %v2606 = vadd.f32 %v2485, %v2605
        %v2607 = vpop.f32.mrb[0].mxu0
        %v2608 = vadd.f32 %v2489, %v2607
        %2609 = vmatprep.mubr.f32.mxu0 0.0
        %2610 = vmatmul.mubr.f32.gmra.mrb[0].mxu0 %v2408
        %v2611 = vpop.f32.mrb[0].mxu0
        %v2612 = vadd.f32 %v2485, %v2611
        %v2613 = vpop.f32.mrb[0].mxu0
        %v2614 = vadd.f32 %v2489, %v2613
        %2615 = vmatprep.mubr.f32.mxu0 0.0
        %2616 = vmatmul.mubr.f32.gmra.mrb[0].mxu0 %v2409
        %v2617 = vpop.f32.mrb[0].mxu0
        %v2618 = vadd.f32 %v2485, %v2617
        %v2619 = vpop.f32.mrb[0].mxu0
        %v2620 = vadd.f32 %v2489, %v2619
        %2621 = vmatprep.mubr.f32.mxu0 0.0
        %2622 = vmatmul.mubr.f32.gmra.mrb[0].mxu0 %v2410
        %v2623 = vpop.f32.mrb[0].mxu0
        %v2624 = vadd.f32 %v2485, %v2623
        %v2625 = vpop.f32.mrb[0].mxu0
        %v2626 = vadd.f32 %v2489, %v2625
        %2627 = vmatprep.mubr.f32.mxu0 0.0
        %2628 = vmatmul.mubr.f32.gmra.mrb[0].mxu0 %v2411
        %v2629 = vpop.f32.mrb[0].mxu0
        %v2630 = vadd.f32 %v2485, %v2629
        %v2631 = vpop.f32.mrb[0].mxu0
        %v2632 = vadd.f32 %v2489, %v2631
        %2633 = vmatprep.mubr.f32.mxu0 0.0
        %2634 = vmatmul.mubr.f32.gmra.mrb[0].mxu0 %v2412
        %v2635 = vpop.f32.mrb[0].mxu0
        %v2636 = vadd.f32 %v2485, %v2635
        %v2637 = vpop.f32.mrb[0].mxu0
        %v2638 = vadd.f32 %v2489, %v2637
        %2639 = vmatprep.mubr.f32.mxu0 0.0
        %2640 = vmatmul.mubr.f32.gmra.mrb[0].mxu0 %v2413
        %v2641 = vpop.f32.mrb[0].mxu0
        %v2642 = vadd.f32 %v2485, %v2641
        %v2643 = vpop.f32.mrb[0].mxu0
        %v2644 = vadd.f32 %v2489, %v2643
        %2645 = vmatprep.mubr.f32.mxu0 0.0
        %2646 = vmatmul.mubr.f32.gmra.mrb[0].mxu0 %v2414
        %v2647 = vpop.f32.mrb[0].mxu0
        %v2648 = vadd.f32 %v2485, %v2647
        %v2649 = vpop.f32.mrb[0].mxu0
        %v2650 = vadd.f32 %v2489, %v2649
        %2651 = vmatprep.mubr.f32.mxu0 0.0
        %2652 = vmatmul.mubr.f32.gmra.mrb[0].mxu0 %v2415
        %v2653 = vpop.f32.mrb[0].mxu0
        %v2654 = vadd.f32 %v2485, %v2653
        %v2655 = vpop.f32.mrb[0].mxu0
        %v2656 = vadd.f32 %v2489, %v2655
        %2657 = vmatprep.mubr.f32.mxu0 0.0
        %2658 = vmatmul.mubr.f32.gmra.mrb[0].mxu0 %v2416
        %v2659 = vpop.f32.mrb[0].mxu0
        %v2660 = vadd.f32 %v2485, %v2659
        %v2661 = vpop.f32.mrb[0].mxu0
        %v2662 = vadd.f32 %v2489, %v2661
        %2663 = vmatprep.mubr.f32.mxu0 0.0
        %2664 = vmatmul.mubr.f32.gmra.mrb[0].mxu0 %v2417
        %v2665 = vpop.f32.mrb[0].mxu0
        %v2666 = vadd.f32 %v2485, %v2665
        %v2667 = vpop.f32.mrb[0].mxu0
        %v2668 = vadd.f32 %v2489, %v2667
        %2669 = vmatprep.mubr.f32.mxu0 0.0
        %2670 = vmatmul.mubr.f32.gmra.mrb[0].mxu0 %v2418
        %v2671 = vpop.f32.mrb[0].mxu0
        %v2672 = vadd.f32 %v2485, %v2671
        %v2673 = vpop.f32.mrb[0].mxu0
        %v2674 = vadd.f32 %v2489, %v2673
        %2675 = vmatprep.mubr.f32.mxu0 0.0
        %2676 = vmatmul.mubr.f32.gmra.mrb[0].mxu0 %v2419
        %v2677 = vpop.f32.mrb[0].mxu0
        %v2678 = vadd.f32 %v2485, %v2677
        %v2679 = vpop.f32.mrb[0].mxu0
        %v2680 = vadd.f32 %v2489, %v2679
        %2681 = vmatprep.mubr.f32.mxu0 0.0
        %2682 = vmatmul.mubr.f32.gmra.mrb[0].mxu0 %v2420
        %v2683 = vpop.f32.mrb[0].mxu0
        %v2684 = vadd.f32 %v2485, %v2683
        %v2685 = vpop.f32.mrb[0].mxu0
        %v2686 = vadd.f32 %v2489, %v2685
        %2687 = vmatprep.mubr.f32.mxu0 0.0
        %2688 = vmatmul.mubr.f32.gmra.mrb[0].mxu0 %v2421
        %v2689 = vpop.f32.mrb[0].mxu0
        %v2690 = vadd.f32 %v2485, %v2689
        %v2691 = vpop.f32.mrb[0].mxu0
        %v2692 = vadd.f32 %v2489, %v2691
        %2693 = vmatprep.mubr.f32.mxu0 0.0
        %2694 = vmatmul.mubr.f32.gmra.mrb[0].mxu0 %v2422
        %v2695 = vpop.f32.mrb[0].mxu0
        %v2696 = vadd.f32 %v2485, %v2695
        %v2697 = vpop.f32.mrb[0].mxu0
        %v2698 = vadd.f32 %v2489, %v2697
        %2699 = vmatprep.mubr.f32.mxu0 0.0
        %2700 = vmatmul.mubr.f32.gmra.mrb[0].mxu0 %v2423
        %v2701 = vpop.f32.mrb[0].mxu0
        %v2702 = vadd.f32 %v2485, %v2701
        %v2703 = vpop.f32.mrb[0].mxu0
        %v2704 = vadd.f32 %v2489, %v2703
        %2705 = vmatprep.mubr.f32.mxu0 0.0
        %2706 = vmatmul.mubr.f32.gmra.mrb[0].mxu0 %v2424
        %v2707 = vpop.f32.mrb[0].mxu0
        %v2708 = vadd.f32 %v2485, %v2707
        %v2709 = vpop.f32.mrb[0].mxu0
        %v2710 = vadd.f32 %v2489, %v2709
        %2711 = vmatprep.mubr.f32.mxu0 0.0
        %2712 = vmatmul.mubr.f32.gmra.mrb[0].mxu0 %v2425
        %v2713 = vpop.f32.mrb[0].mxu0
        %v2714 = vadd.f32 %v2485, %v2713
        %v2715 = vpop.f32.mrb[0].mxu0
        %v2716 = vadd.f32 %v2489, %v2715
        %2717 = vmatprep.mubr.f32.mxu0 0.0
        %2718 = vmatmul.mubr.f32.gmra.mrb[0].mxu0 %v2426
        %v2719 = vpop.f32.mrb[0].mxu0
        %v2720 = vadd.f32 %v2485, %v2719
        %v2721 = vpop.f32.mrb[0].mxu0
        %v2722 = vadd.f32 %v2489, %v2721
        %2723 = vmatprep.mubr.f32.mxu0 0.0
        %2724 = vmatmul.mubr.f32.gmra.mrb[0].mxu0 %v2427
        %v2725 = vpop.f32.mrb[0].mxu0
        %v2726 = vadd.f32 %v2485, %v2725
        %v2727 = vpop.f32.mrb[0].mxu0
        %v2728 = vadd.f32 %v2489, %v2727
        %2729 = vmatprep.mubr.f32.mxu0 0.0
        %2730 = vmatmul.mubr.f32.gmra.mrb[0].mxu0 %v2428
        %v2731 = vpop.f32.mrb[0].mxu0
        %v2732 = vadd.f32 %v2485, %v2731
        %v2733 = vpop.f32.mrb[0].mxu0
        %v2734 = vadd.f32 %v2489, %v2733
        %2735 = vmatprep.mubr.f32.mxu0 0.0
        %2736 = vmatmul.mubr.f32.gmra.mrb[0].mxu0 %v2429
        %v2737 = vpop.f32.mrb[0].mxu0
        %v2738 = vadd.f32 %v2485, %v2737
        %v2739 = vpop.f32.mrb[0].mxu0
        %v2740 = vadd.f32 %v2489, %v2739
        %2741 = vmatprep.mubr.f32.mxu0 0.0
        %2742 = vmatmul.mubr.f32.gmra.mrb[0].mxu0 %v2430
        %v2743 = vpop.f32.mrb[0].mxu0
        %v2744 = vadd.f32 %v2485, %v2743
        %v2745 = vpop.f32.mrb[0].mxu0
        %v2746 = vadd.f32 %v2489, %v2745
        %2747 = vmatprep.mubr.f32.mxu0 0.0
        %2748 = vmatmul.mubr.f32.gmra.mrb[0].mxu0 %v2431
        %v2749 = vpop.f32.mrb[0].mxu0
        %v2750 = vadd.f32 %v2485, %v2749
        %v2751 = vpop.f32.mrb[0].mxu0
        %v2752 = vadd.f32 %v2489, %v2751
        %2753 = vdwg.mxu0
        %2754 = vmatprep.subr.mxu0 0.0
        %2755 = vmatpush1.msra.mxu0 %v2434
        %2756 = vmatprep.subr.mxu0 0.0
        %2757 = vmatpush1.msra.mxu0 %v2437
        %2758 = vmatprep.subr.mxu0 0.0
        %2759 = vmatpush1.msra.mxu0 %v2440
        %2760 = vmatprep.subr.mxu0 0.0
        %2761 = vmatpush1.msra.mxu0 %v2443
        %2762 = vmatprep.subr.mxu0 0.0
        %2763 = vmatpush1.msra.mxu0 %v2446
        %2764 = vmatprep.subr.mxu0 0.0
        %2765 = vmatpush1.msra.mxu0 %v2449
        %2766 = vmatprep.subr.mxu0 0.0
        %2767 = vmatpush1.msra.mxu0 %v2452
        %2768 = vmatprep.subr.mxu0 0.0
        %2769 = vmatpush1.msra.mxu0 %v2455
        %2770 = vmatprep.subr.mxu0 0.0
        %2771 = vmatpush1.msra.mxu0 %v2458
        %2772 = vmatprep.subr.mxu0 0.0
        %2773 = vmatpush1.msra.mxu0 %v2461
        %2774 = vmatprep.subr.mxu0 0.0
        %2775 = vmatpush1.msra.mxu0 %v2464
        %2776 = vmatprep.subr.mxu0 0.0
        %2777 = vmatpush1.msra.mxu0 %v2467
        %2778 = vmatprep.subr.mxu0 0.0
        %2779 = vmatpush1.msra.mxu0 %v2470
        %2780 = vmatprep.subr.mxu0 0.0
        %2781 = vmatpush1.msra.mxu0 %v2473
        %2782 = vmatprep.subr.mxu0 0.0
        %2783 = vmatpush1.msra.mxu0 %v2476
        %2784 = vmatprep.subr.mxu0 0.0
        %2785 = vmatpush1.msra.mxu0 %v2479
        %2786 = vmatprep.subr.mxu0 0.0
        %2787 = vmatpush1.msra.mxu0 0.0
        %2788 = vmatprep.subr.mxu0 0.0
        %2789 = vmatpush1.msra.mxu0 0.0
        %2790 = vmatprep.subr.mxu0 0.0
        %2791 = vmatpush1.msra.mxu0 0.0
        %2792 = vmatprep.subr.mxu0 0.0
        %2793 = vmatpush1.msra.mxu0 0.0
        %2794 = vmatprep.subr.mxu0 0.0
        %2795 = vmatpush1.msra.mxu0 0.0
        %2796 = vmatprep.subr.mxu0 0.0
        %2797 = vmatpush1.msra.mxu0 0.0
        %2798 = vmatprep.subr.mxu0 0.0
        %2799 = vmatpush1.msra.mxu0 0.0
        %2800 = vmatprep.subr.mxu0 0.0
        %2801 = vmatpush1.msra.mxu0 0.0
        %2802 = vmatprep.subr.mxu0 0.0
        %2803 = vmatpush1.msra.mxu0 0.0
        %2804 = vmatprep.subr.mxu0 0.0
        %2805 = vmatpush1.msra.mxu0 0.0
        %2806 = vmatprep.subr.mxu0 0.0
        %2807 = vmatpush1.msra.mxu0 0.0
        %2808 = vmatprep.subr.mxu0 0.0
        %2809 = vmatpush1.msra.mxu0 0.0
        %2810 = vmatprep.subr.mxu0 0.0
        %2811 = vmatpush1.msra.mxu0 0.0
        %2812 = vmatprep.subr.mxu0 0.0
        %2813 = vmatpush1.msra.mxu0 0.0
        %2814 = vmatprep.subr.mxu0 0.0
        %2815 = vmatpush1.msra.mxu0 0.0
        %2816 = vmatprep.subr.mxu0 0.0
        %2817 = vmatpush1.msra.mxu0 0.0
        %2818 = vmatprep.mubr.f32.mxu0 0.0
        %2819 = vmatmul.mubr.f32.gmra.mrb[0].mxu0 %v2400
        %v2820 = vpop.f32.mrb[0].mxu0
        %v2821 = vadd.f32 %v2493, %v2820
        %v2822 = vpop.f32.mrb[0].mxu0
        %2823 = vmatprep.mubr.f32.mxu0 0.0
        %2824 = vmatmul.mubr.f32.gmra.mrb[0].mxu0 %v2401
        %v2825 = vpop.f32.mrb[0].mxu0
        %v2826 = vadd.f32 %v2493, %v2825
        %v2827 = vpop.f32.mrb[0].mxu0
        %2828 = vmatprep.mubr.f32.mxu0 0.0
        %2829 = vmatmul.mubr.f32.gmra.mrb[0].mxu0 %v2402
        %v2830 = vpop.f32.mrb[0].mxu0
        %v2831 = vadd.f32 %v2493, %v2830
        %v2832 = vpop.f32.mrb[0].mxu0
        %2833 = vmatprep.mubr.f32.mxu0 0.0
        %2834 = vmatmul.mubr.f32.gmra.mrb[0].mxu0 %v2403
        %v2835 = vpop.f32.mrb[0].mxu0
        %v2836 = vadd.f32 %v2493, %v2835
        %v2837 = vpop.f32.mrb[0].mxu0
        %2838 = vmatprep.mubr.f32.mxu0 0.0
        %2839 = vmatmul.mubr.f32.gmra.mrb[0].mxu0 %v2404
        %v2840 = vpop.f32.mrb[0].mxu0
        %v2841 = vadd.f32 %v2493, %v2840
        %v2842 = vpop.f32.mrb[0].mxu0
        %2843 = vmatprep.mubr.f32.mxu0 0.0
        %2844 = vmatmul.mubr.f32.gmra.mrb[0].mxu0 %v2405
        %v2845 = vpop.f32.mrb[0].mxu0
        %v2846 = vadd.f32 %v2493, %v2845
        %v2847 = vpop.f32.mrb[0].mxu0
        %2848 = vmatprep.mubr.f32.mxu0 0.0
        %2849 = vmatmul.mubr.f32.gmra.mrb[0].mxu0 %v2406
        %v2850 = vpop.f32.mrb[0].mxu0
        %v2851 = vadd.f32 %v2493, %v2850
        %v2852 = vpop.f32.mrb[0].mxu0
        %2853 = vmatprep.mubr.f32.mxu0 0.0
        %2854 = vmatmul.mubr.f32.gmra.mrb[0].mxu0 %v2407
        %v2855 = vpop.f32.mrb[0].mxu0
        %v2856 = vadd.f32 %v2493, %v2855
        %v2857 = vpop.f32.mrb[0].mxu0
        %2858 = vmatprep.mubr.f32.mxu0 0.0
        %2859 = vmatmul.mubr.f32.gmra.mrb[0].mxu0 %v2408
        %v2860 = vpop.f32.mrb[0].mxu0
        %v2861 = vadd.f32 %v2493, %v2860
        %v2862 = vpop.f32.mrb[0].mxu0
        %2863 = vmatprep.mubr.f32.mxu0 0.0
        %2864 = vmatmul.mubr.f32.gmra.mrb[0].mxu0 %v2409
        %v2865 = vpop.f32.mrb[0].mxu0
        %v2866 = vadd.f32 %v2493, %v2865
        %v2867 = vpop.f32.mrb[0].mxu0
        %2868 = vmatprep.mubr.f32.mxu0 0.0
        %2869 = vmatmul.mubr.f32.gmra.mrb[0].mxu0 %v2410
        %v2870 = vpop.f32.mrb[0].mxu0
        %v2871 = vadd.f32 %v2493, %v2870
        %v2872 = vpop.f32.mrb[0].mxu0
        %2873 = vmatprep.mubr.f32.mxu0 0.0
        %2874 = vmatmul.mubr.f32.gmra.mrb[0].mxu0 %v2411
        %v2875 = vpop.f32.mrb[0].mxu0
        %v2876 = vadd.f32 %v2493, %v2875
        %v2877 = vpop.f32.mrb[0].mxu0
        %2878 = vmatprep.mubr.f32.mxu0 0.0
        %2879 = vmatmul.mubr.f32.gmra.mrb[0].mxu0 %v2412
        %v2880 = vpop.f32.mrb[0].mxu0
        %v2881 = vadd.f32 %v2493, %v2880
        %v2882 = vpop.f32.mrb[0].mxu0
        %2883 = vmatprep.mubr.f32.mxu0 0.0
        %2884 = vmatmul.mubr.f32.gmra.mrb[0].mxu0 %v2413
        %v2885 = vpop.f32.mrb[0].mxu0
        %v2886 = vadd.f32 %v2493, %v2885
        %v2887 = vpop.f32.mrb[0].mxu0
        %2888 = vmatprep.mubr.f32.mxu0 0.0
        %2889 = vmatmul.mubr.f32.gmra.mrb[0].mxu0 %v2414
        %v2890 = vpop.f32.mrb[0].mxu0
        %v2891 = vadd.f32 %v2493, %v2890
        %v2892 = vpop.f32.mrb[0].mxu0
        %2893 = vmatprep.mubr.f32.mxu0 0.0
        %2894 = vmatmul.mubr.f32.gmra.mrb[0].mxu0 %v2415
        %v2895 = vpop.f32.mrb[0].mxu0
        %v2896 = vadd.f32 %v2493, %v2895
        %v2897 = vpop.f32.mrb[0].mxu0
        %2898 = vmatprep.mubr.f32.mxu0 0.0
        %2899 = vmatmul.mubr.f32.gmra.mrb[0].mxu0 %v2416
        %v2900 = vpop.f32.mrb[0].mxu0
        %v2901 = vadd.f32 %v2493, %v2900
        %v2902 = vpop.f32.mrb[0].mxu0
        %2903 = vmatprep.mubr.f32.mxu0 0.0
        %2904 = vmatmul.mubr.f32.gmra.mrb[0].mxu0 %v2417
        %v2905 = vpop.f32.mrb[0].mxu0
        %v2906 = vadd.f32 %v2493, %v2905
        %v2907 = vpop.f32.mrb[0].mxu0
        %2908 = vmatprep.mubr.f32.mxu0 0.0
        %2909 = vmatmul.mubr.f32.gmra.mrb[0].mxu0 %v2418
        %v2910 = vpop.f32.mrb[0].mxu0
        %v2911 = vadd.f32 %v2493, %v2910
        %v2912 = vpop.f32.mrb[0].mxu0
        %2913 = vmatprep.mubr.f32.mxu0 0.0
        %2914 = vmatmul.mubr.f32.gmra.mrb[0].mxu0 %v2419
        %v2915 = vpop.f32.mrb[0].mxu0
        %v2916 = vadd.f32 %v2493, %v2915
        %v2917 = vpop.f32.mrb[0].mxu0
        %2918 = vmatprep.mubr.f32.mxu0 0.0
        %2919 = vmatmul.mubr.f32.gmra.mrb[0].mxu0 %v2420
        %v2920 = vpop.f32.mrb[0].mxu0
        %v2921 = vadd.f32 %v2493, %v2920
        %v2922 = vpop.f32.mrb[0].mxu0
        %2923 = vmatprep.mubr.f32.mxu0 0.0
        %2924 = vmatmul.mubr.f32.gmra.mrb[0].mxu0 %v2421
        %v2925 = vpop.f32.mrb[0].mxu0
        %v2926 = vadd.f32 %v2493, %v2925
        %v2927 = vpop.f32.mrb[0].mxu0
        %2928 = vmatprep.mubr.f32.mxu0 0.0
        %2929 = vmatmul.mubr.f32.gmra.mrb[0].mxu0 %v2422
        %v2930 = vpop.f32.mrb[0].mxu0
        %v2931 = vadd.f32 %v2493, %v2930
        %v2932 = vpop.f32.mrb[0].mxu0
        %2933 = vmatprep.mubr.f32.mxu0 0.0
        %2934 = vmatmul.mubr.f32.gmra.mrb[0].mxu0 %v2423
        %v2935 = vpop.f32.mrb[0].mxu0
        %v2936 = vadd.f32 %v2493, %v2935
        %v2937 = vpop.f32.mrb[0].mxu0
        %2938 = vmatprep.mubr.f32.mxu0 0.0
        %2939 = vmatmul.mubr.f32.gmra.mrb[0].mxu0 %v2424
        %v2940 = vpop.f32.mrb[0].mxu0
        %v2941 = vadd.f32 %v2493, %v2940
        %v2942 = vpop.f32.mrb[0].mxu0
        %2943 = vmatprep.mubr.f32.mxu0 0.0
        %2944 = vmatmul.mubr.f32.gmra.mrb[0].mxu0 %v2425
        %v2945 = vpop.f32.mrb[0].mxu0
        %v2946 = vadd.f32 %v2493, %v2945
        %v2947 = vpop.f32.mrb[0].mxu0
        %2948 = vmatprep.mubr.f32.mxu0 0.0
        %2949 = vmatmul.mubr.f32.gmra.mrb[0].mxu0 %v2426
        %v2950 = vpop.f32.mrb[0].mxu0
        %v2951 = vadd.f32 %v2493, %v2950
        %v2952 = vpop.f32.mrb[0].mxu0
        %2953 = vmatprep.mubr.f32.mxu0 0.0
        %2954 = vmatmul.mubr.f32.gmra.mrb[0].mxu0 %v2427
        %v2955 = vpop.f32.mrb[0].mxu0
        %v2956 = vadd.f32 %v2493, %v2955
        %v2957 = vpop.f32.mrb[0].mxu0
        %2958 = vmatprep.mubr.f32.mxu0 0.0
        %2959 = vmatmul.mubr.f32.gmra.mrb[0].mxu0 %v2428
        %v2960 = vpop.f32.mrb[0].mxu0
        %v2961 = vadd.f32 %v2493, %v2960
        %v2962 = vpop.f32.mrb[0].mxu0
        %2963 = vmatprep.mubr.f32.mxu0 0.0
        %2964 = vmatmul.mubr.f32.gmra.mrb[0].mxu0 %v2429
        %v2965 = vpop.f32.mrb[0].mxu0
        %v2966 = vadd.f32 %v2493, %v2965
        %v2967 = vpop.f32.mrb[0].mxu0
        %2968 = vmatprep.mubr.f32.mxu0 0.0
        %2969 = vmatmul.mubr.f32.gmra.mrb[0].mxu0 %v2430
        %v2970 = vpop.f32.mrb[0].mxu0
        %v2971 = vadd.f32 %v2493, %v2970
        %v2972 = vpop.f32.mrb[0].mxu0
        %2973 = vmatprep.mubr.f32.mxu0 0.0
        %2974 = vmatmul.mubr.f32.gmra.mrb[0].mxu0 %v2431
        %v2975 = vpop.f32.mrb[0].mxu0
        %v2976 = vadd.f32 %v2493, %v2975
        %v2977 = vpop.f32.mrb[0].mxu0
        %2978 = vdwg.mxu0
        %v2979 = vmax.f32 %v2564, %v2576
        %v2980 = vmax.f32 %v2570, %v2582
        %v2981 = vmax.f32 %v2979, %v2588
        %v2982 = vmax.f32 %v2980, %v2594
        %v2983 = vmax.f32 %v2981, %v2600
        %v2984 = vmax.f32 %v2982, %v2606
        %v2985 = vmax.f32 %v2983, %v2612
        %v2986 = vmax.f32 %v2984, %v2618
        %v2987 = vmax.f32 %v2985, %v2624
        %v2988 = vmax.f32 %v2986, %v2630
        %v2989 = vmax.f32 %v2987, %v2636
        %v2990 = vmax.f32 %v2988, %v2642
        %v2991 = vmax.f32 %v2989, %v2648
        %v2992 = vmax.f32 %v2990, %v2654
        %v2993 = vmax.f32 %v2991, %v2660
        %v2994 = vmax.f32 %v2992, %v2666
        %v2995 = vmax.f32 %v2993, %v2672
        %v2996 = vmax.f32 %v2994, %v2678
        %v2997 = vmax.f32 %v2995, %v2684
        %v2998 = vmax.f32 %v2996, %v2690
        %v2999 = vmax.f32 %v2997, %v2696
        %v3000 = vmax.f32 %v2998, %v2702
        %v3001 = vmax.f32 %v2999, %v2708
        %v3002 = vmax.f32 %v3000, %v2714
        %v3003 = vmax.f32 %v3001, %v2720
        %v3004 = vmax.f32 %v3002, %v2726
        %v3005 = vmax.f32 %v3003, %v2732
        %v3006 = vmax.f32 %v3004, %v2738
        %v3007 = vmax.f32 %v3005, %v2744
        %v3008 = vmax.f32 %v3006, %v2750
        %v3009 = vmax.f32 %v3007, %v3008
        %v3010 = vrot.slane %v3009, 4
        %v3011 = vmax.f32 %v3009, %v3010
        %v3012 = vrot.slane %v3011, 2
        %v3013 = vmax.f32 %v3011, %v3012
        %v3014 = vrot.slane %v3013, 1
        %v3015 = vmax.f32 %v3013, %v3014
        %v3016 = vmax.f32 %v2566, %v2578
        %v3017 = vmax.f32 %v2572, %v2584
        %v3018 = vmax.f32 %v3016, %v2590
        %v3019 = vmax.f32 %v3017, %v2596
        %v3020 = vmax.f32 %v3018, %v2602
        %v3021 = vmax.f32 %v3019, %v2608
        %v3022 = vmax.f32 %v3020, %v2614
        %v3023 = vmax.f32 %v3021, %v2620
        %v3024 = vmax.f32 %v3022, %v2626
        %v3025 = vmax.f32 %v3023, %v2632
        %v3026 = vmax.f32 %v3024, %v2638
        %v3027 = vmax.f32 %v3025, %v2644
        %v3028 = vmax.f32 %v3026, %v2650
        %v3029 = vmax.f32 %v3027, %v2656
        %v3030 = vmax.f32 %v3028, %v2662
        %v3031 = vmax.f32 %v3029, %v2668
        %v3032 = vmax.f32 %v3030, %v2674
        %v3033 = vmax.f32 %v3031, %v2680
        %v3034 = vmax.f32 %v3032, %v2686
        %v3035 = vmax.f32 %v3033, %v2692
        %v3036 = vmax.f32 %v3034, %v2698
        %v3037 = vmax.f32 %v3035, %v2704
        %v3038 = vmax.f32 %v3036, %v2710
        %v3039 = vmax.f32 %v3037, %v2716
        %v3040 = vmax.f32 %v3038, %v2722
        %v3041 = vmax.f32 %v3039, %v2728
        %v3042 = vmax.f32 %v3040, %v2734
        %v3043 = vmax.f32 %v3041, %v2740
        %v3044 = vmax.f32 %v3042, %v2746
        %v3045 = vmax.f32 %v3043, %v2752
        %v3046 = vmax.f32 %v3044, %v3045
        %v3047 = vrot.slane %v3046, 4
        %v3048 = vmax.f32 %v3046, %v3047
        %v3049 = vrot.slane %v3048, 2
        %v3050 = vmax.f32 %v3048, %v3049
        %v3051 = vrot.slane %v3050, 1
        %v3052 = vmax.f32 %v3050, %v3051
        %v3053 = vsub.f32 %v2564, %v3015
        %v3054 = vsub.f32 %v2566, %v3052
        %v3055 = vsub.f32 %v2570, %v3015
        %v3056 = vsub.f32 %v2572, %v3052
        %v3057 = vsub.f32 %v2576, %v3015
        %v3058 = vsub.f32 %v2578, %v3052
        %v3059 = vsub.f32 %v2582, %v3015
        %v3060 = vsub.f32 %v2584, %v3052
        %v3061 = vsub.f32 %v2588, %v3015
        %v3062 = vsub.f32 %v2590, %v3052
        %v3063 = vsub.f32 %v2594, %v3015
        %v3064 = vsub.f32 %v2596, %v3052
        %v3065 = vsub.f32 %v2600, %v3015
        %v3066 = vsub.f32 %v2602, %v3052
        %v3067 = vsub.f32 %v2606, %v3015
        %v3068 = vsub.f32 %v2608, %v3052
        %v3069 = vsub.f32 %v2612, %v3015
        %v3070 = vsub.f32 %v2614, %v3052
        %v3071 = vsub.f32 %v2618, %v3015
        %v3072 = vsub.f32 %v2620, %v3052
        %v3073 = vsub.f32 %v2624, %v3015
        %v3074 = vsub.f32 %v2626, %v3052
        %v3075 = vsub.f32 %v2630, %v3015
        %v3076 = vsub.f32 %v2632, %v3052
        %v3077 = vsub.f32 %v2636, %v3015
        %v3078 = vsub.f32 %v2638, %v3052
        %v3079 = vsub.f32 %v2642, %v3015
        %v3080 = vsub.f32 %v2644, %v3052
        %v3081 = vsub.f32 %v2648, %v3015
        %v3082 = vsub.f32 %v2650, %v3052
        %v3083 = vsub.f32 %v2654, %v3015
        %v3084 = vsub.f32 %v2656, %v3052
        %v3085 = vsub.f32 %v2660, %v3015
        %v3086 = vsub.f32 %v2662, %v3052
        %v3087 = vsub.f32 %v2666, %v3015
        %v3088 = vsub.f32 %v2668, %v3052
        %v3089 = vsub.f32 %v2672, %v3015
        %v3090 = vsub.f32 %v2674, %v3052
        %v3091 = vsub.f32 %v2678, %v3015
        %v3092 = vsub.f32 %v2680, %v3052
        %v3093 = vsub.f32 %v2684, %v3015
        %v3094 = vsub.f32 %v2686, %v3052
        %v3095 = vsub.f32 %v2690, %v3015
        %v3096 = vsub.f32 %v2692, %v3052
        %v3097 = vsub.f32 %v2696, %v3015
        %v3098 = vsub.f32 %v2698, %v3052
        %v3099 = vsub.f32 %v2702, %v3015
        %v3100 = vsub.f32 %v2704, %v3052
        %v3101 = vsub.f32 %v2708, %v3015
        %v3102 = vsub.f32 %v2710, %v3052
        %v3103 = vsub.f32 %v2714, %v3015
        %v3104 = vsub.f32 %v2716, %v3052
        %v3105 = vsub.f32 %v2720, %v3015
        %v3106 = vsub.f32 %v2722, %v3052
        %v3107 = vsub.f32 %v2726, %v3015
        %v3108 = vsub.f32 %v2728, %v3052
        %v3109 = vsub.f32 %v2732, %v3015
        %v3110 = vsub.f32 %v2734, %v3052
        %v3111 = vsub.f32 %v2738, %v3015
        %v3112 = vsub.f32 %v2740, %v3052
        %v3113 = vsub.f32 %v2744, %v3015
        %v3114 = vsub.f32 %v2746, %v3052
        %v3115 = vsub.f32 %v2750, %v3015
        %v3116 = vsub.f32 %v2752, %v3052
        %v3117 = vmul.f32 %v3053, 1.442695
        %v3118 = vpow.pop %v3117
        %v3119 = vmul.f32 %v3054, 1.442695
        %v3120 = vpow.pop %v3119
        %v3121 = vmul.f32 %v3055, 1.442695
        %v3122 = vpow.pop %v3121
        %v3123 = vmul.f32 %v3056, 1.442695
        %v3124 = vpow.pop %v3123
        %v3125 = vmul.f32 %v3057, 1.442695
        %v3126 = vpow.pop %v3125
        %v3127 = vmul.f32 %v3058, 1.442695
        %v3128 = vpow.pop %v3127
        %v3129 = vmul.f32 %v3059, 1.442695
        %v3130 = vpow.pop %v3129
        %v3131 = vmul.f32 %v3060, 1.442695
        %v3132 = vpow.pop %v3131
        %v3133 = vmul.f32 %v3061, 1.442695
        %v3134 = vpow.pop %v3133
        %v3135 = vmul.f32 %v3062, 1.442695
        %v3136 = vpow.pop %v3135
        %v3137 = vmul.f32 %v3063, 1.442695
        %v3138 = vpow.pop %v3137
        %v3139 = vmul.f32 %v3064, 1.442695
        %v3140 = vpow.pop %v3139
        %v3141 = vmul.f32 %v3065, 1.442695
        %v3142 = vpow.pop %v3141
        %v3143 = vmul.f32 %v3066, 1.442695
        %v3144 = vpow.pop %v3143
        %v3145 = vmul.f32 %v3067, 1.442695
        %v3146 = vpow.pop %v3145
        %v3147 = vmul.f32 %v3068, 1.442695
        %v3148 = vpow.pop %v3147
        %v3149 = vmul.f32 %v3069, 1.442695
        %v3150 = vpow.pop %v3149
        %v3151 = vmul.f32 %v3070, 1.442695
        %v3152 = vpow.pop %v3151
        %v3153 = vmul.f32 %v3071, 1.442695
        %v3154 = vpow.pop %v3153
        %v3155 = vmul.f32 %v3072, 1.442695
        %v3156 = vpow.pop %v3155
        %v3157 = vmul.f32 %v3073, 1.442695
        %v3158 = vpow.pop %v3157
        %v3159 = vmul.f32 %v3074, 1.442695
        %v3160 = vpow.pop %v3159
        %v3161 = vmul.f32 %v3075, 1.442695
        %v3162 = vpow.pop %v3161
        %v3163 = vmul.f32 %v3076, 1.442695
        %v3164 = vpow.pop %v3163
        %v3165 = vmul.f32 %v3077, 1.442695
        %v3166 = vpow.pop %v3165
        %v3167 = vmul.f32 %v3078, 1.442695
        %v3168 = vpow.pop %v3167
        %v3169 = vmul.f32 %v3079, 1.442695
        %v3170 = vpow.pop %v3169
        %v3171 = vmul.f32 %v3080, 1.442695
        %v3172 = vpow.pop %v3171
        %v3173 = vmul.f32 %v3081, 1.442695
        %v3174 = vpow.pop %v3173
        %v3175 = vmul.f32 %v3082, 1.442695
        %v3176 = vpow.pop %v3175
        %v3177 = vmul.f32 %v3083, 1.442695
        %v3178 = vpow.pop %v3177
        %v3179 = vmul.f32 %v3084, 1.442695
        %v3180 = vpow.pop %v3179
        %v3181 = vmul.f32 %v3085, 1.442695
        %v3182 = vpow.pop %v3181
        %v3183 = vmul.f32 %v3086, 1.442695
        %v3184 = vpow.pop %v3183
        %v3185 = vmul.f32 %v3087, 1.442695
        %v3186 = vpow.pop %v3185
        %v3187 = vmul.f32 %v3088, 1.442695
        %v3188 = vpow.pop %v3187
        %v3189 = vmul.f32 %v3089, 1.442695
        %v3190 = vpow.pop %v3189
        %v3191 = vmul.f32 %v3090, 1.442695
        %v3192 = vpow.pop %v3191
        %v3193 = vmul.f32 %v3091, 1.442695
        %v3194 = vpow.pop %v3193
        %v3195 = vmul.f32 %v3092, 1.442695
        %v3196 = vpow.pop %v3195
        %v3197 = vmul.f32 %v3093, 1.442695
        %v3198 = vpow.pop %v3197
        %v3199 = vmul.f32 %v3094, 1.442695
        %v3200 = vpow.pop %v3199
        %v3201 = vmul.f32 %v3095, 1.442695
        %v3202 = vpow.pop %v3201
        %v3203 = vmul.f32 %v3096, 1.442695
        %v3204 = vpow.pop %v3203
        %v3205 = vmul.f32 %v3097, 1.442695
        %v3206 = vpow.pop %v3205
        %v3207 = vmul.f32 %v3098, 1.442695
        %v3208 = vpow.pop %v3207
        %v3209 = vmul.f32 %v3099, 1.442695
        %v3210 = vpow.pop %v3209
        %v3211 = vmul.f32 %v3100, 1.442695
        %v3212 = vpow.pop %v3211
        %v3213 = vmul.f32 %v3101, 1.442695
        %v3214 = vpow.pop %v3213
        %v3215 = vmul.f32 %v3102, 1.442695
        %v3216 = vpow.pop %v3215
        %v3217 = vmul.f32 %v3103, 1.442695
        %v3218 = vpow.pop %v3217
        %v3219 = vmul.f32 %v3104, 1.442695
        %v3220 = vpow.pop %v3219
        %v3221 = vmul.f32 %v3105, 1.442695
        %v3222 = vpow.pop %v3221
        %v3223 = vmul.f32 %v3106, 1.442695
        %v3224 = vpow.pop %v3223
        %v3225 = vmul.f32 %v3107, 1.442695
        %v3226 = vpow.pop %v3225
        %v3227 = vmul.f32 %v3108, 1.442695
        %v3228 = vpow.pop %v3227
        %v3229 = vmul.f32 %v3109, 1.442695
        %v3230 = vpow.pop %v3229
        %v3231 = vmul.f32 %v3110, 1.442695
        %v3232 = vpow.pop %v3231
        %v3233 = vmul.f32 %v3111, 1.442695
        %v3234 = vpow.pop %v3233
        %v3235 = vmul.f32 %v3112, 1.442695
        %v3236 = vpow.pop %v3235
        %v3237 = vmul.f32 %v3113, 1.442695
        %v3238 = vpow.pop %v3237
        %v3239 = vmul.f32 %v3114, 1.442695
        %v3240 = vpow.pop %v3239
        %v3241 = vmul.f32 %v3115, 1.442695
        %v3242 = vpow.pop %v3241
        %v3243 = vmul.f32 %v3116, 1.442695
        %v3244 = vpow.pop %v3243
        %v3245 = vadd.f32 %v3118, %v3122
        %v3246 = vadd.f32 %v3245, %v3126
        %v3247 = vadd.f32 %v3246, %v3130
        %v3248 = vadd.f32 %v3247, %v3134
        %v3249 = vadd.f32 %v3248, %v3138
        %v3250 = vadd.f32 %v3249, %v3142
        %v3251 = vadd.f32 %v3250, %v3146
        %v3252 = vadd.f32 %v3251, %v3150
        %v3253 = vadd.f32 %v3252, %v3154
        %v3254 = vadd.f32 %v3253, %v3158
        %v3255 = vadd.f32 %v3254, %v3162
        %v3256 = vadd.f32 %v3255, %v3166
        %v3257 = vadd.f32 %v3256, %v3170
        %v3258 = vadd.f32 %v3257, %v3174
        %v3259 = vadd.f32 %v3258, %v3178
        %v3260 = vadd.f32 %v3259, %v3182
        %v3261 = vadd.f32 %v3260, %v3186
        %v3262 = vadd.f32 %v3261, %v3190
        %v3263 = vadd.f32 %v3262, %v3194
        %v3264 = vadd.f32 %v3263, %v3198
        %v3265 = vadd.f32 %v3264, %v3202
        %v3266 = vadd.f32 %v3265, %v3206
        %v3267 = vadd.f32 %v3266, %v3210
        %v3268 = vadd.f32 %v3267, %v3214
        %v3269 = vadd.f32 %v3268, %v3218
        %v3270 = vadd.f32 %v3269, %v3222
        %v3271 = vadd.f32 %v3270, %v3226
        %v3272 = vadd.f32 %v3271, %v3230
        %v3273 = vadd.f32 %v3272, %v3234
        %v3274 = vadd.f32 %v3273, %v3238
        %v3275 = vadd.f32 %v3274, %v3242
        %v3276 = vrot.slane %v3275, 4
        %v3277 = vadd.f32 %v3275, %v3276
        %v3278 = vrot.slane %v3277, 2
        %v3279 = vadd.f32 %v3277, %v3278
        %v3280 = vrot.slane %v3279, 1
        %v3281 = vadd.f32 %v3279, %v3280
        %v3282 = vadd.f32 %v3120, %v3124
        %v3283 = vadd.f32 %v3282, %v3128
        %v3284 = vadd.f32 %v3283, %v3132
        %v3285 = vadd.f32 %v3284, %v3136
        %v3286 = vadd.f32 %v3285, %v3140
        %v3287 = vadd.f32 %v3286, %v3144
        %v3288 = vadd.f32 %v3287, %v3148
        %v3289 = vadd.f32 %v3288, %v3152
        %v3290 = vadd.f32 %v3289, %v3156
        %v3291 = vadd.f32 %v3290, %v3160
        %v3292 = vadd.f32 %v3291, %v3164
        %v3293 = vadd.f32 %v3292, %v3168
        %v3294 = vadd.f32 %v3293, %v3172
        %v3295 = vadd.f32 %v3294, %v3176
        %v3296 = vadd.f32 %v3295, %v3180
        %v3297 = vadd.f32 %v3296, %v3184
        %v3298 = vadd.f32 %v3297, %v3188
        %v3299 = vadd.f32 %v3298, %v3192
        %v3300 = vadd.f32 %v3299, %v3196
        %v3301 = vadd.f32 %v3300, %v3200
        %v3302 = vadd.f32 %v3301, %v3204
        %v3303 = vadd.f32 %v3302, %v3208
        %v3304 = vadd.f32 %v3303, %v3212
        %v3305 = vadd.f32 %v3304, %v3216
        %v3306 = vadd.f32 %v3305, %v3220
        %v3307 = vadd.f32 %v3306, %v3224
        %v3308 = vadd.f32 %v3307, %v3228
        %v3309 = vadd.f32 %v3308, %v3232
        %v3310 = vadd.f32 %v3309, %v3236
        %v3311 = vadd.f32 %v3310, %v3240
        %v3312 = vadd.f32 %v3311, %v3244
        %v3313 = vrot.slane %v3312, 4
        %v3314 = vadd.f32 %v3312, %v3313
        %v3315 = vrot.slane %v3314, 2
        %v3316 = vadd.f32 %v3314, %v3315
        %v3317 = vrot.slane %v3316, 1
        %v3318 = vadd.f32 %v3316, %v3317
        %v3319 = vrcp.pop %v3281
        %v3320 = vrcp.pop %v3318
        %v3321 = vmul.f32 %v3118, %v3319
        %v3322 = vmul.f32 %v3120, %v3320
        %v3323 = vmul.f32 %v3122, %v3319
        %v3324 = vmul.f32 %v3124, %v3320
        %v3325 = vmul.f32 %v3126, %v3319
        %v3326 = vmul.f32 %v3128, %v3320
        %v3327 = vmul.f32 %v3130, %v3319
        %v3328 = vmul.f32 %v3132, %v3320
        %v3329 = vmul.f32 %v3134, %v3319
        %v3330 = vmul.f32 %v3136, %v3320
        %v3331 = vmul.f32 %v3138, %v3319
        %v3332 = vmul.f32 %v3140, %v3320
        %v3333 = vmul.f32 %v3142, %v3319
        %v3334 = vmul.f32 %v3144, %v3320
        %v3335 = vmul.f32 %v3146, %v3319
        %v3336 = vmul.f32 %v3148, %v3320
        %v3337 = vmul.f32 %v3150, %v3319
        %v3338 = vmul.f32 %v3152, %v3320
        %v3339 = vmul.f32 %v3154, %v3319
        %v3340 = vmul.f32 %v3156, %v3320
        %v3341 = vmul.f32 %v3158, %v3319
        %v3342 = vmul.f32 %v3160, %v3320
        %v3343 = vmul.f32 %v3162, %v3319
        %v3344 = vmul.f32 %v3164, %v3320
        %v3345 = vmul.f32 %v3166, %v3319
        %v3346 = vmul.f32 %v3168, %v3320
        %v3347 = vmul.f32 %v3170, %v3319
        %v3348 = vmul.f32 %v3172, %v3320
        %v3349 = vmul.f32 %v3174, %v3319
        %v3350 = vmul.f32 %v3176, %v3320
        %v3351 = vmul.f32 %v3178, %v3319
        %v3352 = vmul.f32 %v3180, %v3320
        %v3353 = vmul.f32 %v3182, %v3319
        %v3354 = vmul.f32 %v3184, %v3320
        %v3355 = vmul.f32 %v3186, %v3319
        %v3356 = vmul.f32 %v3188, %v3320
        %v3357 = vmul.f32 %v3190, %v3319
        %v3358 = vmul.f32 %v3192, %v3320
        %v3359 = vmul.f32 %v3194, %v3319
        %v3360 = vmul.f32 %v3196, %v3320
        %v3361 = vmul.f32 %v3198, %v3319
        %v3362 = vmul.f32 %v3200, %v3320
        %v3363 = vmul.f32 %v3202, %v3319
        %v3364 = vmul.f32 %v3204, %v3320
        %v3365 = vmul.f32 %v3206, %v3319
        %v3366 = vmul.f32 %v3208, %v3320
        %v3367 = vmul.f32 %v3210, %v3319
        %v3368 = vmul.f32 %v3212, %v3320
        %v3369 = vmul.f32 %v3214, %v3319
        %v3370 = vmul.f32 %v3216, %v3320
        %v3371 = vmul.f32 %v3218, %v3319
        %v3372 = vmul.f32 %v3220, %v3320
        %v3373 = vmul.f32 %v3222, %v3319
        %v3374 = vmul.f32 %v3224, %v3320
        %v3375 = vmul.f32 %v3226, %v3319
        %v3376 = vmul.f32 %v3228, %v3320
        %v3377 = vmul.f32 %v3230, %v3319
        %v3378 = vmul.f32 %v3232, %v3320
        %v3379 = vmul.f32 %v3234, %v3319
        %v3380 = vmul.f32 %v3236, %v3320
        %v3381 = vmul.f32 %v3238, %v3319
        %v3382 = vmul.f32 %v3240, %v3320
        %v3383 = vmul.f32 %v3242, %v3319
        %v3384 = vmul.f32 %v3244, %v3320
        %v3385 = vadd.f32 %v2400, %v2401
        %v3386 = vadd.f32 %v3385, %v2402
        %v3387 = vadd.f32 %v3386, %v2403
        %v3388 = vadd.f32 %v3387, %v2404
        %v3389 = vadd.f32 %v3388, %v2405
        %v3390 = vadd.f32 %v3389, %v2406
        %v3391 = vadd.f32 %v3390, %v2407
        %v3392 = vadd.f32 %v3391, %v2408
        %v3393 = vadd.f32 %v3392, %v2409
        %v3394 = vadd.f32 %v3393, %v2410
        %v3395 = vadd.f32 %v3394, %v2411
        %v3396 = vadd.f32 %v3395, %v2412
        %v3397 = vadd.f32 %v3396, %v2413
        %v3398 = vadd.f32 %v3397, %v2414
        %v3399 = vadd.f32 %v3398, %v2415
        %v3400 = vadd.f32 %v3399, %v2416
        %v3401 = vadd.f32 %v3400, %v2417
        %v3402 = vadd.f32 %v3401, %v2418
        %v3403 = vadd.f32 %v3402, %v2419
        %v3404 = vadd.f32 %v3403, %v2420
        %v3405 = vadd.f32 %v3404, %v2421
        %v3406 = vadd.f32 %v3405, %v2422
        %v3407 = vadd.f32 %v3406, %v2423
        %v3408 = vadd.f32 %v3407, %v2424
        %v3409 = vadd.f32 %v3408, %v2425
        %v3410 = vadd.f32 %v3409, %v2426
        %v3411 = vadd.f32 %v3410, %v2427
        %v3412 = vadd.f32 %v3411, %v2428
        %v3413 = vadd.f32 %v3412, %v2429
        %v3414 = vadd.f32 %v3413, %v2430
        %v3415 = vadd.f32 %v3414, %v2431
        %v3416 = vrot.slane %v3415, 4
        %v3417 = vadd.f32 %v3415, %v3416
        %v3418 = vrot.slane %v3417, 2
        %v3419 = vadd.f32 %v3417, %v3418
        %v3420 = vrot.slane %v3419, 1
        %v3421 = vadd.f32 %v3419, %v3420
        %v3422 = vld [vmem:[#allocation14] sm:$0xff]
        %v3423 = vld [vmem:[#allocation14 + $0x8] sm:$0xff]
        %v3424 = vld [vmem:[#allocation14 + $0x10] sm:$0xff]
        %v3425 = vld [vmem:[#allocation14 + $0x18] sm:$0xff]
        %v3426 = vld [vmem:[#allocation14 + $0x20] sm:$0xff]
        %v3427 = vld [vmem:[#allocation14 + $0x28] sm:$0xff]
        %v3428 = vld [vmem:[#allocation14 + $0x30] sm:$0xff]
        %v3429 = vld [vmem:[#allocation14 + $0x38] sm:$0xff]
        %v3430 = vld [vmem:[#allocation14 + $0x40] sm:$0xff]
        %v3431 = vld [vmem:[#allocation14 + $0x48] sm:$0xff]
        %v3432 = vld [vmem:[#allocation14 + $0x50] sm:$0xff]
        %v3433 = vld [vmem:[#allocation14 + $0x58] sm:$0xff]
        %v3434 = vld [vmem:[#allocation14 + $0x60] sm:$0xff]
        %v3435 = vld [vmem:[#allocation14 + $0x68] sm:$0xff]
        %v3436 = vld [vmem:[#allocation14 + $0x70] sm:$0xff]
        %v3437 = vld [vmem:[#allocation14 + $0x78] sm:$0xff]
        %v3438 = vmul.f32 %v672, 256.0
        %v3440 = vrot.slane %v3438, 2
        %3442 = vmatprep.subr.mxu0 0.0
        %3443 = vmatpush1.msra.mxu0 %v3422
        %3444 = vmatprep.subr.mxu0 0.0
        %3445 = vmatpush1.msra.mxu0 %v3423
        %3446 = vmatprep.subr.mxu0 0.0
        %3447 = vmatpush1.msra.mxu0 %v3424
        %3448 = vmatprep.subr.mxu0 0.0
        %3449 = vmatpush1.msra.mxu0 %v3425
        %3450 = vmatprep.subr.mxu0 0.0
        %3451 = vmatpush1.msra.mxu0 %v3426
        %3452 = vmatprep.subr.mxu0 0.0
        %3453 = vmatpush1.msra.mxu0 %v3427
        %3454 = vmatprep.subr.mxu0 0.0
        %3455 = vmatpush1.msra.mxu0 %v3428
        %3456 = vmatprep.subr.mxu0 0.0
        %3457 = vmatpush1.msra.mxu0 %v3429
        %3458 = vmatprep.subr.mxu0 0.0
        %3459 = vmatpush1.msra.mxu0 %v3430
        %3460 = vmatprep.subr.mxu0 0.0
        %3461 = vmatpush1.msra.mxu0 %v3431
        %3462 = vmatprep.subr.mxu0 0.0
        %3463 = vmatpush1.msra.mxu0 %v3432
        %3464 = vmatprep.subr.mxu0 0.0
        %3465 = vmatpush1.msra.mxu0 %v3433
        %3466 = vmatprep.subr.mxu0 0.0
        %3467 = vmatpush1.msra.mxu0 %v3434
        %3468 = vmatprep.subr.mxu0 0.0
        %3469 = vmatpush1.msra.mxu0 %v3435
        %3470 = vmatprep.subr.mxu0 0.0
        %3471 = vmatpush1.msra.mxu0 %v3436
        %3472 = vmatprep.subr.mxu0 0.0
        %3473 = vmatpush1.msra.mxu0 %v3437
        %3474 = vmatprep.subr.mxu0 0.0
        %3475 = vmatpush1.msra.mxu0 0.0
        %3476 = vmatprep.subr.mxu0 0.0
        %3477 = vmatpush1.msra.mxu0 0.0
        %3478 = vmatprep.subr.mxu0 0.0
        %3479 = vmatpush1.msra.mxu0 0.0
        %3480 = vmatprep.subr.mxu0 0.0
        %3481 = vmatpush1.msra.mxu0 0.0
        %3482 = vmatprep.subr.mxu0 0.0
        %3483 = vmatpush1.msra.mxu0 0.0
        %3484 = vmatprep.subr.mxu0 0.0
        %3485 = vmatpush1.msra.mxu0 0.0
        %3486 = vmatprep.subr.mxu0 0.0
        %3487 = vmatpush1.msra.mxu0 0.0
        %3488 = vmatprep.subr.mxu0 0.0
        %3489 = vmatpush1.msra.mxu0 0.0
        %3490 = vmatprep.subr.mxu0 0.0
        %3491 = vmatpush1.msra.mxu0 0.0
        %3492 = vmatprep.subr.mxu0 0.0
        %3493 = vmatpush1.msra.mxu0 0.0
        %3494 = vmatprep.subr.mxu0 0.0
        %3495 = vmatpush1.msra.mxu0 0.0
        %3496 = vmatprep.subr.mxu0 0.0
        %3497 = vmatpush1.msra.mxu0 0.0
        %3498 = vmatprep.subr.mxu0 0.0
        %3499 = vmatpush1.msra.mxu0 0.0
        %3500 = vmatprep.subr.mxu0 0.0
        %3501 = vmatpush1.msra.mxu0 0.0
        %3502 = vmatprep.subr.mxu0 0.0
        %3503 = vmatpush1.msra.mxu0 0.0
        %3504 = vmatprep.subr.mxu0 0.0
        %3505 = vmatpush1.msra.mxu0 0.0
        %3506 = vmatprep.mubr.f32.mxu0 0.0
        %3507 = vmatmul.mubr.f32.gmra.mrb[0].mxu0 %v3421
        %v3508 = vpop.f32.mrb[0].mxu0
        %v3509 = vadd.f32 %v3440, %v3508
        %v3510 = vpop.f32.mrb[0].mxu0
        %3511 = vdwg.mxu0
        %v3512 = vld [vmem:[%s10] sm:$0xff]
        %v3513 = vld [vmem:[%s10 + $0x8] sm:$0xff]
        %v3514 = vld [vmem:[%s10 + $0x10] sm:$0xff]
        %v3515 = vld [vmem:[%s10 + $0x18] sm:$0xff]
        %v3516 = vld [vmem:[%s10 + $0x20] sm:$0xff]
        %v3517 = vld [vmem:[%s10 + $0x28] sm:$0xff]
        %v3518 = vld [vmem:[%s10 + $0x30] sm:$0xff]
        %v3519 = vld [vmem:[%s10 + $0x38] sm:$0xff]
        %v3520 = vld [vmem:[%s10 + $0x40] sm:$0xff]
        %v3521 = vld [vmem:[%s10 + $0x48] sm:$0xff]
        %v3522 = vld [vmem:[%s10 + $0x50] sm:$0xff]
        %v3523 = vld [vmem:[%s10 + $0x58] sm:$0xff]
        %v3524 = vld [vmem:[%s10 + $0x60] sm:$0xff]
        %v3525 = vld [vmem:[%s10 + $0x68] sm:$0xff]
        %v3526 = vld [vmem:[%s10 + $0x70] sm:$0xff]
        %v3527 = vld [vmem:[%s10 + $0x78] sm:$0xff]
        %v3528 = vld [vmem:[%s10 + $0x80] sm:$0xff]
        %v3529 = vld [vmem:[%s10 + $0x88] sm:$0xff]
        %v3530 = vld [vmem:[%s10 + $0x90] sm:$0xff]
        %v3531 = vld [vmem:[%s10 + $0x98] sm:$0xff]
        %v3532 = vld [vmem:[%s10 + $0xa0] sm:$0xff]
        %v3533 = vld [vmem:[%s10 + $0xa8] sm:$0xff]
        %v3534 = vld [vmem:[%s10 + $0xb0] sm:$0xff]
        %v3535 = vld [vmem:[%s10 + $0xb8] sm:$0xff]
        %v3536 = vld [vmem:[%s10 + $0xc0] sm:$0xff]
        %v3537 = vld [vmem:[%s10 + $0xc8] sm:$0xff]
        %v3538 = vld [vmem:[%s10 + $0xd0] sm:$0xff]
        %v3539 = vld [vmem:[%s10 + $0xd8] sm:$0xff]
        %v3540 = vld [vmem:[%s10 + $0xe0] sm:$0xff]
        %v3541 = vld [vmem:[%s10 + $0xe8] sm:$0xff]
        %v3542 = vld [vmem:[%s10 + $0xf0] sm:$0xff]
        %v3543 = vld [vmem:[%s10 + $0xf8] sm:$0xff]
        %3545 = vset.pattern.permute.xlu0 0
        %3546 = vperm.xlu0 %3545, %v3512
        %v3547 = vpop.permute.xlu0 %3546
        %3550 = vset.pattern.permute.xlu0 0
        %3551 = vperm.xlu0 %3550, %v3513
        %v3552 = vpop.permute.xlu0 %3551
        %3555 = vset.pattern.permute.xlu0 0
        %3556 = vperm.xlu0 %3555, %v3514
        %v3557 = vpop.permute.xlu0 %3556
        %3560 = vset.pattern.permute.xlu0 0
        %3561 = vperm.xlu0 %3560, %v3515
        %v3562 = vpop.permute.xlu0 %3561
        %3565 = vset.pattern.permute.xlu0 0
        %3566 = vperm.xlu0 %3565, %v3516
        %v3567 = vpop.permute.xlu0 %3566
        %3570 = vset.pattern.permute.xlu0 0
        %3571 = vperm.xlu0 %3570, %v3517
        %v3572 = vpop.permute.xlu0 %3571
        %3575 = vset.pattern.permute.xlu0 0
        %3576 = vperm.xlu0 %3575, %v3518
        %v3577 = vpop.permute.xlu0 %3576
        %3580 = vset.pattern.permute.xlu0 0
        %3581 = vperm.xlu0 %3580, %v3519
        %v3582 = vpop.permute.xlu0 %3581
        %3585 = vset.pattern.permute.xlu0 0
        %3586 = vperm.xlu0 %3585, %v3520
        %v3587 = vpop.permute.xlu0 %3586
        %3590 = vset.pattern.permute.xlu0 0
        %3591 = vperm.xlu0 %3590, %v3521
        %v3592 = vpop.permute.xlu0 %3591
        %3595 = vset.pattern.permute.xlu0 0
        %3596 = vperm.xlu0 %3595, %v3522
        %v3597 = vpop.permute.xlu0 %3596
        %3600 = vset.pattern.permute.xlu0 0
        %3601 = vperm.xlu0 %3600, %v3523
        %v3602 = vpop.permute.xlu0 %3601
        %3605 = vset.pattern.permute.xlu0 0
        %3606 = vperm.xlu0 %3605, %v3524
        %v3607 = vpop.permute.xlu0 %3606
        %3610 = vset.pattern.permute.xlu0 0
        %3611 = vperm.xlu0 %3610, %v3525
        %v3612 = vpop.permute.xlu0 %3611
        %3615 = vset.pattern.permute.xlu0 0
        %3616 = vperm.xlu0 %3615, %v3526
        %v3617 = vpop.permute.xlu0 %3616
        %3620 = vset.pattern.permute.xlu0 0
        %3621 = vperm.xlu0 %3620, %v3527
        %v3622 = vpop.permute.xlu0 %3621
        %3625 = vset.pattern.permute.xlu0 0
        %3626 = vperm.xlu0 %3625, %v3528
        %v3627 = vpop.permute.xlu0 %3626
        %3630 = vset.pattern.permute.xlu0 0
        %3631 = vperm.xlu0 %3630, %v3529
        %v3632 = vpop.permute.xlu0 %3631
        %3635 = vset.pattern.permute.xlu0 0
        %3636 = vperm.xlu0 %3635, %v3530
        %v3637 = vpop.permute.xlu0 %3636
        %3640 = vset.pattern.permute.xlu0 0
        %3641 = vperm.xlu0 %3640, %v3531
        %v3642 = vpop.permute.xlu0 %3641
        %3645 = vset.pattern.permute.xlu0 0
        %3646 = vperm.xlu0 %3645, %v3532
        %v3647 = vpop.permute.xlu0 %3646
        %3650 = vset.pattern.permute.xlu0 0
        %3651 = vperm.xlu0 %3650, %v3533
        %v3652 = vpop.permute.xlu0 %3651
        %3655 = vset.pattern.permute.xlu0 0
        %3656 = vperm.xlu0 %3655, %v3534
        %v3657 = vpop.permute.xlu0 %3656
        %3660 = vset.pattern.permute.xlu0 0
        %3661 = vperm.xlu0 %3660, %v3535
        %v3662 = vpop.permute.xlu0 %3661
        %3665 = vset.pattern.permute.xlu0 0
        %3666 = vperm.xlu0 %3665, %v3536
        %v3667 = vpop.permute.xlu0 %3666
        %3670 = vset.pattern.permute.xlu0 0
        %3671 = vperm.xlu0 %3670, %v3537
        %v3672 = vpop.permute.xlu0 %3671
        %3675 = vset.pattern.permute.xlu0 0
        %3676 = vperm.xlu0 %3675, %v3538
        %v3677 = vpop.permute.xlu0 %3676
        %3680 = vset.pattern.permute.xlu0 0
        %3681 = vperm.xlu0 %3680, %v3539
        %v3682 = vpop.permute.xlu0 %3681
        %3685 = vset.pattern.permute.xlu0 0
        %3686 = vperm.xlu0 %3685, %v3540
        %v3687 = vpop.permute.xlu0 %3686
        %3690 = vset.pattern.permute.xlu0 0
        %3691 = vperm.xlu0 %3690, %v3541
        %v3692 = vpop.permute.xlu0 %3691
        %3695 = vset.pattern.permute.xlu0 0
        %3696 = vperm.xlu0 %3695, %v3542
        %v3697 = vpop.permute.xlu0 %3696
        %3700 = vset.pattern.permute.xlu0 0
        %3701 = vperm.xlu0 %3700, %v3543
        %v3702 = vpop.permute.xlu0 %3701
        %v3704 = vlaneseq
        %v3705 = vshrl.u32 %v3704, 7
        %v3706 = vsub.s32 0, %v3705
        %v3707 = vrot.slane %v3509, %v3706
        %v3708 = vmul.f32 %v3547, %v3707
        %v3709 = vmul.f32 %v3552, %v3707
        %v3710 = vmul.f32 %v3557, %v3707
        %v3711 = vmul.f32 %v3562, %v3707
        %v3712 = vmul.f32 %v3567, %v3707
        %v3713 = vmul.f32 %v3572, %v3707
        %v3714 = vmul.f32 %v3577, %v3707
        %v3715 = vmul.f32 %v3582, %v3707
        %v3716 = vmul.f32 %v3587, %v3707
        %v3717 = vmul.f32 %v3592, %v3707
        %v3718 = vmul.f32 %v3597, %v3707
        %v3719 = vmul.f32 %v3602, %v3707
        %v3720 = vmul.f32 %v3607, %v3707
        %v3721 = vmul.f32 %v3612, %v3707
        %v3722 = vmul.f32 %v3617, %v3707
        %v3723 = vmul.f32 %v3622, %v3707
        %v3724 = vmul.f32 %v3627, %v3707
        %v3725 = vmul.f32 %v3632, %v3707
        %v3726 = vmul.f32 %v3637, %v3707
        %v3727 = vmul.f32 %v3642, %v3707
        %v3728 = vmul.f32 %v3647, %v3707
        %v3729 = vmul.f32 %v3652, %v3707
        %v3730 = vmul.f32 %v3657, %v3707
        %v3731 = vmul.f32 %v3662, %v3707
        %v3732 = vmul.f32 %v3667, %v3707
        %v3733 = vmul.f32 %v3672, %v3707
        %v3734 = vmul.f32 %v3677, %v3707
        %v3735 = vmul.f32 %v3682, %v3707
        %v3736 = vmul.f32 %v3687, %v3707
        %v3737 = vmul.f32 %v3692, %v3707
        %v3738 = vmul.f32 %v3697, %v3707
        %v3739 = vmul.f32 %v3702, %v3707
        %3740 = vxpose.xlu0.b32.start [1/16] %v3321, 128
        %3741 = vxpose.xlu0.b32.cont [2/16] %v3323, 128
        %3742 = vxpose.xlu0.b32.cont [3/16] %v3325, 128
        %3743 = vxpose.xlu0.b32.cont [4/16] %v3327, 128
        %3744 = vxpose.xlu0.b32.cont [5/16] %v3329, 128
        %3745 = vxpose.xlu0.b32.cont [6/16] %v3331, 128
        %3746 = vxpose.xlu0.b32.cont [7/16] %v3333, 128
        %3747 = vxpose.xlu0.b32.cont [8/16] %v3335, 128
        %3748 = vxpose.xlu0.b32.cont [9/16] %v3337, 128
        %3749 = vxpose.xlu0.b32.cont [10/16] %v3339, 128
        %3750 = vxpose.xlu0.b32.cont [11/16] %v3341, 128
        %3751 = vxpose.xlu0.b32.cont [12/16] %v3343, 128
        %3752 = vxpose.xlu0.b32.cont [13/16] %v3345, 128
        %3753 = vxpose.xlu0.b32.cont [14/16] %v3347, 128
        %3754 = vxpose.xlu0.b32.cont [15/16] %v3349, 128
        %3755 = vxpose.xlu0.b32.end [16/16] %v3351, 128
        %v3756 = vpop.trf.xlu0
        %v3757 = vpop.trf.xlu0
        %v3758 = vpop.trf.xlu0
        %v3759 = vpop.trf.xlu0
        %v3760 = vpop.trf.xlu0
        %v3761 = vpop.trf.xlu0
        %v3762 = vpop.trf.xlu0
        %v3763 = vpop.trf.xlu0
        %v3764 = vpop.trf.xlu0
        %v3765 = vpop.trf.xlu0
        %v3766 = vpop.trf.xlu0
        %v3767 = vpop.trf.xlu0
        %v3768 = vpop.trf.xlu0
        %v3769 = vpop.trf.xlu0
        %v3770 = vpop.trf.xlu0
        %v3771 = vpop.trf.xlu0
        %3772 = vxpose.xlu0.b32.start [1/16] %v3322, 128
        %3773 = vxpose.xlu0.b32.cont [2/16] %v3324, 128
        %3774 = vxpose.xlu0.b32.cont [3/16] %v3326, 128
        %3775 = vxpose.xlu0.b32.cont [4/16] %v3328, 128
        %3776 = vxpose.xlu0.b32.cont [5/16] %v3330, 128
        %3777 = vxpose.xlu0.b32.cont [6/16] %v3332, 128
        %3778 = vxpose.xlu0.b32.cont [7/16] %v3334, 128
        %3779 = vxpose.xlu0.b32.cont [8/16] %v3336, 128
        %3780 = vxpose.xlu0.b32.cont [9/16] %v3338, 128
        %3781 = vxpose.xlu0.b32.cont [10/16] %v3340, 128
        %3782 = vxpose.xlu0.b32.cont [11/16] %v3342, 128
        %3783 = vxpose.xlu0.b32.cont [12/16] %v3344, 128
        %3784 = vxpose.xlu0.b32.cont [13/16] %v3346, 128
        %3785 = vxpose.xlu0.b32.cont [14/16] %v3348, 128
        %3786 = vxpose.xlu0.b32.cont [15/16] %v3350, 128
        %3787 = vxpose.xlu0.b32.end [16/16] %v3352, 128
        %v3788 = vpop.trf.xlu0
        %v3789 = vpop.trf.xlu0
        %v3790 = vpop.trf.xlu0
        %v3791 = vpop.trf.xlu0
        %v3792 = vpop.trf.xlu0
        %v3793 = vpop.trf.xlu0
        %v3794 = vpop.trf.xlu0
        %v3795 = vpop.trf.xlu0
        %v3796 = vpop.trf.xlu0
        %v3797 = vpop.trf.xlu0
        %v3798 = vpop.trf.xlu0
        %v3799 = vpop.trf.xlu0
        %v3800 = vpop.trf.xlu0
        %v3801 = vpop.trf.xlu0
        %v3802 = vpop.trf.xlu0
        %v3803 = vpop.trf.xlu0
        %3804 = vxpose.xlu0.b32.start [1/16] %v3353, 128
        %3805 = vxpose.xlu0.b32.cont [2/16] %v3355, 128
        %3806 = vxpose.xlu0.b32.cont [3/16] %v3357, 128
        %3807 = vxpose.xlu0.b32.cont [4/16] %v3359, 128
        %3808 = vxpose.xlu0.b32.cont [5/16] %v3361, 128
        %3809 = vxpose.xlu0.b32.cont [6/16] %v3363, 128
        %3810 = vxpose.xlu0.b32.cont [7/16] %v3365, 128
        %3811 = vxpose.xlu0.b32.cont [8/16] %v3367, 128
        %3812 = vxpose.xlu0.b32.cont [9/16] %v3369, 128
        %3813 = vxpose.xlu0.b32.cont [10/16] %v3371, 128
        %3814 = vxpose.xlu0.b32.cont [11/16] %v3373, 128
        %3815 = vxpose.xlu0.b32.cont [12/16] %v3375, 128
        %3816 = vxpose.xlu0.b32.cont [13/16] %v3377, 128
        %3817 = vxpose.xlu0.b32.cont [14/16] %v3379, 128
        %3818 = vxpose.xlu0.b32.cont [15/16] %v3381, 128
        %3819 = vxpose.xlu0.b32.end [16/16] %v3383, 128
        %v3820 = vpop.trf.xlu0
        %v3821 = vpop.trf.xlu0
        %v3822 = vpop.trf.xlu0
        %v3823 = vpop.trf.xlu0
        %v3824 = vpop.trf.xlu0
        %v3825 = vpop.trf.xlu0
        %v3826 = vpop.trf.xlu0
        %v3827 = vpop.trf.xlu0
        %v3828 = vpop.trf.xlu0
        %v3829 = vpop.trf.xlu0
        %v3830 = vpop.trf.xlu0
        %v3831 = vpop.trf.xlu0
        %v3832 = vpop.trf.xlu0
        %v3833 = vpop.trf.xlu0
        %v3834 = vpop.trf.xlu0
        %v3835 = vpop.trf.xlu0
        %3836 = vxpose.xlu0.b32.start [1/16] %v3354, 128
        %3837 = vxpose.xlu0.b32.cont [2/16] %v3356, 128
        %3838 = vxpose.xlu0.b32.cont [3/16] %v3358, 128
        %3839 = vxpose.xlu0.b32.cont [4/16] %v3360, 128
        %3840 = vxpose.xlu0.b32.cont [5/16] %v3362, 128
        %3841 = vxpose.xlu0.b32.cont [6/16] %v3364, 128
        %3842 = vxpose.xlu0.b32.cont [7/16] %v3366, 128
        %3843 = vxpose.xlu0.b32.cont [8/16] %v3368, 128
        %3844 = vxpose.xlu0.b32.cont [9/16] %v3370, 128
        %3845 = vxpose.xlu0.b32.cont [10/16] %v3372, 128
        %3846 = vxpose.xlu0.b32.cont [11/16] %v3374, 128
        %3847 = vxpose.xlu0.b32.cont [12/16] %v3376, 128
        %3848 = vxpose.xlu0.b32.cont [13/16] %v3378, 128
        %3849 = vxpose.xlu0.b32.cont [14/16] %v3380, 128
        %3850 = vxpose.xlu0.b32.cont [15/16] %v3382, 128
        %3851 = vxpose.xlu0.b32.end [16/16] %v3384, 128
        %v3852 = vpop.trf.xlu0
        %v3853 = vpop.trf.xlu0
        %v3854 = vpop.trf.xlu0
        %v3855 = vpop.trf.xlu0
        %v3856 = vpop.trf.xlu0
        %v3857 = vpop.trf.xlu0
        %v3858 = vpop.trf.xlu0
        %v3859 = vpop.trf.xlu0
        %v3860 = vpop.trf.xlu0
        %v3861 = vpop.trf.xlu0
        %v3862 = vpop.trf.xlu0
        %v3863 = vpop.trf.xlu0
        %v3864 = vpop.trf.xlu0
        %v3865 = vpop.trf.xlu0
        %v3866 = vpop.trf.xlu0
        %v3867 = vpop.trf.xlu0
        %3868 = vmatprep.subr.mxu0 0.0
        %3869 = vmatpush1.msra.mxu0 %v2821
        %3870 = vmatprep.subr.mxu0 0.0
        %3871 = vmatpush1.msra.mxu0 %v2826
        %3872 = vmatprep.subr.mxu0 0.0
        %3873 = vmatpush1.msra.mxu0 %v2831
        %3874 = vmatprep.subr.mxu0 0.0
        %3875 = vmatpush1.msra.mxu0 %v2836
        %3876 = vmatprep.subr.mxu0 0.0
        %3877 = vmatpush1.msra.mxu0 %v2841
        %3878 = vmatprep.subr.mxu0 0.0
        %3879 = vmatpush1.msra.mxu0 %v2846
        %3880 = vmatprep.subr.mxu0 0.0
        %3881 = vmatpush1.msra.mxu0 %v2851
        %3882 = vmatprep.subr.mxu0 0.0
        %3883 = vmatpush1.msra.mxu0 %v2856
        %3884 = vmatprep.subr.mxu0 0.0
        %3885 = vmatpush1.msra.mxu0 %v2861
        %3886 = vmatprep.subr.mxu0 0.0
        %3887 = vmatpush1.msra.mxu0 %v2866
        %3888 = vmatprep.subr.mxu0 0.0
        %3889 = vmatpush1.msra.mxu0 %v2871
        %3890 = vmatprep.subr.mxu0 0.0
        %3891 = vmatpush1.msra.mxu0 %v2876
        %3892 = vmatprep.subr.mxu0 0.0
        %3893 = vmatpush1.msra.mxu0 %v2881
        %3894 = vmatprep.subr.mxu0 0.0
        %3895 = vmatpush1.msra.mxu0 %v2886
        %3896 = vmatprep.subr.mxu0 0.0
        %3897 = vmatpush1.msra.mxu0 %v2891
        %3898 = vmatprep.subr.mxu0 0.0
        %3899 = vmatpush1.msra.mxu0 %v2896
        %3900 = vmatprep.subr.mxu0 0.0
        %3901 = vmatpush1.msra.mxu0 %v2901
        %3902 = vmatprep.subr.mxu0 0.0
        %3903 = vmatpush1.msra.mxu0 %v2906
        %3904 = vmatprep.subr.mxu0 0.0
        %3905 = vmatpush1.msra.mxu0 %v2911
        %3906 = vmatprep.subr.mxu0 0.0
        %3907 = vmatpush1.msra.mxu0 %v2916
        %3908 = vmatprep.subr.mxu0 0.0
        %3909 = vmatpush1.msra.mxu0 %v2921
        %3910 = vmatprep.subr.mxu0 0.0
        %3911 = vmatpush1.msra.mxu0 %v2926
        %3912 = vmatprep.subr.mxu0 0.0
        %3913 = vmatpush1.msra.mxu0 %v2931
        %3914 = vmatprep.subr.mxu0 0.0
        %3915 = vmatpush1.msra.mxu0 %v2936
        %3916 = vmatprep.subr.mxu0 0.0
        %3917 = vmatpush1.msra.mxu0 %v2941
        %3918 = vmatprep.subr.mxu0 0.0
        %3919 = vmatpush1.msra.mxu0 %v2946
        %3920 = vmatprep.subr.mxu0 0.0
        %3921 = vmatpush1.msra.mxu0 %v2951
        %3922 = vmatprep.subr.mxu0 0.0
        %3923 = vmatpush1.msra.mxu0 %v2956
        %3924 = vmatprep.subr.mxu0 0.0
        %3925 = vmatpush1.msra.mxu0 %v2961
        %3926 = vmatprep.subr.mxu0 0.0
        %3927 = vmatpush1.msra.mxu0 %v2966
        %3928 = vmatprep.subr.mxu0 0.0
        %3929 = vmatpush1.msra.mxu0 %v2971
        %3930 = vmatprep.subr.mxu0 0.0
        %3931 = vmatpush1.msra.mxu0 %v2976
        %3932 = vmatprep.mubr.f32.mxu0 %v3820
        %3933 = vmatmul.mubr.f32.gmra.mrb[0].mxu0 %v3756
        %v3934 = vpop.f32.mrb[0].mxu0
        %v3935 = vadd.f32 %v3708, %v3934
        %v3936 = vpop.f32.mrb[0].mxu0
        %3937 = vmatprep.mubr.f32.mxu0 %v3821
        %3938 = vmatmul.mubr.f32.gmra.mrb[0].mxu0 %v3757
        %v3939 = vpop.f32.mrb[0].mxu0
        %v3940 = vadd.f32 %v3709, %v3939
        %v3941 = vpop.f32.mrb[0].mxu0
        %3942 = vmatprep.mubr.f32.mxu0 %v3822
        %3943 = vmatmul.mubr.f32.gmra.mrb[0].mxu0 %v3758
        %v3944 = vpop.f32.mrb[0].mxu0
        %v3945 = vadd.f32 %v3710, %v3944
        %v3946 = vpop.f32.mrb[0].mxu0
        %3947 = vmatprep.mubr.f32.mxu0 %v3823
        %3948 = vmatmul.mubr.f32.gmra.mrb[0].mxu0 %v3759
        %v3949 = vpop.f32.mrb[0].mxu0
        %v3950 = vadd.f32 %v3711, %v3949
        %v3951 = vpop.f32.mrb[0].mxu0
        %3952 = vmatprep.mubr.f32.mxu0 %v3824
        %3953 = vmatmul.mubr.f32.gmra.mrb[0].mxu0 %v3760
        %v3954 = vpop.f32.mrb[0].mxu0
        %v3955 = vadd.f32 %v3712, %v3954
        %v3956 = vpop.f32.mrb[0].mxu0
        %3957 = vmatprep.mubr.f32.mxu0 %v3825
        %3958 = vmatmul.mubr.f32.gmra.mrb[0].mxu0 %v3761
        %v3959 = vpop.f32.mrb[0].mxu0
        %v3960 = vadd.f32 %v3713, %v3959
        %v3961 = vpop.f32.mrb[0].mxu0
        %3962 = vmatprep.mubr.f32.mxu0 %v3826
        %3963 = vmatmul.mubr.f32.gmra.mrb[0].mxu0 %v3762
        %v3964 = vpop.f32.mrb[0].mxu0
        %v3965 = vadd.f32 %v3714, %v3964
        %v3966 = vpop.f32.mrb[0].mxu0
        %3967 = vmatprep.mubr.f32.mxu0 %v3827
        %3968 = vmatmul.mubr.f32.gmra.mrb[0].mxu0 %v3763
        %v3969 = vpop.f32.mrb[0].mxu0
        %v3970 = vadd.f32 %v3715, %v3969
        %v3971 = vpop.f32.mrb[0].mxu0
        %3972 = vmatprep.mubr.f32.mxu0 %v3828
        %3973 = vmatmul.mubr.f32.gmra.mrb[0].mxu0 %v3764
        %v3974 = vpop.f32.mrb[0].mxu0
        %v3975 = vadd.f32 %v3716, %v3974
        %v3976 = vpop.f32.mrb[0].mxu0
        %3977 = vmatprep.mubr.f32.mxu0 %v3829
        %3978 = vmatmul.mubr.f32.gmra.mrb[0].mxu0 %v3765
        %v3979 = vpop.f32.mrb[0].mxu0
        %v3980 = vadd.f32 %v3717, %v3979
        %v3981 = vpop.f32.mrb[0].mxu0
        %3982 = vmatprep.mubr.f32.mxu0 %v3830
        %3983 = vmatmul.mubr.f32.gmra.mrb[0].mxu0 %v3766
        %v3984 = vpop.f32.mrb[0].mxu0
        %v3985 = vadd.f32 %v3718, %v3984
        %v3986 = vpop.f32.mrb[0].mxu0
        %3987 = vmatprep.mubr.f32.mxu0 %v3831
        %3988 = vmatmul.mubr.f32.gmra.mrb[0].mxu0 %v3767
        %v3989 = vpop.f32.mrb[0].mxu0
        %v3990 = vadd.f32 %v3719, %v3989
        %v3991 = vpop.f32.mrb[0].mxu0
        %3992 = vmatprep.mubr.f32.mxu0 %v3832
        %3993 = vmatmul.mubr.f32.gmra.mrb[0].mxu0 %v3768
        %v3994 = vpop.f32.mrb[0].mxu0
        %v3995 = vadd.f32 %v3720, %v3994
        %v3996 = vpop.f32.mrb[0].mxu0
        %3997 = vmatprep.mubr.f32.mxu0 %v3833
        %3998 = vmatmul.mubr.f32.gmra.mrb[0].mxu0 %v3769
        %v3999 = vpop.f32.mrb[0].mxu0
        %v4000 = vadd.f32 %v3721, %v3999
        %v4001 = vpop.f32.mrb[0].mxu0
        %4002 = vmatprep.mubr.f32.mxu0 %v3834
        %4003 = vmatmul.mubr.f32.gmra.mrb[0].mxu0 %v3770
        %v4004 = vpop.f32.mrb[0].mxu0
        %v4005 = vadd.f32 %v3722, %v4004
        %v4006 = vpop.f32.mrb[0].mxu0
        %4007 = vmatprep.mubr.f32.mxu0 %v3835
        %4008 = vmatmul.mubr.f32.gmra.mrb[0].mxu0 %v3771
        %v4009 = vpop.f32.mrb[0].mxu0
        %v4010 = vadd.f32 %v3723, %v4009
        %v4011 = vpop.f32.mrb[0].mxu0
        %4012 = vmatprep.mubr.f32.mxu0 %v3852
        %4013 = vmatmul.mubr.f32.gmra.mrb[0].mxu0 %v3788
        %v4014 = vpop.f32.mrb[0].mxu0
        %v4015 = vadd.f32 %v3724, %v4014
        %v4016 = vpop.f32.mrb[0].mxu0
        %4017 = vmatprep.mubr.f32.mxu0 %v3853
        %4018 = vmatmul.mubr.f32.gmra.mrb[0].mxu0 %v3789
        %v4019 = vpop.f32.mrb[0].mxu0
        %v4020 = vadd.f32 %v3725, %v4019
        %v4021 = vpop.f32.mrb[0].mxu0
        %4022 = vmatprep.mubr.f32.mxu0 %v3854
        %4023 = vmatmul.mubr.f32.gmra.mrb[0].mxu0 %v3790
        %v4024 = vpop.f32.mrb[0].mxu0
        %v4025 = vadd.f32 %v3726, %v4024
        %v4026 = vpop.f32.mrb[0].mxu0
        %4027 = vmatprep.mubr.f32.mxu0 %v3855
        %4028 = vmatmul.mubr.f32.gmra.mrb[0].mxu0 %v3791
        %v4029 = vpop.f32.mrb[0].mxu0
        %v4030 = vadd.f32 %v3727, %v4029
        %v4031 = vpop.f32.mrb[0].mxu0
        %4032 = vmatprep.mubr.f32.mxu0 %v3856
        %4033 = vmatmul.mubr.f32.gmra.mrb[0].mxu0 %v3792
        %v4034 = vpop.f32.mrb[0].mxu0
        %v4035 = vadd.f32 %v3728, %v4034
        %v4036 = vpop.f32.mrb[0].mxu0
        %4037 = vmatprep.mubr.f32.mxu0 %v3857
        %4038 = vmatmul.mubr.f32.gmra.mrb[0].mxu0 %v3793
        %v4039 = vpop.f32.mrb[0].mxu0
        %v4040 = vadd.f32 %v3729, %v4039
        %v4041 = vpop.f32.mrb[0].mxu0
        %4042 = vmatprep.mubr.f32.mxu0 %v3858
        %4043 = vmatmul.mubr.f32.gmra.mrb[0].mxu0 %v3794
        %v4044 = vpop.f32.mrb[0].mxu0
        %v4045 = vadd.f32 %v3730, %v4044
        %v4046 = vpop.f32.mrb[0].mxu0
        %4047 = vmatprep.mubr.f32.mxu0 %v3859
        %4048 = vmatmul.mubr.f32.gmra.mrb[0].mxu0 %v3795
        %v4049 = vpop.f32.mrb[0].mxu0
        %v4050 = vadd.f32 %v3731, %v4049
        %v4051 = vpop.f32.mrb[0].mxu0
        %4052 = vmatprep.mubr.f32.mxu0 %v3860
        %4053 = vmatmul.mubr.f32.gmra.mrb[0].mxu0 %v3796
        %v4054 = vpop.f32.mrb[0].mxu0
        %v4055 = vadd.f32 %v3732, %v4054
        %v4056 = vpop.f32.mrb[0].mxu0
        %4057 = vmatprep.mubr.f32.mxu0 %v3861
        %4058 = vmatmul.mubr.f32.gmra.mrb[0].mxu0 %v3797
        %v4059 = vpop.f32.mrb[0].mxu0
        %v4060 = vadd.f32 %v3733, %v4059
        %v4061 = vpop.f32.mrb[0].mxu0
        %4062 = vmatprep.mubr.f32.mxu0 %v3862
        %4063 = vmatmul.mubr.f32.gmra.mrb[0].mxu0 %v3798
        %v4064 = vpop.f32.mrb[0].mxu0
        %v4065 = vadd.f32 %v3734, %v4064
        %v4066 = vpop.f32.mrb[0].mxu0
        %4067 = vmatprep.mubr.f32.mxu0 %v3863
        %4068 = vmatmul.mubr.f32.gmra.mrb[0].mxu0 %v3799
        %v4069 = vpop.f32.mrb[0].mxu0
        %v4070 = vadd.f32 %v3735, %v4069
        %v4071 = vpop.f32.mrb[0].mxu0
        %4072 = vmatprep.mubr.f32.mxu0 %v3864
        %4073 = vmatmul.mubr.f32.gmra.mrb[0].mxu0 %v3800
        %v4074 = vpop.f32.mrb[0].mxu0
        %v4075 = vadd.f32 %v3736, %v4074
        %v4076 = vpop.f32.mrb[0].mxu0
        %4077 = vmatprep.mubr.f32.mxu0 %v3865
        %4078 = vmatmul.mubr.f32.gmra.mrb[0].mxu0 %v3801
        %v4079 = vpop.f32.mrb[0].mxu0
        %v4080 = vadd.f32 %v3737, %v4079
        %v4081 = vpop.f32.mrb[0].mxu0
        %4082 = vmatprep.mubr.f32.mxu0 %v3866
        %4083 = vmatmul.mubr.f32.gmra.mrb[0].mxu0 %v3802
        %v4084 = vpop.f32.mrb[0].mxu0
        %v4085 = vadd.f32 %v3738, %v4084
        %v4086 = vpop.f32.mrb[0].mxu0
        %4087 = vmatprep.mubr.f32.mxu0 %v3867
        %4088 = vmatmul.mubr.f32.gmra.mrb[0].mxu0 %v3803
        %v4089 = vpop.f32.mrb[0].mxu0
        %v4090 = vadd.f32 %v3739, %v4089
        %v4091 = vpop.f32.mrb[0].mxu0
        %4092 = vdwg.mxu0
        %v4093 = vld [vmem:[%s11] sm:$0xf]
        %v4094 = vlaneseq
        %v4095 = vshrl.u32 %v4094, 7
        %v4096 = vsub.s32 0, %v4095
        %v4097 = vrot.slane %v4093, %v4096
        %v4098 = vmul.f32 %v3935, %v4097
        %v4099 = vmul.f32 %v3940, %v4097
        %v4100 = vmul.f32 %v3945, %v4097
        %v4101 = vmul.f32 %v3950, %v4097
        %v4102 = vmul.f32 %v3955, %v4097
        %v4103 = vmul.f32 %v3960, %v4097
        %v4104 = vmul.f32 %v3965, %v4097
        %v4105 = vmul.f32 %v3970, %v4097
        %v4106 = vadd.f32 %v4098, 0.0
        %v4107 = vadd.f32 %v4099, 0.0
        %v4108 = vadd.f32 %v4100, 0.0
        %v4109 = vadd.f32 %v4101, 0.0
        %v4110 = vadd.f32 %v4102, 0.0
        %v4111 = vadd.f32 %v4103, 0.0
        %v4112 = vadd.f32 %v4104, 0.0
        %v4113 = vadd.f32 %v4105, 0.0
        %v4114 = vlaneseq
        %v4115 = vshrl.u32 %v4114, 7
        %v4116 = vsub.s32 1, %v4115
        %v4117 = vrot.slane %v4093, %v4116
        %v4118 = vmul.f32 %v3975, %v4117
        %v4119 = vmul.f32 %v3980, %v4117
        %v4120 = vmul.f32 %v3985, %v4117
        %v4121 = vmul.f32 %v3990, %v4117
        %v4122 = vmul.f32 %v3995, %v4117
        %v4123 = vmul.f32 %v4000, %v4117
        %v4124 = vmul.f32 %v4005, %v4117
        %v4125 = vmul.f32 %v4010, %v4117
        %v4126 = vadd.f32 %v4106, %v4118
        %v4127 = vadd.f32 %v4107, %v4119
        %v4128 = vadd.f32 %v4108, %v4120
        %v4129 = vadd.f32 %v4109, %v4121
        %v4130 = vadd.f32 %v4110, %v4122
        %v4131 = vadd.f32 %v4111, %v4123
        %v4132 = vadd.f32 %v4112, %v4124
        %v4133 = vadd.f32 %v4113, %v4125
        %v4134 = vlaneseq
        %v4135 = vshrl.u32 %v4134, 7
        %v4136 = vsub.s32 2, %v4135
        %v4137 = vrot.slane %v4093, %v4136
        %v4138 = vmul.f32 %v4015, %v4137
        %v4139 = vmul.f32 %v4020, %v4137
        %v4140 = vmul.f32 %v4025, %v4137
        %v4141 = vmul.f32 %v4030, %v4137
        %v4142 = vmul.f32 %v4035, %v4137
        %v4143 = vmul.f32 %v4040, %v4137
        %v4144 = vmul.f32 %v4045, %v4137
        %v4145 = vmul.f32 %v4050, %v4137
        %v4146 = vadd.f32 %v4126, %v4138
        %v4147 = vadd.f32 %v4127, %v4139
        %v4148 = vadd.f32 %v4128, %v4140
        %v4149 = vadd.f32 %v4129, %v4141
        %v4150 = vadd.f32 %v4130, %v4142
        %v4151 = vadd.f32 %v4131, %v4143
        %v4152 = vadd.f32 %v4132, %v4144
        %v4153 = vadd.f32 %v4133, %v4145
        %v4154 = vlaneseq
        %v4155 = vshrl.u32 %v4154, 7
        %v4156 = vsub.s32 3, %v4155
        %v4157 = vrot.slane %v4093, %v4156
        %v4158 = vmul.f32 %v4055, %v4157
        %v4159 = vmul.f32 %v4060, %v4157
        %v4160 = vmul.f32 %v4065, %v4157
        %v4161 = vmul.f32 %v4070, %v4157
        %v4162 = vmul.f32 %v4075, %v4157
        %v4163 = vmul.f32 %v4080, %v4157
        %v4164 = vmul.f32 %v4085, %v4157
        %v4165 = vmul.f32 %v4090, %v4157
        %v4166 = vadd.f32 %v4146, %v4158
        %v4167 = vadd.f32 %v4147, %v4159
        %v4168 = vadd.f32 %v4148, %v4160
        %v4169 = vadd.f32 %v4149, %v4161
        %v4170 = vadd.f32 %v4150, %v4162
        %v4171 = vadd.f32 %v4151, %v4163
        %v4172 = vadd.f32 %v4152, %v4164
        %v4173 = vadd.f32 %v4153, %v4165
        %v4174 = vld [vmem:[#allocation16] sm:$0xff]
        %v4175 = vld [vmem:[#allocation16 + $0x8] sm:$0xff]
        %v4176 = vld [vmem:[#allocation16 + $0x10] sm:$0xff]
        %v4177 = vld [vmem:[#allocation16 + $0x18] sm:$0xff]
        %v4178 = vld [vmem:[#allocation16 + $0x20] sm:$0xff]
        %v4179 = vld [vmem:[#allocation16 + $0x28] sm:$0xff]
        %v4180 = vld [vmem:[#allocation16 + $0x30] sm:$0xff]
        %v4181 = vld [vmem:[#allocation16 + $0x38] sm:$0xff]
        %v4182 = vld [vmem:[#allocation16 + $0x40] sm:$0xff]
        %v4183 = vld [vmem:[#allocation16 + $0x48] sm:$0xff]
        %v4184 = vld [vmem:[#allocation16 + $0x50] sm:$0xff]
        %v4185 = vld [vmem:[#allocation16 + $0x58] sm:$0xff]
        %v4186 = vld [vmem:[#allocation16 + $0x60] sm:$0xff]
        %v4187 = vld [vmem:[#allocation16 + $0x68] sm:$0xff]
        %v4188 = vld [vmem:[#allocation16 + $0x70] sm:$0xff]
        %v4189 = vld [vmem:[#allocation16 + $0x78] sm:$0xff]
        %v4190 = vlaneseq
        %v4191 = vshrl.u32 %v4190, 7
        %v4192 = vsub.s32 3, %v4191
        %v4193 = vrot.slane %v672, %v4192
        %4194 = vmatprep.subr.mxu0 0.0
        %4195 = vmatpush1.msra.mxu0 %v4174
        %4196 = vmatprep.subr.mxu0 0.0
        %4197 = vmatpush1.msra.mxu0 %v4175
        %4198 = vmatprep.subr.mxu0 0.0
        %4199 = vmatpush1.msra.mxu0 %v4176
        %4200 = vmatprep.subr.mxu0 0.0
        %4201 = vmatpush1.msra.mxu0 %v4177
        %4202 = vmatprep.subr.mxu0 0.0
        %4203 = vmatpush1.msra.mxu0 %v4178
        %4204 = vmatprep.subr.mxu0 0.0
        %4205 = vmatpush1.msra.mxu0 %v4179
        %4206 = vmatprep.subr.mxu0 0.0
        %4207 = vmatpush1.msra.mxu0 %v4180
        %4208 = vmatprep.subr.mxu0 0.0
        %4209 = vmatpush1.msra.mxu0 %v4181
        %4210 = vmatprep.subr.mxu0 0.0
        %4211 = vmatpush1.msra.mxu0 %v4182
        %4212 = vmatprep.subr.mxu0 0.0
        %4213 = vmatpush1.msra.mxu0 %v4183
        %4214 = vmatprep.subr.mxu0 0.0
        %4215 = vmatpush1.msra.mxu0 %v4184
        %4216 = vmatprep.subr.mxu0 0.0
        %4217 = vmatpush1.msra.mxu0 %v4185
        %4218 = vmatprep.subr.mxu0 0.0
        %4219 = vmatpush1.msra.mxu0 %v4186
        %4220 = vmatprep.subr.mxu0 0.0
        %4221 = vmatpush1.msra.mxu0 %v4187
        %4222 = vmatprep.subr.mxu0 0.0
        %4223 = vmatpush1.msra.mxu0 %v4188
        %4224 = vmatprep.subr.mxu0 0.0
        %4225 = vmatpush1.msra.mxu0 %v4189
        %4226 = vmatprep.subr.mxu0 0.0
        %4227 = vmatpush1.msra.mxu0 0.0
        %4228 = vmatprep.subr.mxu0 0.0
        %4229 = vmatpush1.msra.mxu0 0.0
        %4230 = vmatprep.subr.mxu0 0.0
        %4231 = vmatpush1.msra.mxu0 0.0
        %4232 = vmatprep.subr.mxu0 0.0
        %4233 = vmatpush1.msra.mxu0 0.0
        %4234 = vmatprep.subr.mxu0 0.0
        %4235 = vmatpush1.msra.mxu0 0.0
        %4236 = vmatprep.subr.mxu0 0.0
        %4237 = vmatpush1.msra.mxu0 0.0
        %4238 = vmatprep.subr.mxu0 0.0
        %4239 = vmatpush1.msra.mxu0 0.0
        %4240 = vmatprep.subr.mxu0 0.0
        %4241 = vmatpush1.msra.mxu0 0.0
        %4242 = vmatprep.subr.mxu0 0.0
        %4243 = vmatpush1.msra.mxu0 0.0
        %4244 = vmatprep.subr.mxu0 0.0
        %4245 = vmatpush1.msra.mxu0 0.0
        %4246 = vmatprep.subr.mxu0 0.0
        %4247 = vmatpush1.msra.mxu0 0.0
        %4248 = vmatprep.subr.mxu0 0.0
        %4249 = vmatpush1.msra.mxu0 0.0
        %4250 = vmatprep.subr.mxu0 0.0
        %4251 = vmatpush1.msra.mxu0 0.0
        %4252 = vmatprep.subr.mxu0 0.0
        %4253 = vmatpush1.msra.mxu0 0.0
        %4254 = vmatprep.subr.mxu0 0.0
        %4255 = vmatpush1.msra.mxu0 0.0
        %4256 = vmatprep.subr.mxu0 0.0
        %4257 = vmatpush1.msra.mxu0 0.0
        %4258 = vmatprep.mubr.f32.mxu0 0.0
        %4259 = vmatmul.mubr.f32.gmra.mrb[0].mxu0 %v4166
        %v4260 = vpop.f32.mrb[0].mxu0
        %v4261 = vadd.f32 %v4193, %v4260
        %v4262 = vpop.f32.mrb[0].mxu0
        %4263 = vmatprep.mubr.f32.mxu0 0.0
        %4264 = vmatmul.mubr.f32.gmra.mrb[0].mxu0 %v4167
        %v4265 = vpop.f32.mrb[0].mxu0
        %v4266 = vadd.f32 %v4193, %v4265
        %v4267 = vpop.f32.mrb[0].mxu0
        %4268 = vmatprep.mubr.f32.mxu0 0.0
        %4269 = vmatmul.mubr.f32.gmra.mrb[0].mxu0 %v4168
        %v4270 = vpop.f32.mrb[0].mxu0
        %v4271 = vadd.f32 %v4193, %v4270
        %v4272 = vpop.f32.mrb[0].mxu0
        %4273 = vmatprep.mubr.f32.mxu0 0.0
        %4274 = vmatmul.mubr.f32.gmra.mrb[0].mxu0 %v4169
        %v4275 = vpop.f32.mrb[0].mxu0
        %v4276 = vadd.f32 %v4193, %v4275
        %v4277 = vpop.f32.mrb[0].mxu0
        %4278 = vmatprep.mubr.f32.mxu0 0.0
        %4279 = vmatmul.mubr.f32.gmra.mrb[0].mxu0 %v4170
        %v4280 = vpop.f32.mrb[0].mxu0
        %v4281 = vadd.f32 %v4193, %v4280
        %v4282 = vpop.f32.mrb[0].mxu0
        %4283 = vmatprep.mubr.f32.mxu0 0.0
        %4284 = vmatmul.mubr.f32.gmra.mrb[0].mxu0 %v4171
        %v4285 = vpop.f32.mrb[0].mxu0
        %v4286 = vadd.f32 %v4193, %v4285
        %v4287 = vpop.f32.mrb[0].mxu0
        %4288 = vmatprep.mubr.f32.mxu0 0.0
        %4289 = vmatmul.mubr.f32.gmra.mrb[0].mxu0 %v4172
        %v4290 = vpop.f32.mrb[0].mxu0
        %v4291 = vadd.f32 %v4193, %v4290
        %v4292 = vpop.f32.mrb[0].mxu0
        %4293 = vmatprep.mubr.f32.mxu0 0.0
        %4294 = vmatmul.mubr.f32.gmra.mrb[0].mxu0 %v4173
        %v4295 = vpop.f32.mrb[0].mxu0
        %v4296 = vadd.f32 %v4193, %v4295
        %v4297 = vpop.f32.mrb[0].mxu0
        %4298 = vdwg.mxu0
        %v4299 = vxor.u32 %v4261, 2147483648
        %v4300 = vxor.u32 %v4266, 2147483648
        %v4301 = vxor.u32 %v4271, 2147483648
        %v4302 = vxor.u32 %v4276, 2147483648
        %v4303 = vxor.u32 %v4281, 2147483648
        %v4304 = vxor.u32 %v4286, 2147483648
        %v4305 = vxor.u32 %v4291, 2147483648
        %v4306 = vxor.u32 %v4296, 2147483648
        %v4307 = vmul.f32 %v4299, 1.442695
        %v4308 = vpow.pop %v4307
        %v4309 = vmul.f32 %v4300, 1.442695
        %v4310 = vpow.pop %v4309
        %v4311 = vmul.f32 %v4301, 1.442695
        %v4312 = vpow.pop %v4311
        %v4313 = vmul.f32 %v4302, 1.442695
        %v4314 = vpow.pop %v4313
        %v4315 = vmul.f32 %v4303, 1.442695
        %v4316 = vpow.pop %v4315
        %v4317 = vmul.f32 %v4304, 1.442695
        %v4318 = vpow.pop %v4317
        %v4319 = vmul.f32 %v4305, 1.442695
        %v4320 = vpow.pop %v4319
        %v4321 = vmul.f32 %v4306, 1.442695
        %v4322 = vpow.pop %v4321
        %v4323 = vadd.f32 %v4308, 1.0
        %v4324 = vadd.f32 %v4310, 1.0
        %v4325 = vadd.f32 %v4312, 1.0
        %v4326 = vadd.f32 %v4314, 1.0
        %v4327 = vadd.f32 %v4316, 1.0
        %v4328 = vadd.f32 %v4318, 1.0
        %v4329 = vadd.f32 %v4320, 1.0
        %v4330 = vadd.f32 %v4322, 1.0
        %v4331 = vrcp.pop %v4323
        %v4332 = vmul.f32 1.0, %v4331
        %v4333 = vrcp.pop %v4324
        %v4334 = vmul.f32 1.0, %v4333
        %v4335 = vrcp.pop %v4325
        %v4336 = vmul.f32 1.0, %v4335
        %v4337 = vrcp.pop %v4326
        %v4338 = vmul.f32 1.0, %v4337
        %v4339 = vrcp.pop %v4327
        %v4340 = vmul.f32 1.0, %v4339
        %v4341 = vrcp.pop %v4328
        %v4342 = vmul.f32 1.0, %v4341
        %v4343 = vrcp.pop %v4329
        %v4344 = vmul.f32 1.0, %v4343
        %v4345 = vrcp.pop %v4330
        %v4346 = vmul.f32 1.0, %v4345
        %v4347 = vmul.f32 %v4261, %v4332
        %v4348 = vmul.f32 %v4266, %v4334
        %v4349 = vmul.f32 %v4271, %v4336
        %v4350 = vmul.f32 %v4276, %v4338
        %v4351 = vmul.f32 %v4281, %v4340
        %v4352 = vmul.f32 %v4286, %v4342
        %v4353 = vmul.f32 %v4291, %v4344
        %v4354 = vmul.f32 %v4296, %v4346
        %v4355 = vld [vmem:[#allocation17] sm:$0xff]
        %v4356 = vld [vmem:[#allocation17 + $0x8] sm:$0xff]
        %v4357 = vld [vmem:[#allocation17 + $0x10] sm:$0xff]
        %v4358 = vld [vmem:[#allocation17 + $0x18] sm:$0xff]
        %v4359 = vld [vmem:[#allocation17 + $0x20] sm:$0xff]
        %v4360 = vld [vmem:[#allocation17 + $0x28] sm:$0xff]
        %v4361 = vld [vmem:[#allocation17 + $0x30] sm:$0xff]
        %v4362 = vld [vmem:[#allocation17 + $0x38] sm:$0xff]
        %v4363 = vld [vmem:[#allocation17 + $0x40] sm:$0xff]
        %v4364 = vld [vmem:[#allocation17 + $0x48] sm:$0xff]
        %v4365 = vld [vmem:[#allocation17 + $0x50] sm:$0xff]
        %v4366 = vld [vmem:[#allocation17 + $0x58] sm:$0xff]
        %v4367 = vld [vmem:[#allocation17 + $0x60] sm:$0xff]
        %v4368 = vld [vmem:[#allocation17 + $0x68] sm:$0xff]
        %v4369 = vld [vmem:[#allocation17 + $0x70] sm:$0xff]
        %v4370 = vld [vmem:[#allocation17 + $0x78] sm:$0xff]
        %v4371 = vlaneseq
        %v4372 = vshrl.u32 %v4371, 7
        %v4373 = vsub.s32 4, %v4372
        %v4374 = vrot.slane %v672, %v4373
        %4375 = vmatprep.subr.mxu0 0.0
        %4376 = vmatpush1.msra.mxu0 %v4355
        %4377 = vmatprep.subr.mxu0 0.0
        %4378 = vmatpush1.msra.mxu0 %v4356
        %4379 = vmatprep.subr.mxu0 0.0
        %4380 = vmatpush1.msra.mxu0 %v4357
        %4381 = vmatprep.subr.mxu0 0.0
        %4382 = vmatpush1.msra.mxu0 %v4358
        %4383 = vmatprep.subr.mxu0 0.0
        %4384 = vmatpush1.msra.mxu0 %v4359
        %4385 = vmatprep.subr.mxu0 0.0
        %4386 = vmatpush1.msra.mxu0 %v4360
        %4387 = vmatprep.subr.mxu0 0.0
        %4388 = vmatpush1.msra.mxu0 %v4361
        %4389 = vmatprep.subr.mxu0 0.0
        %4390 = vmatpush1.msra.mxu0 %v4362
        %4391 = vmatprep.subr.mxu0 0.0
        %4392 = vmatpush1.msra.mxu0 %v4363
        %4393 = vmatprep.subr.mxu0 0.0
        %4394 = vmatpush1.msra.mxu0 %v4364
        %4395 = vmatprep.subr.mxu0 0.0
        %4396 = vmatpush1.msra.mxu0 %v4365
        %4397 = vmatprep.subr.mxu0 0.0
        %4398 = vmatpush1.msra.mxu0 %v4366
        %4399 = vmatprep.subr.mxu0 0.0
        %4400 = vmatpush1.msra.mxu0 %v4367
        %4401 = vmatprep.subr.mxu0 0.0
        %4402 = vmatpush1.msra.mxu0 %v4368
        %4403 = vmatprep.subr.mxu0 0.0
        %4404 = vmatpush1.msra.mxu0 %v4369
        %4405 = vmatprep.subr.mxu0 0.0
        %4406 = vmatpush1.msra.mxu0 %v4370
        %4407 = vmatprep.subr.mxu0 0.0
        %4408 = vmatpush1.msra.mxu0 0.0
        %4409 = vmatprep.subr.mxu0 0.0
        %4410 = vmatpush1.msra.mxu0 0.0
        %4411 = vmatprep.subr.mxu0 0.0
        %4412 = vmatpush1.msra.mxu0 0.0
        %4413 = vmatprep.subr.mxu0 0.0
        %4414 = vmatpush1.msra.mxu0 0.0
        %4415 = vmatprep.subr.mxu0 0.0
        %4416 = vmatpush1.msra.mxu0 0.0
        %4417 = vmatprep.subr.mxu0 0.0
        %4418 = vmatpush1.msra.mxu0 0.0
        %4419 = vmatprep.subr.mxu0 0.0
        %4420 = vmatpush1.msra.mxu0 0.0
        %4421 = vmatprep.subr.mxu0 0.0
        %4422 = vmatpush1.msra.mxu0 0.0
        %4423 = vmatprep.subr.mxu0 0.0
        %4424 = vmatpush1.msra.mxu0 0.0
        %4425 = vmatprep.subr.mxu0 0.0
        %4426 = vmatpush1.msra.mxu0 0.0
        %4427 = vmatprep.subr.mxu0 0.0
        %4428 = vmatpush1.msra.mxu0 0.0
        %4429 = vmatprep.subr.mxu0 0.0
        %4430 = vmatpush1.msra.mxu0 0.0
        %4431 = vmatprep.subr.mxu0 0.0
        %4432 = vmatpush1.msra.mxu0 0.0
        %4433 = vmatprep.subr.mxu0 0.0
        %4434 = vmatpush1.msra.mxu0 0.0
        %4435 = vmatprep.subr.mxu0 0.0
        %4436 = vmatpush1.msra.mxu0 0.0
        %4437 = vmatprep.subr.mxu0 0.0
        %4438 = vmatpush1.msra.mxu0 0.0
        %4439 = vmatprep.mubr.f32.mxu0 0.0
        %4440 = vmatmul.mubr.f32.gmra.mrb[0].mxu0 %v4347
        %v4441 = vpop.f32.mrb[0].mxu0
        %v4442 = vadd.f32 %v4374, %v4441
        %v4443 = vpop.f32.mrb[0].mxu0
        %4444 = vmatprep.mubr.f32.mxu0 0.0
        %4445 = vmatmul.mubr.f32.gmra.mrb[0].mxu0 %v4348
        %v4446 = vpop.f32.mrb[0].mxu0
        %v4447 = vadd.f32 %v4374, %v4446
        %v4448 = vpop.f32.mrb[0].mxu0
        %4449 = vmatprep.mubr.f32.mxu0 0.0
        %4450 = vmatmul.mubr.f32.gmra.mrb[0].mxu0 %v4349
        %v4451 = vpop.f32.mrb[0].mxu0
        %v4452 = vadd.f32 %v4374, %v4451
        %v4453 = vpop.f32.mrb[0].mxu0
        %4454 = vmatprep.mubr.f32.mxu0 0.0
        %4455 = vmatmul.mubr.f32.gmra.mrb[0].mxu0 %v4350
        %v4456 = vpop.f32.mrb[0].mxu0
        %v4457 = vadd.f32 %v4374, %v4456
        %v4458 = vpop.f32.mrb[0].mxu0
        %4459 = vmatprep.mubr.f32.mxu0 0.0
        %4460 = vmatmul.mubr.f32.gmra.mrb[0].mxu0 %v4351
        %v4461 = vpop.f32.mrb[0].mxu0
        %v4462 = vadd.f32 %v4374, %v4461
        %v4463 = vpop.f32.mrb[0].mxu0
        %4464 = vmatprep.mubr.f32.mxu0 0.0
        %4465 = vmatmul.mubr.f32.gmra.mrb[0].mxu0 %v4352
        %v4466 = vpop.f32.mrb[0].mxu0
        %v4467 = vadd.f32 %v4374, %v4466
        %v4468 = vpop.f32.mrb[0].mxu0
        %4469 = vmatprep.mubr.f32.mxu0 0.0
        %4470 = vmatmul.mubr.f32.gmra.mrb[0].mxu0 %v4353
        %v4471 = vpop.f32.mrb[0].mxu0
        %v4472 = vadd.f32 %v4374, %v4471
        %v4473 = vpop.f32.mrb[0].mxu0
        %4474 = vmatprep.mubr.f32.mxu0 0.0
        %4475 = vmatmul.mubr.f32.gmra.mrb[0].mxu0 %v4354
        %v4476 = vpop.f32.mrb[0].mxu0
        %v4477 = vadd.f32 %v4374, %v4476
        %v4478 = vpop.f32.mrb[0].mxu0
        %4479 = vdwg.mxu0
        %v4488 = vcombine.high %v4442, %v4442
        %v4490 = vunpack.c.l.s4 1966171168
        %v4491 = vunpack.c.0.s8 %v4490
        %v4492 = vlaneseq
        %v4493 = vshrl.u32 %v4492, 7
        %v4494 = vsub.s32 %v4491, %v4493
        %v4495 = vrot.slane %v4442, %v4494
        %v4497 = vunpack.c.l.s4 1966171168
        %v4498 = vunpack.c.0.s8 %v4497
        %v4499 = vlaneseq
        %v4500 = vshrl.u32 %v4499, 7
        %v4501 = vsub.s32 %v4498, %v4500
        %v4502 = vrot.slane %v4488, %v4501
        %v4503 = vcombine.high %v4495, %v4495
        %v4504 = vcombine.high %v4502, %v4502
        %v4506 = vunpack.c.l.s4 1966171168
        %v4507 = vunpack.c.0.s8 %v4506
        %v4508 = vlaneseq
        %v4509 = vshrl.u32 %v4508, 7
        %v4510 = vsub.s32 %v4507, %v4509
        %v4511 = vrot.slane %v4495, %v4510
        %v4513 = vunpack.c.l.s4 1966171168
        %v4514 = vunpack.c.0.s8 %v4513
        %v4515 = vlaneseq
        %v4516 = vshrl.u32 %v4515, 7
        %v4517 = vsub.s32 %v4514, %v4516
        %v4518 = vrot.slane %v4502, %v4517
        %v4520 = vunpack.c.l.s4 1966171168
        %v4521 = vunpack.c.0.s8 %v4520
        %v4522 = vlaneseq
        %v4523 = vshrl.u32 %v4522, 7
        %v4524 = vsub.s32 %v4521, %v4523
        %v4525 = vrot.slane %v4503, %v4524
        %v4527 = vunpack.c.l.s4 1966171168
        %v4528 = vunpack.c.0.s8 %v4527
        %v4529 = vlaneseq
        %v4530 = vshrl.u32 %v4529, 7
        %v4531 = vsub.s32 %v4528, %v4530
        %v4532 = vrot.slane %v4504, %v4531
        %v4533 = vcombine.high %v4511, %v4511
        %v4534 = vcombine.high %v4518, %v4518
        %v4535 = vcombine.high %v4525, %v4525
        %v4536 = vcombine.high %v4532, %v4532
        %v4537 = vcombine.high %v4447, %v4447
        %v4539 = vunpack.c.l.s4 1966171168
        %v4540 = vunpack.c.0.s8 %v4539
        %v4541 = vlaneseq
        %v4542 = vshrl.u32 %v4541, 7
        %v4543 = vsub.s32 %v4540, %v4542
        %v4544 = vrot.slane %v4447, %v4543
        %v4546 = vunpack.c.l.s4 1966171168
        %v4547 = vunpack.c.0.s8 %v4546
        %v4548 = vlaneseq
        %v4549 = vshrl.u32 %v4548, 7
        %v4550 = vsub.s32 %v4547, %v4549
        %v4551 = vrot.slane %v4537, %v4550
        %v4552 = vcombine.high %v4544, %v4544
        %v4553 = vcombine.high %v4551, %v4551
        %v4555 = vunpack.c.l.s4 1966171168
        %v4556 = vunpack.c.0.s8 %v4555
        %v4557 = vlaneseq
        %v4558 = vshrl.u32 %v4557, 7
        %v4559 = vsub.s32 %v4556, %v4558
        %v4560 = vrot.slane %v4544, %v4559
        %v4562 = vunpack.c.l.s4 1966171168
        %v4563 = vunpack.c.0.s8 %v4562
        %v4564 = vlaneseq
        %v4565 = vshrl.u32 %v4564, 7
        %v4566 = vsub.s32 %v4563, %v4565
        %v4567 = vrot.slane %v4551, %v4566
        %v4569 = vunpack.c.l.s4 1966171168
        %v4570 = vunpack.c.0.s8 %v4569
        %v4571 = vlaneseq
        %v4572 = vshrl.u32 %v4571, 7
        %v4573 = vsub.s32 %v4570, %v4572
        %v4574 = vrot.slane %v4552, %v4573
        %v4576 = vunpack.c.l.s4 1966171168
        %v4577 = vunpack.c.0.s8 %v4576
        %v4578 = vlaneseq
        %v4579 = vshrl.u32 %v4578, 7
        %v4580 = vsub.s32 %v4577, %v4579
        %v4581 = vrot.slane %v4553, %v4580
        %v4582 = vcombine.high %v4560, %v4560
        %v4583 = vcombine.high %v4567, %v4567
        %v4584 = vcombine.high %v4574, %v4574
        %v4585 = vcombine.high %v4581, %v4581
        %v4586 = vcombine.high %v4452, %v4452
        %v4588 = vunpack.c.l.s4 1966171168
        %v4589 = vunpack.c.0.s8 %v4588
        %v4590 = vlaneseq
        %v4591 = vshrl.u32 %v4590, 7
        %v4592 = vsub.s32 %v4589, %v4591
        %v4593 = vrot.slane %v4452, %v4592
        %v4595 = vunpack.c.l.s4 1966171168
        %v4596 = vunpack.c.0.s8 %v4595
        %v4597 = vlaneseq
        %v4598 = vshrl.u32 %v4597, 7
        %v4599 = vsub.s32 %v4596, %v4598
        %v4600 = vrot.slane %v4586, %v4599
        %v4601 = vcombine.high %v4593, %v4593
        %v4602 = vcombine.high %v4600, %v4600
        %v4604 = vunpack.c.l.s4 1966171168
        %v4605 = vunpack.c.0.s8 %v4604
        %v4606 = vlaneseq
        %v4607 = vshrl.u32 %v4606, 7
        %v4608 = vsub.s32 %v4605, %v4607
        %v4609 = vrot.slane %v4593, %v4608
        %v4611 = vunpack.c.l.s4 1966171168
        %v4612 = vunpack.c.0.s8 %v4611
        %v4613 = vlaneseq
        %v4614 = vshrl.u32 %v4613, 7
        %v4615 = vsub.s32 %v4612, %v4614
        %v4616 = vrot.slane %v4600, %v4615
        %v4618 = vunpack.c.l.s4 1966171168
        %v4619 = vunpack.c.0.s8 %v4618
        %v4620 = vlaneseq
        %v4621 = vshrl.u32 %v4620, 7
        %v4622 = vsub.s32 %v4619, %v4621
        %v4623 = vrot.slane %v4601, %v4622
        %v4625 = vunpack.c.l.s4 1966171168
        %v4626 = vunpack.c.0.s8 %v4625
        %v4627 = vlaneseq
        %v4628 = vshrl.u32 %v4627, 7
        %v4629 = vsub.s32 %v4626, %v4628
        %v4630 = vrot.slane %v4602, %v4629
        %v4631 = vcombine.high %v4609, %v4609
        %v4632 = vcombine.high %v4616, %v4616
        %v4633 = vcombine.high %v4623, %v4623
        %v4634 = vcombine.high %v4630, %v4630
        %v4635 = vcombine.high %v4457, %v4457
        %v4637 = vunpack.c.l.s4 1966171168
        %v4638 = vunpack.c.0.s8 %v4637
        %v4639 = vlaneseq
        %v4640 = vshrl.u32 %v4639, 7
        %v4641 = vsub.s32 %v4638, %v4640
        %v4642 = vrot.slane %v4457, %v4641
        %v4644 = vunpack.c.l.s4 1966171168
        %v4645 = vunpack.c.0.s8 %v4644
        %v4646 = vlaneseq
        %v4647 = vshrl.u32 %v4646, 7
        %v4648 = vsub.s32 %v4645, %v4647
        %v4649 = vrot.slane %v4635, %v4648
        %v4650 = vcombine.high %v4642, %v4642
        %v4651 = vcombine.high %v4649, %v4649
        %v4653 = vunpack.c.l.s4 1966171168
        %v4654 = vunpack.c.0.s8 %v4653
        %v4655 = vlaneseq
        %v4656 = vshrl.u32 %v4655, 7
        %v4657 = vsub.s32 %v4654, %v4656
        %v4658 = vrot.slane %v4642, %v4657
        %v4660 = vunpack.c.l.s4 1966171168
        %v4661 = vunpack.c.0.s8 %v4660
        %v4662 = vlaneseq
        %v4663 = vshrl.u32 %v4662, 7
        %v4664 = vsub.s32 %v4661, %v4663
        %v4665 = vrot.slane %v4649, %v4664
        %v4667 = vunpack.c.l.s4 1966171168
        %v4668 = vunpack.c.0.s8 %v4667
        %v4669 = vlaneseq
        %v4670 = vshrl.u32 %v4669, 7
        %v4671 = vsub.s32 %v4668, %v4670
        %v4672 = vrot.slane %v4650, %v4671
        %v4674 = vunpack.c.l.s4 1966171168
        %v4675 = vunpack.c.0.s8 %v4674
        %v4676 = vlaneseq
        %v4677 = vshrl.u32 %v4676, 7
        %v4678 = vsub.s32 %v4675, %v4677
        %v4679 = vrot.slane %v4651, %v4678
        %v4680 = vcombine.high %v4658, %v4658
        %v4681 = vcombine.high %v4665, %v4665
        %v4682 = vcombine.high %v4672, %v4672
        %v4683 = vcombine.high %v4679, %v4679
        %v4684 = vcombine.high %v4462, %v4462
        %v4686 = vunpack.c.l.s4 1966171168
        %v4687 = vunpack.c.0.s8 %v4686
        %v4688 = vlaneseq
        %v4689 = vshrl.u32 %v4688, 7
        %v4690 = vsub.s32 %v4687, %v4689
        %v4691 = vrot.slane %v4462, %v4690
        %v4693 = vunpack.c.l.s4 1966171168
        %v4694 = vunpack.c.0.s8 %v4693
        %v4695 = vlaneseq
        %v4696 = vshrl.u32 %v4695, 7
        %v4697 = vsub.s32 %v4694, %v4696
        %v4698 = vrot.slane %v4684, %v4697
        %v4699 = vcombine.high %v4691, %v4691
        %v4700 = vcombine.high %v4698, %v4698
        %v4702 = vunpack.c.l.s4 1966171168
        %v4703 = vunpack.c.0.s8 %v4702
        %v4704 = vlaneseq
        %v4705 = vshrl.u32 %v4704, 7
        %v4706 = vsub.s32 %v4703, %v4705
        %v4707 = vrot.slane %v4691, %v4706
        %v4709 = vunpack.c.l.s4 1966171168
        %v4710 = vunpack.c.0.s8 %v4709
        %v4711 = vlaneseq
        %v4712 = vshrl.u32 %v4711, 7
        %v4713 = vsub.s32 %v4710, %v4712
        %v4714 = vrot.slane %v4698, %v4713
        %v4716 = vunpack.c.l.s4 1966171168
        %v4717 = vunpack.c.0.s8 %v4716
        %v4718 = vlaneseq
        %v4719 = vshrl.u32 %v4718, 7
        %v4720 = vsub.s32 %v4717, %v4719
        %v4721 = vrot.slane %v4699, %v4720
        %v4723 = vunpack.c.l.s4 1966171168
        %v4724 = vunpack.c.0.s8 %v4723
        %v4725 = vlaneseq
        %v4726 = vshrl.u32 %v4725, 7
        %v4727 = vsub.s32 %v4724, %v4726
        %v4728 = vrot.slane %v4700, %v4727
        %v4729 = vcombine.high %v4707, %v4707
        %v4730 = vcombine.high %v4714, %v4714
        %v4731 = vcombine.high %v4721, %v4721
        %v4732 = vcombine.high %v4728, %v4728
        %v4733 = vcombine.high %v4467, %v4467
        %v4735 = vunpack.c.l.s4 1966171168
        %v4736 = vunpack.c.0.s8 %v4735
        %v4737 = vlaneseq
        %v4738 = vshrl.u32 %v4737, 7
        %v4739 = vsub.s32 %v4736, %v4738
        %v4740 = vrot.slane %v4467, %v4739
        %v4742 = vunpack.c.l.s4 1966171168
        %v4743 = vunpack.c.0.s8 %v4742
        %v4744 = vlaneseq
        %v4745 = vshrl.u32 %v4744, 7
        %v4746 = vsub.s32 %v4743, %v4745
        %v4747 = vrot.slane %v4733, %v4746
        %v4748 = vcombine.high %v4740, %v4740
        %v4749 = vcombine.high %v4747, %v4747
        %v4751 = vunpack.c.l.s4 1966171168
        %v4752 = vunpack.c.0.s8 %v4751
        %v4753 = vlaneseq
        %v4754 = vshrl.u32 %v4753, 7
        %v4755 = vsub.s32 %v4752, %v4754
        %v4756 = vrot.slane %v4740, %v4755
        %v4758 = vunpack.c.l.s4 1966171168
        %v4759 = vunpack.c.0.s8 %v4758
        %v4760 = vlaneseq
        %v4761 = vshrl.u32 %v4760, 7
        %v4762 = vsub.s32 %v4759, %v4761
        %v4763 = vrot.slane %v4747, %v4762
        %v4765 = vunpack.c.l.s4 1966171168
        %v4766 = vunpack.c.0.s8 %v4765
        %v4767 = vlaneseq
        %v4768 = vshrl.u32 %v4767, 7
        %v4769 = vsub.s32 %v4766, %v4768
        %v4770 = vrot.slane %v4748, %v4769
        %v4772 = vunpack.c.l.s4 1966171168
        %v4773 = vunpack.c.0.s8 %v4772
        %v4774 = vlaneseq
        %v4775 = vshrl.u32 %v4774, 7
        %v4776 = vsub.s32 %v4773, %v4775
        %v4777 = vrot.slane %v4749, %v4776
        %v4778 = vcombine.high %v4756, %v4756
        %v4779 = vcombine.high %v4763, %v4763
        %v4780 = vcombine.high %v4770, %v4770
        %v4781 = vcombine.high %v4777, %v4777
        %v4782 = vcombine.high %v4472, %v4472
        %v4784 = vunpack.c.l.s4 1966171168
        %v4785 = vunpack.c.0.s8 %v4784
        %v4786 = vlaneseq
        %v4787 = vshrl.u32 %v4786, 7
        %v4788 = vsub.s32 %v4785, %v4787
        %v4789 = vrot.slane %v4472, %v4788
        %v4791 = vunpack.c.l.s4 1966171168
        %v4792 = vunpack.c.0.s8 %v4791
        %v4793 = vlaneseq
        %v4794 = vshrl.u32 %v4793, 7
        %v4795 = vsub.s32 %v4792, %v4794
        %v4796 = vrot.slane %v4782, %v4795
        %v4797 = vcombine.high %v4789, %v4789
        %v4798 = vcombine.high %v4796, %v4796
        %v4800 = vunpack.c.l.s4 1966171168
        %v4801 = vunpack.c.0.s8 %v4800
        %v4802 = vlaneseq
        %v4803 = vshrl.u32 %v4802, 7
        %v4804 = vsub.s32 %v4801, %v4803
        %v4805 = vrot.slane %v4789, %v4804
        %v4807 = vunpack.c.l.s4 1966171168
        %v4808 = vunpack.c.0.s8 %v4807
        %v4809 = vlaneseq
        %v4810 = vshrl.u32 %v4809, 7
        %v4811 = vsub.s32 %v4808, %v4810
        %v4812 = vrot.slane %v4796, %v4811
        %v4814 = vunpack.c.l.s4 1966171168
        %v4815 = vunpack.c.0.s8 %v4814
        %v4816 = vlaneseq
        %v4817 = vshrl.u32 %v4816, 7
        %v4818 = vsub.s32 %v4815, %v4817
        %v4819 = vrot.slane %v4797, %v4818
        %v4821 = vunpack.c.l.s4 1966171168
        %v4822 = vunpack.c.0.s8 %v4821
        %v4823 = vlaneseq
        %v4824 = vshrl.u32 %v4823, 7
        %v4825 = vsub.s32 %v4822, %v4824
        %v4826 = vrot.slane %v4798, %v4825
        %v4827 = vcombine.high %v4805, %v4805
        %v4828 = vcombine.high %v4812, %v4812
        %v4829 = vcombine.high %v4819, %v4819
        %v4830 = vcombine.high %v4826, %v4826
        %v4831 = vcombine.high %v4477, %v4477
        %v4833 = vunpack.c.l.s4 1966171168
        %v4834 = vunpack.c.0.s8 %v4833
        %v4835 = vlaneseq
        %v4836 = vshrl.u32 %v4835, 7
        %v4837 = vsub.s32 %v4834, %v4836
        %v4838 = vrot.slane %v4477, %v4837
        %v4840 = vunpack.c.l.s4 1966171168
        %v4841 = vunpack.c.0.s8 %v4840
        %v4842 = vlaneseq
        %v4843 = vshrl.u32 %v4842, 7
        %v4844 = vsub.s32 %v4841, %v4843
        %v4845 = vrot.slane %v4831, %v4844
        %v4846 = vcombine.high %v4838, %v4838
        %v4847 = vcombine.high %v4845, %v4845
        %v4849 = vunpack.c.l.s4 1966171168
        %v4850 = vunpack.c.0.s8 %v4849
        %v4851 = vlaneseq
        %v4852 = vshrl.u32 %v4851, 7
        %v4853 = vsub.s32 %v4850, %v4852
        %v4854 = vrot.slane %v4838, %v4853
        %v4856 = vunpack.c.l.s4 1966171168
        %v4857 = vunpack.c.0.s8 %v4856
        %v4858 = vlaneseq
        %v4859 = vshrl.u32 %v4858, 7
        %v4860 = vsub.s32 %v4857, %v4859
        %v4861 = vrot.slane %v4845, %v4860
        %v4863 = vunpack.c.l.s4 1966171168
        %v4864 = vunpack.c.0.s8 %v4863
        %v4865 = vlaneseq
        %v4866 = vshrl.u32 %v4865, 7
        %v4867 = vsub.s32 %v4864, %v4866
        %v4868 = vrot.slane %v4846, %v4867
        %v4870 = vunpack.c.l.s4 1966171168
        %v4871 = vunpack.c.0.s8 %v4870
        %v4872 = vlaneseq
        %v4873 = vshrl.u32 %v4872, 7
        %v4874 = vsub.s32 %v4871, %v4873
        %v4875 = vrot.slane %v4847, %v4874
        %v4876 = vcombine.high %v4854, %v4854
        %v4877 = vcombine.high %v4861, %v4861
        %v4878 = vcombine.high %v4868, %v4868
        %v4879 = vcombine.high %v4875, %v4875
        %v4880 = vlaneseq
        %v4881 = vshrl.u32 %v4880, 7
        %v4882 = vsub.s32 0, %v4881
        %v4883 = vrot.slane %v4511, %v4882
        %v4884 = vlaneseq
        %v4885 = vshrl.u32 %v4884, 7
        %v4886 = vsub.s32 0, %v4885
        %v4887 = vrot.slane %v4525, %v4886
        %v4888 = vlaneseq
        %v4889 = vshrl.u32 %v4888, 7
        %v4890 = vsub.s32 0, %v4889
        %v4891 = vrot.slane %v4533, %v4890
        %v4892 = vlaneseq
        %v4893 = vshrl.u32 %v4892, 7
        %v4894 = vsub.s32 0, %v4893
        %v4895 = vrot.slane %v4535, %v4894
        %v4896 = vlaneseq
        %v4897 = vshrl.u32 %v4896, 7
        %v4898 = vsub.s32 0, %v4897
        %v4899 = vrot.slane %v4518, %v4898
        %v4900 = vlaneseq
        %v4901 = vshrl.u32 %v4900, 7
        %v4902 = vsub.s32 0, %v4901
        %v4903 = vrot.slane %v4532, %v4902
        %v4904 = vlaneseq
        %v4905 = vshrl.u32 %v4904, 7
        %v4906 = vsub.s32 0, %v4905
        %v4907 = vrot.slane %v4534, %v4906
        %v4908 = vlaneseq
        %v4909 = vshrl.u32 %v4908, 7
        %v4910 = vsub.s32 0, %v4909
        %v4911 = vrot.slane %v4536, %v4910
        %v4912 = vlaneseq
        %v4913 = vshrl.u32 %v4912, 7
        %v4914 = vsub.s32 0, %v4913
        %v4915 = vrot.slane %v4560, %v4914
        %v4916 = vlaneseq
        %v4917 = vshrl.u32 %v4916, 7
        %v4918 = vsub.s32 0, %v4917
        %v4919 = vrot.slane %v4574, %v4918
        %v4920 = vlaneseq
        %v4921 = vshrl.u32 %v4920, 7
        %v4922 = vsub.s32 0, %v4921
        %v4923 = vrot.slane %v4582, %v4922
        %v4924 = vlaneseq
        %v4925 = vshrl.u32 %v4924, 7
        %v4926 = vsub.s32 0, %v4925
        %v4927 = vrot.slane %v4584, %v4926
        %v4928 = vlaneseq
        %v4929 = vshrl.u32 %v4928, 7
        %v4930 = vsub.s32 0, %v4929
        %v4931 = vrot.slane %v4567, %v4930
        %v4932 = vlaneseq
        %v4933 = vshrl.u32 %v4932, 7
        %v4934 = vsub.s32 0, %v4933
        %v4935 = vrot.slane %v4581, %v4934
        %v4936 = vlaneseq
        %v4937 = vshrl.u32 %v4936, 7
        %v4938 = vsub.s32 0, %v4937
        %v4939 = vrot.slane %v4583, %v4938
        %v4940 = vlaneseq
        %v4941 = vshrl.u32 %v4940, 7
        %v4942 = vsub.s32 0, %v4941
        %v4943 = vrot.slane %v4585, %v4942
        %v4944 = vlaneseq
        %v4945 = vshrl.u32 %v4944, 7
        %v4946 = vsub.s32 0, %v4945
        %v4947 = vrot.slane %v4609, %v4946
        %v4948 = vlaneseq
        %v4949 = vshrl.u32 %v4948, 7
        %v4950 = vsub.s32 0, %v4949
        %v4951 = vrot.slane %v4623, %v4950
        %v4952 = vlaneseq
        %v4953 = vshrl.u32 %v4952, 7
        %v4954 = vsub.s32 0, %v4953
        %v4955 = vrot.slane %v4631, %v4954
        %v4956 = vlaneseq
        %v4957 = vshrl.u32 %v4956, 7
        %v4958 = vsub.s32 0, %v4957
        %v4959 = vrot.slane %v4633, %v4958
        %v4960 = vlaneseq
        %v4961 = vshrl.u32 %v4960, 7
        %v4962 = vsub.s32 0, %v4961
        %v4963 = vrot.slane %v4616, %v4962
        %v4964 = vlaneseq
        %v4965 = vshrl.u32 %v4964, 7
        %v4966 = vsub.s32 0, %v4965
        %v4967 = vrot.slane %v4630, %v4966
        %v4968 = vlaneseq
        %v4969 = vshrl.u32 %v4968, 7
        %v4970 = vsub.s32 0, %v4969
        %v4971 = vrot.slane %v4632, %v4970
        %v4972 = vlaneseq
        %v4973 = vshrl.u32 %v4972, 7
        %v4974 = vsub.s32 0, %v4973
        %v4975 = vrot.slane %v4634, %v4974
        %v4976 = vlaneseq
        %v4977 = vshrl.u32 %v4976, 7
        %v4978 = vsub.s32 0, %v4977
        %v4979 = vrot.slane %v4658, %v4978
        %v4980 = vlaneseq
        %v4981 = vshrl.u32 %v4980, 7
        %v4982 = vsub.s32 0, %v4981
        %v4983 = vrot.slane %v4672, %v4982
        %v4984 = vlaneseq
        %v4985 = vshrl.u32 %v4984, 7
        %v4986 = vsub.s32 0, %v4985
        %v4987 = vrot.slane %v4680, %v4986
        %v4988 = vlaneseq
        %v4989 = vshrl.u32 %v4988, 7
        %v4990 = vsub.s32 0, %v4989
        %v4991 = vrot.slane %v4682, %v4990
        %v4992 = vlaneseq
        %v4993 = vshrl.u32 %v4992, 7
        %v4994 = vsub.s32 0, %v4993
        %v4995 = vrot.slane %v4665, %v4994
        %v4996 = vlaneseq
        %v4997 = vshrl.u32 %v4996, 7
        %v4998 = vsub.s32 0, %v4997
        %v4999 = vrot.slane %v4679, %v4998
        %v5000 = vlaneseq
        %v5001 = vshrl.u32 %v5000, 7
        %v5002 = vsub.s32 0, %v5001
        %v5003 = vrot.slane %v4681, %v5002
        %v5004 = vlaneseq
        %v5005 = vshrl.u32 %v5004, 7
        %v5006 = vsub.s32 0, %v5005
        %v5007 = vrot.slane %v4683, %v5006
        %v5008 = vlaneseq
        %v5009 = vshrl.u32 %v5008, 7
        %v5010 = vsub.s32 0, %v5009
        %v5011 = vrot.slane %v4707, %v5010
        %v5012 = vlaneseq
        %v5013 = vshrl.u32 %v5012, 7
        %v5014 = vsub.s32 0, %v5013
        %v5015 = vrot.slane %v4721, %v5014
        %v5016 = vlaneseq
        %v5017 = vshrl.u32 %v5016, 7
        %v5018 = vsub.s32 0, %v5017
        %v5019 = vrot.slane %v4729, %v5018
        %v5020 = vlaneseq
        %v5021 = vshrl.u32 %v5020, 7
        %v5022 = vsub.s32 0, %v5021
        %v5023 = vrot.slane %v4731, %v5022
        %v5024 = vlaneseq
        %v5025 = vshrl.u32 %v5024, 7
        %v5026 = vsub.s32 0, %v5025
        %v5027 = vrot.slane %v4714, %v5026
        %v5028 = vlaneseq
        %v5029 = vshrl.u32 %v5028, 7
        %v5030 = vsub.s32 0, %v5029
        %v5031 = vrot.slane %v4728, %v5030
        %v5032 = vlaneseq
        %v5033 = vshrl.u32 %v5032, 7
        %v5034 = vsub.s32 0, %v5033
        %v5035 = vrot.slane %v4730, %v5034
        %v5036 = vlaneseq
        %v5037 = vshrl.u32 %v5036, 7
        %v5038 = vsub.s32 0, %v5037
        %v5039 = vrot.slane %v4732, %v5038
        %v5040 = vlaneseq
        %v5041 = vshrl.u32 %v5040, 7
        %v5042 = vsub.s32 0, %v5041
        %v5043 = vrot.slane %v4756, %v5042
        %v5044 = vlaneseq
        %v5045 = vshrl.u32 %v5044, 7
        %v5046 = vsub.s32 0, %v5045
        %v5047 = vrot.slane %v4770, %v5046
        %v5048 = vlaneseq
        %v5049 = vshrl.u32 %v5048, 7
        %v5050 = vsub.s32 0, %v5049
        %v5051 = vrot.slane %v4778, %v5050
        %v5052 = vlaneseq
        %v5053 = vshrl.u32 %v5052, 7
        %v5054 = vsub.s32 0, %v5053
        %v5055 = vrot.slane %v4780, %v5054
        %v5056 = vlaneseq
        %v5057 = vshrl.u32 %v5056, 7
        %v5058 = vsub.s32 0, %v5057
        %v5059 = vrot.slane %v4763, %v5058
        %v5060 = vlaneseq
        %v5061 = vshrl.u32 %v5060, 7
        %v5062 = vsub.s32 0, %v5061
        %v5063 = vrot.slane %v4777, %v5062
        %v5064 = vlaneseq
        %v5065 = vshrl.u32 %v5064, 7
        %v5066 = vsub.s32 0, %v5065
        %v5067 = vrot.slane %v4779, %v5066
        %v5068 = vlaneseq
        %v5069 = vshrl.u32 %v5068, 7
        %v5070 = vsub.s32 0, %v5069
        %v5071 = vrot.slane %v4781, %v5070
        %v5072 = vlaneseq
        %v5073 = vshrl.u32 %v5072, 7
        %v5074 = vsub.s32 0, %v5073
        %v5075 = vrot.slane %v4805, %v5074
        %v5076 = vlaneseq
        %v5077 = vshrl.u32 %v5076, 7
        %v5078 = vsub.s32 0, %v5077
        %v5079 = vrot.slane %v4819, %v5078
        %v5080 = vlaneseq
        %v5081 = vshrl.u32 %v5080, 7
        %v5082 = vsub.s32 0, %v5081
        %v5083 = vrot.slane %v4827, %v5082
        %v5084 = vlaneseq
        %v5085 = vshrl.u32 %v5084, 7
        %v5086 = vsub.s32 0, %v5085
        %v5087 = vrot.slane %v4829, %v5086
        %v5088 = vlaneseq
        %v5089 = vshrl.u32 %v5088, 7
        %v5090 = vsub.s32 0, %v5089
        %v5091 = vrot.slane %v4812, %v5090
        %v5092 = vlaneseq
        %v5093 = vshrl.u32 %v5092, 7
        %v5094 = vsub.s32 0, %v5093
        %v5095 = vrot.slane %v4826, %v5094
        %v5096 = vlaneseq
        %v5097 = vshrl.u32 %v5096, 7
        %v5098 = vsub.s32 0, %v5097
        %v5099 = vrot.slane %v4828, %v5098
        %v5100 = vlaneseq
        %v5101 = vshrl.u32 %v5100, 7
        %v5102 = vsub.s32 0, %v5101
        %v5103 = vrot.slane %v4830, %v5102
        %v5104 = vlaneseq
        %v5105 = vshrl.u32 %v5104, 7
        %v5106 = vsub.s32 0, %v5105
        %v5107 = vrot.slane %v4854, %v5106
        %v5108 = vlaneseq
        %v5109 = vshrl.u32 %v5108, 7
        %v5110 = vsub.s32 0, %v5109
        %v5111 = vrot.slane %v4868, %v5110
        %v5112 = vlaneseq
        %v5113 = vshrl.u32 %v5112, 7
        %v5114 = vsub.s32 0, %v5113
        %v5115 = vrot.slane %v4876, %v5114
        %v5116 = vlaneseq
        %v5117 = vshrl.u32 %v5116, 7
        %v5118 = vsub.s32 0, %v5117
        %v5119 = vrot.slane %v4878, %v5118
        %v5120 = vlaneseq
        %v5121 = vshrl.u32 %v5120, 7
        %v5122 = vsub.s32 0, %v5121
        %v5123 = vrot.slane %v4861, %v5122
        %v5124 = vlaneseq
        %v5125 = vshrl.u32 %v5124, 7
        %v5126 = vsub.s32 0, %v5125
        %v5127 = vrot.slane %v4875, %v5126
        %v5128 = vlaneseq
        %v5129 = vshrl.u32 %v5128, 7
        %v5130 = vsub.s32 0, %v5129
        %v5131 = vrot.slane %v4877, %v5130
        %v5132 = vlaneseq
        %v5133 = vshrl.u32 %v5132, 7
        %v5134 = vsub.s32 0, %v5133
        %v5135 = vrot.slane %v4879, %v5134
        %v5232 = vcombine.high %v2400, %v2400
        %v5234 = vunpack.c.l.s4 1983009808
        %v5235 = vunpack.c.0.s8 %v5234
        %v5236 = vlaneseq
        %v5237 = vshrl.u32 %v5236, 7
        %v5238 = vsub.s32 %v5235, %v5237
        %v5239 = vrot.slane %v2400, %v5238
        %v5241 = vunpack.c.l.s4 1983009808
        %v5242 = vunpack.c.0.s8 %v5241
        %v5243 = vlaneseq
        %v5244 = vshrl.u32 %v5243, 7
        %v5245 = vsub.s32 %v5242, %v5244
        %v5246 = vrot.slane %v5232, %v5245
        %v5247 = vcombine.high %v5239, %v5239
        %v5248 = vcombine.high %v5246, %v5246
        %v5249 = vcombine.high %v2401, %v2401
        %v5251 = vunpack.c.l.s4 1983009808
        %v5252 = vunpack.c.0.s8 %v5251
        %v5253 = vlaneseq
        %v5254 = vshrl.u32 %v5253, 7
        %v5255 = vsub.s32 %v5252, %v5254
        %v5256 = vrot.slane %v2401, %v5255
        %v5258 = vunpack.c.l.s4 1983009808
        %v5259 = vunpack.c.0.s8 %v5258
        %v5260 = vlaneseq
        %v5261 = vshrl.u32 %v5260, 7
        %v5262 = vsub.s32 %v5259, %v5261
        %v5263 = vrot.slane %v5249, %v5262
        %v5264 = vcombine.high %v5256, %v5256
        %v5265 = vcombine.high %v5263, %v5263
        %v5266 = vcombine.high %v2402, %v2402
        %v5268 = vunpack.c.l.s4 1983009808
        %v5269 = vunpack.c.0.s8 %v5268
        %v5270 = vlaneseq
        %v5271 = vshrl.u32 %v5270, 7
        %v5272 = vsub.s32 %v5269, %v5271
        %v5273 = vrot.slane %v2402, %v5272
        %v5275 = vunpack.c.l.s4 1983009808
        %v5276 = vunpack.c.0.s8 %v5275
        %v5277 = vlaneseq
        %v5278 = vshrl.u32 %v5277, 7
        %v5279 = vsub.s32 %v5276, %v5278
        %v5280 = vrot.slane %v5266, %v5279
        %v5281 = vcombine.high %v5273, %v5273
        %v5282 = vcombine.high %v5280, %v5280
        %v5283 = vcombine.high %v2403, %v2403
        %v5285 = vunpack.c.l.s4 1983009808
        %v5286 = vunpack.c.0.s8 %v5285
        %v5287 = vlaneseq
        %v5288 = vshrl.u32 %v5287, 7
        %v5289 = vsub.s32 %v5286, %v5288
        %v5290 = vrot.slane %v2403, %v5289
        %v5292 = vunpack.c.l.s4 1983009808
        %v5293 = vunpack.c.0.s8 %v5292
        %v5294 = vlaneseq
        %v5295 = vshrl.u32 %v5294, 7
        %v5296 = vsub.s32 %v5293, %v5295
        %v5297 = vrot.slane %v5283, %v5296
        %v5298 = vcombine.high %v5290, %v5290
        %v5299 = vcombine.high %v5297, %v5297
        %v5300 = vcombine.high %v2404, %v2404
        %v5302 = vunpack.c.l.s4 1983009808
        %v5303 = vunpack.c.0.s8 %v5302
        %v5304 = vlaneseq
        %v5305 = vshrl.u32 %v5304, 7
        %v5306 = vsub.s32 %v5303, %v5305
        %v5307 = vrot.slane %v2404, %v5306
        %v5309 = vunpack.c.l.s4 1983009808
        %v5310 = vunpack.c.0.s8 %v5309
        %v5311 = vlaneseq
        %v5312 = vshrl.u32 %v5311, 7
        %v5313 = vsub.s32 %v5310, %v5312
        %v5314 = vrot.slane %v5300, %v5313
        %v5315 = vcombine.high %v5307, %v5307
        %v5316 = vcombine.high %v5314, %v5314
        %v5317 = vcombine.high %v2405, %v2405
        %v5319 = vunpack.c.l.s4 1983009808
        %v5320 = vunpack.c.0.s8 %v5319
        %v5321 = vlaneseq
        %v5322 = vshrl.u32 %v5321, 7
        %v5323 = vsub.s32 %v5320, %v5322
        %v5324 = vrot.slane %v2405, %v5323
        %v5326 = vunpack.c.l.s4 1983009808
        %v5327 = vunpack.c.0.s8 %v5326
        %v5328 = vlaneseq
        %v5329 = vshrl.u32 %v5328, 7
        %v5330 = vsub.s32 %v5327, %v5329
        %v5331 = vrot.slane %v5317, %v5330
        %v5332 = vcombine.high %v5324, %v5324
        %v5333 = vcombine.high %v5331, %v5331
        %v5334 = vcombine.high %v2406, %v2406
        %v5336 = vunpack.c.l.s4 1983009808
        %v5337 = vunpack.c.0.s8 %v5336
        %v5338 = vlaneseq
        %v5339 = vshrl.u32 %v5338, 7
        %v5340 = vsub.s32 %v5337, %v5339
        %v5341 = vrot.slane %v2406, %v5340
        %v5343 = vunpack.c.l.s4 1983009808
        %v5344 = vunpack.c.0.s8 %v5343
        %v5345 = vlaneseq
        %v5346 = vshrl.u32 %v5345, 7
        %v5347 = vsub.s32 %v5344, %v5346
        %v5348 = vrot.slane %v5334, %v5347
        %v5349 = vcombine.high %v5341, %v5341
        %v5350 = vcombine.high %v5348, %v5348
        %v5351 = vcombine.high %v2407, %v2407
        %v5353 = vunpack.c.l.s4 1983009808
        %v5354 = vunpack.c.0.s8 %v5353
        %v5355 = vlaneseq
        %v5356 = vshrl.u32 %v5355, 7
        %v5357 = vsub.s32 %v5354, %v5356
        %v5358 = vrot.slane %v2407, %v5357
        %v5360 = vunpack.c.l.s4 1983009808
        %v5361 = vunpack.c.0.s8 %v5360
        %v5362 = vlaneseq
        %v5363 = vshrl.u32 %v5362, 7
        %v5364 = vsub.s32 %v5361, %v5363
        %v5365 = vrot.slane %v5351, %v5364
        %v5366 = vcombine.high %v5358, %v5358
        %v5367 = vcombine.high %v5365, %v5365
        %v5368 = vcombine.high %v2408, %v2408
        %v5370 = vunpack.c.l.s4 1983009808
        %v5371 = vunpack.c.0.s8 %v5370
        %v5372 = vlaneseq
        %v5373 = vshrl.u32 %v5372, 7
        %v5374 = vsub.s32 %v5371, %v5373
        %v5375 = vrot.slane %v2408, %v5374
        %v5377 = vunpack.c.l.s4 1983009808
        %v5378 = vunpack.c.0.s8 %v5377
        %v5379 = vlaneseq
        %v5380 = vshrl.u32 %v5379, 7
        %v5381 = vsub.s32 %v5378, %v5380
        %v5382 = vrot.slane %v5368, %v5381
        %v5383 = vcombine.high %v5375, %v5375
        %v5384 = vcombine.high %v5382, %v5382
        %v5385 = vcombine.high %v2409, %v2409
        %v5387 = vunpack.c.l.s4 1983009808
        %v5388 = vunpack.c.0.s8 %v5387
        %v5389 = vlaneseq
        %v5390 = vshrl.u32 %v5389, 7
        %v5391 = vsub.s32 %v5388, %v5390
        %v5392 = vrot.slane %v2409, %v5391
        %v5394 = vunpack.c.l.s4 1983009808
        %v5395 = vunpack.c.0.s8 %v5394
        %v5396 = vlaneseq
        %v5397 = vshrl.u32 %v5396, 7
        %v5398 = vsub.s32 %v5395, %v5397
        %v5399 = vrot.slane %v5385, %v5398
        %v5400 = vcombine.high %v5392, %v5392
        %v5401 = vcombine.high %v5399, %v5399
        %v5402 = vcombine.high %v2410, %v2410
        %v5404 = vunpack.c.l.s4 1983009808
        %v5405 = vunpack.c.0.s8 %v5404
        %v5406 = vlaneseq
        %v5407 = vshrl.u32 %v5406, 7
        %v5408 = vsub.s32 %v5405, %v5407
        %v5409 = vrot.slane %v2410, %v5408
        %v5411 = vunpack.c.l.s4 1983009808
        %v5412 = vunpack.c.0.s8 %v5411
        %v5413 = vlaneseq
        %v5414 = vshrl.u32 %v5413, 7
        %v5415 = vsub.s32 %v5412, %v5414
        %v5416 = vrot.slane %v5402, %v5415
        %v5417 = vcombine.high %v5409, %v5409
        %v5418 = vcombine.high %v5416, %v5416
        %v5419 = vcombine.high %v2411, %v2411
        %v5421 = vunpack.c.l.s4 1983009808
        %v5422 = vunpack.c.0.s8 %v5421
        %v5423 = vlaneseq
        %v5424 = vshrl.u32 %v5423, 7
        %v5425 = vsub.s32 %v5422, %v5424
        %v5426 = vrot.slane %v2411, %v5425
        %v5428 = vunpack.c.l.s4 1983009808
        %v5429 = vunpack.c.0.s8 %v5428
        %v5430 = vlaneseq
        %v5431 = vshrl.u32 %v5430, 7
        %v5432 = vsub.s32 %v5429, %v5431
        %v5433 = vrot.slane %v5419, %v5432
        %v5434 = vcombine.high %v5426, %v5426
        %v5435 = vcombine.high %v5433, %v5433
        %v5436 = vcombine.high %v2412, %v2412
        %v5438 = vunpack.c.l.s4 1983009808
        %v5439 = vunpack.c.0.s8 %v5438
        %v5440 = vlaneseq
        %v5441 = vshrl.u32 %v5440, 7
        %v5442 = vsub.s32 %v5439, %v5441
        %v5443 = vrot.slane %v2412, %v5442
        %v5445 = vunpack.c.l.s4 1983009808
        %v5446 = vunpack.c.0.s8 %v5445
        %v5447 = vlaneseq
        %v5448 = vshrl.u32 %v5447, 7
        %v5449 = vsub.s32 %v5446, %v5448
        %v5450 = vrot.slane %v5436, %v5449
        %v5451 = vcombine.high %v5443, %v5443
        %v5452 = vcombine.high %v5450, %v5450
        %v5453 = vcombine.high %v2413, %v2413
        %v5455 = vunpack.c.l.s4 1983009808
        %v5456 = vunpack.c.0.s8 %v5455
        %v5457 = vlaneseq
        %v5458 = vshrl.u32 %v5457, 7
        %v5459 = vsub.s32 %v5456, %v5458
        %v5460 = vrot.slane %v2413, %v5459
        %v5462 = vunpack.c.l.s4 1983009808
        %v5463 = vunpack.c.0.s8 %v5462
        %v5464 = vlaneseq
        %v5465 = vshrl.u32 %v5464, 7
        %v5466 = vsub.s32 %v5463, %v5465
        %v5467 = vrot.slane %v5453, %v5466
        %v5468 = vcombine.high %v5460, %v5460
        %v5469 = vcombine.high %v5467, %v5467
        %v5470 = vcombine.high %v2414, %v2414
        %v5472 = vunpack.c.l.s4 1983009808
        %v5473 = vunpack.c.0.s8 %v5472
        %v5474 = vlaneseq
        %v5475 = vshrl.u32 %v5474, 7
        %v5476 = vsub.s32 %v5473, %v5475
        %v5477 = vrot.slane %v2414, %v5476
        %v5479 = vunpack.c.l.s4 1983009808
        %v5480 = vunpack.c.0.s8 %v5479
        %v5481 = vlaneseq
        %v5482 = vshrl.u32 %v5481, 7
        %v5483 = vsub.s32 %v5480, %v5482
        %v5484 = vrot.slane %v5470, %v5483
        %v5485 = vcombine.high %v5477, %v5477
        %v5486 = vcombine.high %v5484, %v5484
        %v5487 = vcombine.high %v2415, %v2415
        %v5489 = vunpack.c.l.s4 1983009808
        %v5490 = vunpack.c.0.s8 %v5489
        %v5491 = vlaneseq
        %v5492 = vshrl.u32 %v5491, 7
        %v5493 = vsub.s32 %v5490, %v5492
        %v5494 = vrot.slane %v2415, %v5493
        %v5496 = vunpack.c.l.s4 1983009808
        %v5497 = vunpack.c.0.s8 %v5496
        %v5498 = vlaneseq
        %v5499 = vshrl.u32 %v5498, 7
        %v5500 = vsub.s32 %v5497, %v5499
        %v5501 = vrot.slane %v5487, %v5500
        %v5502 = vcombine.high %v5494, %v5494
        %v5503 = vcombine.high %v5501, %v5501
        %v5504 = vcombine.high %v2416, %v2416
        %v5506 = vunpack.c.l.s4 1983009808
        %v5507 = vunpack.c.0.s8 %v5506
        %v5508 = vlaneseq
        %v5509 = vshrl.u32 %v5508, 7
        %v5510 = vsub.s32 %v5507, %v5509
        %v5511 = vrot.slane %v2416, %v5510
        %v5513 = vunpack.c.l.s4 1983009808
        %v5514 = vunpack.c.0.s8 %v5513
        %v5515 = vlaneseq
        %v5516 = vshrl.u32 %v5515, 7
        %v5517 = vsub.s32 %v5514, %v5516
        %v5518 = vrot.slane %v5504, %v5517
        %v5519 = vcombine.high %v5511, %v5511
        %v5520 = vcombine.high %v5518, %v5518
        %v5521 = vcombine.high %v2417, %v2417
        %v5523 = vunpack.c.l.s4 1983009808
        %v5524 = vunpack.c.0.s8 %v5523
        %v5525 = vlaneseq
        %v5526 = vshrl.u32 %v5525, 7
        %v5527 = vsub.s32 %v5524, %v5526
        %v5528 = vrot.slane %v2417, %v5527
        %v5530 = vunpack.c.l.s4 1983009808
        %v5531 = vunpack.c.0.s8 %v5530
        %v5532 = vlaneseq
        %v5533 = vshrl.u32 %v5532, 7
        %v5534 = vsub.s32 %v5531, %v5533
        %v5535 = vrot.slane %v5521, %v5534
        %v5536 = vcombine.high %v5528, %v5528
        %v5537 = vcombine.high %v5535, %v5535
        %v5538 = vcombine.high %v2418, %v2418
        %v5540 = vunpack.c.l.s4 1983009808
        %v5541 = vunpack.c.0.s8 %v5540
        %v5542 = vlaneseq
        %v5543 = vshrl.u32 %v5542, 7
        %v5544 = vsub.s32 %v5541, %v5543
        %v5545 = vrot.slane %v2418, %v5544
        %v5547 = vunpack.c.l.s4 1983009808
        %v5548 = vunpack.c.0.s8 %v5547
        %v5549 = vlaneseq
        %v5550 = vshrl.u32 %v5549, 7
        %v5551 = vsub.s32 %v5548, %v5550
        %v5552 = vrot.slane %v5538, %v5551
        %v5553 = vcombine.high %v5545, %v5545
        %v5554 = vcombine.high %v5552, %v5552
        %v5555 = vcombine.high %v2419, %v2419
        %v5557 = vunpack.c.l.s4 1983009808
        %v5558 = vunpack.c.0.s8 %v5557
        %v5559 = vlaneseq
        %v5560 = vshrl.u32 %v5559, 7
        %v5561 = vsub.s32 %v5558, %v5560
        %v5562 = vrot.slane %v2419, %v5561
        %v5564 = vunpack.c.l.s4 1983009808
        %v5565 = vunpack.c.0.s8 %v5564
        %v5566 = vlaneseq
        %v5567 = vshrl.u32 %v5566, 7
        %v5568 = vsub.s32 %v5565, %v5567
        %v5569 = vrot.slane %v5555, %v5568
        %v5570 = vcombine.high %v5562, %v5562
        %v5571 = vcombine.high %v5569, %v5569
        %v5572 = vcombine.high %v2420, %v2420
        %v5574 = vunpack.c.l.s4 1983009808
        %v5575 = vunpack.c.0.s8 %v5574
        %v5576 = vlaneseq
        %v5577 = vshrl.u32 %v5576, 7
        %v5578 = vsub.s32 %v5575, %v5577
        %v5579 = vrot.slane %v2420, %v5578
        %v5581 = vunpack.c.l.s4 1983009808
        %v5582 = vunpack.c.0.s8 %v5581
        %v5583 = vlaneseq
        %v5584 = vshrl.u32 %v5583, 7
        %v5585 = vsub.s32 %v5582, %v5584
        %v5586 = vrot.slane %v5572, %v5585
        %v5587 = vcombine.high %v5579, %v5579
        %v5588 = vcombine.high %v5586, %v5586
        %v5589 = vcombine.high %v2421, %v2421
        %v5591 = vunpack.c.l.s4 1983009808
        %v5592 = vunpack.c.0.s8 %v5591
        %v5593 = vlaneseq
        %v5594 = vshrl.u32 %v5593, 7
        %v5595 = vsub.s32 %v5592, %v5594
        %v5596 = vrot.slane %v2421, %v5595
        %v5598 = vunpack.c.l.s4 1983009808
        %v5599 = vunpack.c.0.s8 %v5598
        %v5600 = vlaneseq
        %v5601 = vshrl.u32 %v5600, 7
        %v5602 = vsub.s32 %v5599, %v5601
        %v5603 = vrot.slane %v5589, %v5602
        %v5604 = vcombine.high %v5596, %v5596
        %v5605 = vcombine.high %v5603, %v5603
        %v5606 = vcombine.high %v2422, %v2422
        %v5608 = vunpack.c.l.s4 1983009808
        %v5609 = vunpack.c.0.s8 %v5608
        %v5610 = vlaneseq
        %v5611 = vshrl.u32 %v5610, 7
        %v5612 = vsub.s32 %v5609, %v5611
        %v5613 = vrot.slane %v2422, %v5612
        %v5615 = vunpack.c.l.s4 1983009808
        %v5616 = vunpack.c.0.s8 %v5615
        %v5617 = vlaneseq
        %v5618 = vshrl.u32 %v5617, 7
        %v5619 = vsub.s32 %v5616, %v5618
        %v5620 = vrot.slane %v5606, %v5619
        %v5621 = vcombine.high %v5613, %v5613
        %v5622 = vcombine.high %v5620, %v5620
        %v5623 = vcombine.high %v2423, %v2423
        %v5625 = vunpack.c.l.s4 1983009808
        %v5626 = vunpack.c.0.s8 %v5625
        %v5627 = vlaneseq
        %v5628 = vshrl.u32 %v5627, 7
        %v5629 = vsub.s32 %v5626, %v5628
        %v5630 = vrot.slane %v2423, %v5629
        %v5632 = vunpack.c.l.s4 1983009808
        %v5633 = vunpack.c.0.s8 %v5632
        %v5634 = vlaneseq
        %v5635 = vshrl.u32 %v5634, 7
        %v5636 = vsub.s32 %v5633, %v5635
        %v5637 = vrot.slane %v5623, %v5636
        %v5638 = vcombine.high %v5630, %v5630
        %v5639 = vcombine.high %v5637, %v5637
        %v5640 = vcombine.high %v2424, %v2424
        %v5642 = vunpack.c.l.s4 1983009808
        %v5643 = vunpack.c.0.s8 %v5642
        %v5644 = vlaneseq
        %v5645 = vshrl.u32 %v5644, 7
        %v5646 = vsub.s32 %v5643, %v5645
        %v5647 = vrot.slane %v2424, %v5646
        %v5649 = vunpack.c.l.s4 1983009808
        %v5650 = vunpack.c.0.s8 %v5649
        %v5651 = vlaneseq
        %v5652 = vshrl.u32 %v5651, 7
        %v5653 = vsub.s32 %v5650, %v5652
        %v5654 = vrot.slane %v5640, %v5653
        %v5655 = vcombine.high %v5647, %v5647
        %v5656 = vcombine.high %v5654, %v5654
        %v5657 = vcombine.high %v2425, %v2425
        %v5659 = vunpack.c.l.s4 1983009808
        %v5660 = vunpack.c.0.s8 %v5659
        %v5661 = vlaneseq
        %v5662 = vshrl.u32 %v5661, 7
        %v5663 = vsub.s32 %v5660, %v5662
        %v5664 = vrot.slane %v2425, %v5663
        %v5666 = vunpack.c.l.s4 1983009808
        %v5667 = vunpack.c.0.s8 %v5666
        %v5668 = vlaneseq
        %v5669 = vshrl.u32 %v5668, 7
        %v5670 = vsub.s32 %v5667, %v5669
        %v5671 = vrot.slane %v5657, %v5670
        %v5672 = vcombine.high %v5664, %v5664
        %v5673 = vcombine.high %v5671, %v5671
        %v5674 = vcombine.high %v2426, %v2426
        %v5676 = vunpack.c.l.s4 1983009808
        %v5677 = vunpack.c.0.s8 %v5676
        %v5678 = vlaneseq
        %v5679 = vshrl.u32 %v5678, 7
        %v5680 = vsub.s32 %v5677, %v5679
        %v5681 = vrot.slane %v2426, %v5680
        %v5683 = vunpack.c.l.s4 1983009808
        %v5684 = vunpack.c.0.s8 %v5683
        %v5685 = vlaneseq
        %v5686 = vshrl.u32 %v5685, 7
        %v5687 = vsub.s32 %v5684, %v5686
        %v5688 = vrot.slane %v5674, %v5687
        %v5689 = vcombine.high %v5681, %v5681
        %v5690 = vcombine.high %v5688, %v5688
        %v5691 = vcombine.high %v2427, %v2427
        %v5693 = vunpack.c.l.s4 1983009808
        %v5694 = vunpack.c.0.s8 %v5693
        %v5695 = vlaneseq
        %v5696 = vshrl.u32 %v5695, 7
        %v5697 = vsub.s32 %v5694, %v5696
        %v5698 = vrot.slane %v2427, %v5697
        %v5700 = vunpack.c.l.s4 1983009808
        %v5701 = vunpack.c.0.s8 %v5700
        %v5702 = vlaneseq
        %v5703 = vshrl.u32 %v5702, 7
        %v5704 = vsub.s32 %v5701, %v5703
        %v5705 = vrot.slane %v5691, %v5704
        %v5706 = vcombine.high %v5698, %v5698
        %v5707 = vcombine.high %v5705, %v5705
        %v5708 = vcombine.high %v2428, %v2428
        %v5710 = vunpack.c.l.s4 1983009808
        %v5711 = vunpack.c.0.s8 %v5710
        %v5712 = vlaneseq
        %v5713 = vshrl.u32 %v5712, 7
        %v5714 = vsub.s32 %v5711, %v5713
        %v5715 = vrot.slane %v2428, %v5714
        %v5717 = vunpack.c.l.s4 1983009808
        %v5718 = vunpack.c.0.s8 %v5717
        %v5719 = vlaneseq
        %v5720 = vshrl.u32 %v5719, 7
        %v5721 = vsub.s32 %v5718, %v5720
        %v5722 = vrot.slane %v5708, %v5721
        %v5723 = vcombine.high %v5715, %v5715
        %v5724 = vcombine.high %v5722, %v5722
        %v5725 = vcombine.high %v2429, %v2429
        %v5727 = vunpack.c.l.s4 1983009808
        %v5728 = vunpack.c.0.s8 %v5727
        %v5729 = vlaneseq
        %v5730 = vshrl.u32 %v5729, 7
        %v5731 = vsub.s32 %v5728, %v5730
        %v5732 = vrot.slane %v2429, %v5731
        %v5734 = vunpack.c.l.s4 1983009808
        %v5735 = vunpack.c.0.s8 %v5734
        %v5736 = vlaneseq
        %v5737 = vshrl.u32 %v5736, 7
        %v5738 = vsub.s32 %v5735, %v5737
        %v5739 = vrot.slane %v5725, %v5738
        %v5740 = vcombine.high %v5732, %v5732
        %v5741 = vcombine.high %v5739, %v5739
        %v5742 = vcombine.high %v2430, %v2430
        %v5744 = vunpack.c.l.s4 1983009808
        %v5745 = vunpack.c.0.s8 %v5744
        %v5746 = vlaneseq
        %v5747 = vshrl.u32 %v5746, 7
        %v5748 = vsub.s32 %v5745, %v5747
        %v5749 = vrot.slane %v2430, %v5748
        %v5751 = vunpack.c.l.s4 1983009808
        %v5752 = vunpack.c.0.s8 %v5751
        %v5753 = vlaneseq
        %v5754 = vshrl.u32 %v5753, 7
        %v5755 = vsub.s32 %v5752, %v5754
        %v5756 = vrot.slane %v5742, %v5755
        %v5757 = vcombine.high %v5749, %v5749
        %v5758 = vcombine.high %v5756, %v5756
        %v5759 = vcombine.high %v2431, %v2431
        %v5761 = vunpack.c.l.s4 1983009808
        %v5762 = vunpack.c.0.s8 %v5761
        %v5763 = vlaneseq
        %v5764 = vshrl.u32 %v5763, 7
        %v5765 = vsub.s32 %v5762, %v5764
        %v5766 = vrot.slane %v2431, %v5765
        %v5768 = vunpack.c.l.s4 1983009808
        %v5769 = vunpack.c.0.s8 %v5768
        %v5770 = vlaneseq
        %v5771 = vshrl.u32 %v5770, 7
        %v5772 = vsub.s32 %v5769, %v5771
        %v5773 = vrot.slane %v5759, %v5772
        %v5774 = vcombine.high %v5766, %v5766
        %v5775 = vcombine.high %v5773, %v5773
        %v5904 = vadd.f32 %v4883, %v5239
        %v5905 = vadd.f32 %v4887, %v5247
        %v5906 = vadd.f32 %v4891, %v5246
        %v5907 = vadd.f32 %v4895, %v5248
        %v5908 = vadd.f32 %v4899, %v5256
        %v5909 = vadd.f32 %v4903, %v5264
        %v5910 = vadd.f32 %v4907, %v5263
        %v5911 = vadd.f32 %v4911, %v5265
        %v5912 = vadd.f32 %v4883, %v5273
        %v5913 = vadd.f32 %v4887, %v5281
        %v5914 = vadd.f32 %v4891, %v5280
        %v5915 = vadd.f32 %v4895, %v5282
        %v5916 = vadd.f32 %v4899, %v5290
        %v5917 = vadd.f32 %v4903, %v5298
        %v5918 = vadd.f32 %v4907, %v5297
        %v5919 = vadd.f32 %v4911, %v5299
        %v5920 = vadd.f32 %v4915, %v5307
        %v5921 = vadd.f32 %v4919, %v5315
        %v5922 = vadd.f32 %v4923, %v5314
        %v5923 = vadd.f32 %v4927, %v5316
        %v5924 = vadd.f32 %v4931, %v5324
        %v5925 = vadd.f32 %v4935, %v5332
        %v5926 = vadd.f32 %v4939, %v5331
        %v5927 = vadd.f32 %v4943, %v5333
        %v5928 = vadd.f32 %v4915, %v5341
        %v5929 = vadd.f32 %v4919, %v5349
        %v5930 = vadd.f32 %v4923, %v5348
        %v5931 = vadd.f32 %v4927, %v5350
        %v5932 = vadd.f32 %v4931, %v5358
        %v5933 = vadd.f32 %v4935, %v5366
        %v5934 = vadd.f32 %v4939, %v5365
        %v5935 = vadd.f32 %v4943, %v5367
        %v5936 = vadd.f32 %v4947, %v5375
        %v5937 = vadd.f32 %v4951, %v5383
        %v5938 = vadd.f32 %v4955, %v5382
        %v5939 = vadd.f32 %v4959, %v5384
        %v5940 = vadd.f32 %v4963, %v5392
        %v5941 = vadd.f32 %v4967, %v5400
        %v5942 = vadd.f32 %v4971, %v5399
        %v5943 = vadd.f32 %v4975, %v5401
        %v5944 = vadd.f32 %v4947, %v5409
        %v5945 = vadd.f32 %v4951, %v5417
        %v5946 = vadd.f32 %v4955, %v5416
        %v5947 = vadd.f32 %v4959, %v5418
        %v5948 = vadd.f32 %v4963, %v5426
        %v5949 = vadd.f32 %v4967, %v5434
        %v5950 = vadd.f32 %v4971, %v5433
        %v5951 = vadd.f32 %v4975, %v5435
        %v5952 = vadd.f32 %v4979, %v5443
        %v5953 = vadd.f32 %v4983, %v5451
        %v5954 = vadd.f32 %v4987, %v5450
        %v5955 = vadd.f32 %v4991, %v5452
        %v5956 = vadd.f32 %v4995, %v5460
        %v5957 = vadd.f32 %v4999, %v5468
        %v5958 = vadd.f32 %v5003, %v5467
        %v5959 = vadd.f32 %v5007, %v5469
        %v5960 = vadd.f32 %v4979, %v5477
        %v5961 = vadd.f32 %v4983, %v5485
        %v5962 = vadd.f32 %v4987, %v5484
        %v5963 = vadd.f32 %v4991, %v5486
        %v5964 = vadd.f32 %v4995, %v5494
        %v5965 = vadd.f32 %v4999, %v5502
        %v5966 = vadd.f32 %v5003, %v5501
        %v5967 = vadd.f32 %v5007, %v5503
        %v5968 = vadd.f32 %v5011, %v5511
        %v5969 = vadd.f32 %v5015, %v5519
        %v5970 = vadd.f32 %v5019, %v5518
        %v5971 = vadd.f32 %v5023, %v5520
        %v5972 = vadd.f32 %v5027, %v5528
        %v5973 = vadd.f32 %v5031, %v5536
        %v5974 = vadd.f32 %v5035, %v5535
        %v5975 = vadd.f32 %v5039, %v5537
        %v5976 = vadd.f32 %v5011, %v5545
        %v5977 = vadd.f32 %v5015, %v5553
        %v5978 = vadd.f32 %v5019, %v5552
        %v5979 = vadd.f32 %v5023, %v5554
        %v5980 = vadd.f32 %v5027, %v5562
        %v5981 = vadd.f32 %v5031, %v5570
        %v5982 = vadd.f32 %v5035, %v5569
        %v5983 = vadd.f32 %v5039, %v5571
        %v5984 = vadd.f32 %v5043, %v5579
        %v5985 = vadd.f32 %v5047, %v5587
        %v5986 = vadd.f32 %v5051, %v5586
        %v5987 = vadd.f32 %v5055, %v5588
        %v5988 = vadd.f32 %v5059, %v5596
        %v5989 = vadd.f32 %v5063, %v5604
        %v5990 = vadd.f32 %v5067, %v5603
        %v5991 = vadd.f32 %v5071, %v5605
        %v5992 = vadd.f32 %v5043, %v5613
        %v5993 = vadd.f32 %v5047, %v5621
        %v5994 = vadd.f32 %v5051, %v5620
        %v5995 = vadd.f32 %v5055, %v5622
        %v5996 = vadd.f32 %v5059, %v5630
        %v5997 = vadd.f32 %v5063, %v5638
        %v5998 = vadd.f32 %v5067, %v5637
        %v5999 = vadd.f32 %v5071, %v5639
        %v6000 = vadd.f32 %v5075, %v5647
        %v6001 = vadd.f32 %v5079, %v5655
        %v6002 = vadd.f32 %v5083, %v5654
        %v6003 = vadd.f32 %v5087, %v5656
        %v6004 = vadd.f32 %v5091, %v5664
        %v6005 = vadd.f32 %v5095, %v5672
        %v6006 = vadd.f32 %v5099, %v5671
        %v6007 = vadd.f32 %v5103, %v5673
        %v6008 = vadd.f32 %v5075, %v5681
        %v6009 = vadd.f32 %v5079, %v5689
        %v6010 = vadd.f32 %v5083, %v5688
        %v6011 = vadd.f32 %v5087, %v5690
        %v6012 = vadd.f32 %v5091, %v5698
        %v6013 = vadd.f32 %v5095, %v5706
        %v6014 = vadd.f32 %v5099, %v5705
        %v6015 = vadd.f32 %v5103, %v5707
        %v6016 = vadd.f32 %v5107, %v5715
        %v6017 = vadd.f32 %v5111, %v5723
        %v6018 = vadd.f32 %v5115, %v5722
        %v6019 = vadd.f32 %v5119, %v5724
        %v6020 = vadd.f32 %v5123, %v5732
        %v6021 = vadd.f32 %v5127, %v5740
        %v6022 = vadd.f32 %v5131, %v5739
        %v6023 = vadd.f32 %v5135, %v5741
        %v6024 = vadd.f32 %v5107, %v5749
        %v6025 = vadd.f32 %v5111, %v5757
        %v6026 = vadd.f32 %v5115, %v5756
        %v6027 = vadd.f32 %v5119, %v5758
        %v6028 = vadd.f32 %v5123, %v5766
        %v6029 = vadd.f32 %v5127, %v5774
        %v6030 = vadd.f32 %v5131, %v5773
        %v6031 = vadd.f32 %v5135, %v5775
        %v6064 = vcombine.high %v640, %v640
        %v6066 = vunpack.c.l.s4 1983009808
        %v6067 = vunpack.c.0.s8 %v6066
        %v6068 = vlaneseq
        %v6069 = vshrl.u32 %v6068, 7
        %v6070 = vsub.s32 %v6067, %v6069
        %v6071 = vrot.slane %v640, %v6070
        %v6073 = vunpack.c.l.s4 1983009808
        %v6074 = vunpack.c.0.s8 %v6073
        %v6075 = vlaneseq
        %v6076 = vshrl.u32 %v6075, 7
        %v6077 = vsub.s32 %v6074, %v6076
        %v6078 = vrot.slane %v6064, %v6077
        %v6079 = vcombine.high %v6071, %v6071
        %v6080 = vcombine.high %v6078, %v6078
        %v6081 = vcombine.high %v641, %v641
        %v6083 = vunpack.c.l.s4 1983009808
        %v6084 = vunpack.c.0.s8 %v6083
        %v6085 = vlaneseq
        %v6086 = vshrl.u32 %v6085, 7
        %v6087 = vsub.s32 %v6084, %v6086
        %v6088 = vrot.slane %v641, %v6087
        %v6090 = vunpack.c.l.s4 1983009808
        %v6091 = vunpack.c.0.s8 %v6090
        %v6092 = vlaneseq
        %v6093 = vshrl.u32 %v6092, 7
        %v6094 = vsub.s32 %v6091, %v6093
        %v6095 = vrot.slane %v6081, %v6094
        %v6096 = vcombine.high %v6088, %v6088
        %v6097 = vcombine.high %v6095, %v6095
        %v6098 = vcombine.high %v642, %v642
        %v6100 = vunpack.c.l.s4 1983009808
        %v6101 = vunpack.c.0.s8 %v6100
        %v6102 = vlaneseq
        %v6103 = vshrl.u32 %v6102, 7
        %v6104 = vsub.s32 %v6101, %v6103
        %v6105 = vrot.slane %v642, %v6104
        %v6107 = vunpack.c.l.s4 1983009808
        %v6108 = vunpack.c.0.s8 %v6107
        %v6109 = vlaneseq
        %v6110 = vshrl.u32 %v6109, 7
        %v6111 = vsub.s32 %v6108, %v6110
        %v6112 = vrot.slane %v6098, %v6111
        %v6113 = vcombine.high %v6105, %v6105
        %v6114 = vcombine.high %v6112, %v6112
        %v6115 = vcombine.high %v643, %v643
        %v6117 = vunpack.c.l.s4 1983009808
        %v6118 = vunpack.c.0.s8 %v6117
        %v6119 = vlaneseq
        %v6120 = vshrl.u32 %v6119, 7
        %v6121 = vsub.s32 %v6118, %v6120
        %v6122 = vrot.slane %v643, %v6121
        %v6124 = vunpack.c.l.s4 1983009808
        %v6125 = vunpack.c.0.s8 %v6124
        %v6126 = vlaneseq
        %v6127 = vshrl.u32 %v6126, 7
        %v6128 = vsub.s32 %v6125, %v6127
        %v6129 = vrot.slane %v6115, %v6128
        %v6130 = vcombine.high %v6122, %v6122
        %v6131 = vcombine.high %v6129, %v6129
        %v6132 = vcombine.high %v644, %v644
        %v6134 = vunpack.c.l.s4 1983009808
        %v6135 = vunpack.c.0.s8 %v6134
        %v6136 = vlaneseq
        %v6137 = vshrl.u32 %v6136, 7
        %v6138 = vsub.s32 %v6135, %v6137
        %v6139 = vrot.slane %v644, %v6138
        %v6141 = vunpack.c.l.s4 1983009808
        %v6142 = vunpack.c.0.s8 %v6141
        %v6143 = vlaneseq
        %v6144 = vshrl.u32 %v6143, 7
        %v6145 = vsub.s32 %v6142, %v6144
        %v6146 = vrot.slane %v6132, %v6145
        %v6147 = vcombine.high %v6139, %v6139
        %v6148 = vcombine.high %v6146, %v6146
        %v6149 = vcombine.high %v645, %v645
        %v6151 = vunpack.c.l.s4 1983009808
        %v6152 = vunpack.c.0.s8 %v6151
        %v6153 = vlaneseq
        %v6154 = vshrl.u32 %v6153, 7
        %v6155 = vsub.s32 %v6152, %v6154
        %v6156 = vrot.slane %v645, %v6155
        %v6158 = vunpack.c.l.s4 1983009808
        %v6159 = vunpack.c.0.s8 %v6158
        %v6160 = vlaneseq
        %v6161 = vshrl.u32 %v6160, 7
        %v6162 = vsub.s32 %v6159, %v6161
        %v6163 = vrot.slane %v6149, %v6162
        %v6164 = vcombine.high %v6156, %v6156
        %v6165 = vcombine.high %v6163, %v6163
        %v6166 = vcombine.high %v646, %v646
        %v6168 = vunpack.c.l.s4 1983009808
        %v6169 = vunpack.c.0.s8 %v6168
        %v6170 = vlaneseq
        %v6171 = vshrl.u32 %v6170, 7
        %v6172 = vsub.s32 %v6169, %v6171
        %v6173 = vrot.slane %v646, %v6172
        %v6175 = vunpack.c.l.s4 1983009808
        %v6176 = vunpack.c.0.s8 %v6175
        %v6177 = vlaneseq
        %v6178 = vshrl.u32 %v6177, 7
        %v6179 = vsub.s32 %v6176, %v6178
        %v6180 = vrot.slane %v6166, %v6179
        %v6181 = vcombine.high %v6173, %v6173
        %v6182 = vcombine.high %v6180, %v6180
        %v6183 = vcombine.high %v647, %v647
        %v6185 = vunpack.c.l.s4 1983009808
        %v6186 = vunpack.c.0.s8 %v6185
        %v6187 = vlaneseq
        %v6188 = vshrl.u32 %v6187, 7
        %v6189 = vsub.s32 %v6186, %v6188
        %v6190 = vrot.slane %v647, %v6189
        %v6192 = vunpack.c.l.s4 1983009808
        %v6193 = vunpack.c.0.s8 %v6192
        %v6194 = vlaneseq
        %v6195 = vshrl.u32 %v6194, 7
        %v6196 = vsub.s32 %v6193, %v6195
        %v6197 = vrot.slane %v6183, %v6196
        %v6198 = vcombine.high %v6190, %v6190
        %v6199 = vcombine.high %v6197, %v6197
        %v6200 = vcombine.high %v648, %v648
        %v6202 = vunpack.c.l.s4 1983009808
        %v6203 = vunpack.c.0.s8 %v6202
        %v6204 = vlaneseq
        %v6205 = vshrl.u32 %v6204, 7
        %v6206 = vsub.s32 %v6203, %v6205
        %v6207 = vrot.slane %v648, %v6206
        %v6209 = vunpack.c.l.s4 1983009808
        %v6210 = vunpack.c.0.s8 %v6209
        %v6211 = vlaneseq
        %v6212 = vshrl.u32 %v6211, 7
        %v6213 = vsub.s32 %v6210, %v6212
        %v6214 = vrot.slane %v6200, %v6213
        %v6215 = vcombine.high %v6207, %v6207
        %v6216 = vcombine.high %v6214, %v6214
        %v6217 = vcombine.high %v649, %v649
        %v6219 = vunpack.c.l.s4 1983009808
        %v6220 = vunpack.c.0.s8 %v6219
        %v6221 = vlaneseq
        %v6222 = vshrl.u32 %v6221, 7
        %v6223 = vsub.s32 %v6220, %v6222
        %v6224 = vrot.slane %v649, %v6223
        %v6226 = vunpack.c.l.s4 1983009808
        %v6227 = vunpack.c.0.s8 %v6226
        %v6228 = vlaneseq
        %v6229 = vshrl.u32 %v6228, 7
        %v6230 = vsub.s32 %v6227, %v6229
        %v6231 = vrot.slane %v6217, %v6230
        %v6232 = vcombine.high %v6224, %v6224
        %v6233 = vcombine.high %v6231, %v6231
        %v6234 = vcombine.high %v650, %v650
        %v6236 = vunpack.c.l.s4 1983009808
        %v6237 = vunpack.c.0.s8 %v6236
        %v6238 = vlaneseq
        %v6239 = vshrl.u32 %v6238, 7
        %v6240 = vsub.s32 %v6237, %v6239
        %v6241 = vrot.slane %v650, %v6240
        %v6243 = vunpack.c.l.s4 1983009808
        %v6244 = vunpack.c.0.s8 %v6243
        %v6245 = vlaneseq
        %v6246 = vshrl.u32 %v6245, 7
        %v6247 = vsub.s32 %v6244, %v6246
        %v6248 = vrot.slane %v6234, %v6247
        %v6249 = vcombine.high %v6241, %v6241
        %v6250 = vcombine.high %v6248, %v6248
        %v6251 = vcombine.high %v651, %v651
        %v6253 = vunpack.c.l.s4 1983009808
        %v6254 = vunpack.c.0.s8 %v6253
        %v6255 = vlaneseq
        %v6256 = vshrl.u32 %v6255, 7
        %v6257 = vsub.s32 %v6254, %v6256
        %v6258 = vrot.slane %v651, %v6257
        %v6260 = vunpack.c.l.s4 1983009808
        %v6261 = vunpack.c.0.s8 %v6260
        %v6262 = vlaneseq
        %v6263 = vshrl.u32 %v6262, 7
        %v6264 = vsub.s32 %v6261, %v6263
        %v6265 = vrot.slane %v6251, %v6264
        %v6266 = vcombine.high %v6258, %v6258
        %v6267 = vcombine.high %v6265, %v6265
        %v6268 = vcombine.high %v652, %v652
        %v6270 = vunpack.c.l.s4 1983009808
        %v6271 = vunpack.c.0.s8 %v6270
        %v6272 = vlaneseq
        %v6273 = vshrl.u32 %v6272, 7
        %v6274 = vsub.s32 %v6271, %v6273
        %v6275 = vrot.slane %v652, %v6274
        %v6277 = vunpack.c.l.s4 1983009808
        %v6278 = vunpack.c.0.s8 %v6277
        %v6279 = vlaneseq
        %v6280 = vshrl.u32 %v6279, 7
        %v6281 = vsub.s32 %v6278, %v6280
        %v6282 = vrot.slane %v6268, %v6281
        %v6283 = vcombine.high %v6275, %v6275
        %v6284 = vcombine.high %v6282, %v6282
        %v6285 = vcombine.high %v653, %v653
        %v6287 = vunpack.c.l.s4 1983009808
        %v6288 = vunpack.c.0.s8 %v6287
        %v6289 = vlaneseq
        %v6290 = vshrl.u32 %v6289, 7
        %v6291 = vsub.s32 %v6288, %v6290
        %v6292 = vrot.slane %v653, %v6291
        %v6294 = vunpack.c.l.s4 1983009808
        %v6295 = vunpack.c.0.s8 %v6294
        %v6296 = vlaneseq
        %v6297 = vshrl.u32 %v6296, 7
        %v6298 = vsub.s32 %v6295, %v6297
        %v6299 = vrot.slane %v6285, %v6298
        %v6300 = vcombine.high %v6292, %v6292
        %v6301 = vcombine.high %v6299, %v6299
        %v6302 = vcombine.high %v654, %v654
        %v6304 = vunpack.c.l.s4 1983009808
        %v6305 = vunpack.c.0.s8 %v6304
        %v6306 = vlaneseq
        %v6307 = vshrl.u32 %v6306, 7
        %v6308 = vsub.s32 %v6305, %v6307
        %v6309 = vrot.slane %v654, %v6308
        %v6311 = vunpack.c.l.s4 1983009808
        %v6312 = vunpack.c.0.s8 %v6311
        %v6313 = vlaneseq
        %v6314 = vshrl.u32 %v6313, 7
        %v6315 = vsub.s32 %v6312, %v6314
        %v6316 = vrot.slane %v6302, %v6315
        %v6317 = vcombine.high %v6309, %v6309
        %v6318 = vcombine.high %v6316, %v6316
        %v6319 = vcombine.high %v655, %v655
        %v6321 = vunpack.c.l.s4 1983009808
        %v6322 = vunpack.c.0.s8 %v6321
        %v6323 = vlaneseq
        %v6324 = vshrl.u32 %v6323, 7
        %v6325 = vsub.s32 %v6322, %v6324
        %v6326 = vrot.slane %v655, %v6325
        %v6328 = vunpack.c.l.s4 1983009808
        %v6329 = vunpack.c.0.s8 %v6328
        %v6330 = vlaneseq
        %v6331 = vshrl.u32 %v6330, 7
        %v6332 = vsub.s32 %v6329, %v6331
        %v6333 = vrot.slane %v6319, %v6332
        %v6334 = vcombine.high %v6326, %v6326
        %v6335 = vcombine.high %v6333, %v6333
        %v6336 = vcombine.high %v656, %v656
        %v6338 = vunpack.c.l.s4 1983009808
        %v6339 = vunpack.c.0.s8 %v6338
        %v6340 = vlaneseq
        %v6341 = vshrl.u32 %v6340, 7
        %v6342 = vsub.s32 %v6339, %v6341
        %v6343 = vrot.slane %v656, %v6342
        %v6345 = vunpack.c.l.s4 1983009808
        %v6346 = vunpack.c.0.s8 %v6345
        %v6347 = vlaneseq
        %v6348 = vshrl.u32 %v6347, 7
        %v6349 = vsub.s32 %v6346, %v6348
        %v6350 = vrot.slane %v6336, %v6349
        %v6351 = vcombine.high %v6343, %v6343
        %v6352 = vcombine.high %v6350, %v6350
        %v6353 = vcombine.high %v657, %v657
        %v6355 = vunpack.c.l.s4 1983009808
        %v6356 = vunpack.c.0.s8 %v6355
        %v6357 = vlaneseq
        %v6358 = vshrl.u32 %v6357, 7
        %v6359 = vsub.s32 %v6356, %v6358
        %v6360 = vrot.slane %v657, %v6359
        %v6362 = vunpack.c.l.s4 1983009808
        %v6363 = vunpack.c.0.s8 %v6362
        %v6364 = vlaneseq
        %v6365 = vshrl.u32 %v6364, 7
        %v6366 = vsub.s32 %v6363, %v6365
        %v6367 = vrot.slane %v6353, %v6366
        %v6368 = vcombine.high %v6360, %v6360
        %v6369 = vcombine.high %v6367, %v6367
        %v6370 = vcombine.high %v658, %v658
        %v6372 = vunpack.c.l.s4 1983009808
        %v6373 = vunpack.c.0.s8 %v6372
        %v6374 = vlaneseq
        %v6375 = vshrl.u32 %v6374, 7
        %v6376 = vsub.s32 %v6373, %v6375
        %v6377 = vrot.slane %v658, %v6376
        %v6379 = vunpack.c.l.s4 1983009808
        %v6380 = vunpack.c.0.s8 %v6379
        %v6381 = vlaneseq
        %v6382 = vshrl.u32 %v6381, 7
        %v6383 = vsub.s32 %v6380, %v6382
        %v6384 = vrot.slane %v6370, %v6383
        %v6385 = vcombine.high %v6377, %v6377
        %v6386 = vcombine.high %v6384, %v6384
        %v6387 = vcombine.high %v659, %v659
        %v6389 = vunpack.c.l.s4 1983009808
        %v6390 = vunpack.c.0.s8 %v6389
        %v6391 = vlaneseq
        %v6392 = vshrl.u32 %v6391, 7
        %v6393 = vsub.s32 %v6390, %v6392
        %v6394 = vrot.slane %v659, %v6393
        %v6396 = vunpack.c.l.s4 1983009808
        %v6397 = vunpack.c.0.s8 %v6396
        %v6398 = vlaneseq
        %v6399 = vshrl.u32 %v6398, 7
        %v6400 = vsub.s32 %v6397, %v6399
        %v6401 = vrot.slane %v6387, %v6400
        %v6402 = vcombine.high %v6394, %v6394
        %v6403 = vcombine.high %v6401, %v6401
        %v6404 = vcombine.high %v660, %v660
        %v6406 = vunpack.c.l.s4 1983009808
        %v6407 = vunpack.c.0.s8 %v6406
        %v6408 = vlaneseq
        %v6409 = vshrl.u32 %v6408, 7
        %v6410 = vsub.s32 %v6407, %v6409
        %v6411 = vrot.slane %v660, %v6410
        %v6413 = vunpack.c.l.s4 1983009808
        %v6414 = vunpack.c.0.s8 %v6413
        %v6415 = vlaneseq
        %v6416 = vshrl.u32 %v6415, 7
        %v6417 = vsub.s32 %v6414, %v6416
        %v6418 = vrot.slane %v6404, %v6417
        %v6419 = vcombine.high %v6411, %v6411
        %v6420 = vcombine.high %v6418, %v6418
        %v6421 = vcombine.high %v661, %v661
        %v6423 = vunpack.c.l.s4 1983009808
        %v6424 = vunpack.c.0.s8 %v6423
        %v6425 = vlaneseq
        %v6426 = vshrl.u32 %v6425, 7
        %v6427 = vsub.s32 %v6424, %v6426
        %v6428 = vrot.slane %v661, %v6427
        %v6430 = vunpack.c.l.s4 1983009808
        %v6431 = vunpack.c.0.s8 %v6430
        %v6432 = vlaneseq
        %v6433 = vshrl.u32 %v6432, 7
        %v6434 = vsub.s32 %v6431, %v6433
        %v6435 = vrot.slane %v6421, %v6434
        %v6436 = vcombine.high %v6428, %v6428
        %v6437 = vcombine.high %v6435, %v6435
        %v6438 = vcombine.high %v662, %v662
        %v6440 = vunpack.c.l.s4 1983009808
        %v6441 = vunpack.c.0.s8 %v6440
        %v6442 = vlaneseq
        %v6443 = vshrl.u32 %v6442, 7
        %v6444 = vsub.s32 %v6441, %v6443
        %v6445 = vrot.slane %v662, %v6444
        %v6447 = vunpack.c.l.s4 1983009808
        %v6448 = vunpack.c.0.s8 %v6447
        %v6449 = vlaneseq
        %v6450 = vshrl.u32 %v6449, 7
        %v6451 = vsub.s32 %v6448, %v6450
        %v6452 = vrot.slane %v6438, %v6451
        %v6453 = vcombine.high %v6445, %v6445
        %v6454 = vcombine.high %v6452, %v6452
        %v6455 = vcombine.high %v663, %v663
        %v6457 = vunpack.c.l.s4 1983009808
        %v6458 = vunpack.c.0.s8 %v6457
        %v6459 = vlaneseq
        %v6460 = vshrl.u32 %v6459, 7
        %v6461 = vsub.s32 %v6458, %v6460
        %v6462 = vrot.slane %v663, %v6461
        %v6464 = vunpack.c.l.s4 1983009808
        %v6465 = vunpack.c.0.s8 %v6464
        %v6466 = vlaneseq
        %v6467 = vshrl.u32 %v6466, 7
        %v6468 = vsub.s32 %v6465, %v6467
        %v6469 = vrot.slane %v6455, %v6468
        %v6470 = vcombine.high %v6462, %v6462
        %v6471 = vcombine.high %v6469, %v6469
        %v6472 = vcombine.high %v664, %v664
        %v6474 = vunpack.c.l.s4 1983009808
        %v6475 = vunpack.c.0.s8 %v6474
        %v6476 = vlaneseq
        %v6477 = vshrl.u32 %v6476, 7
        %v6478 = vsub.s32 %v6475, %v6477
        %v6479 = vrot.slane %v664, %v6478
        %v6481 = vunpack.c.l.s4 1983009808
        %v6482 = vunpack.c.0.s8 %v6481
        %v6483 = vlaneseq
        %v6484 = vshrl.u32 %v6483, 7
        %v6485 = vsub.s32 %v6482, %v6484
        %v6486 = vrot.slane %v6472, %v6485
        %v6487 = vcombine.high %v6479, %v6479
        %v6488 = vcombine.high %v6486, %v6486
        %v6489 = vcombine.high %v665, %v665
        %v6491 = vunpack.c.l.s4 1983009808
        %v6492 = vunpack.c.0.s8 %v6491
        %v6493 = vlaneseq
        %v6494 = vshrl.u32 %v6493, 7
        %v6495 = vsub.s32 %v6492, %v6494
        %v6496 = vrot.slane %v665, %v6495
        %v6498 = vunpack.c.l.s4 1983009808
        %v6499 = vunpack.c.0.s8 %v6498
        %v6500 = vlaneseq
        %v6501 = vshrl.u32 %v6500, 7
        %v6502 = vsub.s32 %v6499, %v6501
        %v6503 = vrot.slane %v6489, %v6502
        %v6504 = vcombine.high %v6496, %v6496
        %v6505 = vcombine.high %v6503, %v6503
        %v6506 = vcombine.high %v666, %v666
        %v6508 = vunpack.c.l.s4 1983009808
        %v6509 = vunpack.c.0.s8 %v6508
        %v6510 = vlaneseq
        %v6511 = vshrl.u32 %v6510, 7
        %v6512 = vsub.s32 %v6509, %v6511
        %v6513 = vrot.slane %v666, %v6512
        %v6515 = vunpack.c.l.s4 1983009808
        %v6516 = vunpack.c.0.s8 %v6515
        %v6517 = vlaneseq
        %v6518 = vshrl.u32 %v6517, 7
        %v6519 = vsub.s32 %v6516, %v6518
        %v6520 = vrot.slane %v6506, %v6519
        %v6521 = vcombine.high %v6513, %v6513
        %v6522 = vcombine.high %v6520, %v6520
        %v6523 = vcombine.high %v667, %v667
        %v6525 = vunpack.c.l.s4 1983009808
        %v6526 = vunpack.c.0.s8 %v6525
        %v6527 = vlaneseq
        %v6528 = vshrl.u32 %v6527, 7
        %v6529 = vsub.s32 %v6526, %v6528
        %v6530 = vrot.slane %v667, %v6529
        %v6532 = vunpack.c.l.s4 1983009808
        %v6533 = vunpack.c.0.s8 %v6532
        %v6534 = vlaneseq
        %v6535 = vshrl.u32 %v6534, 7
        %v6536 = vsub.s32 %v6533, %v6535
        %v6537 = vrot.slane %v6523, %v6536
        %v6538 = vcombine.high %v6530, %v6530
        %v6539 = vcombine.high %v6537, %v6537
        %v6540 = vcombine.high %v668, %v668
        %v6542 = vunpack.c.l.s4 1983009808
        %v6543 = vunpack.c.0.s8 %v6542
        %v6544 = vlaneseq
        %v6545 = vshrl.u32 %v6544, 7
        %v6546 = vsub.s32 %v6543, %v6545
        %v6547 = vrot.slane %v668, %v6546
        %v6549 = vunpack.c.l.s4 1983009808
        %v6550 = vunpack.c.0.s8 %v6549
        %v6551 = vlaneseq
        %v6552 = vshrl.u32 %v6551, 7
        %v6553 = vsub.s32 %v6550, %v6552
        %v6554 = vrot.slane %v6540, %v6553
        %v6555 = vcombine.high %v6547, %v6547
        %v6556 = vcombine.high %v6554, %v6554
        %v6557 = vcombine.high %v669, %v669
        %v6559 = vunpack.c.l.s4 1983009808
        %v6560 = vunpack.c.0.s8 %v6559
        %v6561 = vlaneseq
        %v6562 = vshrl.u32 %v6561, 7
        %v6563 = vsub.s32 %v6560, %v6562
        %v6564 = vrot.slane %v669, %v6563
        %v6566 = vunpack.c.l.s4 1983009808
        %v6567 = vunpack.c.0.s8 %v6566
        %v6568 = vlaneseq
        %v6569 = vshrl.u32 %v6568, 7
        %v6570 = vsub.s32 %v6567, %v6569
        %v6571 = vrot.slane %v6557, %v6570
        %v6572 = vcombine.high %v6564, %v6564
        %v6573 = vcombine.high %v6571, %v6571
        %v6574 = vcombine.high %v670, %v670
        %v6576 = vunpack.c.l.s4 1983009808
        %v6577 = vunpack.c.0.s8 %v6576
        %v6578 = vlaneseq
        %v6579 = vshrl.u32 %v6578, 7
        %v6580 = vsub.s32 %v6577, %v6579
        %v6581 = vrot.slane %v670, %v6580
        %v6583 = vunpack.c.l.s4 1983009808
        %v6584 = vunpack.c.0.s8 %v6583
        %v6585 = vlaneseq
        %v6586 = vshrl.u32 %v6585, 7
        %v6587 = vsub.s32 %v6584, %v6586
        %v6588 = vrot.slane %v6574, %v6587
        %v6589 = vcombine.high %v6581, %v6581
        %v6590 = vcombine.high %v6588, %v6588
        %v6591 = vcombine.high %v671, %v671
        %v6593 = vunpack.c.l.s4 1983009808
        %v6594 = vunpack.c.0.s8 %v6593
        %v6595 = vlaneseq
        %v6596 = vshrl.u32 %v6595, 7
        %v6597 = vsub.s32 %v6594, %v6596
        %v6598 = vrot.slane %v671, %v6597
        %v6600 = vunpack.c.l.s4 1983009808
        %v6601 = vunpack.c.0.s8 %v6600
        %v6602 = vlaneseq
        %v6603 = vshrl.u32 %v6602, 7
        %v6604 = vsub.s32 %v6601, %v6603
        %v6605 = vrot.slane %v6591, %v6604
        %v6606 = vcombine.high %v6598, %v6598
        %v6607 = vcombine.high %v6605, %v6605
        %v6736 = vadd.f32 %v5904, %v6071
        %v6737 = vadd.f32 %v5905, %v6079
        %v6738 = vadd.f32 %v5906, %v6078
        %v6739 = vadd.f32 %v5907, %v6080
        %v6740 = vadd.f32 %v5908, %v6088
        %v6741 = vadd.f32 %v5909, %v6096
        %v6742 = vadd.f32 %v5910, %v6095
        %v6743 = vadd.f32 %v5911, %v6097
        %v6744 = vadd.f32 %v5912, %v6105
        %v6745 = vadd.f32 %v5913, %v6113
        %v6746 = vadd.f32 %v5914, %v6112
        %v6747 = vadd.f32 %v5915, %v6114
        %v6748 = vadd.f32 %v5916, %v6122
        %v6749 = vadd.f32 %v5917, %v6130
        %v6750 = vadd.f32 %v5918, %v6129
        %v6751 = vadd.f32 %v5919, %v6131
        %v6752 = vadd.f32 %v5920, %v6139
        %v6753 = vadd.f32 %v5921, %v6147
        %v6754 = vadd.f32 %v5922, %v6146
        %v6755 = vadd.f32 %v5923, %v6148
        %v6756 = vadd.f32 %v5924, %v6156
        %v6757 = vadd.f32 %v5925, %v6164
        %v6758 = vadd.f32 %v5926, %v6163
        %v6759 = vadd.f32 %v5927, %v6165
        %v6760 = vadd.f32 %v5928, %v6173
        %v6761 = vadd.f32 %v5929, %v6181
        %v6762 = vadd.f32 %v5930, %v6180
        %v6763 = vadd.f32 %v5931, %v6182
        %v6764 = vadd.f32 %v5932, %v6190
        %v6765 = vadd.f32 %v5933, %v6198
        %v6766 = vadd.f32 %v5934, %v6197
        %v6767 = vadd.f32 %v5935, %v6199
        %v6768 = vadd.f32 %v5936, %v6207
        %v6769 = vadd.f32 %v5937, %v6215
        %v6770 = vadd.f32 %v5938, %v6214
        %v6771 = vadd.f32 %v5939, %v6216
        %v6772 = vadd.f32 %v5940, %v6224
        %v6773 = vadd.f32 %v5941, %v6232
        %v6774 = vadd.f32 %v5942, %v6231
        %v6775 = vadd.f32 %v5943, %v6233
        %v6776 = vadd.f32 %v5944, %v6241
        %v6777 = vadd.f32 %v5945, %v6249
        %v6778 = vadd.f32 %v5946, %v6248
        %v6779 = vadd.f32 %v5947, %v6250
        %v6780 = vadd.f32 %v5948, %v6258
        %v6781 = vadd.f32 %v5949, %v6266
        %v6782 = vadd.f32 %v5950, %v6265
        %v6783 = vadd.f32 %v5951, %v6267
        %v6784 = vadd.f32 %v5952, %v6275
        %v6785 = vadd.f32 %v5953, %v6283
        %v6786 = vadd.f32 %v5954, %v6282
        %v6787 = vadd.f32 %v5955, %v6284
        %v6788 = vadd.f32 %v5956, %v6292
        %v6789 = vadd.f32 %v5957, %v6300
        %v6790 = vadd.f32 %v5958, %v6299
        %v6791 = vadd.f32 %v5959, %v6301
        %v6792 = vadd.f32 %v5960, %v6309
        %v6793 = vadd.f32 %v5961, %v6317
        %v6794 = vadd.f32 %v5962, %v6316
        %v6795 = vadd.f32 %v5963, %v6318
        %v6796 = vadd.f32 %v5964, %v6326
        %v6797 = vadd.f32 %v5965, %v6334
        %v6798 = vadd.f32 %v5966, %v6333
        %v6799 = vadd.f32 %v5967, %v6335
        %v6800 = vadd.f32 %v5968, %v6343
        %v6801 = vadd.f32 %v5969, %v6351
        %v6802 = vadd.f32 %v5970, %v6350
        %v6803 = vadd.f32 %v5971, %v6352
        %v6804 = vadd.f32 %v5972, %v6360
        %v6805 = vadd.f32 %v5973, %v6368
        %v6806 = vadd.f32 %v5974, %v6367
        %v6807 = vadd.f32 %v5975, %v6369
        %v6808 = vadd.f32 %v5976, %v6377
        %v6809 = vadd.f32 %v5977, %v6385
        %v6810 = vadd.f32 %v5978, %v6384
        %v6811 = vadd.f32 %v5979, %v6386
        %v6812 = vadd.f32 %v5980, %v6394
        %v6813 = vadd.f32 %v5981, %v6402
        %v6814 = vadd.f32 %v5982, %v6401
        %v6815 = vadd.f32 %v5983, %v6403
        %v6816 = vadd.f32 %v5984, %v6411
        %v6817 = vadd.f32 %v5985, %v6419
        %v6818 = vadd.f32 %v5986, %v6418
        %v6819 = vadd.f32 %v5987, %v6420
        %v6820 = vadd.f32 %v5988, %v6428
        %v6821 = vadd.f32 %v5989, %v6436
        %v6822 = vadd.f32 %v5990, %v6435
        %v6823 = vadd.f32 %v5991, %v6437
        %v6824 = vadd.f32 %v5992, %v6445
        %v6825 = vadd.f32 %v5993, %v6453
        %v6826 = vadd.f32 %v5994, %v6452
        %v6827 = vadd.f32 %v5995, %v6454
        %v6828 = vadd.f32 %v5996, %v6462
        %v6829 = vadd.f32 %v5997, %v6470
        %v6830 = vadd.f32 %v5998, %v6469
        %v6831 = vadd.f32 %v5999, %v6471
        %v6832 = vadd.f32 %v6000, %v6479
        %v6833 = vadd.f32 %v6001, %v6487
        %v6834 = vadd.f32 %v6002, %v6486
        %v6835 = vadd.f32 %v6003, %v6488
        %v6836 = vadd.f32 %v6004, %v6496
        %v6837 = vadd.f32 %v6005, %v6504
        %v6838 = vadd.f32 %v6006, %v6503
        %v6839 = vadd.f32 %v6007, %v6505
        %v6840 = vadd.f32 %v6008, %v6513
        %v6841 = vadd.f32 %v6009, %v6521
        %v6842 = vadd.f32 %v6010, %v6520
        %v6843 = vadd.f32 %v6011, %v6522
        %v6844 = vadd.f32 %v6012, %v6530
        %v6845 = vadd.f32 %v6013, %v6538
        %v6846 = vadd.f32 %v6014, %v6537
        %v6847 = vadd.f32 %v6015, %v6539
        %v6848 = vadd.f32 %v6016, %v6547
        %v6849 = vadd.f32 %v6017, %v6555
        %v6850 = vadd.f32 %v6018, %v6554
        %v6851 = vadd.f32 %v6019, %v6556
        %v6852 = vadd.f32 %v6020, %v6564
        %v6853 = vadd.f32 %v6021, %v6572
        %v6854 = vadd.f32 %v6022, %v6571
        %v6855 = vadd.f32 %v6023, %v6573
        %v6856 = vadd.f32 %v6024, %v6581
        %v6857 = vadd.f32 %v6025, %v6589
        %v6858 = vadd.f32 %v6026, %v6588
        %v6859 = vadd.f32 %v6027, %v6590
        %v6860 = vadd.f32 %v6028, %v6598
        %v6861 = vadd.f32 %v6029, %v6606
        %v6862 = vadd.f32 %v6030, %v6605
        %v6863 = vadd.f32 %v6031, %v6607
        %v6992 = vcombine.low %v6736, %v6737
        %v6993 = vcombine.low %v6738, %v6739
        %v6995 = vunpack.c.l.s4 1983009808
        %v6996 = vunpack.c.0.s8 %v6995
        %v6997 = vlaneseq
        %v6998 = vshrl.u32 %v6997, 7
        %v6999 = vsub.s32 %v6996, %v6998
        %v7000 = vrot.slane %v6992, %v6999
        %v7002 = vunpack.c.l.s4 1983009808
        %v7003 = vunpack.c.0.s8 %v7002
        %v7004 = vlaneseq
        %v7005 = vshrl.u32 %v7004, 7
        %v7006 = vsub.s32 %v7003, %v7005
        %v7007 = vrot.slane %v6993, %v7006
        %v7008 = vcombine.low %v7000, %v7007
        %v7009 = vcombine.low %v6740, %v6741
        %v7010 = vcombine.low %v6742, %v6743
        %v7012 = vunpack.c.l.s4 1983009808
        %v7013 = vunpack.c.0.s8 %v7012
        %v7014 = vlaneseq
        %v7015 = vshrl.u32 %v7014, 7
        %v7016 = vsub.s32 %v7013, %v7015
        %v7017 = vrot.slane %v7009, %v7016
        %v7019 = vunpack.c.l.s4 1983009808
        %v7020 = vunpack.c.0.s8 %v7019
        %v7021 = vlaneseq
        %v7022 = vshrl.u32 %v7021, 7
        %v7023 = vsub.s32 %v7020, %v7022
        %v7024 = vrot.slane %v7010, %v7023
        %v7025 = vcombine.low %v7017, %v7024
        %v7026 = vcombine.low %v6744, %v6745
        %v7027 = vcombine.low %v6746, %v6747
        %v7029 = vunpack.c.l.s4 1983009808
        %v7030 = vunpack.c.0.s8 %v7029
        %v7031 = vlaneseq
        %v7032 = vshrl.u32 %v7031, 7
        %v7033 = vsub.s32 %v7030, %v7032
        %v7034 = vrot.slane %v7026, %v7033
        %v7036 = vunpack.c.l.s4 1983009808
        %v7037 = vunpack.c.0.s8 %v7036
        %v7038 = vlaneseq
        %v7039 = vshrl.u32 %v7038, 7
        %v7040 = vsub.s32 %v7037, %v7039
        %v7041 = vrot.slane %v7027, %v7040
        %v7042 = vcombine.low %v7034, %v7041
        %v7043 = vcombine.low %v6748, %v6749
        %v7044 = vcombine.low %v6750, %v6751
        %v7046 = vunpack.c.l.s4 1983009808
        %v7047 = vunpack.c.0.s8 %v7046
        %v7048 = vlaneseq
        %v7049 = vshrl.u32 %v7048, 7
        %v7050 = vsub.s32 %v7047, %v7049
        %v7051 = vrot.slane %v7043, %v7050
        %v7053 = vunpack.c.l.s4 1983009808
        %v7054 = vunpack.c.0.s8 %v7053
        %v7055 = vlaneseq
        %v7056 = vshrl.u32 %v7055, 7
        %v7057 = vsub.s32 %v7054, %v7056
        %v7058 = vrot.slane %v7044, %v7057
        %v7059 = vcombine.low %v7051, %v7058
        %v7060 = vcombine.low %v6752, %v6753
        %v7061 = vcombine.low %v6754, %v6755
        %v7063 = vunpack.c.l.s4 1983009808
        %v7064 = vunpack.c.0.s8 %v7063
        %v7065 = vlaneseq
        %v7066 = vshrl.u32 %v7065, 7
        %v7067 = vsub.s32 %v7064, %v7066
        %v7068 = vrot.slane %v7060, %v7067
        %v7070 = vunpack.c.l.s4 1983009808
        %v7071 = vunpack.c.0.s8 %v7070
        %v7072 = vlaneseq
        %v7073 = vshrl.u32 %v7072, 7
        %v7074 = vsub.s32 %v7071, %v7073
        %v7075 = vrot.slane %v7061, %v7074
        %v7076 = vcombine.low %v7068, %v7075
        %v7077 = vcombine.low %v6756, %v6757
        %v7078 = vcombine.low %v6758, %v6759
        %v7080 = vunpack.c.l.s4 1983009808
        %v7081 = vunpack.c.0.s8 %v7080
        %v7082 = vlaneseq
        %v7083 = vshrl.u32 %v7082, 7
        %v7084 = vsub.s32 %v7081, %v7083
        %v7085 = vrot.slane %v7077, %v7084
        %v7087 = vunpack.c.l.s4 1983009808
        %v7088 = vunpack.c.0.s8 %v7087
        %v7089 = vlaneseq
        %v7090 = vshrl.u32 %v7089, 7
        %v7091 = vsub.s32 %v7088, %v7090
        %v7092 = vrot.slane %v7078, %v7091
        %v7093 = vcombine.low %v7085, %v7092
        %v7094 = vcombine.low %v6760, %v6761
        %v7095 = vcombine.low %v6762, %v6763
        %v7097 = vunpack.c.l.s4 1983009808
        %v7098 = vunpack.c.0.s8 %v7097
        %v7099 = vlaneseq
        %v7100 = vshrl.u32 %v7099, 7
        %v7101 = vsub.s32 %v7098, %v7100
        %v7102 = vrot.slane %v7094, %v7101
        %v7104 = vunpack.c.l.s4 1983009808
        %v7105 = vunpack.c.0.s8 %v7104
        %v7106 = vlaneseq
        %v7107 = vshrl.u32 %v7106, 7
        %v7108 = vsub.s32 %v7105, %v7107
        %v7109 = vrot.slane %v7095, %v7108
        %v7110 = vcombine.low %v7102, %v7109
        %v7111 = vcombine.low %v6764, %v6765
        %v7112 = vcombine.low %v6766, %v6767
        %v7114 = vunpack.c.l.s4 1983009808
        %v7115 = vunpack.c.0.s8 %v7114
        %v7116 = vlaneseq
        %v7117 = vshrl.u32 %v7116, 7
        %v7118 = vsub.s32 %v7115, %v7117
        %v7119 = vrot.slane %v7111, %v7118
        %v7121 = vunpack.c.l.s4 1983009808
        %v7122 = vunpack.c.0.s8 %v7121
        %v7123 = vlaneseq
        %v7124 = vshrl.u32 %v7123, 7
        %v7125 = vsub.s32 %v7122, %v7124
        %v7126 = vrot.slane %v7112, %v7125
        %v7127 = vcombine.low %v7119, %v7126
        %v7128 = vcombine.low %v6768, %v6769
        %v7129 = vcombine.low %v6770, %v6771
        %v7131 = vunpack.c.l.s4 1983009808
        %v7132 = vunpack.c.0.s8 %v7131
        %v7133 = vlaneseq
        %v7134 = vshrl.u32 %v7133, 7
        %v7135 = vsub.s32 %v7132, %v7134
        %v7136 = vrot.slane %v7128, %v7135
        %v7138 = vunpack.c.l.s4 1983009808
        %v7139 = vunpack.c.0.s8 %v7138
        %v7140 = vlaneseq
        %v7141 = vshrl.u32 %v7140, 7
        %v7142 = vsub.s32 %v7139, %v7141
        %v7143 = vrot.slane %v7129, %v7142
        %v7144 = vcombine.low %v7136, %v7143
        %v7145 = vcombine.low %v6772, %v6773
        %v7146 = vcombine.low %v6774, %v6775
        %v7148 = vunpack.c.l.s4 1983009808
        %v7149 = vunpack.c.0.s8 %v7148
        %v7150 = vlaneseq
        %v7151 = vshrl.u32 %v7150, 7
        %v7152 = vsub.s32 %v7149, %v7151
        %v7153 = vrot.slane %v7145, %v7152
        %v7155 = vunpack.c.l.s4 1983009808
        %v7156 = vunpack.c.0.s8 %v7155
        %v7157 = vlaneseq
        %v7158 = vshrl.u32 %v7157, 7
        %v7159 = vsub.s32 %v7156, %v7158
        %v7160 = vrot.slane %v7146, %v7159
        %v7161 = vcombine.low %v7153, %v7160
        %v7162 = vcombine.low %v6776, %v6777
        %v7163 = vcombine.low %v6778, %v6779
        %v7165 = vunpack.c.l.s4 1983009808
        %v7166 = vunpack.c.0.s8 %v7165
        %v7167 = vlaneseq
        %v7168 = vshrl.u32 %v7167, 7
        %v7169 = vsub.s32 %v7166, %v7168
        %v7170 = vrot.slane %v7162, %v7169
        %v7172 = vunpack.c.l.s4 1983009808
        %v7173 = vunpack.c.0.s8 %v7172
        %v7174 = vlaneseq
        %v7175 = vshrl.u32 %v7174, 7
        %v7176 = vsub.s32 %v7173, %v7175
        %v7177 = vrot.slane %v7163, %v7176
        %v7178 = vcombine.low %v7170, %v7177
        %v7179 = vcombine.low %v6780, %v6781
        %v7180 = vcombine.low %v6782, %v6783
        %v7182 = vunpack.c.l.s4 1983009808
        %v7183 = vunpack.c.0.s8 %v7182
        %v7184 = vlaneseq
        %v7185 = vshrl.u32 %v7184, 7
        %v7186 = vsub.s32 %v7183, %v7185
        %v7187 = vrot.slane %v7179, %v7186
        %v7189 = vunpack.c.l.s4 1983009808
        %v7190 = vunpack.c.0.s8 %v7189
        %v7191 = vlaneseq
        %v7192 = vshrl.u32 %v7191, 7
        %v7193 = vsub.s32 %v7190, %v7192
        %v7194 = vrot.slane %v7180, %v7193
        %v7195 = vcombine.low %v7187, %v7194
        %v7196 = vcombine.low %v6784, %v6785
        %v7197 = vcombine.low %v6786, %v6787
        %v7199 = vunpack.c.l.s4 1983009808
        %v7200 = vunpack.c.0.s8 %v7199
        %v7201 = vlaneseq
        %v7202 = vshrl.u32 %v7201, 7
        %v7203 = vsub.s32 %v7200, %v7202
        %v7204 = vrot.slane %v7196, %v7203
        %v7206 = vunpack.c.l.s4 1983009808
        %v7207 = vunpack.c.0.s8 %v7206
        %v7208 = vlaneseq
        %v7209 = vshrl.u32 %v7208, 7
        %v7210 = vsub.s32 %v7207, %v7209
        %v7211 = vrot.slane %v7197, %v7210
        %v7212 = vcombine.low %v7204, %v7211
        %v7213 = vcombine.low %v6788, %v6789
        %v7214 = vcombine.low %v6790, %v6791
        %v7216 = vunpack.c.l.s4 1983009808
        %v7217 = vunpack.c.0.s8 %v7216
        %v7218 = vlaneseq
        %v7219 = vshrl.u32 %v7218, 7
        %v7220 = vsub.s32 %v7217, %v7219
        %v7221 = vrot.slane %v7213, %v7220
        %v7223 = vunpack.c.l.s4 1983009808
        %v7224 = vunpack.c.0.s8 %v7223
        %v7225 = vlaneseq
        %v7226 = vshrl.u32 %v7225, 7
        %v7227 = vsub.s32 %v7224, %v7226
        %v7228 = vrot.slane %v7214, %v7227
        %v7229 = vcombine.low %v7221, %v7228
        %v7230 = vcombine.low %v6792, %v6793
        %v7231 = vcombine.low %v6794, %v6795
        %v7233 = vunpack.c.l.s4 1983009808
        %v7234 = vunpack.c.0.s8 %v7233
        %v7235 = vlaneseq
        %v7236 = vshrl.u32 %v7235, 7
        %v7237 = vsub.s32 %v7234, %v7236
        %v7238 = vrot.slane %v7230, %v7237
        %v7240 = vunpack.c.l.s4 1983009808
        %v7241 = vunpack.c.0.s8 %v7240
        %v7242 = vlaneseq
        %v7243 = vshrl.u32 %v7242, 7
        %v7244 = vsub.s32 %v7241, %v7243
        %v7245 = vrot.slane %v7231, %v7244
        %v7246 = vcombine.low %v7238, %v7245
        %v7247 = vcombine.low %v6796, %v6797
        %v7248 = vcombine.low %v6798, %v6799
        %v7250 = vunpack.c.l.s4 1983009808
        %v7251 = vunpack.c.0.s8 %v7250
        %v7252 = vlaneseq
        %v7253 = vshrl.u32 %v7252, 7
        %v7254 = vsub.s32 %v7251, %v7253
        %v7255 = vrot.slane %v7247, %v7254
        %v7257 = vunpack.c.l.s4 1983009808
        %v7258 = vunpack.c.0.s8 %v7257
        %v7259 = vlaneseq
        %v7260 = vshrl.u32 %v7259, 7
        %v7261 = vsub.s32 %v7258, %v7260
        %v7262 = vrot.slane %v7248, %v7261
        %v7263 = vcombine.low %v7255, %v7262
        %v7264 = vcombine.low %v6800, %v6801
        %v7265 = vcombine.low %v6802, %v6803
        %v7267 = vunpack.c.l.s4 1983009808
        %v7268 = vunpack.c.0.s8 %v7267
        %v7269 = vlaneseq
        %v7270 = vshrl.u32 %v7269, 7
        %v7271 = vsub.s32 %v7268, %v7270
        %v7272 = vrot.slane %v7264, %v7271
        %v7274 = vunpack.c.l.s4 1983009808
        %v7275 = vunpack.c.0.s8 %v7274
        %v7276 = vlaneseq
        %v7277 = vshrl.u32 %v7276, 7
        %v7278 = vsub.s32 %v7275, %v7277
        %v7279 = vrot.slane %v7265, %v7278
        %v7280 = vcombine.low %v7272, %v7279
        %v7281 = vcombine.low %v6804, %v6805
        %v7282 = vcombine.low %v6806, %v6807
        %v7284 = vunpack.c.l.s4 1983009808
        %v7285 = vunpack.c.0.s8 %v7284
        %v7286 = vlaneseq
        %v7287 = vshrl.u32 %v7286, 7
        %v7288 = vsub.s32 %v7285, %v7287
        %v7289 = vrot.slane %v7281, %v7288
        %v7291 = vunpack.c.l.s4 1983009808
        %v7292 = vunpack.c.0.s8 %v7291
        %v7293 = vlaneseq
        %v7294 = vshrl.u32 %v7293, 7
        %v7295 = vsub.s32 %v7292, %v7294
        %v7296 = vrot.slane %v7282, %v7295
        %v7297 = vcombine.low %v7289, %v7296
        %v7298 = vcombine.low %v6808, %v6809
        %v7299 = vcombine.low %v6810, %v6811
        %v7301 = vunpack.c.l.s4 1983009808
        %v7302 = vunpack.c.0.s8 %v7301
        %v7303 = vlaneseq
        %v7304 = vshrl.u32 %v7303, 7
        %v7305 = vsub.s32 %v7302, %v7304
        %v7306 = vrot.slane %v7298, %v7305
        %v7308 = vunpack.c.l.s4 1983009808
        %v7309 = vunpack.c.0.s8 %v7308
        %v7310 = vlaneseq
        %v7311 = vshrl.u32 %v7310, 7
        %v7312 = vsub.s32 %v7309, %v7311
        %v7313 = vrot.slane %v7299, %v7312
        %v7314 = vcombine.low %v7306, %v7313
        %v7315 = vcombine.low %v6812, %v6813
        %v7316 = vcombine.low %v6814, %v6815
        %v7318 = vunpack.c.l.s4 1983009808
        %v7319 = vunpack.c.0.s8 %v7318
        %v7320 = vlaneseq
        %v7321 = vshrl.u32 %v7320, 7
        %v7322 = vsub.s32 %v7319, %v7321
        %v7323 = vrot.slane %v7315, %v7322
        %v7325 = vunpack.c.l.s4 1983009808
        %v7326 = vunpack.c.0.s8 %v7325
        %v7327 = vlaneseq
        %v7328 = vshrl.u32 %v7327, 7
        %v7329 = vsub.s32 %v7326, %v7328
        %v7330 = vrot.slane %v7316, %v7329
        %v7331 = vcombine.low %v7323, %v7330
        %v7332 = vcombine.low %v6816, %v6817
        %v7333 = vcombine.low %v6818, %v6819
        %v7335 = vunpack.c.l.s4 1983009808
        %v7336 = vunpack.c.0.s8 %v7335
        %v7337 = vlaneseq
        %v7338 = vshrl.u32 %v7337, 7
        %v7339 = vsub.s32 %v7336, %v7338
        %v7340 = vrot.slane %v7332, %v7339
        %v7342 = vunpack.c.l.s4 1983009808
        %v7343 = vunpack.c.0.s8 %v7342
        %v7344 = vlaneseq
        %v7345 = vshrl.u32 %v7344, 7
        %v7346 = vsub.s32 %v7343, %v7345
        %v7347 = vrot.slane %v7333, %v7346
        %v7348 = vcombine.low %v7340, %v7347
        %v7349 = vcombine.low %v6820, %v6821
        %v7350 = vcombine.low %v6822, %v6823
        %v7352 = vunpack.c.l.s4 1983009808
        %v7353 = vunpack.c.0.s8 %v7352
        %v7354 = vlaneseq
        %v7355 = vshrl.u32 %v7354, 7
        %v7356 = vsub.s32 %v7353, %v7355
        %v7357 = vrot.slane %v7349, %v7356
        %v7359 = vunpack.c.l.s4 1983009808
        %v7360 = vunpack.c.0.s8 %v7359
        %v7361 = vlaneseq
        %v7362 = vshrl.u32 %v7361, 7
        %v7363 = vsub.s32 %v7360, %v7362
        %v7364 = vrot.slane %v7350, %v7363
        %v7365 = vcombine.low %v7357, %v7364
        %v7366 = vcombine.low %v6824, %v6825
        %v7367 = vcombine.low %v6826, %v6827
        %v7369 = vunpack.c.l.s4 1983009808
        %v7370 = vunpack.c.0.s8 %v7369
        %v7371 = vlaneseq
        %v7372 = vshrl.u32 %v7371, 7
        %v7373 = vsub.s32 %v7370, %v7372
        %v7374 = vrot.slane %v7366, %v7373
        %v7376 = vunpack.c.l.s4 1983009808
        %v7377 = vunpack.c.0.s8 %v7376
        %v7378 = vlaneseq
        %v7379 = vshrl.u32 %v7378, 7
        %v7380 = vsub.s32 %v7377, %v7379
        %v7381 = vrot.slane %v7367, %v7380
        %v7382 = vcombine.low %v7374, %v7381
        %v7383 = vcombine.low %v6828, %v6829
        %v7384 = vcombine.low %v6830, %v6831
        %v7386 = vunpack.c.l.s4 1983009808
        %v7387 = vunpack.c.0.s8 %v7386
        %v7388 = vlaneseq
        %v7389 = vshrl.u32 %v7388, 7
        %v7390 = vsub.s32 %v7387, %v7389
        %v7391 = vrot.slane %v7383, %v7390
        %v7393 = vunpack.c.l.s4 1983009808
        %v7394 = vunpack.c.0.s8 %v7393
        %v7395 = vlaneseq
        %v7396 = vshrl.u32 %v7395, 7
        %v7397 = vsub.s32 %v7394, %v7396
        %v7398 = vrot.slane %v7384, %v7397
        %v7399 = vcombine.low %v7391, %v7398
        %v7400 = vcombine.low %v6832, %v6833
        %v7401 = vcombine.low %v6834, %v6835
        %v7403 = vunpack.c.l.s4 1983009808
        %v7404 = vunpack.c.0.s8 %v7403
        %v7405 = vlaneseq
        %v7406 = vshrl.u32 %v7405, 7
        %v7407 = vsub.s32 %v7404, %v7406
        %v7408 = vrot.slane %v7400, %v7407
        %v7410 = vunpack.c.l.s4 1983009808
        %v7411 = vunpack.c.0.s8 %v7410
        %v7412 = vlaneseq
        %v7413 = vshrl.u32 %v7412, 7
        %v7414 = vsub.s32 %v7411, %v7413
        %v7415 = vrot.slane %v7401, %v7414
        %v7416 = vcombine.low %v7408, %v7415
        %v7417 = vcombine.low %v6836, %v6837
        %v7418 = vcombine.low %v6838, %v6839
        %v7420 = vunpack.c.l.s4 1983009808
        %v7421 = vunpack.c.0.s8 %v7420
        %v7422 = vlaneseq
        %v7423 = vshrl.u32 %v7422, 7
        %v7424 = vsub.s32 %v7421, %v7423
        %v7425 = vrot.slane %v7417, %v7424
        %v7427 = vunpack.c.l.s4 1983009808
        %v7428 = vunpack.c.0.s8 %v7427
        %v7429 = vlaneseq
        %v7430 = vshrl.u32 %v7429, 7
        %v7431 = vsub.s32 %v7428, %v7430
        %v7432 = vrot.slane %v7418, %v7431
        %v7433 = vcombine.low %v7425, %v7432
        %v7434 = vcombine.low %v6840, %v6841
        %v7435 = vcombine.low %v6842, %v6843
        %v7437 = vunpack.c.l.s4 1983009808
        %v7438 = vunpack.c.0.s8 %v7437
        %v7439 = vlaneseq
        %v7440 = vshrl.u32 %v7439, 7
        %v7441 = vsub.s32 %v7438, %v7440
        %v7442 = vrot.slane %v7434, %v7441
        %v7444 = vunpack.c.l.s4 1983009808
        %v7445 = vunpack.c.0.s8 %v7444
        %v7446 = vlaneseq
        %v7447 = vshrl.u32 %v7446, 7
        %v7448 = vsub.s32 %v7445, %v7447
        %v7449 = vrot.slane %v7435, %v7448
        %v7450 = vcombine.low %v7442, %v7449
        %v7451 = vcombine.low %v6844, %v6845
        %v7452 = vcombine.low %v6846, %v6847
        %v7454 = vunpack.c.l.s4 1983009808
        %v7455 = vunpack.c.0.s8 %v7454
        %v7456 = vlaneseq
        %v7457 = vshrl.u32 %v7456, 7
        %v7458 = vsub.s32 %v7455, %v7457
        %v7459 = vrot.slane %v7451, %v7458
        %v7461 = vunpack.c.l.s4 1983009808
        %v7462 = vunpack.c.0.s8 %v7461
        %v7463 = vlaneseq
        %v7464 = vshrl.u32 %v7463, 7
        %v7465 = vsub.s32 %v7462, %v7464
        %v7466 = vrot.slane %v7452, %v7465
        %v7467 = vcombine.low %v7459, %v7466
        %v7468 = vcombine.low %v6848, %v6849
        %v7469 = vcombine.low %v6850, %v6851
        %v7471 = vunpack.c.l.s4 1983009808
        %v7472 = vunpack.c.0.s8 %v7471
        %v7473 = vlaneseq
        %v7474 = vshrl.u32 %v7473, 7
        %v7475 = vsub.s32 %v7472, %v7474
        %v7476 = vrot.slane %v7468, %v7475
        %v7478 = vunpack.c.l.s4 1983009808
        %v7479 = vunpack.c.0.s8 %v7478
        %v7480 = vlaneseq
        %v7481 = vshrl.u32 %v7480, 7
        %v7482 = vsub.s32 %v7479, %v7481
        %v7483 = vrot.slane %v7469, %v7482
        %v7484 = vcombine.low %v7476, %v7483
        %v7485 = vcombine.low %v6852, %v6853
        %v7486 = vcombine.low %v6854, %v6855
        %v7488 = vunpack.c.l.s4 1983009808
        %v7489 = vunpack.c.0.s8 %v7488
        %v7490 = vlaneseq
        %v7491 = vshrl.u32 %v7490, 7
        %v7492 = vsub.s32 %v7489, %v7491
        %v7493 = vrot.slane %v7485, %v7492
        %v7495 = vunpack.c.l.s4 1983009808
        %v7496 = vunpack.c.0.s8 %v7495
        %v7497 = vlaneseq
        %v7498 = vshrl.u32 %v7497, 7
        %v7499 = vsub.s32 %v7496, %v7498
        %v7500 = vrot.slane %v7486, %v7499
        %v7501 = vcombine.low %v7493, %v7500
        %v7502 = vcombine.low %v6856, %v6857
        %v7503 = vcombine.low %v6858, %v6859
        %v7505 = vunpack.c.l.s4 1983009808
        %v7506 = vunpack.c.0.s8 %v7505
        %v7507 = vlaneseq
        %v7508 = vshrl.u32 %v7507, 7
        %v7509 = vsub.s32 %v7506, %v7508
        %v7510 = vrot.slane %v7502, %v7509
        %v7512 = vunpack.c.l.s4 1983009808
        %v7513 = vunpack.c.0.s8 %v7512
        %v7514 = vlaneseq
        %v7515 = vshrl.u32 %v7514, 7
        %v7516 = vsub.s32 %v7513, %v7515
        %v7517 = vrot.slane %v7503, %v7516
        %v7518 = vcombine.low %v7510, %v7517
        %v7519 = vcombine.low %v6860, %v6861
        %v7520 = vcombine.low %v6862, %v6863
        %v7522 = vunpack.c.l.s4 1983009808
        %v7523 = vunpack.c.0.s8 %v7522
        %v7524 = vlaneseq
        %v7525 = vshrl.u32 %v7524, 7
        %v7526 = vsub.s32 %v7523, %v7525
        %v7527 = vrot.slane %v7519, %v7526
        %v7529 = vunpack.c.l.s4 1983009808
        %v7530 = vunpack.c.0.s8 %v7529
        %v7531 = vlaneseq
        %v7532 = vshrl.u32 %v7531, 7
        %v7533 = vsub.s32 %v7530, %v7532
        %v7534 = vrot.slane %v7520, %v7533
        %v7535 = vcombine.low %v7527, %v7534
        %7568 = vst [vmem:[%s639] sm:$0xff] %v7008
        %7569 = vst [vmem:[%s639 + $0x8] sm:$0xff] %v7025
        %7570 = vst [vmem:[%s639 + $0x10] sm:$0xff] %v7042
        %7571 = vst [vmem:[%s639 + $0x18] sm:$0xff] %v7059
        %7572 = vst [vmem:[%s639 + $0x20] sm:$0xff] %v7076
        %7573 = vst [vmem:[%s639 + $0x28] sm:$0xff] %v7093
        %7574 = vst [vmem:[%s639 + $0x30] sm:$0xff] %v7110
        %7575 = vst [vmem:[%s639 + $0x38] sm:$0xff] %v7127
        %7576 = vst [vmem:[%s639 + $0x40] sm:$0xff] %v7144
        %7577 = vst [vmem:[%s639 + $0x48] sm:$0xff] %v7161
        %7578 = vst [vmem:[%s639 + $0x50] sm:$0xff] %v7178
        %7579 = vst [vmem:[%s639 + $0x58] sm:$0xff] %v7195
        %7580 = vst [vmem:[%s639 + $0x60] sm:$0xff] %v7212
        %7581 = vst [vmem:[%s639 + $0x68] sm:$0xff] %v7229
        %7582 = vst [vmem:[%s639 + $0x70] sm:$0xff] %v7246
        %7583 = vst [vmem:[%s639 + $0x78] sm:$0xff] %v7263
        %7584 = vst [vmem:[%s639 + $0x80] sm:$0xff] %v7280
        %7585 = vst [vmem:[%s639 + $0x88] sm:$0xff] %v7297
        %7586 = vst [vmem:[%s639 + $0x90] sm:$0xff] %v7314
        %7587 = vst [vmem:[%s639 + $0x98] sm:$0xff] %v7331
        %7588 = vst [vmem:[%s639 + $0xa0] sm:$0xff] %v7348
        %7589 = vst [vmem:[%s639 + $0xa8] sm:$0xff] %v7365
        %7590 = vst [vmem:[%s639 + $0xb0] sm:$0xff] %v7382
        %7591 = vst [vmem:[%s639 + $0xb8] sm:$0xff] %v7399
        %7592 = vst [vmem:[%s639 + $0xc0] sm:$0xff] %v7416
        %7593 = vst [vmem:[%s639 + $0xc8] sm:$0xff] %v7433
        %7594 = vst [vmem:[%s639 + $0xd0] sm:$0xff] %v7450
        %7595 = vst [vmem:[%s639 + $0xd8] sm:$0xff] %v7467
        %7596 = vst [vmem:[%s639 + $0xe0] sm:$0xff] %v7484
        %7597 = vst [vmem:[%s639 + $0xe8] sm:$0xff] %v7501
        %7598 = vst [vmem:[%s639 + $0xf0] sm:$0xff] %v7518
        %7599 = vst [vmem:[%s639 + $0xf8] sm:$0xff] %v7535
        %s7600 = sand.u32 %s365, 1
        %s7601 = scalar_lea.sflag [#allocation4], %s7600
        %s7602 = sand.u32 %s365, 1
        %s7603 = smul.addr %s7602, 256
        %s7604 = scalar_lea.vmem [#allocation19], %s7603
        // Predicated region
        $region121: #{tpu_custom_call.1} parent=79 // pred_check
          %p7605 = pneg %p375
        $region122: #{tpu_custom_call.1} parent=79 // pred_check_branch
          %7607 = sbr.rel (%p7605) target = $region124
        $region123: #{tpu_custom_call.1} parent=79 // pred_region
          %s7609 = ssub.s32 4096, 4096
          %7610 = vsyncadd %s7601, %s7609
          %s7611 = smul.addr %s37, 32
          %s7612 = smul.addr %s7611, 128
          %s7613 = scalar_lea.hbm %s15, %s7612
          %s7614 = sshll.u32 %s7604, 4
          %s7615 = int_to_ptr.vmem [resolvable:$true] %s7614
          %7620 = dma.vmem_to_hbm [thread:$0]  %s7615, 4096, %s7613, %s7601, 128, 128, 8
        $region124: #{tpu_custom_call.1} parent=79 // pred_fallthru
          _
      $region80: #{tpu_custom_call.1} parent=5 // pred_fallthru
        _
      %p7621 = scmp.le.s32.totalorder 2, %s32
      // Predicated region
      $region125: #{tpu_custom_call.1} parent=5 // pred_check
        %p7622 = pneg %p7621
      $region126: #{tpu_custom_call.1} parent=5 // pred_check_branch
        %7624 = sbr.rel (%p7622) target = $region128
      $region127: #{tpu_custom_call.1} parent=5 // pred_region
        %s7625 = ssub.s32 %s32, 2
        // Predicated region
        $region129: #{tpu_custom_call.1} parent=127 // pred_check
          %p7626 = pneg %p381
        $region130: #{tpu_custom_call.1} parent=127 // pred_check_branch
          %7628 = sbr.rel (%p7626) target = $region132
        $region131: #{tpu_custom_call.1} parent=127 // pred_region
          %s7629 = sand.u32 %s366, 1
          %s7630 = scalar_lea.sflag [#allocation4], %s7629
          %s7631 = sand.u32 %s366, 1
          %s7632 = smul.addr %s7631, 256
          %s7633 = scalar_lea.vmem [#allocation19], %s7632
          %7634 = dma.done %s7630, 4096
        $region132: #{tpu_custom_call.1} parent=127 // pred_fallthru
          _
      $region128: #{tpu_custom_call.1} parent=5 // pred_fallthru
        _
    $region6: #{tpu_custom_call.1} parent=1 // loop_footer
      %s36 = sadd.s32 1, %s32
    $region7: #{tpu_custom_call.1} parent=1 // loop_footer_branch
      %31 = sbr.rel target = $region3
    $region8: #{tpu_custom_call.1} parent=1 // loop_exit
      _
    %7635 = vsyncpa [#allocation3], 1
    %s7636 = scalar_lea.sflag [#allocation3], 1
    %7637 = vsyncpa %s7636, 1
    %7638 = vsyncpa [#allocation6], 1
    %7639 = vsyncpa [#allocation9], 1
    %7640 = vsyncpa [#allocation12], 1
    %7641 = vsyncpa [#allocation15], 1
    %7642 = vsyncpa [#allocation18], 1
    %7643 = vsyncpa [#allocation4], 1
    %s7644 = scalar_lea.sflag [#allocation4], 1
    %7645 = vsyncpa %s7644, 1

</llo_original>
